<compile_context>
chip_gen: v6e
topology: v6e:2x2x1
jax: 0.10.0
libtpu: 0.0.40
codegen_flags: <defaults>
</compile_context>

<pallas_src>
import jax
import jax.numpy as jnp
from jax.experimental import pallas as pl
from jax.experimental.pallas import tpu as pltpu

# ----------------------------- model constants --------------------------------
C_PAD = 128          # lane-width padding for matmul N / channel dims (VMEM only)
K_STEM = 32          # stem im2col contraction: 9 taps * 3 channels = 27 -> 32
NUM_CLASSES = 10

H_IN = 32            # input spatial size
C_IN = 3             # input channels
C1 = 8               # stem / block-1 channels
C2 = 16              # block-2 channels
H1 = H_IN // 2       # 16 : spatial size after the stem max-pool
H2 = H1 // 2         # 8  : spatial size after the stride-2 block


# --------------------------- in-kernel helpers -------------------------------

def _conv3x3_windows(pad_ref, w_ref, ho, wo, stride):
    """3x3 conv as 9 shifted-window MXU matmuls reading from a zero-halo padded
    f32 VMEM scratch.  bf16 operands, f32 accumulation.  Returns (ho*wo, C_PAD)
    f32."""
    acc = None
    for i in range(3):
        for j in range(3):
            if stride == 1:
                win = pad_ref[i:i + ho, j:j + wo, :]
            else:  # stride-2 window read straight from the padded scratch
                win = pad_ref[pl.ds(i, ho, stride=stride),
                              pl.ds(j, wo, stride=stride), :]
            lhs = win.reshape(ho * wo, C_PAD).astype(jnp.bfloat16)
            part = jnp.dot(lhs, w_ref[i * 3 + j],
                           preferred_element_type=jnp.float32)
            acc = part if acc is None else acc + part
    return acc


# ------------------------------ the fused kernel ------------------------------

def _jht_fused_kernel(patch_ref, ws_ref, bs_ref,
                      w11_ref, b11_ref, w12_ref, b12_ref,
                      w21_ref, b21_ref, w22_ref, b22_ref,
                      wds_ref, bds_ref, fcw_ref, fcb_ref,
                      out_ref,
                      pool_ref, padA_ref, padB_ref, padC_ref):
    # Zero the padded scratches once; interiors are fully rewritten each step,
    # the 1-pixel halos stay zero across the whole grid.
    @pl.when(pl.program_id(0) == 0)
    def _init():
        padA_ref[...] = jnp.zeros(padA_ref.shape, padA_ref.dtype)
        padB_ref[...] = jnp.zeros(padB_ref.shape, padB_ref.dtype)
        padC_ref[...] = jnp.zeros(padC_ref.shape, padC_ref.dtype)

    # ---- stem: conv3x3(s1,p1)+BN+ReLU as ONE matmul over prepacked patches,
    #      fused with the 2x2/s2 max-pool --------------------------------------
    y = jnp.dot(patch_ref[0], ws_ref[...],
                preferred_element_type=jnp.float32)            # (1024, 128)
    y = jnp.maximum(y + bs_ref[...], 0.0)
    # pool H-pairs entirely in registers ...
    y4 = y.reshape(H1, 2, H_IN, C_PAD)
    pool_ref[...] = jnp.maximum(y4[:, 0], y4[:, 1])            # (16, 32, 128)
    # ... then W-pairs with two stride-2 reads of the small scratch
    x0 = jnp.maximum(pool_ref[:, pl.ds(0, H1, stride=2), :],
                     pool_ref[:, pl.ds(1, H1, stride=2), :])   # (16, 16, 128)
    padA_ref[1:H1 + 1, 1:H1 + 1, :] = x0

    # ---- basic block 1 (identity shortcut) -----------------------------------
    acc = _conv3x3_windows(padA_ref, w11_ref, H1, H1, 1)
    y1 = jnp.maximum(acc + b11_ref[...], 0.0)
    padB_ref[1:H1 + 1, 1:H1 + 1, :] = y1.reshape(H1, H1, C_PAD)
    acc = _conv3x3_windows(padB_ref, w12_ref, H1, H1, 1)
    # residual re-read from the resident scratch (not held live across convs)
    resid = padA_ref[1:H1 + 1, 1:H1 + 1, :].reshape(H1 * H1, C_PAD)
    out1 = jnp.maximum(acc + b12_ref[...] + resid, 0.0)
    padA_ref[1:H1 + 1, 1:H1 + 1, :] = out1.reshape(H1, H1, C_PAD)

    # ---- basic block 2 (stride-2, projection shortcut) + GAP + FC ------------
    acc = _conv3x3_windows(padA_ref, w21_ref, H2, H2, 2)
    y2 = jnp.maximum(acc + b21_ref[...], 0.0)
    padC_ref[1:H2 + 1, 1:H2 + 1, :] = y2.reshape(H2, H2, C_PAD)
    acc = _conv3x3_windows(padC_ref, w22_ref, H2, H2, 1)

    # 1x1 stride-2 projection shortcut: even rows/cols of the block-1 output are
    # read straight out of the padded scratch (pad index 1,3,... == index 0,2,..)
    xs = padA_ref[pl.ds(1, H2, stride=2), pl.ds(1, H2, stride=2), :]
    sc = jnp.dot(xs.reshape(H2 * H2, C_PAD).astype(jnp.bfloat16), wds_ref[...],
                 preferred_element_type=jnp.float32) + bds_ref[...]

    res = jnp.maximum(acc + b22_ref[...] + sc, 0.0)            # (64, 128)
    pooled = jnp.mean(res, axis=0, keepdims=True)              # (1, 128)
    logits = jnp.dot(pooled.astype(jnp.bfloat16), fcw_ref[...],
                     preferred_element_type=jnp.float32) + fcb_ref[...]
    out_ref[0] = jnp.broadcast_to(logits, (out_ref.shape[1], C_PAD))


# ----------------------------- pallas_call wrapper -----------------------------

def _jht_pallas(patches, prep):
    n, hw, ks = patches.shape
    wspec9 = pl.BlockSpec((9, C_PAD, C_PAD), lambda i: (0, 0, 0))
    wspec2 = pl.BlockSpec((C_PAD, C_PAD), lambda i: (0, 0))
    bspec = pl.BlockSpec((1, C_PAD), lambda i: (0, 0))
    return pl.pallas_call(
        _jht_fused_kernel,
        grid=(n,),
        in_specs=[
            pl.BlockSpec((1, hw, ks), lambda i: (i, 0, 0)),    # stem patches
            pl.BlockSpec((K_STEM, C_PAD), lambda i: (0, 0)), bspec,   # stem
            wspec9, bspec,                                     # block1 conv1
            wspec9, bspec,                                     # block1 conv2
            wspec9, bspec,                                     # block2 conv1
            wspec9, bspec,                                     # block2 conv2
            wspec2, bspec,                                     # projection
            wspec2, bspec,                                     # fc
        ],
        out_specs=pl.BlockSpec((1, 8, C_PAD), lambda i: (i, 0, 0)),
        out_shape=jax.ShapeDtypeStruct((n, 8, C_PAD), jnp.float32),
        scratch_shapes=[
            pltpu.VMEM((H1, H_IN, C_PAD), jnp.float32),            # H-pooled stem rows
            pltpu.VMEM((H1 + 2, H1 + 2, C_PAD), jnp.float32),      # padA (input / residual)
            pltpu.VMEM((H1 + 2, H1 + 2, C_PAD), jnp.float32),      # padB (block1 conv1 out)
            pltpu.VMEM((H2 + 2, H2 + 2, C_PAD), jnp.float32),      # padC (block2 conv1 out)
        ],
        compiler_params=pltpu.CompilerParams(
            dimension_semantics=("parallel",),       # megacore: shard batch axis
            vmem_limit_bytes=32 * 1024 * 1024,
        ),
    )(patches,
      prep["stem_w"], prep["stem_b"],
      prep["b1c1_w"], prep["b1c1_b"], prep["b1c2_w"], prep["b1c2_b"],
      prep["b2c1_w"], prep["b2c1_b"], prep["b2c2_w"], prep["b2c2_b"],
      prep["b2ds_w"], prep["b2ds_b"], prep["fc_w"], prep["fc_b"])


# ------------------------------ parameters ------------------------------------

def init_params(key, c_in=C_IN, c1=C1, c2=C2, num_classes=NUM_CLASSES):
    ks = list(jax.random.split(key, 14))

    def conv_w(k, cout, cin, kh, kw):
        return 0.1 * jax.random.normal(k, (cout, cin, kh, kw), jnp.float32)

    def bn_p(k, c):
        k1, k2, k3 = jax.random.split(k, 3)
        return (1.0 + 0.1 * jax.random.normal(k1, (c,), jnp.float32),  # gamma
                0.1 * jax.random.normal(k2, (c,), jnp.float32),        # beta
                0.1 * jax.random.normal(k3, (c,), jnp.float32),        # running mean
                jnp.ones((c,), jnp.float32))                           # running var

    return {
        "stem_w": conv_w(ks[0], c1, c_in, 3, 3), "stem_bn": bn_p(ks[1], c1),
        "b1c1_w": conv_w(ks[2], c1, c1, 3, 3), "b1c1_bn": bn_p(ks[3], c1),
        "b1c2_w": conv_w(ks[4], c1, c1, 3, 3), "b1c2_bn": bn_p(ks[5], c1),
        "b2c1_w": conv_w(ks[6], c2, c1, 3, 3), "b2c1_bn": bn_p(ks[7], c2),
        "b2c2_w": conv_w(ks[8], c2, c2, 3, 3), "b2c2_bn": bn_p(ks[9], c2),
        "b2ds_w": conv_w(ks[10], c2, c1, 1, 1), "b2ds_bn": bn_p(ks[11], c2),
        "fc_w": 0.1 * jax.random.normal(ks[12], (c2, num_classes), jnp.float32),
        "fc_b": 0.1 * jax.random.normal(ks[13], (1, num_classes), jnp.float32),
    }


def _bn_scale_bias(bn, eps=1e-5):
    gamma, beta, mean, var = bn
    scale = gamma / jnp.sqrt(var + eps)
    return scale, beta - mean * scale


def _fold_conv3x3(w_oihw, bn):
    # Fold inference BatchNorm into the conv weights / bias ONCE at prep time.
    scale, bias = _bn_scale_bias(bn)
    cout, cin = w_oihw.shape[:2]
    w = jnp.transpose(w_oihw, (2, 3, 1, 0)) * scale            # (3,3,cin,cout)
    w = jnp.pad(w, ((0, 0), (0, 0), (0, C_PAD - cin), (0, C_PAD - cout)))
    w = w.reshape(9, C_PAD, C_PAD).astype(jnp.bfloat16)
    b = jnp.pad(bias, (0, C_PAD - cout)).reshape(1, C_PAD).astype(jnp.float32)
    return w, b


def _fold_stem(w_oihw, bn):
    # K packed as (tap, cin) to match the host-side im2col patch layout.
    scale, bias = _bn_scale_bias(bn)
    cout, cin = w_oihw.shape[:2]
    w = jnp.transpose(w_oihw, (2, 3, 1, 0)) * scale            # (3,3,cin,cout)
    w = w.reshape(9 * cin, cout)
    w = jnp.pad(w, ((0, K_STEM - 9 * cin), (0, C_PAD - cout))).astype(jnp.bfloat16)
    b = jnp.pad(bias, (0, C_PAD - cout)).reshape(1, C_PAD).astype(jnp.float32)
    return w, b


def _fold_1x1(w_oihw, bn):
    scale, bias = _bn_scale_bias(bn)
    cout, cin = w_oihw.shape[:2]
    w = jnp.transpose(w_oihw[:, :, 0, 0], (1, 0)) * scale      # (cin, cout)
    w = jnp.pad(w, ((0, C_PAD - cin), (0, C_PAD - cout))).astype(jnp.bfloat16)
    b = jnp.pad(bias, (0, C_PAD - cout)).reshape(1, C_PAD).astype(jnp.float32)
    return w, b


def prepare_params(p):
    prep = {}
    prep["stem_w"], prep["stem_b"] = _fold_stem(p["stem_w"], p["stem_bn"])
    for name in ("b1c1", "b1c2", "b2c1", "b2c2"):
        prep[name + "_w"], prep[name + "_b"] = _fold_conv3x3(p[name + "_w"],
                                                             p[name + "_bn"])
    prep["b2ds_w"], prep["b2ds_b"] = _fold_1x1(p["b2ds_w"], p["b2ds_bn"])
    c2, ncls = p["fc_w"].shape
    prep["fc_w"] = jnp.pad(p["fc_w"],
                           ((0, C_PAD - c2), (0, C_PAD - ncls))).astype(jnp.bfloat16)
    prep["fc_b"] = jnp.pad(p["fc_b"], ((0, 0), (0, C_PAD - ncls))).astype(jnp.float32)
    return prep


# ------------------------------ forward pass ----------------------------------

def jht_forward(prep, image_data_nchw):
    # input_dict['image_data'] is NCHW (PyTorch).  Pack the tiny 3-channel input
    # as bf16 im2col patches (layout plumbing only, no HBM zero-padding to 128).
    x = jnp.transpose(image_data_nchw, (0, 2, 3, 1)).astype(jnp.float32)
    n, h, w, c = x.shape
    xp = jnp.pad(x, ((0, 0), (1, 1), (1, 1), (0, 0)))
    taps = [xp[:, i:i + h, j:j + w, :] for i in range(3) for j in range(3)]
    patches = jnp.concatenate(taps, axis=-1)                     # (N, 32, 32, 27)
    patches = jnp.pad(patches, ((0, 0), (0, 0), (0, 0), (0, K_STEM - 9 * c)))
    patches = patches.reshape(n, h * w, K_STEM).astype(jnp.bfloat16)

    out = _jht_pallas(patches, prep)                             # (N, 8, 128)
    # prob_dict['output'] = logits (the module returns this tensor directly)
    return out[:, 0, :NUM_CLASSES]


# ------------------------- pure-JAX reference (f32) ----------------------------

def _ref_forward(p, image_nchw, eps=1e-5):
    def conv_bn(x, w, bn, stride, padding):
        y = jax.lax.conv_general_dilated(
            x, w, window_strides=(stride, stride), padding=padding,
            dimension_numbers=("NHWC", "OIHW", "NHWC"))
        gamma, beta, mean, var = bn
        scale = gamma / jnp.sqrt(var + eps)
        return y * scale + (beta - mean * scale)

    x = jnp.transpose(image_nchw, (0, 2, 3, 1)).astype(jnp.float32)
    y = jax.nn.relu(conv_bn(x, p["stem_w"], p["stem_bn"], 1, ((1, 1), (1, 1))))
    y = jax.lax.reduce_window(y, -jnp.inf, jax.lax.max,
                              (1, 2, 2, 1), (1, 2, 2, 1), "VALID")
    h = jax.nn.relu(conv_bn(y, p["b1c1_w"], p["b1c1_bn"], 1, ((1, 1), (1, 1))))
    h = conv_bn(h, p["b1c2_w"], p["b1c2_bn"], 1, ((1, 1), (1, 1)))
    y = jax.nn.relu(h + y)
    h = jax.nn.relu(conv_bn(y, p["b2c1_w"], p["b2c1_bn"], 2, ((1, 1), (1, 1))))
    h = conv_bn(h, p["b2c2_w"], p["b2c2_bn"], 1, ((1, 1), (1, 1)))
    s = conv_bn(y, p["b2ds_w"], p["b2ds_bn"], 2, "VALID")
    y = jax.nn.relu(h + s)
    emb = jnp.mean(y, axis=(1, 2))
    return emb @ p["fc_w"] + p["fc_b"]


# ---------------------------------- main ---------------------------------------

if __name__ == "__main__":
    key = jax.random.PRNGKey(0)
    k_param, k_data = jax.random.split(key)
    params = init_params(k_param)
    prep = prepare_params(params)
    image_data = jax.random.normal(k_data, (2, C_IN, H_IN, H_IN), jnp.float32)  # NCHW

    out = jax.jit(jht_forward)(prep, image_data)
    out = jax.block_until_ready(out)
    assert out.shape == (2, NUM_CLASSES) and out.dtype == jnp.float32

    ref = _ref_forward(params, image_data)
    max_err = float(jnp.max(jnp.abs(out - ref)))
    assert max_err < 1e-1, f"kernel/reference mismatch: max abs err {max_err}"

    print("KERNEL_OK")
</pallas_src>

<mosaic_0001>
module attributes {stable_mosaic.version = 11 : i64} {
  func.func @_jht_fused_kernel(%arg0: i32, %arg1: memref<1x1024x32xbf16, #tpu.memory_space<vmem>>, %arg2: memref<32x128xbf16, #tpu.memory_space<vmem>>, %arg3: memref<1x128xf32, #tpu.memory_space<vmem>>, %arg4: memref<9x128x128xbf16, #tpu.memory_space<vmem>>, %arg5: memref<1x128xf32, #tpu.memory_space<vmem>>, %arg6: memref<9x128x128xbf16, #tpu.memory_space<vmem>>, %arg7: memref<1x128xf32, #tpu.memory_space<vmem>>, %arg8: memref<9x128x128xbf16, #tpu.memory_space<vmem>>, %arg9: memref<1x128xf32, #tpu.memory_space<vmem>>, %arg10: memref<9x128x128xbf16, #tpu.memory_space<vmem>>, %arg11: memref<1x128xf32, #tpu.memory_space<vmem>>, %arg12: memref<128x128xbf16, #tpu.memory_space<vmem>>, %arg13: memref<1x128xf32, #tpu.memory_space<vmem>>, %arg14: memref<128x128xbf16, #tpu.memory_space<vmem>>, %arg15: memref<1x128xf32, #tpu.memory_space<vmem>>, %arg16: memref<1x8x128xf32, #tpu.memory_space<vmem>>, %arg17: memref<16x32x128xf32, #tpu.memory_space<vmem>>, %arg18: memref<18x18x128xf32, #tpu.memory_space<vmem>>, %arg19: memref<18x18x128xf32, #tpu.memory_space<vmem>>, %arg20: memref<10x10x128xf32, #tpu.memory_space<vmem>>) attributes {dimension_semantics = [#tpu.dimension_semantics<parallel>], iteration_bounds = array<i64: 2>, scalar_prefetch = 0 : i64, scratch_operands = 4 : i64, tpu.core_type = #tpu.core_type<tc>, window_params = [{transform_indices = @transform_0, window_bounds = array<i64: 1, 1024, 32>}, {pipeline_mode = #tpu.pipeline_mode<synchronous>, transform_indices = @transform_1, window_bounds = array<i64: 32, 128>}, {pipeline_mode = #tpu.pipeline_mode<synchronous>, transform_indices = @transform_2, window_bounds = array<i64: 1, 128>}, {pipeline_mode = #tpu.pipeline_mode<synchronous>, transform_indices = @transform_3, window_bounds = array<i64: 9, 128, 128>}, {pipeline_mode = #tpu.pipeline_mode<synchronous>, transform_indices = @transform_4, window_bounds = array<i64: 1, 128>}, {pipeline_mode = #tpu.pipeline_mode<synchronous>, transform_indices = @transform_5, window_bounds = array<i64: 9, 128, 128>}, {pipeline_mode = #tpu.pipeline_mode<synchronous>, transform_indices = @transform_6, window_bounds = array<i64: 1, 128>}, {pipeline_mode = #tpu.pipeline_mode<synchronous>, transform_indices = @transform_7, window_bounds = array<i64: 9, 128, 128>}, {pipeline_mode = #tpu.pipeline_mode<synchronous>, transform_indices = @transform_8, window_bounds = array<i64: 1, 128>}, {pipeline_mode = #tpu.pipeline_mode<synchronous>, transform_indices = @transform_9, window_bounds = array<i64: 9, 128, 128>}, {pipeline_mode = #tpu.pipeline_mode<synchronous>, transform_indices = @transform_10, window_bounds = array<i64: 1, 128>}, {pipeline_mode = #tpu.pipeline_mode<synchronous>, transform_indices = @transform_11, window_bounds = array<i64: 128, 128>}, {pipeline_mode = #tpu.pipeline_mode<synchronous>, transform_indices = @transform_12, window_bounds = array<i64: 1, 128>}, {pipeline_mode = #tpu.pipeline_mode<synchronous>, transform_indices = @transform_13, window_bounds = array<i64: 128, 128>}, {pipeline_mode = #tpu.pipeline_mode<synchronous>, transform_indices = @transform_14, window_bounds = array<i64: 1, 128>}, {transform_indices = @transform_15, window_bounds = array<i64: 1, 8, 128>}]} {
    %c0_i32 = arith.constant 0 : i32
    %0 = arith.cmpi eq, %arg0, %c0_i32 : i32
    %1 = arith.extui %0 : i1 to i32
    %c0_i32_0 = arith.constant 0 : i32
    %2 = arith.cmpi ne, %1, %c0_i32_0 : i32
    scf.if %2 {
      %cst_306 = arith.constant 0.000000e+00 : f32
      %323 = vector.broadcast %cst_306 : f32 to vector<18x18x128xf32>
      %c0_307 = arith.constant 0 : index
      %c0_308 = arith.constant 0 : index
      %c0_309 = arith.constant 0 : index
      %324 = vector.load %arg18[%c0_307, %c0_308, %c0_309] : memref<18x18x128xf32, #tpu.memory_space<vmem>>, vector<18x18x128xf32>
      tpu.vector_store %arg18[%c0_307, %c0_308, %c0_309], %323 {strides = array<i32>} : memref<18x18x128xf32, #tpu.memory_space<vmem>>, vector<18x18x128xf32>,
      %cst_310 = arith.constant 0.000000e+00 : f32
      %325 = vector.broadcast %cst_310 : f32 to vector<18x18x128xf32>
      %c0_311 = arith.constant 0 : index
      %c0_312 = arith.constant 0 : index
      %c0_313 = arith.constant 0 : index
      %326 = vector.load %arg19[%c0_311, %c0_312, %c0_313] : memref<18x18x128xf32, #tpu.memory_space<vmem>>, vector<18x18x128xf32>
      tpu.vector_store %arg19[%c0_311, %c0_312, %c0_313], %325 {strides = array<i32>} : memref<18x18x128xf32, #tpu.memory_space<vmem>>, vector<18x18x128xf32>,
      %cst_314 = arith.constant 0.000000e+00 : f32
      %327 = vector.broadcast %cst_314 : f32 to vector<10x10x128xf32>
      %c0_315 = arith.constant 0 : index
      %c0_316 = arith.constant 0 : index
      %c0_317 = arith.constant 0 : index
      %328 = vector.load %arg20[%c0_315, %c0_316, %c0_317] : memref<10x10x128xf32, #tpu.memory_space<vmem>>, vector<10x10x128xf32>
      tpu.vector_store %arg20[%c0_315, %c0_316, %c0_317], %327 {strides = array<i32>} : memref<10x10x128xf32, #tpu.memory_space<vmem>>, vector<10x10x128xf32>,
    } else {
    }
    %c0 = arith.constant 0 : index
    %c0_1 = arith.constant 0 : index
    %c0_2 = arith.constant 0 : index
    %3 = vector.load %arg1[%c0, %c0_1, %c0_2] : memref<1x1024x32xbf16, #tpu.memory_space<vmem>>, vector<1x1024x32xbf16>
    %4 = vector.shape_cast %3 : vector<1x1024x32xbf16> to vector<1024x32xbf16>
    %c0_3 = arith.constant 0 : index
    %c0_4 = arith.constant 0 : index
    %5 = vector.load %arg2[%c0_3, %c0_4] : memref<32x128xbf16, #tpu.memory_space<vmem>>, vector<32x128xbf16>
    %cst = arith.constant dense<0.000000e+00> : vector<1024x128xf32>
    %6 = tpu.matmul %4, %5, %cst {dimension_numbers = #tpu.dot_dimension_numbers<[1], [0], [0], [1], [0, 0, 1, 1], [], []>} : vector<1024x32xbf16>, vector<32x128xbf16>, vector<1024x128xf32> -> vector<1024x128xf32>
    %c0_5 = arith.constant 0 : index
    %c0_6 = arith.constant 0 : index
    %7 = vector.load %arg3[%c0_5, %c0_6] : memref<1x128xf32, #tpu.memory_space<vmem>>, vector<1x128xf32>
    %8 = vector.broadcast %7 : vector<1x128xf32> to vector<1024x128xf32>
    %9 = arith.addf %6, %8 : vector<1024x128xf32>
    %cst_7 = arith.constant 0.000000e+00 : f32
    %10 = vector.broadcast %cst_7 : f32 to vector<1024x128xf32>
    %11 = arith.maximumf %9, %10 : vector<1024x128xf32>
    %12 = vector.shape_cast %11 : vector<1024x128xf32> to vector<16x2x32x128xf32>
    %13 = vector.extract_strided_slice %12 {offsets = [0, 0, 0, 0], sizes = [16, 1, 32, 128], strides = [1, 1, 1, 1]} : vector<16x2x32x128xf32> to vector<16x1x32x128xf32>
    %14 = vector.shape_cast %13 : vector<16x1x32x128xf32> to vector<16x32x128xf32>
    %15 = vector.extract_strided_slice %12 {offsets = [0, 1, 0, 0], sizes = [16, 1, 32, 128], strides = [1, 1, 1, 1]} : vector<16x2x32x128xf32> to vector<16x1x32x128xf32>
    %16 = vector.shape_cast %15 : vector<16x1x32x128xf32> to vector<16x32x128xf32>
    %17 = arith.maximumf %14, %16 : vector<16x32x128xf32>
    %c0_8 = arith.constant 0 : index
    %c0_9 = arith.constant 0 : index
    %c0_10 = arith.constant 0 : index
    %18 = vector.load %arg17[%c0_8, %c0_9, %c0_10] : memref<16x32x128xf32, #tpu.memory_space<vmem>>, vector<16x32x128xf32>
    tpu.vector_store %arg17[%c0_8, %c0_9, %c0_10], %17 {strides = array<i32>} : memref<16x32x128xf32, #tpu.memory_space<vmem>>, vector<16x32x128xf32>,
    %c0_11 = arith.constant 0 : index
    %c0_12 = arith.constant 0 : index
    %c0_13 = arith.constant 0 : index
    %19 = tpu.strided_load %arg17[%c0_11, %c0_12, %c0_13] {strides = array<i32: 1, 2, 1>} : memref<16x32x128xf32, #tpu.memory_space<vmem>>, vector<16x16x128xf32>
    %c0_14 = arith.constant 0 : index
    %c1 = arith.constant 1 : index
    %c0_15 = arith.constant 0 : index
    %20 = tpu.strided_load %arg17[%c0_14, %c1, %c0_15] {strides = array<i32: 1, 2, 1>} : memref<16x32x128xf32, #tpu.memory_space<vmem>>, vector<16x16x128xf32>
    %21 = arith.maximumf %19, %20 : vector<16x16x128xf32>
    %c1_16 = arith.constant 1 : index
    %c1_17 = arith.constant 1 : index
    %c0_18 = arith.constant 0 : index
    %22 = vector.load %arg18[%c1_16, %c1_17, %c0_18] : memref<18x18x128xf32, #tpu.memory_space<vmem>>, vector<16x16x128xf32>
    tpu.vector_store %arg18[%c1_16, %c1_17, %c0_18], %21 {strides = array<i32>} : memref<18x18x128xf32, #tpu.memory_space<vmem>>, vector<16x16x128xf32>,
    %c0_19 = arith.constant 0 : index
    %c0_20 = arith.constant 0 : index
    %c0_21 = arith.constant 0 : index
    %23 = vector.load %arg18[%c0_19, %c0_20, %c0_21] : memref<18x18x128xf32, #tpu.memory_space<vmem>>, vector<16x16x128xf32>
    %24 = vector.shape_cast %23 : vector<16x16x128xf32> to vector<256x128xf32>
    %25 = arith.truncf %24 : vector<256x128xf32> to vector<256x128xbf16>
    %c0_22 = arith.constant 0 : index
    %c0_23 = arith.constant 0 : index
    %c0_24 = arith.constant 0 : index
    %26 = vector.load %arg4[%c0_22, %c0_23, %c0_24] : memref<9x128x128xbf16, #tpu.memory_space<vmem>>, vector<1x128x128xbf16>
    %27 = vector.shape_cast %26 : vector<1x128x128xbf16> to vector<128x128xbf16>
    %cst_25 = arith.constant dense<0.000000e+00> : vector<256x128xf32>
    %28 = tpu.matmul %25, %27, %cst_25 {dimension_numbers = #tpu.dot_dimension_numbers<[1], [0], [0], [1], [0, 0, 1, 1], [], []>} : vector<256x128xbf16>, vector<128x128xbf16>, vector<256x128xf32> -> vector<256x128xf32>
    %c0_26 = arith.constant 0 : index
    %c1_27 = arith.constant 1 : index
    %c0_28 = arith.constant 0 : index
    %29 = vector.load %arg18[%c0_26, %c1_27, %c0_28] : memref<18x18x128xf32, #tpu.memory_space<vmem>>, vector<16x16x128xf32>
    %30 = vector.shape_cast %29 : vector<16x16x128xf32> to vector<256x128xf32>
    %31 = arith.truncf %30 : vector<256x128xf32> to vector<256x128xbf16>
    %c1_29 = arith.constant 1 : index
    %c0_30 = arith.constant 0 : index
    %c0_31 = arith.constant 0 : index
    %32 = vector.load %arg4[%c1_29, %c0_30, %c0_31] : memref<9x128x128xbf16, #tpu.memory_space<vmem>>, vector<1x128x128xbf16>
    %33 = vector.shape_cast %32 : vector<1x128x128xbf16> to vector<128x128xbf16>
    %cst_32 = arith.constant dense<0.000000e+00> : vector<256x128xf32>
    %34 = tpu.matmul %31, %33, %cst_32 {dimension_numbers = #tpu.dot_dimension_numbers<[1], [0], [0], [1], [0, 0, 1, 1], [], []>} : vector<256x128xbf16>, vector<128x128xbf16>, vector<256x128xf32> -> vector<256x128xf32>
    %35 = arith.addf %28, %34 : vector<256x128xf32>
    %c0_33 = arith.constant 0 : index
    %c2 = arith.constant 2 : index
    %c0_34 = arith.constant 0 : index
    %36 = vector.load %arg18[%c0_33, %c2, %c0_34] : memref<18x18x128xf32, #tpu.memory_space<vmem>>, vector<16x16x128xf32>
    %37 = vector.shape_cast %36 : vector<16x16x128xf32> to vector<256x128xf32>
    %38 = arith.truncf %37 : vector<256x128xf32> to vector<256x128xbf16>
    %c2_35 = arith.constant 2 : index
    %c0_36 = arith.constant 0 : index
    %c0_37 = arith.constant 0 : index
    %39 = vector.load %arg4[%c2_35, %c0_36, %c0_37] : memref<9x128x128xbf16, #tpu.memory_space<vmem>>, vector<1x128x128xbf16>
    %40 = vector.shape_cast %39 : vector<1x128x128xbf16> to vector<128x128xbf16>
    %cst_38 = arith.constant dense<0.000000e+00> : vector<256x128xf32>
    %41 = tpu.matmul %38, %40, %cst_38 {dimension_numbers = #tpu.dot_dimension_numbers<[1], [0], [0], [1], [0, 0, 1, 1], [], []>} : vector<256x128xbf16>, vector<128x128xbf16>, vector<256x128xf32> -> vector<256x128xf32>
    %42 = arith.addf %35, %41 : vector<256x128xf32>
    %c1_39 = arith.constant 1 : index
    %c0_40 = arith.constant 0 : index
    %c0_41 = arith.constant 0 : index
    %43 = vector.load %arg18[%c1_39, %c0_40, %c0_41] : memref<18x18x128xf32, #tpu.memory_space<vmem>>, vector<16x16x128xf32>
    %44 = vector.shape_cast %43 : vector<16x16x128xf32> to vector<256x128xf32>
    %45 = arith.truncf %44 : vector<256x128xf32> to vector<256x128xbf16>
    %c3 = arith.constant 3 : index
    %c0_42 = arith.constant 0 : index
    %c0_43 = arith.constant 0 : index
    %46 = vector.load %arg4[%c3, %c0_42, %c0_43] : memref<9x128x128xbf16, #tpu.memory_space<vmem>>, vector<1x128x128xbf16>
    %47 = vector.shape_cast %46 : vector<1x128x128xbf16> to vector<128x128xbf16>
    %cst_44 = arith.constant dense<0.000000e+00> : vector<256x128xf32>
    %48 = tpu.matmul %45, %47, %cst_44 {dimension_numbers = #tpu.dot_dimension_numbers<[1], [0], [0], [1], [0, 0, 1, 1], [], []>} : vector<256x128xbf16>, vector<128x128xbf16>, vector<256x128xf32> -> vector<256x128xf32>
    %49 = arith.addf %42, %48 : vector<256x128xf32>
    %c1_45 = arith.constant 1 : index
    %c1_46 = arith.constant 1 : index
    %c0_47 = arith.constant 0 : index
    %50 = vector.load %arg18[%c1_45, %c1_46, %c0_47] : memref<18x18x128xf32, #tpu.memory_space<vmem>>, vector<16x16x128xf32>
    %51 = vector.shape_cast %50 : vector<16x16x128xf32> to vector<256x128xf32>
    %52 = arith.truncf %51 : vector<256x128xf32> to vector<256x128xbf16>
    %c4 = arith.constant 4 : index
    %c0_48 = arith.constant 0 : index
    %c0_49 = arith.constant 0 : index
    %53 = vector.load %arg4[%c4, %c0_48, %c0_49] : memref<9x128x128xbf16, #tpu.memory_space<vmem>>, vector<1x128x128xbf16>
    %54 = vector.shape_cast %53 : vector<1x128x128xbf16> to vector<128x128xbf16>
    %cst_50 = arith.constant dense<0.000000e+00> : vector<256x128xf32>
    %55 = tpu.matmul %52, %54, %cst_50 {dimension_numbers = #tpu.dot_dimension_numbers<[1], [0], [0], [1], [0, 0, 1, 1], [], []>} : vector<256x128xbf16>, vector<128x128xbf16>, vector<256x128xf32> -> vector<256x128xf32>
    %56 = arith.addf %49, %55 : vector<256x128xf32>
    %c1_51 = arith.constant 1 : index
    %c2_52 = arith.constant 2 : index
    %c0_53 = arith.constant 0 : index
    %57 = vector.load %arg18[%c1_51, %c2_52, %c0_53] : memref<18x18x128xf32, #tpu.memory_space<vmem>>, vector<16x16x128xf32>
    %58 = vector.shape_cast %57 : vector<16x16x128xf32> to vector<256x128xf32>
    %59 = arith.truncf %58 : vector<256x128xf32> to vector<256x128xbf16>
    %c5 = arith.constant 5 : index
    %c0_54 = arith.constant 0 : index
    %c0_55 = arith.constant 0 : index
    %60 = vector.load %arg4[%c5, %c0_54, %c0_55] : memref<9x128x128xbf16, #tpu.memory_space<vmem>>, vector<1x128x128xbf16>
    %61 = vector.shape_cast %60 : vector<1x128x128xbf16> to vector<128x128xbf16>
    %cst_56 = arith.constant dense<0.000000e+00> : vector<256x128xf32>
    %62 = tpu.matmul %59, %61, %cst_56 {dimension_numbers = #tpu.dot_dimension_numbers<[1], [0], [0], [1], [0, 0, 1, 1], [], []>} : vector<256x128xbf16>, vector<128x128xbf16>, vector<256x128xf32> -> vector<256x128xf32>
    %63 = arith.addf %56, %62 : vector<256x128xf32>
    %c2_57 = arith.constant 2 : index
    %c0_58 = arith.constant 0 : index
    %c0_59 = arith.constant 0 : index
    %64 = vector.load %arg18[%c2_57, %c0_58, %c0_59] : memref<18x18x128xf32, #tpu.memory_space<vmem>>, vector<16x16x128xf32>
    %65 = vector.shape_cast %64 : vector<16x16x128xf32> to vector<256x128xf32>
    %66 = arith.truncf %65 : vector<256x128xf32> to vector<256x128xbf16>
    %c6 = arith.constant 6 : index
    %c0_60 = arith.constant 0 : index
    %c0_61 = arith.constant 0 : index
    %67 = vector.load %arg4[%c6, %c0_60, %c0_61] : memref<9x128x128xbf16, #tpu.memory_space<vmem>>, vector<1x128x128xbf16>
    %68 = vector.shape_cast %67 : vector<1x128x128xbf16> to vector<128x128xbf16>
    %cst_62 = arith.constant dense<0.000000e+00> : vector<256x128xf32>
    %69 = tpu.matmul %66, %68, %cst_62 {dimension_numbers = #tpu.dot_dimension_numbers<[1], [0], [0], [1], [0, 0, 1, 1], [], []>} : vector<256x128xbf16>, vector<128x128xbf16>, vector<256x128xf32> -> vector<256x128xf32>
    %70 = arith.addf %63, %69 : vector<256x128xf32>
    %c2_63 = arith.constant 2 : index
    %c1_64 = arith.constant 1 : index
    %c0_65 = arith.constant 0 : index
    %71 = vector.load %arg18[%c2_63, %c1_64, %c0_65] : memref<18x18x128xf32, #tpu.memory_space<vmem>>, vector<16x16x128xf32>
    %72 = vector.shape_cast %71 : vector<16x16x128xf32> to vector<256x128xf32>
    %73 = arith.truncf %72 : vector<256x128xf32> to vector<256x128xbf16>
    %c7 = arith.constant 7 : index
    %c0_66 = arith.constant 0 : index
    %c0_67 = arith.constant 0 : index
    %74 = vector.load %arg4[%c7, %c0_66, %c0_67] : memref<9x128x128xbf16, #tpu.memory_space<vmem>>, vector<1x128x128xbf16>
    %75 = vector.shape_cast %74 : vector<1x128x128xbf16> to vector<128x128xbf16>
    %cst_68 = arith.constant dense<0.000000e+00> : vector<256x128xf32>
    %76 = tpu.matmul %73, %75, %cst_68 {dimension_numbers = #tpu.dot_dimension_numbers<[1], [0], [0], [1], [0, 0, 1, 1], [], []>} : vector<256x128xbf16>, vector<128x128xbf16>, vector<256x128xf32> -> vector<256x128xf32>
    %77 = arith.addf %70, %76 : vector<256x128xf32>
    %c2_69 = arith.constant 2 : index
    %c2_70 = arith.constant 2 : index
    %c0_71 = arith.constant 0 : index
    %78 = vector.load %arg18[%c2_69, %c2_70, %c0_71] : memref<18x18x128xf32, #tpu.memory_space<vmem>>, vector<16x16x128xf32>
    %79 = vector.shape_cast %78 : vector<16x16x128xf32> to vector<256x128xf32>
    %80 = arith.truncf %79 : vector<256x128xf32> to vector<256x128xbf16>
    %c8 = arith.constant 8 : index
    %c0_72 = arith.constant 0 : index
    %c0_73 = arith.constant 0 : index
    %81 = vector.load %arg4[%c8, %c0_72, %c0_73] : memref<9x128x128xbf16, #tpu.memory_space<vmem>>, vector<1x128x128xbf16>
    %82 = vector.shape_cast %81 : vector<1x128x128xbf16> to vector<128x128xbf16>
    %cst_74 = arith.constant dense<0.000000e+00> : vector<256x128xf32>
    %83 = tpu.matmul %80, %82, %cst_74 {dimension_numbers = #tpu.dot_dimension_numbers<[1], [0], [0], [1], [0, 0, 1, 1], [], []>} : vector<256x128xbf16>, vector<128x128xbf16>, vector<256x128xf32> -> vector<256x128xf32>
    %84 = arith.addf %77, %83 : vector<256x128xf32>
    %c0_75 = arith.constant 0 : index
    %c0_76 = arith.constant 0 : index
    %85 = vector.load %arg5[%c0_75, %c0_76] : memref<1x128xf32, #tpu.memory_space<vmem>>, vector<1x128xf32>
    %86 = vector.broadcast %85 : vector<1x128xf32> to vector<256x128xf32>
    %87 = arith.addf %84, %86 : vector<256x128xf32>
    %cst_77 = arith.constant 0.000000e+00 : f32
    %88 = vector.broadcast %cst_77 : f32 to vector<256x128xf32>
    %89 = arith.maximumf %87, %88 : vector<256x128xf32>
    %90 = vector.shape_cast %89 : vector<256x128xf32> to vector<16x16x128xf32>
    %c1_78 = arith.constant 1 : index
    %c1_79 = arith.constant 1 : index
    %c0_80 = arith.constant 0 : index
    %91 = vector.load %arg19[%c1_78, %c1_79, %c0_80] : memref<18x18x128xf32, #tpu.memory_space<vmem>>, vector<16x16x128xf32>
    tpu.vector_store %arg19[%c1_78, %c1_79, %c0_80], %90 {strides = array<i32>} : memref<18x18x128xf32, #tpu.memory_space<vmem>>, vector<16x16x128xf32>,
    %c0_81 = arith.constant 0 : index
    %c0_82 = arith.constant 0 : index
    %c0_83 = arith.constant 0 : index
    %92 = vector.load %arg19[%c0_81, %c0_82, %c0_83] : memref<18x18x128xf32, #tpu.memory_space<vmem>>, vector<16x16x128xf32>
    %93 = vector.shape_cast %92 : vector<16x16x128xf32> to vector<256x128xf32>
    %94 = arith.truncf %93 : vector<256x128xf32> to vector<256x128xbf16>
    %c0_84 = arith.constant 0 : index
    %c0_85 = arith.constant 0 : index
    %c0_86 = arith.constant 0 : index
    %95 = vector.load %arg6[%c0_84, %c0_85, %c0_86] : memref<9x128x128xbf16, #tpu.memory_space<vmem>>, vector<1x128x128xbf16>
    %96 = vector.shape_cast %95 : vector<1x128x128xbf16> to vector<128x128xbf16>
    %cst_87 = arith.constant dense<0.000000e+00> : vector<256x128xf32>
    %97 = tpu.matmul %94, %96, %cst_87 {dimension_numbers = #tpu.dot_dimension_numbers<[1], [0], [0], [1], [0, 0, 1, 1], [], []>} : vector<256x128xbf16>, vector<128x128xbf16>, vector<256x128xf32> -> vector<256x128xf32>
    %c0_88 = arith.constant 0 : index
    %c1_89 = arith.constant 1 : index
    %c0_90 = arith.constant 0 : index
    %98 = vector.load %arg19[%c0_88, %c1_89, %c0_90] : memref<18x18x128xf32, #tpu.memory_space<vmem>>, vector<16x16x128xf32>
    %99 = vector.shape_cast %98 : vector<16x16x128xf32> to vector<256x128xf32>
    %100 = arith.truncf %99 : vector<256x128xf32> to vector<256x128xbf16>
    %c1_91 = arith.constant 1 : index
    %c0_92 = arith.constant 0 : index
    %c0_93 = arith.constant 0 : index
    %101 = vector.load %arg6[%c1_91, %c0_92, %c0_93] : memref<9x128x128xbf16, #tpu.memory_space<vmem>>, vector<1x128x128xbf16>
    %102 = vector.shape_cast %101 : vector<1x128x128xbf16> to vector<128x128xbf16>
    %cst_94 = arith.constant dense<0.000000e+00> : vector<256x128xf32>
    %103 = tpu.matmul %100, %102, %cst_94 {dimension_numbers = #tpu.dot_dimension_numbers<[1], [0], [0], [1], [0, 0, 1, 1], [], []>} : vector<256x128xbf16>, vector<128x128xbf16>, vector<256x128xf32> -> vector<256x128xf32>
    %104 = arith.addf %97, %103 : vector<256x128xf32>
    %c0_95 = arith.constant 0 : index
    %c2_96 = arith.constant 2 : index
    %c0_97 = arith.constant 0 : index
    %105 = vector.load %arg19[%c0_95, %c2_96, %c0_97] : memref<18x18x128xf32, #tpu.memory_space<vmem>>, vector<16x16x128xf32>
    %106 = vector.shape_cast %105 : vector<16x16x128xf32> to vector<256x128xf32>
    %107 = arith.truncf %106 : vector<256x128xf32> to vector<256x128xbf16>
    %c2_98 = arith.constant 2 : index
    %c0_99 = arith.constant 0 : index
    %c0_100 = arith.constant 0 : index
    %108 = vector.load %arg6[%c2_98, %c0_99, %c0_100] : memref<9x128x128xbf16, #tpu.memory_space<vmem>>, vector<1x128x128xbf16>
    %109 = vector.shape_cast %108 : vector<1x128x128xbf16> to vector<128x128xbf16>
    %cst_101 = arith.constant dense<0.000000e+00> : vector<256x128xf32>
    %110 = tpu.matmul %107, %109, %cst_101 {dimension_numbers = #tpu.dot_dimension_numbers<[1], [0], [0], [1], [0, 0, 1, 1], [], []>} : vector<256x128xbf16>, vector<128x128xbf16>, vector<256x128xf32> -> vector<256x128xf32>
    %111 = arith.addf %104, %110 : vector<256x128xf32>
    %c1_102 = arith.constant 1 : index
    %c0_103 = arith.constant 0 : index
    %c0_104 = arith.constant 0 : index
    %112 = vector.load %arg19[%c1_102, %c0_103, %c0_104] : memref<18x18x128xf32, #tpu.memory_space<vmem>>, vector<16x16x128xf32>
    %113 = vector.shape_cast %112 : vector<16x16x128xf32> to vector<256x128xf32>
    %114 = arith.truncf %113 : vector<256x128xf32> to vector<256x128xbf16>
    %c3_105 = arith.constant 3 : index
    %c0_106 = arith.constant 0 : index
    %c0_107 = arith.constant 0 : index
    %115 = vector.load %arg6[%c3_105, %c0_106, %c0_107] : memref<9x128x128xbf16, #tpu.memory_space<vmem>>, vector<1x128x128xbf16>
    %116 = vector.shape_cast %115 : vector<1x128x128xbf16> to vector<128x128xbf16>
    %cst_108 = arith.constant dense<0.000000e+00> : vector<256x128xf32>
    %117 = tpu.matmul %114, %116, %cst_108 {dimension_numbers = #tpu.dot_dimension_numbers<[1], [0], [0], [1], [0, 0, 1, 1], [], []>} : vector<256x128xbf16>, vector<128x128xbf16>, vector<256x128xf32> -> vector<256x128xf32>
    %118 = arith.addf %111, %117 : vector<256x128xf32>
    %c1_109 = arith.constant 1 : index
    %c1_110 = arith.constant 1 : index
    %c0_111 = arith.constant 0 : index
    %119 = vector.load %arg19[%c1_109, %c1_110, %c0_111] : memref<18x18x128xf32, #tpu.memory_space<vmem>>, vector<16x16x128xf32>
    %120 = vector.shape_cast %119 : vector<16x16x128xf32> to vector<256x128xf32>
    %121 = arith.truncf %120 : vector<256x128xf32> to vector<256x128xbf16>
    %c4_112 = arith.constant 4 : index
    %c0_113 = arith.constant 0 : index
    %c0_114 = arith.constant 0 : index
    %122 = vector.load %arg6[%c4_112, %c0_113, %c0_114] : memref<9x128x128xbf16, #tpu.memory_space<vmem>>, vector<1x128x128xbf16>
    %123 = vector.shape_cast %122 : vector<1x128x128xbf16> to vector<128x128xbf16>
    %cst_115 = arith.constant dense<0.000000e+00> : vector<256x128xf32>
    %124 = tpu.matmul %121, %123, %cst_115 {dimension_numbers = #tpu.dot_dimension_numbers<[1], [0], [0], [1], [0, 0, 1, 1], [], []>} : vector<256x128xbf16>, vector<128x128xbf16>, vector<256x128xf32> -> vector<256x128xf32>
    %125 = arith.addf %118, %124 : vector<256x128xf32>
    %c1_116 = arith.constant 1 : index
    %c2_117 = arith.constant 2 : index
    %c0_118 = arith.constant 0 : index
    %126 = vector.load %arg19[%c1_116, %c2_117, %c0_118] : memref<18x18x128xf32, #tpu.memory_space<vmem>>, vector<16x16x128xf32>
    %127 = vector.shape_cast %126 : vector<16x16x128xf32> to vector<256x128xf32>
    %128 = arith.truncf %127 : vector<256x128xf32> to vector<256x128xbf16>
    %c5_119 = arith.constant 5 : index
    %c0_120 = arith.constant 0 : index
    %c0_121 = arith.constant 0 : index
    %129 = vector.load %arg6[%c5_119, %c0_120, %c0_121] : memref<9x128x128xbf16, #tpu.memory_space<vmem>>, vector<1x128x128xbf16>
    %130 = vector.shape_cast %129 : vector<1x128x128xbf16> to vector<128x128xbf16>
    %cst_122 = arith.constant dense<0.000000e+00> : vector<256x128xf32>
    %131 = tpu.matmul %128, %130, %cst_122 {dimension_numbers = #tpu.dot_dimension_numbers<[1], [0], [0], [1], [0, 0, 1, 1], [], []>} : vector<256x128xbf16>, vector<128x128xbf16>, vector<256x128xf32> -> vector<256x128xf32>
    %132 = arith.addf %125, %131 : vector<256x128xf32>
    %c2_123 = arith.constant 2 : index
    %c0_124 = arith.constant 0 : index
    %c0_125 = arith.constant 0 : index
    %133 = vector.load %arg19[%c2_123, %c0_124, %c0_125] : memref<18x18x128xf32, #tpu.memory_space<vmem>>, vector<16x16x128xf32>
    %134 = vector.shape_cast %133 : vector<16x16x128xf32> to vector<256x128xf32>
    %135 = arith.truncf %134 : vector<256x128xf32> to vector<256x128xbf16>
    %c6_126 = arith.constant 6 : index
    %c0_127 = arith.constant 0 : index
    %c0_128 = arith.constant 0 : index
    %136 = vector.load %arg6[%c6_126, %c0_127, %c0_128] : memref<9x128x128xbf16, #tpu.memory_space<vmem>>, vector<1x128x128xbf16>
    %137 = vector.shape_cast %136 : vector<1x128x128xbf16> to vector<128x128xbf16>
    %cst_129 = arith.constant dense<0.000000e+00> : vector<256x128xf32>
    %138 = tpu.matmul %135, %137, %cst_129 {dimension_numbers = #tpu.dot_dimension_numbers<[1], [0], [0], [1], [0, 0, 1, 1], [], []>} : vector<256x128xbf16>, vector<128x128xbf16>, vector<256x128xf32> -> vector<256x128xf32>
    %139 = arith.addf %132, %138 : vector<256x128xf32>
    %c2_130 = arith.constant 2 : index
    %c1_131 = arith.constant 1 : index
    %c0_132 = arith.constant 0 : index
    %140 = vector.load %arg19[%c2_130, %c1_131, %c0_132] : memref<18x18x128xf32, #tpu.memory_space<vmem>>, vector<16x16x128xf32>
    %141 = vector.shape_cast %140 : vector<16x16x128xf32> to vector<256x128xf32>
    %142 = arith.truncf %141 : vector<256x128xf32> to vector<256x128xbf16>
    %c7_133 = arith.constant 7 : index
    %c0_134 = arith.constant 0 : index
    %c0_135 = arith.constant 0 : index
    %143 = vector.load %arg6[%c7_133, %c0_134, %c0_135] : memref<9x128x128xbf16, #tpu.memory_space<vmem>>, vector<1x128x128xbf16>
    %144 = vector.shape_cast %143 : vector<1x128x128xbf16> to vector<128x128xbf16>
    %cst_136 = arith.constant dense<0.000000e+00> : vector<256x128xf32>
    %145 = tpu.matmul %142, %144, %cst_136 {dimension_numbers = #tpu.dot_dimension_numbers<[1], [0], [0], [1], [0, 0, 1, 1], [], []>} : vector<256x128xbf16>, vector<128x128xbf16>, vector<256x128xf32> -> vector<256x128xf32>
    %146 = arith.addf %139, %145 : vector<256x128xf32>
    %c2_137 = arith.constant 2 : index
    %c2_138 = arith.constant 2 : index
    %c0_139 = arith.constant 0 : index
    %147 = vector.load %arg19[%c2_137, %c2_138, %c0_139] : memref<18x18x128xf32, #tpu.memory_space<vmem>>, vector<16x16x128xf32>
    %148 = vector.shape_cast %147 : vector<16x16x128xf32> to vector<256x128xf32>
    %149 = arith.truncf %148 : vector<256x128xf32> to vector<256x128xbf16>
    %c8_140 = arith.constant 8 : index
    %c0_141 = arith.constant 0 : index
    %c0_142 = arith.constant 0 : index
    %150 = vector.load %arg6[%c8_140, %c0_141, %c0_142] : memref<9x128x128xbf16, #tpu.memory_space<vmem>>, vector<1x128x128xbf16>
    %151 = vector.shape_cast %150 : vector<1x128x128xbf16> to vector<128x128xbf16>
    %cst_143 = arith.constant dense<0.000000e+00> : vector<256x128xf32>
    %152 = tpu.matmul %149, %151, %cst_143 {dimension_numbers = #tpu.dot_dimension_numbers<[1], [0], [0], [1], [0, 0, 1, 1], [], []>} : vector<256x128xbf16>, vector<128x128xbf16>, vector<256x128xf32> -> vector<256x128xf32>
    %153 = arith.addf %146, %152 : vector<256x128xf32>
    %c1_144 = arith.constant 1 : index
    %c1_145 = arith.constant 1 : index
    %c0_146 = arith.constant 0 : index
    %154 = vector.load %arg18[%c1_144, %c1_145, %c0_146] : memref<18x18x128xf32, #tpu.memory_space<vmem>>, vector<16x16x128xf32>
    %155 = vector.shape_cast %154 : vector<16x16x128xf32> to vector<256x128xf32>
    %c0_147 = arith.constant 0 : index
    %c0_148 = arith.constant 0 : index
    %156 = vector.load %arg7[%c0_147, %c0_148] : memref<1x128xf32, #tpu.memory_space<vmem>>, vector<1x128xf32>
    %157 = vector.broadcast %156 : vector<1x128xf32> to vector<256x128xf32>
    %158 = arith.addf %153, %157 : vector<256x128xf32>
    %159 = arith.addf %158, %155 : vector<256x128xf32>
    %cst_149 = arith.constant 0.000000e+00 : f32
    %160 = vector.broadcast %cst_149 : f32 to vector<256x128xf32>
    %161 = arith.maximumf %159, %160 : vector<256x128xf32>
    %162 = vector.shape_cast %161 : vector<256x128xf32> to vector<16x16x128xf32>
    %c1_150 = arith.constant 1 : index
    %c1_151 = arith.constant 1 : index
    %c0_152 = arith.constant 0 : index
    %163 = vector.load %arg18[%c1_150, %c1_151, %c0_152] : memref<18x18x128xf32, #tpu.memory_space<vmem>>, vector<16x16x128xf32>
    tpu.vector_store %arg18[%c1_150, %c1_151, %c0_152], %162 {strides = array<i32>} : memref<18x18x128xf32, #tpu.memory_space<vmem>>, vector<16x16x128xf32>,
    %c0_153 = arith.constant 0 : index
    %c0_154 = arith.constant 0 : index
    %c0_155 = arith.constant 0 : index
    %164 = tpu.strided_load %arg18[%c0_153, %c0_154, %c0_155] {strides = array<i32: 2, 2, 1>} : memref<18x18x128xf32, #tpu.memory_space<vmem>>, vector<8x8x128xf32>
    %165 = vector.shape_cast %164 : vector<8x8x128xf32> to vector<64x128xf32>
    %166 = arith.truncf %165 : vector<64x128xf32> to vector<64x128xbf16>
    %c0_156 = arith.constant 0 : index
    %c0_157 = arith.constant 0 : index
    %c0_158 = arith.constant 0 : index
    %167 = vector.load %arg8[%c0_156, %c0_157, %c0_158] : memref<9x128x128xbf16, #tpu.memory_space<vmem>>, vector<1x128x128xbf16>
    %168 = vector.shape_cast %167 : vector<1x128x128xbf16> to vector<128x128xbf16>
    %cst_159 = arith.constant dense<0.000000e+00> : vector<64x128xf32>
    %169 = tpu.matmul %166, %168, %cst_159 {dimension_numbers = #tpu.dot_dimension_numbers<[1], [0], [0], [1], [0, 0, 1, 1], [], []>} : vector<64x128xbf16>, vector<128x128xbf16>, vector<64x128xf32> -> vector<64x128xf32>
    %c0_160 = arith.constant 0 : index
    %c1_161 = arith.constant 1 : index
    %c0_162 = arith.constant 0 : index
    %170 = tpu.strided_load %arg18[%c0_160, %c1_161, %c0_162] {strides = array<i32: 2, 2, 1>} : memref<18x18x128xf32, #tpu.memory_space<vmem>>, vector<8x8x128xf32>
    %171 = vector.shape_cast %170 : vector<8x8x128xf32> to vector<64x128xf32>
    %172 = arith.truncf %171 : vector<64x128xf32> to vector<64x128xbf16>
    %c1_163 = arith.constant 1 : index
    %c0_164 = arith.constant 0 : index
    %c0_165 = arith.constant 0 : index
    %173 = vector.load %arg8[%c1_163, %c0_164, %c0_165] : memref<9x128x128xbf16, #tpu.memory_space<vmem>>, vector<1x128x128xbf16>
    %174 = vector.shape_cast %173 : vector<1x128x128xbf16> to vector<128x128xbf16>
    %cst_166 = arith.constant dense<0.000000e+00> : vector<64x128xf32>
    %175 = tpu.matmul %172, %174, %cst_166 {dimension_numbers = #tpu.dot_dimension_numbers<[1], [0], [0], [1], [0, 0, 1, 1], [], []>} : vector<64x128xbf16>, vector<128x128xbf16>, vector<64x128xf32> -> vector<64x128xf32>
    %176 = arith.addf %169, %175 : vector<64x128xf32>
    %c0_167 = arith.constant 0 : index
    %c2_168 = arith.constant 2 : index
    %c0_169 = arith.constant 0 : index
    %177 = tpu.strided_load %arg18[%c0_167, %c2_168, %c0_169] {strides = array<i32: 2, 2, 1>} : memref<18x18x128xf32, #tpu.memory_space<vmem>>, vector<8x8x128xf32>
    %178 = vector.shape_cast %177 : vector<8x8x128xf32> to vector<64x128xf32>
    %179 = arith.truncf %178 : vector<64x128xf32> to vector<64x128xbf16>
    %c2_170 = arith.constant 2 : index
    %c0_171 = arith.constant 0 : index
    %c0_172 = arith.constant 0 : index
    %180 = vector.load %arg8[%c2_170, %c0_171, %c0_172] : memref<9x128x128xbf16, #tpu.memory_space<vmem>>, vector<1x128x128xbf16>
    %181 = vector.shape_cast %180 : vector<1x128x128xbf16> to vector<128x128xbf16>
    %cst_173 = arith.constant dense<0.000000e+00> : vector<64x128xf32>
    %182 = tpu.matmul %179, %181, %cst_173 {dimension_numbers = #tpu.dot_dimension_numbers<[1], [0], [0], [1], [0, 0, 1, 1], [], []>} : vector<64x128xbf16>, vector<128x128xbf16>, vector<64x128xf32> -> vector<64x128xf32>
    %183 = arith.addf %176, %182 : vector<64x128xf32>
    %c1_174 = arith.constant 1 : index
    %c0_175 = arith.constant 0 : index
    %c0_176 = arith.constant 0 : index
    %184 = tpu.strided_load %arg18[%c1_174, %c0_175, %c0_176] {strides = array<i32: 2, 2, 1>} : memref<18x18x128xf32, #tpu.memory_space<vmem>>, vector<8x8x128xf32>
    %185 = vector.shape_cast %184 : vector<8x8x128xf32> to vector<64x128xf32>
    %186 = arith.truncf %185 : vector<64x128xf32> to vector<64x128xbf16>
    %c3_177 = arith.constant 3 : index
    %c0_178 = arith.constant 0 : index
    %c0_179 = arith.constant 0 : index
    %187 = vector.load %arg8[%c3_177, %c0_178, %c0_179] : memref<9x128x128xbf16, #tpu.memory_space<vmem>>, vector<1x128x128xbf16>
    %188 = vector.shape_cast %187 : vector<1x128x128xbf16> to vector<128x128xbf16>
    %cst_180 = arith.constant dense<0.000000e+00> : vector<64x128xf32>
    %189 = tpu.matmul %186, %188, %cst_180 {dimension_numbers = #tpu.dot_dimension_numbers<[1], [0], [0], [1], [0, 0, 1, 1], [], []>} : vector<64x128xbf16>, vector<128x128xbf16>, vector<64x128xf32> -> vector<64x128xf32>
    %190 = arith.addf %183, %189 : vector<64x128xf32>
    %c1_181 = arith.constant 1 : index
    %c1_182 = arith.constant 1 : index
    %c0_183 = arith.constant 0 : index
    %191 = tpu.strided_load %arg18[%c1_181, %c1_182, %c0_183] {strides = array<i32: 2, 2, 1>} : memref<18x18x128xf32, #tpu.memory_space<vmem>>, vector<8x8x128xf32>
    %192 = vector.shape_cast %191 : vector<8x8x128xf32> to vector<64x128xf32>
    %193 = arith.truncf %192 : vector<64x128xf32> to vector<64x128xbf16>
    %c4_184 = arith.constant 4 : index
    %c0_185 = arith.constant 0 : index
    %c0_186 = arith.constant 0 : index
    %194 = vector.load %arg8[%c4_184, %c0_185, %c0_186] : memref<9x128x128xbf16, #tpu.memory_space<vmem>>, vector<1x128x128xbf16>
    %195 = vector.shape_cast %194 : vector<1x128x128xbf16> to vector<128x128xbf16>
    %cst_187 = arith.constant dense<0.000000e+00> : vector<64x128xf32>
    %196 = tpu.matmul %193, %195, %cst_187 {dimension_numbers = #tpu.dot_dimension_numbers<[1], [0], [0], [1], [0, 0, 1, 1], [], []>} : vector<64x128xbf16>, vector<128x128xbf16>, vector<64x128xf32> -> vector<64x128xf32>
    %197 = arith.addf %190, %196 : vector<64x128xf32>
    %c1_188 = arith.constant 1 : index
    %c2_189 = arith.constant 2 : index
    %c0_190 = arith.constant 0 : index
    %198 = tpu.strided_load %arg18[%c1_188, %c2_189, %c0_190] {strides = array<i32: 2, 2, 1>} : memref<18x18x128xf32, #tpu.memory_space<vmem>>, vector<8x8x128xf32>
    %199 = vector.shape_cast %198 : vector<8x8x128xf32> to vector<64x128xf32>
    %200 = arith.truncf %199 : vector<64x128xf32> to vector<64x128xbf16>
    %c5_191 = arith.constant 5 : index
    %c0_192 = arith.constant 0 : index
    %c0_193 = arith.constant 0 : index
    %201 = vector.load %arg8[%c5_191, %c0_192, %c0_193] : memref<9x128x128xbf16, #tpu.memory_space<vmem>>, vector<1x128x128xbf16>
    %202 = vector.shape_cast %201 : vector<1x128x128xbf16> to vector<128x128xbf16>
    %cst_194 = arith.constant dense<0.000000e+00> : vector<64x128xf32>
    %203 = tpu.matmul %200, %202, %cst_194 {dimension_numbers = #tpu.dot_dimension_numbers<[1], [0], [0], [1], [0, 0, 1, 1], [], []>} : vector<64x128xbf16>, vector<128x128xbf16>, vector<64x128xf32> -> vector<64x128xf32>
    %204 = arith.addf %197, %203 : vector<64x128xf32>
    %c2_195 = arith.constant 2 : index
    %c0_196 = arith.constant 0 : index
    %c0_197 = arith.constant 0 : index
    %205 = tpu.strided_load %arg18[%c2_195, %c0_196, %c0_197] {strides = array<i32: 2, 2, 1>} : memref<18x18x128xf32, #tpu.memory_space<vmem>>, vector<8x8x128xf32>
    %206 = vector.shape_cast %205 : vector<8x8x128xf32> to vector<64x128xf32>
    %207 = arith.truncf %206 : vector<64x128xf32> to vector<64x128xbf16>
    %c6_198 = arith.constant 6 : index
    %c0_199 = arith.constant 0 : index
    %c0_200 = arith.constant 0 : index
    %208 = vector.load %arg8[%c6_198, %c0_199, %c0_200] : memref<9x128x128xbf16, #tpu.memory_space<vmem>>, vector<1x128x128xbf16>
    %209 = vector.shape_cast %208 : vector<1x128x128xbf16> to vector<128x128xbf16>
    %cst_201 = arith.constant dense<0.000000e+00> : vector<64x128xf32>
    %210 = tpu.matmul %207, %209, %cst_201 {dimension_numbers = #tpu.dot_dimension_numbers<[1], [0], [0], [1], [0, 0, 1, 1], [], []>} : vector<64x128xbf16>, vector<128x128xbf16>, vector<64x128xf32> -> vector<64x128xf32>
    %211 = arith.addf %204, %210 : vector<64x128xf32>
    %c2_202 = arith.constant 2 : index
    %c1_203 = arith.constant 1 : index
    %c0_204 = arith.constant 0 : index
    %212 = tpu.strided_load %arg18[%c2_202, %c1_203, %c0_204] {strides = array<i32: 2, 2, 1>} : memref<18x18x128xf32, #tpu.memory_space<vmem>>, vector<8x8x128xf32>
    %213 = vector.shape_cast %212 : vector<8x8x128xf32> to vector<64x128xf32>
    %214 = arith.truncf %213 : vector<64x128xf32> to vector<64x128xbf16>
    %c7_205 = arith.constant 7 : index
    %c0_206 = arith.constant 0 : index
    %c0_207 = arith.constant 0 : index
    %215 = vector.load %arg8[%c7_205, %c0_206, %c0_207] : memref<9x128x128xbf16, #tpu.memory_space<vmem>>, vector<1x128x128xbf16>
    %216 = vector.shape_cast %215 : vector<1x128x128xbf16> to vector<128x128xbf16>
    %cst_208 = arith.constant dense<0.000000e+00> : vector<64x128xf32>
    %217 = tpu.matmul %214, %216, %cst_208 {dimension_numbers = #tpu.dot_dimension_numbers<[1], [0], [0], [1], [0, 0, 1, 1], [], []>} : vector<64x128xbf16>, vector<128x128xbf16>, vector<64x128xf32> -> vector<64x128xf32>
    %218 = arith.addf %211, %217 : vector<64x128xf32>
    %c2_209 = arith.constant 2 : index
    %c2_210 = arith.constant 2 : index
    %c0_211 = arith.constant 0 : index
    %219 = tpu.strided_load %arg18[%c2_209, %c2_210, %c0_211] {strides = array<i32: 2, 2, 1>} : memref<18x18x128xf32, #tpu.memory_space<vmem>>, vector<8x8x128xf32>
    %220 = vector.shape_cast %219 : vector<8x8x128xf32> to vector<64x128xf32>
    %221 = arith.truncf %220 : vector<64x128xf32> to vector<64x128xbf16>
    %c8_212 = arith.constant 8 : index
    %c0_213 = arith.constant 0 : index
    %c0_214 = arith.constant 0 : index
    %222 = vector.load %arg8[%c8_212, %c0_213, %c0_214] : memref<9x128x128xbf16, #tpu.memory_space<vmem>>, vector<1x128x128xbf16>
    %223 = vector.shape_cast %222 : vector<1x128x128xbf16> to vector<128x128xbf16>
    %cst_215 = arith.constant dense<0.000000e+00> : vector<64x128xf32>
    %224 = tpu.matmul %221, %223, %cst_215 {dimension_numbers = #tpu.dot_dimension_numbers<[1], [0], [0], [1], [0, 0, 1, 1], [], []>} : vector<64x128xbf16>, vector<128x128xbf16>, vector<64x128xf32> -> vector<64x128xf32>
    %225 = arith.addf %218, %224 : vector<64x128xf32>
    %c0_216 = arith.constant 0 : index
    %c0_217 = arith.constant 0 : index
    %226 = vector.load %arg9[%c0_216, %c0_217] : memref<1x128xf32, #tpu.memory_space<vmem>>, vector<1x128xf32>
    %227 = vector.broadcast %226 : vector<1x128xf32> to vector<64x128xf32>
    %228 = arith.addf %225, %227 : vector<64x128xf32>
    %cst_218 = arith.constant 0.000000e+00 : f32
    %229 = vector.broadcast %cst_218 : f32 to vector<64x128xf32>
    %230 = arith.maximumf %228, %229 : vector<64x128xf32>
    %231 = vector.shape_cast %230 : vector<64x128xf32> to vector<8x8x128xf32>
    %c1_219 = arith.constant 1 : index
    %c1_220 = arith.constant 1 : index
    %c0_221 = arith.constant 0 : index
    %232 = vector.load %arg20[%c1_219, %c1_220, %c0_221] : memref<10x10x128xf32, #tpu.memory_space<vmem>>, vector<8x8x128xf32>
    tpu.vector_store %arg20[%c1_219, %c1_220, %c0_221], %231 {strides = array<i32>} : memref<10x10x128xf32, #tpu.memory_space<vmem>>, vector<8x8x128xf32>,
    %c0_222 = arith.constant 0 : index
    %c0_223 = arith.constant 0 : index
    %c0_224 = arith.constant 0 : index
    %233 = vector.load %arg20[%c0_222, %c0_223, %c0_224] : memref<10x10x128xf32, #tpu.memory_space<vmem>>, vector<8x8x128xf32>
    %234 = vector.shape_cast %233 : vector<8x8x128xf32> to vector<64x128xf32>
    %235 = arith.truncf %234 : vector<64x128xf32> to vector<64x128xbf16>
    %c0_225 = arith.constant 0 : index
    %c0_226 = arith.constant 0 : index
    %c0_227 = arith.constant 0 : index
    %236 = vector.load %arg10[%c0_225, %c0_226, %c0_227] : memref<9x128x128xbf16, #tpu.memory_space<vmem>>, vector<1x128x128xbf16>
    %237 = vector.shape_cast %236 : vector<1x128x128xbf16> to vector<128x128xbf16>
    %cst_228 = arith.constant dense<0.000000e+00> : vector<64x128xf32>
    %238 = tpu.matmul %235, %237, %cst_228 {dimension_numbers = #tpu.dot_dimension_numbers<[1], [0], [0], [1], [0, 0, 1, 1], [], []>} : vector<64x128xbf16>, vector<128x128xbf16>, vector<64x128xf32> -> vector<64x128xf32>
    %c0_229 = arith.constant 0 : index
    %c1_230 = arith.constant 1 : index
    %c0_231 = arith.constant 0 : index
    %239 = vector.load %arg20[%c0_229, %c1_230, %c0_231] : memref<10x10x128xf32, #tpu.memory_space<vmem>>, vector<8x8x128xf32>
    %240 = vector.shape_cast %239 : vector<8x8x128xf32> to vector<64x128xf32>
    %241 = arith.truncf %240 : vector<64x128xf32> to vector<64x128xbf16>
    %c1_232 = arith.constant 1 : index
    %c0_233 = arith.constant 0 : index
    %c0_234 = arith.constant 0 : index
    %242 = vector.load %arg10[%c1_232, %c0_233, %c0_234] : memref<9x128x128xbf16, #tpu.memory_space<vmem>>, vector<1x128x128xbf16>
    %243 = vector.shape_cast %242 : vector<1x128x128xbf16> to vector<128x128xbf16>
    %cst_235 = arith.constant dense<0.000000e+00> : vector<64x128xf32>
    %244 = tpu.matmul %241, %243, %cst_235 {dimension_numbers = #tpu.dot_dimension_numbers<[1], [0], [0], [1], [0, 0, 1, 1], [], []>} : vector<64x128xbf16>, vector<128x128xbf16>, vector<64x128xf32> -> vector<64x128xf32>
    %245 = arith.addf %238, %244 : vector<64x128xf32>
    %c0_236 = arith.constant 0 : index
    %c2_237 = arith.constant 2 : index
    %c0_238 = arith.constant 0 : index
    %246 = vector.load %arg20[%c0_236, %c2_237, %c0_238] : memref<10x10x128xf32, #tpu.memory_space<vmem>>, vector<8x8x128xf32>
    %247 = vector.shape_cast %246 : vector<8x8x128xf32> to vector<64x128xf32>
    %248 = arith.truncf %247 : vector<64x128xf32> to vector<64x128xbf16>
    %c2_239 = arith.constant 2 : index
    %c0_240 = arith.constant 0 : index
    %c0_241 = arith.constant 0 : index
    %249 = vector.load %arg10[%c2_239, %c0_240, %c0_241] : memref<9x128x128xbf16, #tpu.memory_space<vmem>>, vector<1x128x128xbf16>
    %250 = vector.shape_cast %249 : vector<1x128x128xbf16> to vector<128x128xbf16>
    %cst_242 = arith.constant dense<0.000000e+00> : vector<64x128xf32>
    %251 = tpu.matmul %248, %250, %cst_242 {dimension_numbers = #tpu.dot_dimension_numbers<[1], [0], [0], [1], [0, 0, 1, 1], [], []>} : vector<64x128xbf16>, vector<128x128xbf16>, vector<64x128xf32> -> vector<64x128xf32>
    %252 = arith.addf %245, %251 : vector<64x128xf32>
    %c1_243 = arith.constant 1 : index
    %c0_244 = arith.constant 0 : index
    %c0_245 = arith.constant 0 : index
    %253 = vector.load %arg20[%c1_243, %c0_244, %c0_245] : memref<10x10x128xf32, #tpu.memory_space<vmem>>, vector<8x8x128xf32>
    %254 = vector.shape_cast %253 : vector<8x8x128xf32> to vector<64x128xf32>
    %255 = arith.truncf %254 : vector<64x128xf32> to vector<64x128xbf16>
    %c3_246 = arith.constant 3 : index
    %c0_247 = arith.constant 0 : index
    %c0_248 = arith.constant 0 : index
    %256 = vector.load %arg10[%c3_246, %c0_247, %c0_248] : memref<9x128x128xbf16, #tpu.memory_space<vmem>>, vector<1x128x128xbf16>
    %257 = vector.shape_cast %256 : vector<1x128x128xbf16> to vector<128x128xbf16>
    %cst_249 = arith.constant dense<0.000000e+00> : vector<64x128xf32>
    %258 = tpu.matmul %255, %257, %cst_249 {dimension_numbers = #tpu.dot_dimension_numbers<[1], [0], [0], [1], [0, 0, 1, 1], [], []>} : vector<64x128xbf16>, vector<128x128xbf16>, vector<64x128xf32> -> vector<64x128xf32>
    %259 = arith.addf %252, %258 : vector<64x128xf32>
    %c1_250 = arith.constant 1 : index
    %c1_251 = arith.constant 1 : index
    %c0_252 = arith.constant 0 : index
    %260 = vector.load %arg20[%c1_250, %c1_251, %c0_252] : memref<10x10x128xf32, #tpu.memory_space<vmem>>, vector<8x8x128xf32>
    %261 = vector.shape_cast %260 : vector<8x8x128xf32> to vector<64x128xf32>
    %262 = arith.truncf %261 : vector<64x128xf32> to vector<64x128xbf16>
    %c4_253 = arith.constant 4 : index
    %c0_254 = arith.constant 0 : index
    %c0_255 = arith.constant 0 : index
    %263 = vector.load %arg10[%c4_253, %c0_254, %c0_255] : memref<9x128x128xbf16, #tpu.memory_space<vmem>>, vector<1x128x128xbf16>
    %264 = vector.shape_cast %263 : vector<1x128x128xbf16> to vector<128x128xbf16>
    %cst_256 = arith.constant dense<0.000000e+00> : vector<64x128xf32>
    %265 = tpu.matmul %262, %264, %cst_256 {dimension_numbers = #tpu.dot_dimension_numbers<[1], [0], [0], [1], [0, 0, 1, 1], [], []>} : vector<64x128xbf16>, vector<128x128xbf16>, vector<64x128xf32> -> vector<64x128xf32>
    %266 = arith.addf %259, %265 : vector<64x128xf32>
    %c1_257 = arith.constant 1 : index
    %c2_258 = arith.constant 2 : index
    %c0_259 = arith.constant 0 : index
    %267 = vector.load %arg20[%c1_257, %c2_258, %c0_259] : memref<10x10x128xf32, #tpu.memory_space<vmem>>, vector<8x8x128xf32>
    %268 = vector.shape_cast %267 : vector<8x8x128xf32> to vector<64x128xf32>
    %269 = arith.truncf %268 : vector<64x128xf32> to vector<64x128xbf16>
    %c5_260 = arith.constant 5 : index
    %c0_261 = arith.constant 0 : index
    %c0_262 = arith.constant 0 : index
    %270 = vector.load %arg10[%c5_260, %c0_261, %c0_262] : memref<9x128x128xbf16, #tpu.memory_space<vmem>>, vector<1x128x128xbf16>
    %271 = vector.shape_cast %270 : vector<1x128x128xbf16> to vector<128x128xbf16>
    %cst_263 = arith.constant dense<0.000000e+00> : vector<64x128xf32>
    %272 = tpu.matmul %269, %271, %cst_263 {dimension_numbers = #tpu.dot_dimension_numbers<[1], [0], [0], [1], [0, 0, 1, 1], [], []>} : vector<64x128xbf16>, vector<128x128xbf16>, vector<64x128xf32> -> vector<64x128xf32>
    %273 = arith.addf %266, %272 : vector<64x128xf32>
    %c2_264 = arith.constant 2 : index
    %c0_265 = arith.constant 0 : index
    %c0_266 = arith.constant 0 : index
    %274 = vector.load %arg20[%c2_264, %c0_265, %c0_266] : memref<10x10x128xf32, #tpu.memory_space<vmem>>, vector<8x8x128xf32>
    %275 = vector.shape_cast %274 : vector<8x8x128xf32> to vector<64x128xf32>
    %276 = arith.truncf %275 : vector<64x128xf32> to vector<64x128xbf16>
    %c6_267 = arith.constant 6 : index
    %c0_268 = arith.constant 0 : index
    %c0_269 = arith.constant 0 : index
    %277 = vector.load %arg10[%c6_267, %c0_268, %c0_269] : memref<9x128x128xbf16, #tpu.memory_space<vmem>>, vector<1x128x128xbf16>
    %278 = vector.shape_cast %277 : vector<1x128x128xbf16> to vector<128x128xbf16>
    %cst_270 = arith.constant dense<0.000000e+00> : vector<64x128xf32>
    %279 = tpu.matmul %276, %278, %cst_270 {dimension_numbers = #tpu.dot_dimension_numbers<[1], [0], [0], [1], [0, 0, 1, 1], [], []>} : vector<64x128xbf16>, vector<128x128xbf16>, vector<64x128xf32> -> vector<64x128xf32>
    %280 = arith.addf %273, %279 : vector<64x128xf32>
    %c2_271 = arith.constant 2 : index
    %c1_272 = arith.constant 1 : index
    %c0_273 = arith.constant 0 : index
    %281 = vector.load %arg20[%c2_271, %c1_272, %c0_273] : memref<10x10x128xf32, #tpu.memory_space<vmem>>, vector<8x8x128xf32>
    %282 = vector.shape_cast %281 : vector<8x8x128xf32> to vector<64x128xf32>
    %283 = arith.truncf %282 : vector<64x128xf32> to vector<64x128xbf16>
    %c7_274 = arith.constant 7 : index
    %c0_275 = arith.constant 0 : index
    %c0_276 = arith.constant 0 : index
    %284 = vector.load %arg10[%c7_274, %c0_275, %c0_276] : memref<9x128x128xbf16, #tpu.memory_space<vmem>>, vector<1x128x128xbf16>
    %285 = vector.shape_cast %284 : vector<1x128x128xbf16> to vector<128x128xbf16>
    %cst_277 = arith.constant dense<0.000000e+00> : vector<64x128xf32>
    %286 = tpu.matmul %283, %285, %cst_277 {dimension_numbers = #tpu.dot_dimension_numbers<[1], [0], [0], [1], [0, 0, 1, 1], [], []>} : vector<64x128xbf16>, vector<128x128xbf16>, vector<64x128xf32> -> vector<64x128xf32>
    %287 = arith.addf %280, %286 : vector<64x128xf32>
    %c2_278 = arith.constant 2 : index
    %c2_279 = arith.constant 2 : index
    %c0_280 = arith.constant 0 : index
    %288 = vector.load %arg20[%c2_278, %c2_279, %c0_280] : memref<10x10x128xf32, #tpu.memory_space<vmem>>, vector<8x8x128xf32>
    %289 = vector.shape_cast %288 : vector<8x8x128xf32> to vector<64x128xf32>
    %290 = arith.truncf %289 : vector<64x128xf32> to vector<64x128xbf16>
    %c8_281 = arith.constant 8 : index
    %c0_282 = arith.constant 0 : index
    %c0_283 = arith.constant 0 : index
    %291 = vector.load %arg10[%c8_281, %c0_282, %c0_283] : memref<9x128x128xbf16, #tpu.memory_space<vmem>>, vector<1x128x128xbf16>
    %292 = vector.shape_cast %291 : vector<1x128x128xbf16> to vector<128x128xbf16>
    %cst_284 = arith.constant dense<0.000000e+00> : vector<64x128xf32>
    %293 = tpu.matmul %290, %292, %cst_284 {dimension_numbers = #tpu.dot_dimension_numbers<[1], [0], [0], [1], [0, 0, 1, 1], [], []>} : vector<64x128xbf16>, vector<128x128xbf16>, vector<64x128xf32> -> vector<64x128xf32>
    %294 = arith.addf %287, %293 : vector<64x128xf32>
    %c1_285 = arith.constant 1 : index
    %c1_286 = arith.constant 1 : index
    %c0_287 = arith.constant 0 : index
    %295 = tpu.strided_load %arg18[%c1_285, %c1_286, %c0_287] {strides = array<i32: 2, 2, 1>} : memref<18x18x128xf32, #tpu.memory_space<vmem>>, vector<8x8x128xf32>
    %296 = vector.shape_cast %295 : vector<8x8x128xf32> to vector<64x128xf32>
    %297 = arith.truncf %296 : vector<64x128xf32> to vector<64x128xbf16>
    %c0_288 = arith.constant 0 : index
    %c0_289 = arith.constant 0 : index
    %298 = vector.load %arg12[%c0_288, %c0_289] : memref<128x128xbf16, #tpu.memory_space<vmem>>, vector<128x128xbf16>
    %cst_290 = arith.constant dense<0.000000e+00> : vector<64x128xf32>
    %299 = tpu.matmul %297, %298, %cst_290 {dimension_numbers = #tpu.dot_dimension_numbers<[1], [0], [0], [1], [0, 0, 1, 1], [], []>} : vector<64x128xbf16>, vector<128x128xbf16>, vector<64x128xf32> -> vector<64x128xf32>
    %c0_291 = arith.constant 0 : index
    %c0_292 = arith.constant 0 : index
    %300 = vector.load %arg13[%c0_291, %c0_292] : memref<1x128xf32, #tpu.memory_space<vmem>>, vector<1x128xf32>
    %301 = vector.broadcast %300 : vector<1x128xf32> to vector<64x128xf32>
    %302 = arith.addf %299, %301 : vector<64x128xf32>
    %c0_293 = arith.constant 0 : index
    %c0_294 = arith.constant 0 : index
    %303 = vector.load %arg11[%c0_293, %c0_294] : memref<1x128xf32, #tpu.memory_space<vmem>>, vector<1x128xf32>
    %304 = vector.broadcast %303 : vector<1x128xf32> to vector<64x128xf32>
    %305 = arith.addf %294, %304 : vector<64x128xf32>
    %306 = arith.addf %305, %302 : vector<64x128xf32>
    %cst_295 = arith.constant 0.000000e+00 : f32
    %307 = vector.broadcast %cst_295 : f32 to vector<64x128xf32>
    %308 = arith.maximumf %306, %307 : vector<64x128xf32>
    %cst_296 = arith.constant dense<0.000000e+00> : vector<128xf32>
    %309 = vector.multi_reduction <add>, %308, %cst_296 [0] : vector<64x128xf32> to vector<128xf32>
    %310 = vector.shape_cast %309 : vector<128xf32> to vector<1x128xf32>
    %cst_297 = arith.constant 6.400000e+01 : f32
    %311 = vector.broadcast %cst_297 : f32 to vector<1x128xf32>
    %312 = arith.divf %310, %311 : vector<1x128xf32>
    %313 = arith.truncf %312 : vector<1x128xf32> to vector<1x128xbf16>
    %c0_298 = arith.constant 0 : index
    %c0_299 = arith.constant 0 : index
    %314 = vector.load %arg14[%c0_298, %c0_299] : memref<128x128xbf16, #tpu.memory_space<vmem>>, vector<128x128xbf16>
    %cst_300 = arith.constant dense<0.000000e+00> : vector<1x128xf32>
    %315 = tpu.matmul %313, %314, %cst_300 {dimension_numbers = #tpu.dot_dimension_numbers<[1], [0], [0], [1], [0, 0, 1, 1], [], []>} : vector<1x128xbf16>, vector<128x128xbf16>, vector<1x128xf32> -> vector<1x128xf32>
    %c0_301 = arith.constant 0 : index
    %c0_302 = arith.constant 0 : index
    %316 = vector.load %arg15[%c0_301, %c0_302] : memref<1x128xf32, #tpu.memory_space<vmem>>, vector<1x128xf32>
    %317 = arith.addf %315, %316 : vector<1x128xf32>
    %318 = vector.shape_cast %317 : vector<1x128xf32> to vector<1x128xf32>
    %319 = vector.broadcast %318 : vector<1x128xf32> to vector<8x128xf32>
    %c0_303 = arith.constant 0 : index
    %c0_304 = arith.constant 0 : index
    %c0_305 = arith.constant 0 : index
    %320 = vector.load %arg16[%c0_303, %c0_304, %c0_305] : memref<1x8x128xf32, #tpu.memory_space<vmem>>, vector<1x8x128xf32>
    %321 = vector.shape_cast %320 : vector<1x8x128xf32> to vector<8x128xf32>
    %322 = vector.shape_cast %319 : vector<8x128xf32> to vector<1x8x128xf32>
    tpu.vector_store %arg16[%c0_303, %c0_304, %c0_305], %322 {strides = array<i32>} : memref<1x8x128xf32, #tpu.memory_space<vmem>>, vector<1x8x128xf32>,
    return
  }
  func.func @transform_0(%arg0: i32) -> (i32, i32, i32) {
    %c0_i32 = arith.constant 0 : i32
    %c0_i32_0 = arith.constant 0 : i32
    %c0_i32_1 = arith.constant 0 : i32
    return %arg0, %c0_i32, %c0_i32_0 : i32, i32, i32
  }
  func.func @transform_1(%arg0: i32) -> (i32, i32) {
    %c0_i32 = arith.constant 0 : i32
    %c0_i32_0 = arith.constant 0 : i32
    %c0_i32_1 = arith.constant 0 : i32
    return %c0_i32, %c0_i32_0 : i32, i32
  }
  func.func @transform_2(%arg0: i32) -> (i32, i32) {
    %c0_i32 = arith.constant 0 : i32
    %c0_i32_0 = arith.constant 0 : i32
    %c0_i32_1 = arith.constant 0 : i32
    return %c0_i32, %c0_i32_0 : i32, i32
  }
  func.func @transform_3(%arg0: i32) -> (i32, i32, i32) {
    %c0_i32 = arith.constant 0 : i32
    %c0_i32_0 = arith.constant 0 : i32
    %c0_i32_1 = arith.constant 0 : i32
    %c0_i32_2 = arith.constant 0 : i32
    return %c0_i32, %c0_i32_0, %c0_i32_1 : i32, i32, i32
  }
  func.func @transform_4(%arg0: i32) -> (i32, i32) {
    %c0_i32 = arith.constant 0 : i32
    %c0_i32_0 = arith.constant 0 : i32
    %c0_i32_1 = arith.constant 0 : i32
    return %c0_i32, %c0_i32_0 : i32, i32
  }
  func.func @transform_5(%arg0: i32) -> (i32, i32, i32) {
    %c0_i32 = arith.constant 0 : i32
    %c0_i32_0 = arith.constant 0 : i32
    %c0_i32_1 = arith.constant 0 : i32
    %c0_i32_2 = arith.constant 0 : i32
    return %c0_i32, %c0_i32_0, %c0_i32_1 : i32, i32, i32
  }
  func.func @transform_6(%arg0: i32) -> (i32, i32) {
    %c0_i32 = arith.constant 0 : i32
    %c0_i32_0 = arith.constant 0 : i32
    %c0_i32_1 = arith.constant 0 : i32
    return %c0_i32, %c0_i32_0 : i32, i32
  }
  func.func @transform_7(%arg0: i32) -> (i32, i32, i32) {
    %c0_i32 = arith.constant 0 : i32
    %c0_i32_0 = arith.constant 0 : i32
    %c0_i32_1 = arith.constant 0 : i32
    %c0_i32_2 = arith.constant 0 : i32
    return %c0_i32, %c0_i32_0, %c0_i32_1 : i32, i32, i32
  }
  func.func @transform_8(%arg0: i32) -> (i32, i32) {
    %c0_i32 = arith.constant 0 : i32
    %c0_i32_0 = arith.constant 0 : i32
    %c0_i32_1 = arith.constant 0 : i32
    return %c0_i32, %c0_i32_0 : i32, i32
  }
  func.func @transform_9(%arg0: i32) -> (i32, i32, i32) {
    %c0_i32 = arith.constant 0 : i32
    %c0_i32_0 = arith.constant 0 : i32
    %c0_i32_1 = arith.constant 0 : i32
    %c0_i32_2 = arith.constant 0 : i32
    return %c0_i32, %c0_i32_0, %c0_i32_1 : i32, i32, i32
  }
  func.func @transform_10(%arg0: i32) -> (i32, i32) {
    %c0_i32 = arith.constant 0 : i32
    %c0_i32_0 = arith.constant 0 : i32
    %c0_i32_1 = arith.constant 0 : i32
    return %c0_i32, %c0_i32_0 : i32, i32
  }
  func.func @transform_11(%arg0: i32) -> (i32, i32) {
    %c0_i32 = arith.constant 0 : i32
    %c0_i32_0 = arith.constant 0 : i32
    %c0_i32_1 = arith.constant 0 : i32
    return %c0_i32, %c0_i32_0 : i32, i32
  }
  func.func @transform_12(%arg0: i32) -> (i32, i32) {
    %c0_i32 = arith.constant 0 : i32
    %c0_i32_0 = arith.constant 0 : i32
    %c0_i32_1 = arith.constant 0 : i32
    return %c0_i32, %c0_i32_0 : i32, i32
  }
  func.func @transform_13(%arg0: i32) -> (i32, i32) {
    %c0_i32 = arith.constant 0 : i32
    %c0_i32_0 = arith.constant 0 : i32
    %c0_i32_1 = arith.constant 0 : i32
    return %c0_i32, %c0_i32_0 : i32, i32
  }
  func.func @transform_14(%arg0: i32) -> (i32, i32) {
    %c0_i32 = arith.constant 0 : i32
    %c0_i32_0 = arith.constant 0 : i32
    %c0_i32_1 = arith.constant 0 : i32
    return %c0_i32, %c0_i32_0 : i32, i32
  }
  func.func @transform_15(%arg0: i32) -> (i32, i32, i32) {
    %c0_i32 = arith.constant 0 : i32
    %c0_i32_0 = arith.constant 0 : i32
    %c0_i32_1 = arith.constant 0 : i32
    return %arg0, %c0_i32, %c0_i32_0 : i32, i32, i32
  }
}

</mosaic_0001>

<llo_original>
// kernel: jht_forward.1
$region0: #{jht_forward.1}
  #allocation0 [shape = 'u32[]', space=smem, size = 0x4, offset = 0x4, fixed_abs, tag = 'smem constant byte address 0x4 - core index']
  #allocation1 [shape = 'u32[144,128]{1,0:T(1,128)}', space=vmem, size = 0x12000, scoped, tag = 'internal scratch']
  #allocation2 [shape = 'f32[16,32,128]{2,1,0:T(8,128)}', space=vmem, size = 0x40000, scoped, tag = 'scratch operand']
  #allocation3 [shape = 'f32[18,18,128]{2,1,0:T(8,128)}', space=vmem, size = 0x36000, scoped, tag = 'scratch operand']
  #allocation4 [shape = 'f32[18,18,128]{2,1,0:T(8,128)}', space=vmem, size = 0x36000, scoped, tag = 'scratch operand']
  #allocation5 [shape = 'f32[10,10,128]{2,1,0:T(8,128)}', space=vmem, size = 0x14000, scoped, tag = 'scratch operand']
  %s0 = inlined_call_operand.vmem [shape: bf16[2,1024,32], index: 0, kind: input, shape index: {}]
  %s1 = inlined_call_operand.vmem [shape: bf16[32,128], index: 1, kind: input, shape index: {}]
  %s2 = inlined_call_operand.vmem [shape: f32[1,128], index: 2, kind: input, shape index: {}]
  %s3 = inlined_call_operand.vmem [shape: bf16[9,128,128], index: 3, kind: input, shape index: {}]
  %s4 = inlined_call_operand.vmem [shape: f32[1,128], index: 4, kind: input, shape index: {}]
  %s5 = inlined_call_operand.vmem [shape: bf16[9,128,128], index: 5, kind: input, shape index: {}]
  %s6 = inlined_call_operand.vmem [shape: f32[1,128], index: 6, kind: input, shape index: {}]
  %s7 = inlined_call_operand.vmem [shape: bf16[9,128,128], index: 7, kind: input, shape index: {}]
  %s8 = inlined_call_operand.vmem [shape: f32[1,128], index: 8, kind: input, shape index: {}]
  %s9 = inlined_call_operand.vmem [shape: bf16[9,128,128], index: 9, kind: input, shape index: {}]
  %s10 = inlined_call_operand.vmem [shape: f32[1,128], index: 10, kind: input, shape index: {}]
  %s11 = inlined_call_operand.vmem [shape: bf16[128,128], index: 11, kind: input, shape index: {}]
  %s12 = inlined_call_operand.vmem [shape: f32[1,128], index: 12, kind: input, shape index: {}]
  %s13 = inlined_call_operand.vmem [shape: bf16[128,128], index: 13, kind: input, shape index: {}]
  %s14 = inlined_call_operand.vmem [shape: f32[1,128], index: 14, kind: input, shape index: {}]
  %s15 = inlined_call_operand.vmem [shape: f32[2,8,128], index: 15, kind: output, shape index: {}]
  %s16 = sld [smem:[#allocation0]]
  $region97: #{jht_forward.1} parent=0
    _
  %s18 = ssub.s32 1, %s16
  %s19 = scalar_select 0, %s18, %s16
  loop: start=0, step=1, limit=4
  $region2: #{jht_forward.1} parent=0 // loop_pre_header
    _
  $region3: #{jht_forward.1} parent=0 // loop_header
    %s21 = sphi 0, %s25
    %p22 = scmp.ge.s32.totalorder %s21, 4
    %s31 = sphi 0, %s33
    %s34 = sphi 0, %s31
    %s35 = sphi 0, %s34
    %s51 = sphi 0, %s35
    %s55 = sphi 0, %s55
    %s57 = sphi 0, %s55
    %s58 = sphi 0, %s57
    %s72 = sphi 0, %s58
    %s76 = sphi 0, %s76
    %s78 = sphi 0, %s76
    %s79 = sphi 0, %s78
    %s93 = sphi 0, %s79
    %s97 = sphi 0, %s97
    %s99 = sphi 0, %s97
    %s100 = sphi 0, %s99
    %s114 = sphi 0, %s100
    %s118 = sphi 0, %s118
    %s120 = sphi 0, %s118
    %s121 = sphi 0, %s120
    %s135 = sphi 0, %s121
    %s139 = sphi 0, %s139
    %s141 = sphi 0, %s139
    %s142 = sphi 0, %s141
    %s156 = sphi 0, %s142
    %s160 = sphi 0, %s160
    %s162 = sphi 0, %s160
    %s163 = sphi 0, %s162
    %s177 = sphi 0, %s163
    %s181 = sphi 0, %s181
    %s183 = sphi 0, %s181
    %s184 = sphi 0, %s183
    %s198 = sphi 0, %s184
    %s202 = sphi 0, %s202
    %s204 = sphi 0, %s202
    %s205 = sphi 0, %s204
    %s219 = sphi 0, %s205
    %s223 = sphi 0, %s223
    %s225 = sphi 0, %s223
    %s226 = sphi 0, %s225
    %s240 = sphi 0, %s226
    %s244 = sphi 0, %s244
    %s246 = sphi 0, %s244
    %s247 = sphi 0, %s246
    %s261 = sphi 0, %s247
    %s265 = sphi 0, %s265
    %s267 = sphi 0, %s265
    %s268 = sphi 0, %s267
    %s282 = sphi 0, %s268
    %s286 = sphi 0, %s286
    %s288 = sphi 0, %s286
    %s289 = sphi 0, %s288
    %s303 = sphi 0, %s289
    %s307 = sphi 0, %s307
    %s309 = sphi 0, %s307
    %s310 = sphi 0, %s309
    %s324 = sphi 0, %s310
    %s328 = sphi 0, %s328
    %s330 = sphi 0, %s328
    %s331 = sphi 0, %s330
    %s345 = sphi 0, %s331
    %s351 = sphi 0, %s353
    %s354 = sphi 0, %s351
    %s355 = sphi 0, %s354
    %s371 = sphi 0, %s355
  $region4: #{jht_forward.1} parent=0 // loop_header_branch
    %24 = sbr.rel (%p22) target = $region8
  $region5: #{jht_forward.1} parent=0 // loop_body
    %s26 = ssub.s32 %s21, 1
    %s27 = ssub.s32 %s21, 2
    %s28 = sadd.s32 %s21, 1
    %s29 = ssub.s32 %s21, %s28
    %p30 = scmp.eq.s32.totalorder %s29, 0
    %s32 = sadd.s32 %s31, 1
    %s33 = scalar_select %p30, %s31, %s32
    %p36 = pneg %p30
    %p37 = scmp.eq.s32.totalorder %s21, 1
    %p38 = por %p36, %p37
    %p39 = scmp.ne.s32.totalorder %s31, %s34
    %p40 = scmp.eq.s32.totalorder %s21, 0
    %p41 = por %p39, %p40
    %p42 = scmp.ne.s32.totalorder %s31, %s34
    %p43 = scmp.eq.s32.totalorder %s26, 1
    %p44 = por %p42, %p43
    %p45 = scmp.ne.s32.totalorder %s34, %s35
    %p46 = scmp.eq.s32.totalorder %s26, 0
    %p47 = por %p45, %p46
    %p48 = scmp.ne.s32.totalorder %s34, %s35
    %p49 = scmp.eq.s32.totalorder %s27, 1
    %p50 = por %p48, %p49
    %p52 = scmp.ne.s32.totalorder %s35, %s51
    %p53 = scmp.eq.s32.totalorder %s27, 0
    %p54 = por %p52, %p53
    %s56 = sadd.s32 %s55, 1
    %p59 = scmp.eq.s32.totalorder %s21, 1
    %p60 = scmp.ne.s32.totalorder %s55, %s57
    %p61 = scmp.eq.s32.totalorder %s21, 0
    %p62 = por %p60, %p61
    %p63 = scmp.ne.s32.totalorder %s55, %s57
    %p64 = scmp.eq.s32.totalorder %s26, 1
    %p65 = por %p63, %p64
    %p66 = scmp.ne.s32.totalorder %s57, %s58
    %p67 = scmp.eq.s32.totalorder %s26, 0
    %p68 = por %p66, %p67
    %p69 = scmp.ne.s32.totalorder %s57, %s58
    %p70 = scmp.eq.s32.totalorder %s27, 1
    %p71 = por %p69, %p70
    %p73 = scmp.ne.s32.totalorder %s58, %s72
    %p74 = scmp.eq.s32.totalorder %s27, 0
    %p75 = por %p73, %p74
    %s77 = sadd.s32 %s76, 1
    %p80 = scmp.eq.s32.totalorder %s21, 1
    %p81 = scmp.ne.s32.totalorder %s76, %s78
    %p82 = scmp.eq.s32.totalorder %s21, 0
    %p83 = por %p81, %p82
    %p84 = scmp.ne.s32.totalorder %s76, %s78
    %p85 = scmp.eq.s32.totalorder %s26, 1
    %p86 = por %p84, %p85
    %p87 = scmp.ne.s32.totalorder %s78, %s79
    %p88 = scmp.eq.s32.totalorder %s26, 0
    %p89 = por %p87, %p88
    %p90 = scmp.ne.s32.totalorder %s78, %s79
    %p91 = scmp.eq.s32.totalorder %s27, 1
    %p92 = por %p90, %p91
    %p94 = scmp.ne.s32.totalorder %s79, %s93
    %p95 = scmp.eq.s32.totalorder %s27, 0
    %p96 = por %p94, %p95
    %s98 = sadd.s32 %s97, 1
    %p101 = scmp.eq.s32.totalorder %s21, 1
    %p102 = scmp.ne.s32.totalorder %s97, %s99
    %p103 = scmp.eq.s32.totalorder %s21, 0
    %p104 = por %p102, %p103
    %p105 = scmp.ne.s32.totalorder %s97, %s99
    %p106 = scmp.eq.s32.totalorder %s26, 1
    %p107 = por %p105, %p106
    %p108 = scmp.ne.s32.totalorder %s99, %s100
    %p109 = scmp.eq.s32.totalorder %s26, 0
    %p110 = por %p108, %p109
    %p111 = scmp.ne.s32.totalorder %s99, %s100
    %p112 = scmp.eq.s32.totalorder %s27, 1
    %p113 = por %p111, %p112
    %p115 = scmp.ne.s32.totalorder %s100, %s114
    %p116 = scmp.eq.s32.totalorder %s27, 0
    %p117 = por %p115, %p116
    %s119 = sadd.s32 %s118, 1
    %p122 = scmp.eq.s32.totalorder %s21, 1
    %p123 = scmp.ne.s32.totalorder %s118, %s120
    %p124 = scmp.eq.s32.totalorder %s21, 0
    %p125 = por %p123, %p124
    %p126 = scmp.ne.s32.totalorder %s118, %s120
    %p127 = scmp.eq.s32.totalorder %s26, 1
    %p128 = por %p126, %p127
    %p129 = scmp.ne.s32.totalorder %s120, %s121
    %p130 = scmp.eq.s32.totalorder %s26, 0
    %p131 = por %p129, %p130
    %p132 = scmp.ne.s32.totalorder %s120, %s121
    %p133 = scmp.eq.s32.totalorder %s27, 1
    %p134 = por %p132, %p133
    %p136 = scmp.ne.s32.totalorder %s121, %s135
    %p137 = scmp.eq.s32.totalorder %s27, 0
    %p138 = por %p136, %p137
    %s140 = sadd.s32 %s139, 1
    %p143 = scmp.eq.s32.totalorder %s21, 1
    %p144 = scmp.ne.s32.totalorder %s139, %s141
    %p145 = scmp.eq.s32.totalorder %s21, 0
    %p146 = por %p144, %p145
    %p147 = scmp.ne.s32.totalorder %s139, %s141
    %p148 = scmp.eq.s32.totalorder %s26, 1
    %p149 = por %p147, %p148
    %p150 = scmp.ne.s32.totalorder %s141, %s142
    %p151 = scmp.eq.s32.totalorder %s26, 0
    %p152 = por %p150, %p151
    %p153 = scmp.ne.s32.totalorder %s141, %s142
    %p154 = scmp.eq.s32.totalorder %s27, 1
    %p155 = por %p153, %p154
    %p157 = scmp.ne.s32.totalorder %s142, %s156
    %p158 = scmp.eq.s32.totalorder %s27, 0
    %p159 = por %p157, %p158
    %s161 = sadd.s32 %s160, 1
    %p164 = scmp.eq.s32.totalorder %s21, 1
    %p165 = scmp.ne.s32.totalorder %s160, %s162
    %p166 = scmp.eq.s32.totalorder %s21, 0
    %p167 = por %p165, %p166
    %p168 = scmp.ne.s32.totalorder %s160, %s162
    %p169 = scmp.eq.s32.totalorder %s26, 1
    %p170 = por %p168, %p169
    %p171 = scmp.ne.s32.totalorder %s162, %s163
    %p172 = scmp.eq.s32.totalorder %s26, 0
    %p173 = por %p171, %p172
    %p174 = scmp.ne.s32.totalorder %s162, %s163
    %p175 = scmp.eq.s32.totalorder %s27, 1
    %p176 = por %p174, %p175
    %p178 = scmp.ne.s32.totalorder %s163, %s177
    %p179 = scmp.eq.s32.totalorder %s27, 0
    %p180 = por %p178, %p179
    %s182 = sadd.s32 %s181, 1
    %p185 = scmp.eq.s32.totalorder %s21, 1
    %p186 = scmp.ne.s32.totalorder %s181, %s183
    %p187 = scmp.eq.s32.totalorder %s21, 0
    %p188 = por %p186, %p187
    %p189 = scmp.ne.s32.totalorder %s181, %s183
    %p190 = scmp.eq.s32.totalorder %s26, 1
    %p191 = por %p189, %p190
    %p192 = scmp.ne.s32.totalorder %s183, %s184
    %p193 = scmp.eq.s32.totalorder %s26, 0
    %p194 = por %p192, %p193
    %p195 = scmp.ne.s32.totalorder %s183, %s184
    %p196 = scmp.eq.s32.totalorder %s27, 1
    %p197 = por %p195, %p196
    %p199 = scmp.ne.s32.totalorder %s184, %s198
    %p200 = scmp.eq.s32.totalorder %s27, 0
    %p201 = por %p199, %p200
    %s203 = sadd.s32 %s202, 1
    %p206 = scmp.eq.s32.totalorder %s21, 1
    %p207 = scmp.ne.s32.totalorder %s202, %s204
    %p208 = scmp.eq.s32.totalorder %s21, 0
    %p209 = por %p207, %p208
    %p210 = scmp.ne.s32.totalorder %s202, %s204
    %p211 = scmp.eq.s32.totalorder %s26, 1
    %p212 = por %p210, %p211
    %p213 = scmp.ne.s32.totalorder %s204, %s205
    %p214 = scmp.eq.s32.totalorder %s26, 0
    %p215 = por %p213, %p214
    %p216 = scmp.ne.s32.totalorder %s204, %s205
    %p217 = scmp.eq.s32.totalorder %s27, 1
    %p218 = por %p216, %p217
    %p220 = scmp.ne.s32.totalorder %s205, %s219
    %p221 = scmp.eq.s32.totalorder %s27, 0
    %p222 = por %p220, %p221
    %s224 = sadd.s32 %s223, 1
    %p227 = scmp.eq.s32.totalorder %s21, 1
    %p228 = scmp.ne.s32.totalorder %s223, %s225
    %p229 = scmp.eq.s32.totalorder %s21, 0
    %p230 = por %p228, %p229
    %p231 = scmp.ne.s32.totalorder %s223, %s225
    %p232 = scmp.eq.s32.totalorder %s26, 1
    %p233 = por %p231, %p232
    %p234 = scmp.ne.s32.totalorder %s225, %s226
    %p235 = scmp.eq.s32.totalorder %s26, 0
    %p236 = por %p234, %p235
    %p237 = scmp.ne.s32.totalorder %s225, %s226
    %p238 = scmp.eq.s32.totalorder %s27, 1
    %p239 = por %p237, %p238
    %p241 = scmp.ne.s32.totalorder %s226, %s240
    %p242 = scmp.eq.s32.totalorder %s27, 0
    %p243 = por %p241, %p242
    %s245 = sadd.s32 %s244, 1
    %p248 = scmp.eq.s32.totalorder %s21, 1
    %p249 = scmp.ne.s32.totalorder %s244, %s246
    %p250 = scmp.eq.s32.totalorder %s21, 0
    %p251 = por %p249, %p250
    %p252 = scmp.ne.s32.totalorder %s244, %s246
    %p253 = scmp.eq.s32.totalorder %s26, 1
    %p254 = por %p252, %p253
    %p255 = scmp.ne.s32.totalorder %s246, %s247
    %p256 = scmp.eq.s32.totalorder %s26, 0
    %p257 = por %p255, %p256
    %p258 = scmp.ne.s32.totalorder %s246, %s247
    %p259 = scmp.eq.s32.totalorder %s27, 1
    %p260 = por %p258, %p259
    %p262 = scmp.ne.s32.totalorder %s247, %s261
    %p263 = scmp.eq.s32.totalorder %s27, 0
    %p264 = por %p262, %p263
    %s266 = sadd.s32 %s265, 1
    %p269 = scmp.eq.s32.totalorder %s21, 1
    %p270 = scmp.ne.s32.totalorder %s265, %s267
    %p271 = scmp.eq.s32.totalorder %s21, 0
    %p272 = por %p270, %p271
    %p273 = scmp.ne.s32.totalorder %s265, %s267
    %p274 = scmp.eq.s32.totalorder %s26, 1
    %p275 = por %p273, %p274
    %p276 = scmp.ne.s32.totalorder %s267, %s268
    %p277 = scmp.eq.s32.totalorder %s26, 0
    %p278 = por %p276, %p277
    %p279 = scmp.ne.s32.totalorder %s267, %s268
    %p280 = scmp.eq.s32.totalorder %s27, 1
    %p281 = por %p279, %p280
    %p283 = scmp.ne.s32.totalorder %s268, %s282
    %p284 = scmp.eq.s32.totalorder %s27, 0
    %p285 = por %p283, %p284
    %s287 = sadd.s32 %s286, 1
    %p290 = scmp.eq.s32.totalorder %s21, 1
    %p291 = scmp.ne.s32.totalorder %s286, %s288
    %p292 = scmp.eq.s32.totalorder %s21, 0
    %p293 = por %p291, %p292
    %p294 = scmp.ne.s32.totalorder %s286, %s288
    %p295 = scmp.eq.s32.totalorder %s26, 1
    %p296 = por %p294, %p295
    %p297 = scmp.ne.s32.totalorder %s288, %s289
    %p298 = scmp.eq.s32.totalorder %s26, 0
    %p299 = por %p297, %p298
    %p300 = scmp.ne.s32.totalorder %s288, %s289
    %p301 = scmp.eq.s32.totalorder %s27, 1
    %p302 = por %p300, %p301
    %p304 = scmp.ne.s32.totalorder %s289, %s303
    %p305 = scmp.eq.s32.totalorder %s27, 0
    %p306 = por %p304, %p305
    %s308 = sadd.s32 %s307, 1
    %p311 = scmp.eq.s32.totalorder %s21, 1
    %p312 = scmp.ne.s32.totalorder %s307, %s309
    %p313 = scmp.eq.s32.totalorder %s21, 0
    %p314 = por %p312, %p313
    %p315 = scmp.ne.s32.totalorder %s307, %s309
    %p316 = scmp.eq.s32.totalorder %s26, 1
    %p317 = por %p315, %p316
    %p318 = scmp.ne.s32.totalorder %s309, %s310
    %p319 = scmp.eq.s32.totalorder %s26, 0
    %p320 = por %p318, %p319
    %p321 = scmp.ne.s32.totalorder %s309, %s310
    %p322 = scmp.eq.s32.totalorder %s27, 1
    %p323 = por %p321, %p322
    %p325 = scmp.ne.s32.totalorder %s310, %s324
    %p326 = scmp.eq.s32.totalorder %s27, 0
    %p327 = por %p325, %p326
    %s329 = sadd.s32 %s328, 1
    %p332 = scmp.eq.s32.totalorder %s21, 1
    %p333 = scmp.ne.s32.totalorder %s328, %s330
    %p334 = scmp.eq.s32.totalorder %s21, 0
    %p335 = por %p333, %p334
    %p336 = scmp.ne.s32.totalorder %s328, %s330
    %p337 = scmp.eq.s32.totalorder %s26, 1
    %p338 = por %p336, %p337
    %p339 = scmp.ne.s32.totalorder %s330, %s331
    %p340 = scmp.eq.s32.totalorder %s26, 0
    %p341 = por %p339, %p340
    %p342 = scmp.ne.s32.totalorder %s330, %s331
    %p343 = scmp.eq.s32.totalorder %s27, 1
    %p344 = por %p342, %p343
    %p346 = scmp.ne.s32.totalorder %s331, %s345
    %p347 = scmp.eq.s32.totalorder %s27, 0
    %p348 = por %p346, %p347
    %s349 = ssub.s32 %s21, %s28
    %p350 = scmp.eq.s32.totalorder %s349, 0
    %s352 = sadd.s32 %s351, 1
    %s353 = scalar_select %p350, %s351, %s352
    %p356 = pneg %p350
    %p357 = scmp.eq.s32.totalorder %s21, 1
    %p358 = por %p356, %p357
    %p359 = scmp.ne.s32.totalorder %s351, %s354
    %p360 = scmp.eq.s32.totalorder %s21, 0
    %p361 = por %p359, %p360
    %p362 = scmp.ne.s32.totalorder %s351, %s354
    %p363 = scmp.eq.s32.totalorder %s26, 1
    %p364 = por %p362, %p363
    %p365 = scmp.ne.s32.totalorder %s354, %s355
    %p366 = scmp.eq.s32.totalorder %s26, 0
    %p367 = por %p365, %p366
    %p368 = scmp.ne.s32.totalorder %s354, %s355
    %p369 = scmp.eq.s32.totalorder %s27, 1
    %p370 = por %p368, %p369
    %p372 = scmp.ne.s32.totalorder %s355, %s371
    %p373 = scmp.eq.s32.totalorder %s27, 0
    %p374 = por %p372, %p373
    %p375 = scmp.le.s32.totalorder 1, %s21
    %p376 = scmp.lt.s32.totalorder %s21, 3
    %p377 = pnand %p375, %p376
    %p378 = pneg %p377
    // Predicated region
    $region9: #{jht_forward.1} parent=5 // pred_check
      _
    $region10: #{jht_forward.1} parent=5 // pred_check_branch
      %380 = sbr.rel (%p377) target = $region12
    $region11: #{jht_forward.1} parent=5 // pred_region
      %s381 = ssub.s32 %s21, 1
      // Predicated region
      $region13: #{jht_forward.1} parent=11 // pred_check
        %p382 = pneg %p68
      $region14: #{jht_forward.1} parent=11 // pred_check_branch
        %384 = sbr.rel (%p382) target = $region16
      $region15: #{jht_forward.1} parent=11 // pred_region
        _
      $region16: #{jht_forward.1} parent=11 // pred_fallthru
        _
      // Predicated region
      $region17: #{jht_forward.1} parent=11 // pred_check
        %p385 = pneg %p89
      $region18: #{jht_forward.1} parent=11 // pred_check_branch
        %387 = sbr.rel (%p385) target = $region20
      $region19: #{jht_forward.1} parent=11 // pred_region
        _
      $region20: #{jht_forward.1} parent=11 // pred_fallthru
        _
      // Predicated region
      $region21: #{jht_forward.1} parent=11 // pred_check
        %p388 = pneg %p110
      $region22: #{jht_forward.1} parent=11 // pred_check_branch
        %390 = sbr.rel (%p388) target = $region24
      $region23: #{jht_forward.1} parent=11 // pred_region
        _
      $region24: #{jht_forward.1} parent=11 // pred_fallthru
        _
      // Predicated region
      $region25: #{jht_forward.1} parent=11 // pred_check
        %p391 = pneg %p131
      $region26: #{jht_forward.1} parent=11 // pred_check_branch
        %393 = sbr.rel (%p391) target = $region28
      $region27: #{jht_forward.1} parent=11 // pred_region
        _
      $region28: #{jht_forward.1} parent=11 // pred_fallthru
        _
      // Predicated region
      $region29: #{jht_forward.1} parent=11 // pred_check
        %p394 = pneg %p152
      $region30: #{jht_forward.1} parent=11 // pred_check_branch
        %396 = sbr.rel (%p394) target = $region32
      $region31: #{jht_forward.1} parent=11 // pred_region
        _
      $region32: #{jht_forward.1} parent=11 // pred_fallthru
        _
      // Predicated region
      $region33: #{jht_forward.1} parent=11 // pred_check
        %p397 = pneg %p173
      $region34: #{jht_forward.1} parent=11 // pred_check_branch
        %399 = sbr.rel (%p397) target = $region36
      $region35: #{jht_forward.1} parent=11 // pred_region
        _
      $region36: #{jht_forward.1} parent=11 // pred_fallthru
        _
      // Predicated region
      $region37: #{jht_forward.1} parent=11 // pred_check
        %p400 = pneg %p194
      $region38: #{jht_forward.1} parent=11 // pred_check_branch
        %402 = sbr.rel (%p400) target = $region40
      $region39: #{jht_forward.1} parent=11 // pred_region
        _
      $region40: #{jht_forward.1} parent=11 // pred_fallthru
        _
      // Predicated region
      $region41: #{jht_forward.1} parent=11 // pred_check
        %p403 = pneg %p215
      $region42: #{jht_forward.1} parent=11 // pred_check_branch
        %405 = sbr.rel (%p403) target = $region44
      $region43: #{jht_forward.1} parent=11 // pred_region
        _
      $region44: #{jht_forward.1} parent=11 // pred_fallthru
        _
      // Predicated region
      $region45: #{jht_forward.1} parent=11 // pred_check
        %p406 = pneg %p236
      $region46: #{jht_forward.1} parent=11 // pred_check_branch
        %408 = sbr.rel (%p406) target = $region48
      $region47: #{jht_forward.1} parent=11 // pred_region
        _
      $region48: #{jht_forward.1} parent=11 // pred_fallthru
        _
      // Predicated region
      $region49: #{jht_forward.1} parent=11 // pred_check
        %p409 = pneg %p257
      $region50: #{jht_forward.1} parent=11 // pred_check_branch
        %411 = sbr.rel (%p409) target = $region52
      $region51: #{jht_forward.1} parent=11 // pred_region
        _
      $region52: #{jht_forward.1} parent=11 // pred_fallthru
        _
      // Predicated region
      $region53: #{jht_forward.1} parent=11 // pred_check
        %p412 = pneg %p278
      $region54: #{jht_forward.1} parent=11 // pred_check_branch
        %414 = sbr.rel (%p412) target = $region56
      $region55: #{jht_forward.1} parent=11 // pred_region
        _
      $region56: #{jht_forward.1} parent=11 // pred_fallthru
        _
      // Predicated region
      $region57: #{jht_forward.1} parent=11 // pred_check
        %p415 = pneg %p299
      $region58: #{jht_forward.1} parent=11 // pred_check_branch
        %417 = sbr.rel (%p415) target = $region60
      $region59: #{jht_forward.1} parent=11 // pred_region
        _
      $region60: #{jht_forward.1} parent=11 // pred_fallthru
        _
      // Predicated region
      $region61: #{jht_forward.1} parent=11 // pred_check
        %p418 = pneg %p320
      $region62: #{jht_forward.1} parent=11 // pred_check_branch
        %420 = sbr.rel (%p418) target = $region64
      $region63: #{jht_forward.1} parent=11 // pred_region
        _
      $region64: #{jht_forward.1} parent=11 // pred_fallthru
        _
      // Predicated region
      $region65: #{jht_forward.1} parent=11 // pred_check
        %p421 = pneg %p341
      $region66: #{jht_forward.1} parent=11 // pred_check_branch
        %423 = sbr.rel (%p421) target = $region68
      $region67: #{jht_forward.1} parent=11 // pred_region
        _
      $region68: #{jht_forward.1} parent=11 // pred_fallthru
        _
    $region12: #{jht_forward.1} parent=5 // pred_fallthru
      _
    %p424 = scmp.lt.s32.totalorder %s21, 2
    // Predicated region
    $region69: #{jht_forward.1} parent=5 // pred_check
      %p425 = pneg %p424
    $region70: #{jht_forward.1} parent=5 // pred_check_branch
      %427 = sbr.rel (%p425) target = $region72
    $region71: #{jht_forward.1} parent=5 // pred_region
      // Predicated region
      $region73: #{jht_forward.1} parent=71 // pred_check
        %p428 = pneg %p41
      $region74: #{jht_forward.1} parent=71 // pred_check_branch
        %430 = sbr.rel (%p428) target = $region76
      $region75: #{jht_forward.1} parent=71 // pred_region
        %p431 = scmp.lt.s32.totalorder %s21, 1
        %s432 = scalar_select %p431, %s21, 1
        %s433 = smul.addr %s432, 128
        %s434 = smul.addr %s433, 4
        %s435 = scalar_lea.vmem %s0, %s434
      $region76: #{jht_forward.1} parent=71 // pred_fallthru
        _
    $region72: #{jht_forward.1} parent=5 // pred_fallthru
      _
    %p436 = scmp.le.s32.totalorder 1, %s21
    %p437 = scmp.lt.s32.totalorder %s21, 3
    %p438 = pnand %p436, %p437
    %p439 = pneg %p438
    // Predicated region
    $region77: #{jht_forward.1} parent=5 // pred_check
      _
    $region78: #{jht_forward.1} parent=5 // pred_check_branch
      %441 = sbr.rel (%p438) target = $region80
    $region79: #{jht_forward.1} parent=5 // pred_region
      %s442 = ssub.s32 %s21, 1
      %p443 = scmp.lt.s32.totalorder %s26, 1
      %s444 = scalar_select %p443, %s26, 1
      %s445 = smul.addr %s444, 128
      %s446 = smul.addr %s445, 4
      %s447 = scalar_lea.vmem %s0, %s446
      %p448 = pneg %p47
      %p449 = pneg %p44
      %p450 = pneg %p68
      %p451 = pneg %p65
      %p452 = pneg %p89
      %p453 = pneg %p86
      %p454 = pneg %p110
      %p455 = pneg %p107
      %p456 = pneg %p131
      %p457 = pneg %p128
      %p458 = pneg %p152
      %p459 = pneg %p149
      %p460 = pneg %p173
      %p461 = pneg %p170
      %p462 = pneg %p194
      %p463 = pneg %p191
      %p464 = pneg %p215
      %p465 = pneg %p212
      %p466 = pneg %p236
      %p467 = pneg %p233
      %p468 = pneg %p257
      %p469 = pneg %p254
      %p470 = pneg %p278
      %p471 = pneg %p275
      %p472 = pneg %p299
      %p473 = pneg %p296
      %p474 = pneg %p320
      %p475 = pneg %p317
      %p476 = pneg %p341
      %p477 = pneg %p338
      %p478 = pneg %p367
      %p479 = pneg %p364
      %p480 = scmp.lt.s32.totalorder %s26, 1
      %s481 = scalar_select %p480, %s26, 1
      %s482 = smul.addr %s481, 8
      %s483 = scalar_lea.vmem %s15, %s482
      %p484 = scmp.lt.s32.totalorder %s26, 1
      %s485 = scalar_select %p484, %s26, 1
      %s486 = smul.addr %s485, 128
      %s487 = smul.addr %s486, 4
      %s488 = scalar_lea.vmem %s0, %s487
      %p489 = scmp.lt.s32.totalorder %s26, 1
      %s490 = scalar_select %p489, %s26, 1
      %s491 = smul.addr %s490, 8
      %s492 = scalar_lea.vmem %s15, %s491
      %p494 = scmp.eq.s32.totalorder %s26, 0
      // Predicated region
      $region81: #{jht_forward.1} parent=79 // pred_check
        %p495 = pneg %p494
      $region82: #{jht_forward.1} parent=79 // pred_check_branch
        %497 = sbr.rel (%p495) target = $region84
      $region83: #{jht_forward.1} parent=79 // pred_region
        %498 = vst [vmem:[#allocation3] sm:$0xff] 0.0
        %499 = vst [vmem:[#allocation3 + $0x8] sm:$0xff] 0.0
        %500 = vst [vmem:[#allocation3 + $0x10] sm:$0x3] 0.0
        %501 = vst [vmem:[#allocation3 + $0x18] sm:$0xff] 0.0
        %502 = vst [vmem:[#allocation3 + $0x20] sm:$0xff] 0.0
        %503 = vst [vmem:[#allocation3 + $0x28] sm:$0x3] 0.0
        %504 = vst [vmem:[#allocation3 + $0x30] sm:$0xff] 0.0
        %505 = vst [vmem:[#allocation3 + $0x38] sm:$0xff] 0.0
        %506 = vst [vmem:[#allocation3 + $0x40] sm:$0x3] 0.0
        %507 = vst [vmem:[#allocation3 + $0x48] sm:$0xff] 0.0
        %508 = vst [vmem:[#allocation3 + $0x50] sm:$0xff] 0.0
        %509 = vst [vmem:[#allocation3 + $0x58] sm:$0x3] 0.0
        %510 = vst [vmem:[#allocation3 + $0x60] sm:$0xff] 0.0
        %511 = vst [vmem:[#allocation3 + $0x68] sm:$0xff] 0.0
        %512 = vst [vmem:[#allocation3 + $0x70] sm:$0x3] 0.0
        %513 = vst [vmem:[#allocation3 + $0x78] sm:$0xff] 0.0
        %514 = vst [vmem:[#allocation3 + $0x80] sm:$0xff] 0.0
        %515 = vst [vmem:[#allocation3 + $0x88] sm:$0x3] 0.0
        %516 = vst [vmem:[#allocation3 + $0x90] sm:$0xff] 0.0
        %517 = vst [vmem:[#allocation3 + $0x98] sm:$0xff] 0.0
        %518 = vst [vmem:[#allocation3 + $0xa0] sm:$0x3] 0.0
        %519 = vst [vmem:[#allocation3 + $0xa8] sm:$0xff] 0.0
        %520 = vst [vmem:[#allocation3 + $0xb0] sm:$0xff] 0.0
        %521 = vst [vmem:[#allocation3 + $0xb8] sm:$0x3] 0.0
        %522 = vst [vmem:[#allocation3 + $0xc0] sm:$0xff] 0.0
        %523 = vst [vmem:[#allocation3 + $0xc8] sm:$0xff] 0.0
        %524 = vst [vmem:[#allocation3 + $0xd0] sm:$0x3] 0.0
        %525 = vst [vmem:[#allocation3 + $0xd8] sm:$0xff] 0.0
        %526 = vst [vmem:[#allocation3 + $0xe0] sm:$0xff] 0.0
        %527 = vst [vmem:[#allocation3 + $0xe8] sm:$0x3] 0.0
        %528 = vst [vmem:[#allocation3 + $0xf0] sm:$0xff] 0.0
        %529 = vst [vmem:[#allocation3 + $0xf8] sm:$0xff] 0.0
        %530 = vst [vmem:[#allocation3 + $0x100] sm:$0x3] 0.0
        %531 = vst [vmem:[#allocation3 + $0x108] sm:$0xff] 0.0
        %532 = vst [vmem:[#allocation3 + $0x110] sm:$0xff] 0.0
        %533 = vst [vmem:[#allocation3 + $0x118] sm:$0x3] 0.0
        %534 = vst [vmem:[#allocation3 + $0x120] sm:$0xff] 0.0
        %535 = vst [vmem:[#allocation3 + $0x128] sm:$0xff] 0.0
        %536 = vst [vmem:[#allocation3 + $0x130] sm:$0x3] 0.0
        %537 = vst [vmem:[#allocation3 + $0x138] sm:$0xff] 0.0
        %538 = vst [vmem:[#allocation3 + $0x140] sm:$0xff] 0.0
        %539 = vst [vmem:[#allocation3 + $0x148] sm:$0x3] 0.0
        %540 = vst [vmem:[#allocation3 + $0x150] sm:$0xff] 0.0
        %541 = vst [vmem:[#allocation3 + $0x158] sm:$0xff] 0.0
        %542 = vst [vmem:[#allocation3 + $0x160] sm:$0x3] 0.0
        %543 = vst [vmem:[#allocation3 + $0x168] sm:$0xff] 0.0
        %544 = vst [vmem:[#allocation3 + $0x170] sm:$0xff] 0.0
        %545 = vst [vmem:[#allocation3 + $0x178] sm:$0x3] 0.0
        %546 = vst [vmem:[#allocation3 + $0x180] sm:$0xff] 0.0
        %547 = vst [vmem:[#allocation3 + $0x188] sm:$0xff] 0.0
        %548 = vst [vmem:[#allocation3 + $0x190] sm:$0x3] 0.0
        %549 = vst [vmem:[#allocation3 + $0x198] sm:$0xff] 0.0
        %550 = vst [vmem:[#allocation3 + $0x1a0] sm:$0xff] 0.0
        %551 = vst [vmem:[#allocation3 + $0x1a8] sm:$0x3] 0.0
        %552 = vst [vmem:[#allocation4] sm:$0xff] 0.0
        %553 = vst [vmem:[#allocation4 + $0x8] sm:$0xff] 0.0
        %554 = vst [vmem:[#allocation4 + $0x10] sm:$0x3] 0.0
        %555 = vst [vmem:[#allocation4 + $0x18] sm:$0xff] 0.0
        %556 = vst [vmem:[#allocation4 + $0x20] sm:$0xff] 0.0
        %557 = vst [vmem:[#allocation4 + $0x28] sm:$0x3] 0.0
        %558 = vst [vmem:[#allocation4 + $0x30] sm:$0xff] 0.0
        %559 = vst [vmem:[#allocation4 + $0x38] sm:$0xff] 0.0
        %560 = vst [vmem:[#allocation4 + $0x40] sm:$0x3] 0.0
        %561 = vst [vmem:[#allocation4 + $0x48] sm:$0xff] 0.0
        %562 = vst [vmem:[#allocation4 + $0x50] sm:$0xff] 0.0
        %563 = vst [vmem:[#allocation4 + $0x58] sm:$0x3] 0.0
        %564 = vst [vmem:[#allocation4 + $0x60] sm:$0xff] 0.0
        %565 = vst [vmem:[#allocation4 + $0x68] sm:$0xff] 0.0
        %566 = vst [vmem:[#allocation4 + $0x70] sm:$0x3] 0.0
        %567 = vst [vmem:[#allocation4 + $0x78] sm:$0xff] 0.0
        %568 = vst [vmem:[#allocation4 + $0x80] sm:$0xff] 0.0
        %569 = vst [vmem:[#allocation4 + $0x88] sm:$0x3] 0.0
        %570 = vst [vmem:[#allocation4 + $0x90] sm:$0xff] 0.0
        %571 = vst [vmem:[#allocation4 + $0x98] sm:$0xff] 0.0
        %572 = vst [vmem:[#allocation4 + $0xa0] sm:$0x3] 0.0
        %573 = vst [vmem:[#allocation4 + $0xa8] sm:$0xff] 0.0
        %574 = vst [vmem:[#allocation4 + $0xb0] sm:$0xff] 0.0
        %575 = vst [vmem:[#allocation4 + $0xb8] sm:$0x3] 0.0
        %576 = vst [vmem:[#allocation4 + $0xc0] sm:$0xff] 0.0
        %577 = vst [vmem:[#allocation4 + $0xc8] sm:$0xff] 0.0
        %578 = vst [vmem:[#allocation4 + $0xd0] sm:$0x3] 0.0
        %579 = vst [vmem:[#allocation4 + $0xd8] sm:$0xff] 0.0
        %580 = vst [vmem:[#allocation4 + $0xe0] sm:$0xff] 0.0
        %581 = vst [vmem:[#allocation4 + $0xe8] sm:$0x3] 0.0
        %582 = vst [vmem:[#allocation4 + $0xf0] sm:$0xff] 0.0
        %583 = vst [vmem:[#allocation4 + $0xf8] sm:$0xff] 0.0
        %584 = vst [vmem:[#allocation4 + $0x100] sm:$0x3] 0.0
        %585 = vst [vmem:[#allocation4 + $0x108] sm:$0xff] 0.0
        %586 = vst [vmem:[#allocation4 + $0x110] sm:$0xff] 0.0
        %587 = vst [vmem:[#allocation4 + $0x118] sm:$0x3] 0.0
        %588 = vst [vmem:[#allocation4 + $0x120] sm:$0xff] 0.0
        %589 = vst [vmem:[#allocation4 + $0x128] sm:$0xff] 0.0
        %590 = vst [vmem:[#allocation4 + $0x130] sm:$0x3] 0.0
        %591 = vst [vmem:[#allocation4 + $0x138] sm:$0xff] 0.0
        %592 = vst [vmem:[#allocation4 + $0x140] sm:$0xff] 0.0
        %593 = vst [vmem:[#allocation4 + $0x148] sm:$0x3] 0.0
        %594 = vst [vmem:[#allocation4 + $0x150] sm:$0xff] 0.0
        %595 = vst [vmem:[#allocation4 + $0x158] sm:$0xff] 0.0
        %596 = vst [vmem:[#allocation4 + $0x160] sm:$0x3] 0.0
        %597 = vst [vmem:[#allocation4 + $0x168] sm:$0xff] 0.0
        %598 = vst [vmem:[#allocation4 + $0x170] sm:$0xff] 0.0
        %599 = vst [vmem:[#allocation4 + $0x178] sm:$0x3] 0.0
        %600 = vst [vmem:[#allocation4 + $0x180] sm:$0xff] 0.0
        %601 = vst [vmem:[#allocation4 + $0x188] sm:$0xff] 0.0
        %602 = vst [vmem:[#allocation4 + $0x190] sm:$0x3] 0.0
        %603 = vst [vmem:[#allocation4 + $0x198] sm:$0xff] 0.0
        %604 = vst [vmem:[#allocation4 + $0x1a0] sm:$0xff] 0.0
        %605 = vst [vmem:[#allocation4 + $0x1a8] sm:$0x3] 0.0
        %606 = vst [vmem:[#allocation5] sm:$0xff] 0.0
        %607 = vst [vmem:[#allocation5 + $0x8] sm:$0x3] 0.0
        %608 = vst [vmem:[#allocation5 + $0x10] sm:$0xff] 0.0
        %609 = vst [vmem:[#allocation5 + $0x18] sm:$0x3] 0.0
        %610 = vst [vmem:[#allocation5 + $0x20] sm:$0xff] 0.0
        %611 = vst [vmem:[#allocation5 + $0x28] sm:$0x3] 0.0
        %612 = vst [vmem:[#allocation5 + $0x30] sm:$0xff] 0.0
        %613 = vst [vmem:[#allocation5 + $0x38] sm:$0x3] 0.0
        %614 = vst [vmem:[#allocation5 + $0x40] sm:$0xff] 0.0
        %615 = vst [vmem:[#allocation5 + $0x48] sm:$0x3] 0.0
        %616 = vst [vmem:[#allocation5 + $0x50] sm:$0xff] 0.0
        %617 = vst [vmem:[#allocation5 + $0x58] sm:$0x3] 0.0
        %618 = vst [vmem:[#allocation5 + $0x60] sm:$0xff] 0.0
        %619 = vst [vmem:[#allocation5 + $0x68] sm:$0x3] 0.0
        %620 = vst [vmem:[#allocation5 + $0x70] sm:$0xff] 0.0
        %621 = vst [vmem:[#allocation5 + $0x78] sm:$0x3] 0.0
        %622 = vst [vmem:[#allocation5 + $0x80] sm:$0xff] 0.0
        %623 = vst [vmem:[#allocation5 + $0x88] sm:$0x3] 0.0
        %624 = vst [vmem:[#allocation5 + $0x90] sm:$0xff] 0.0
        %625 = vst [vmem:[#allocation5 + $0x98] sm:$0x3] 0.0
      $region84: #{jht_forward.1} parent=79 // pred_fallthru
        _
      %v626 = vld [vmem:[%s488] sm:$0xf]
      %v627 = vld [vmem:[%s488 + $0x4] sm:$0xf]
      %v628 = vld [vmem:[%s488 + $0x8] sm:$0xf]
      %v629 = vld [vmem:[%s488 + $0xc] sm:$0xf]
      %v630 = vld [vmem:[%s488 + $0x10] sm:$0xf]
      %v631 = vld [vmem:[%s488 + $0x14] sm:$0xf]
      %v632 = vld [vmem:[%s488 + $0x18] sm:$0xf]
      %v633 = vld [vmem:[%s488 + $0x1c] sm:$0xf]
      %v634 = vld [vmem:[%s488 + $0x20] sm:$0xf]
      %v635 = vld [vmem:[%s488 + $0x24] sm:$0xf]
      %v636 = vld [vmem:[%s488 + $0x28] sm:$0xf]
      %v637 = vld [vmem:[%s488 + $0x2c] sm:$0xf]
      %v638 = vld [vmem:[%s488 + $0x30] sm:$0xf]
      %v639 = vld [vmem:[%s488 + $0x34] sm:$0xf]
      %v640 = vld [vmem:[%s488 + $0x38] sm:$0xf]
      %v641 = vld [vmem:[%s488 + $0x3c] sm:$0xf]
      %v642 = vld [vmem:[%s488 + $0x40] sm:$0xf]
      %v643 = vld [vmem:[%s488 + $0x44] sm:$0xf]
      %v644 = vld [vmem:[%s488 + $0x48] sm:$0xf]
      %v645 = vld [vmem:[%s488 + $0x4c] sm:$0xf]
      %v646 = vld [vmem:[%s488 + $0x50] sm:$0xf]
      %v647 = vld [vmem:[%s488 + $0x54] sm:$0xf]
      %v648 = vld [vmem:[%s488 + $0x58] sm:$0xf]
      %v649 = vld [vmem:[%s488 + $0x5c] sm:$0xf]
      %v650 = vld [vmem:[%s488 + $0x60] sm:$0xf]
      %v651 = vld [vmem:[%s488 + $0x64] sm:$0xf]
      %v652 = vld [vmem:[%s488 + $0x68] sm:$0xf]
      %v653 = vld [vmem:[%s488 + $0x6c] sm:$0xf]
      %v654 = vld [vmem:[%s488 + $0x70] sm:$0xf]
      %v655 = vld [vmem:[%s488 + $0x74] sm:$0xf]
      %v656 = vld [vmem:[%s488 + $0x78] sm:$0xf]
      %v657 = vld [vmem:[%s488 + $0x7c] sm:$0xf]
      %v658 = vld [vmem:[%s488 + $0x80] sm:$0xf]
      %v659 = vld [vmem:[%s488 + $0x84] sm:$0xf]
      %v660 = vld [vmem:[%s488 + $0x88] sm:$0xf]
      %v661 = vld [vmem:[%s488 + $0x8c] sm:$0xf]
      %v662 = vld [vmem:[%s488 + $0x90] sm:$0xf]
      %v663 = vld [vmem:[%s488 + $0x94] sm:$0xf]
      %v664 = vld [vmem:[%s488 + $0x98] sm:$0xf]
      %v665 = vld [vmem:[%s488 + $0x9c] sm:$0xf]
      %v666 = vld [vmem:[%s488 + $0xa0] sm:$0xf]
      %v667 = vld [vmem:[%s488 + $0xa4] sm:$0xf]
      %v668 = vld [vmem:[%s488 + $0xa8] sm:$0xf]
      %v669 = vld [vmem:[%s488 + $0xac] sm:$0xf]
      %v670 = vld [vmem:[%s488 + $0xb0] sm:$0xf]
      %v671 = vld [vmem:[%s488 + $0xb4] sm:$0xf]
      %v672 = vld [vmem:[%s488 + $0xb8] sm:$0xf]
      %v673 = vld [vmem:[%s488 + $0xbc] sm:$0xf]
      %v674 = vld [vmem:[%s488 + $0xc0] sm:$0xf]
      %v675 = vld [vmem:[%s488 + $0xc4] sm:$0xf]
      %v676 = vld [vmem:[%s488 + $0xc8] sm:$0xf]
      %v677 = vld [vmem:[%s488 + $0xcc] sm:$0xf]
      %v678 = vld [vmem:[%s488 + $0xd0] sm:$0xf]
      %v679 = vld [vmem:[%s488 + $0xd4] sm:$0xf]
      %v680 = vld [vmem:[%s488 + $0xd8] sm:$0xf]
      %v681 = vld [vmem:[%s488 + $0xdc] sm:$0xf]
      %v682 = vld [vmem:[%s488 + $0xe0] sm:$0xf]
      %v683 = vld [vmem:[%s488 + $0xe4] sm:$0xf]
      %v684 = vld [vmem:[%s488 + $0xe8] sm:$0xf]
      %v685 = vld [vmem:[%s488 + $0xec] sm:$0xf]
      %v686 = vld [vmem:[%s488 + $0xf0] sm:$0xf]
      %v687 = vld [vmem:[%s488 + $0xf4] sm:$0xf]
      %v688 = vld [vmem:[%s488 + $0xf8] sm:$0xf]
      %v689 = vld [vmem:[%s488 + $0xfc] sm:$0xf]
      %v690 = vld [vmem:[%s488 + $0x100] sm:$0xf]
      %v691 = vld [vmem:[%s488 + $0x104] sm:$0xf]
      %v692 = vld [vmem:[%s488 + $0x108] sm:$0xf]
      %v693 = vld [vmem:[%s488 + $0x10c] sm:$0xf]
      %v694 = vld [vmem:[%s488 + $0x110] sm:$0xf]
      %v695 = vld [vmem:[%s488 + $0x114] sm:$0xf]
      %v696 = vld [vmem:[%s488 + $0x118] sm:$0xf]
      %v697 = vld [vmem:[%s488 + $0x11c] sm:$0xf]
      %v698 = vld [vmem:[%s488 + $0x120] sm:$0xf]
      %v699 = vld [vmem:[%s488 + $0x124] sm:$0xf]
      %v700 = vld [vmem:[%s488 + $0x128] sm:$0xf]
      %v701 = vld [vmem:[%s488 + $0x12c] sm:$0xf]
      %v702 = vld [vmem:[%s488 + $0x130] sm:$0xf]
      %v703 = vld [vmem:[%s488 + $0x134] sm:$0xf]
      %v704 = vld [vmem:[%s488 + $0x138] sm:$0xf]
      %v705 = vld [vmem:[%s488 + $0x13c] sm:$0xf]
      %v706 = vld [vmem:[%s488 + $0x140] sm:$0xf]
      %v707 = vld [vmem:[%s488 + $0x144] sm:$0xf]
      %v708 = vld [vmem:[%s488 + $0x148] sm:$0xf]
      %v709 = vld [vmem:[%s488 + $0x14c] sm:$0xf]
      %v710 = vld [vmem:[%s488 + $0x150] sm:$0xf]
      %v711 = vld [vmem:[%s488 + $0x154] sm:$0xf]
      %v712 = vld [vmem:[%s488 + $0x158] sm:$0xf]
      %v713 = vld [vmem:[%s488 + $0x15c] sm:$0xf]
      %v714 = vld [vmem:[%s488 + $0x160] sm:$0xf]
      %v715 = vld [vmem:[%s488 + $0x164] sm:$0xf]
      %v716 = vld [vmem:[%s488 + $0x168] sm:$0xf]
      %v717 = vld [vmem:[%s488 + $0x16c] sm:$0xf]
      %v718 = vld [vmem:[%s488 + $0x170] sm:$0xf]
      %v719 = vld [vmem:[%s488 + $0x174] sm:$0xf]
      %v720 = vld [vmem:[%s488 + $0x178] sm:$0xf]
      %v721 = vld [vmem:[%s488 + $0x17c] sm:$0xf]
      %v722 = vld [vmem:[%s488 + $0x180] sm:$0xf]
      %v723 = vld [vmem:[%s488 + $0x184] sm:$0xf]
      %v724 = vld [vmem:[%s488 + $0x188] sm:$0xf]
      %v725 = vld [vmem:[%s488 + $0x18c] sm:$0xf]
      %v726 = vld [vmem:[%s488 + $0x190] sm:$0xf]
      %v727 = vld [vmem:[%s488 + $0x194] sm:$0xf]
      %v728 = vld [vmem:[%s488 + $0x198] sm:$0xf]
      %v729 = vld [vmem:[%s488 + $0x19c] sm:$0xf]
      %v730 = vld [vmem:[%s488 + $0x1a0] sm:$0xf]
      %v731 = vld [vmem:[%s488 + $0x1a4] sm:$0xf]
      %v732 = vld [vmem:[%s488 + $0x1a8] sm:$0xf]
      %v733 = vld [vmem:[%s488 + $0x1ac] sm:$0xf]
      %v734 = vld [vmem:[%s488 + $0x1b0] sm:$0xf]
      %v735 = vld [vmem:[%s488 + $0x1b4] sm:$0xf]
      %v736 = vld [vmem:[%s488 + $0x1b8] sm:$0xf]
      %v737 = vld [vmem:[%s488 + $0x1bc] sm:$0xf]
      %v738 = vld [vmem:[%s488 + $0x1c0] sm:$0xf]
      %v739 = vld [vmem:[%s488 + $0x1c4] sm:$0xf]
      %v740 = vld [vmem:[%s488 + $0x1c8] sm:$0xf]
      %v741 = vld [vmem:[%s488 + $0x1cc] sm:$0xf]
      %v742 = vld [vmem:[%s488 + $0x1d0] sm:$0xf]
      %v743 = vld [vmem:[%s488 + $0x1d4] sm:$0xf]
      %v744 = vld [vmem:[%s488 + $0x1d8] sm:$0xf]
      %v745 = vld [vmem:[%s488 + $0x1dc] sm:$0xf]
      %v746 = vld [vmem:[%s488 + $0x1e0] sm:$0xf]
      %v747 = vld [vmem:[%s488 + $0x1e4] sm:$0xf]
      %v748 = vld [vmem:[%s488 + $0x1e8] sm:$0xf]
      %v749 = vld [vmem:[%s488 + $0x1ec] sm:$0xf]
      %v750 = vld [vmem:[%s488 + $0x1f0] sm:$0xf]
      %v751 = vld [vmem:[%s488 + $0x1f4] sm:$0xf]
      %v752 = vld [vmem:[%s488 + $0x1f8] sm:$0xf]
      %v753 = vld [vmem:[%s488 + $0x1fc] sm:$0xf]
      %v754 = vld [vmem:[%s1] sm:$0xf]
      %v755 = vld [vmem:[%s1 + $0x4] sm:$0xf]
      %v756 = vld [vmem:[%s1 + $0x8] sm:$0xf]
      %v757 = vld [vmem:[%s1 + $0xc] sm:$0xf]
      %v758 = vld [vmem:[%s2] sm:$0x1]
      %v760 = vlaneseq
      %v761 = vshrl.u32 %v760, 7
      %v762 = vsub.s32 0, %v761
      %v763 = vrot.slane %v758, %v762
      %v893 = vunpack.c.l.b16 %v626
      %v894 = vunpack.c.l.b16 %v627
      %v895 = vunpack.c.l.b16 %v628
      %v896 = vunpack.c.l.b16 %v629
      %v897 = vunpack.c.l.b16 %v630
      %v898 = vunpack.c.l.b16 %v631
      %v899 = vunpack.c.l.b16 %v632
      %v900 = vunpack.c.l.b16 %v633
      %v901 = vunpack.c.l.b16 %v634
      %v902 = vunpack.c.l.b16 %v635
      %v903 = vunpack.c.l.b16 %v636
      %v904 = vunpack.c.l.b16 %v637
      %v905 = vunpack.c.l.b16 %v638
      %v906 = vunpack.c.l.b16 %v639
      %v907 = vunpack.c.l.b16 %v640
      %v908 = vunpack.c.l.b16 %v641
      %v909 = vunpack.c.l.b16 %v642
      %v910 = vunpack.c.l.b16 %v643
      %v911 = vunpack.c.l.b16 %v644
      %v912 = vunpack.c.l.b16 %v645
      %v913 = vunpack.c.l.b16 %v646
      %v914 = vunpack.c.l.b16 %v647
      %v915 = vunpack.c.l.b16 %v648
      %v916 = vunpack.c.l.b16 %v649
      %v917 = vunpack.c.l.b16 %v650
      %v918 = vunpack.c.l.b16 %v651
      %v919 = vunpack.c.l.b16 %v652
      %v920 = vunpack.c.l.b16 %v653
      %v921 = vunpack.c.l.b16 %v654
      %v922 = vunpack.c.l.b16 %v655
      %v923 = vunpack.c.l.b16 %v656
      %v924 = vunpack.c.l.b16 %v657
      %v925 = vunpack.c.l.b16 %v658
      %v926 = vunpack.c.l.b16 %v659
      %v927 = vunpack.c.l.b16 %v660
      %v928 = vunpack.c.l.b16 %v661
      %v929 = vunpack.c.l.b16 %v662
      %v930 = vunpack.c.l.b16 %v663
      %v931 = vunpack.c.l.b16 %v664
      %v932 = vunpack.c.l.b16 %v665
      %v933 = vunpack.c.l.b16 %v666
      %v934 = vunpack.c.l.b16 %v667
      %v935 = vunpack.c.l.b16 %v668
      %v936 = vunpack.c.l.b16 %v669
      %v937 = vunpack.c.l.b16 %v670
      %v938 = vunpack.c.l.b16 %v671
      %v939 = vunpack.c.l.b16 %v672
      %v940 = vunpack.c.l.b16 %v673
      %v941 = vunpack.c.l.b16 %v674
      %v942 = vunpack.c.l.b16 %v675
      %v943 = vunpack.c.l.b16 %v676
      %v944 = vunpack.c.l.b16 %v677
      %v945 = vunpack.c.l.b16 %v678
      %v946 = vunpack.c.l.b16 %v679
      %v947 = vunpack.c.l.b16 %v680
      %v948 = vunpack.c.l.b16 %v681
      %v949 = vunpack.c.l.b16 %v682
      %v950 = vunpack.c.l.b16 %v683
      %v951 = vunpack.c.l.b16 %v684
      %v952 = vunpack.c.l.b16 %v685
      %v953 = vunpack.c.l.b16 %v686
      %v954 = vunpack.c.l.b16 %v687
      %v955 = vunpack.c.l.b16 %v688
      %v956 = vunpack.c.l.b16 %v689
      %v957 = vunpack.c.l.b16 %v690
      %v958 = vunpack.c.l.b16 %v691
      %v959 = vunpack.c.l.b16 %v692
      %v960 = vunpack.c.l.b16 %v693
      %v961 = vunpack.c.l.b16 %v694
      %v962 = vunpack.c.l.b16 %v695
      %v963 = vunpack.c.l.b16 %v696
      %v964 = vunpack.c.l.b16 %v697
      %v965 = vunpack.c.l.b16 %v698
      %v966 = vunpack.c.l.b16 %v699
      %v967 = vunpack.c.l.b16 %v700
      %v968 = vunpack.c.l.b16 %v701
      %v969 = vunpack.c.l.b16 %v702
      %v970 = vunpack.c.l.b16 %v703
      %v971 = vunpack.c.l.b16 %v704
      %v972 = vunpack.c.l.b16 %v705
      %v973 = vunpack.c.l.b16 %v706
      %v974 = vunpack.c.l.b16 %v707
      %v975 = vunpack.c.l.b16 %v708
      %v976 = vunpack.c.l.b16 %v709
      %v977 = vunpack.c.l.b16 %v710
      %v978 = vunpack.c.l.b16 %v711
      %v979 = vunpack.c.l.b16 %v712
      %v980 = vunpack.c.l.b16 %v713
      %v981 = vunpack.c.l.b16 %v714
      %v982 = vunpack.c.l.b16 %v715
      %v983 = vunpack.c.l.b16 %v716
      %v984 = vunpack.c.l.b16 %v717
      %v985 = vunpack.c.l.b16 %v718
      %v986 = vunpack.c.l.b16 %v719
      %v987 = vunpack.c.l.b16 %v720
      %v988 = vunpack.c.l.b16 %v721
      %v989 = vunpack.c.l.b16 %v722
      %v990 = vunpack.c.l.b16 %v723
      %v991 = vunpack.c.l.b16 %v724
      %v992 = vunpack.c.l.b16 %v725
      %v993 = vunpack.c.l.b16 %v726
      %v994 = vunpack.c.l.b16 %v727
      %v995 = vunpack.c.l.b16 %v728
      %v996 = vunpack.c.l.b16 %v729
      %v997 = vunpack.c.l.b16 %v730
      %v998 = vunpack.c.l.b16 %v731
      %v999 = vunpack.c.l.b16 %v732
      %v1000 = vunpack.c.l.b16 %v733
      %v1001 = vunpack.c.l.b16 %v734
      %v1002 = vunpack.c.l.b16 %v735
      %v1003 = vunpack.c.l.b16 %v736
      %v1004 = vunpack.c.l.b16 %v737
      %v1005 = vunpack.c.l.b16 %v738
      %v1006 = vunpack.c.l.b16 %v739
      %v1007 = vunpack.c.l.b16 %v740
      %v1008 = vunpack.c.l.b16 %v741
      %v1009 = vunpack.c.l.b16 %v742
      %v1010 = vunpack.c.l.b16 %v743
      %v1011 = vunpack.c.l.b16 %v744
      %v1012 = vunpack.c.l.b16 %v745
      %v1013 = vunpack.c.l.b16 %v746
      %v1014 = vunpack.c.l.b16 %v747
      %v1015 = vunpack.c.l.b16 %v748
      %v1016 = vunpack.c.l.b16 %v749
      %v1017 = vunpack.c.l.b16 %v750
      %v1018 = vunpack.c.l.b16 %v751
      %v1019 = vunpack.c.l.b16 %v752
      %v1020 = vunpack.c.l.b16 %v753
      %v1021 = vpack.c.b16 %v894, %v893
      %v1022 = vpack.c.b16 %v896, %v895
      %v1023 = vpack.c.b16 %v898, %v897
      %v1024 = vpack.c.b16 %v900, %v899
      %v1025 = vpack.c.b16 %v902, %v901
      %v1026 = vpack.c.b16 %v904, %v903
      %v1027 = vpack.c.b16 %v906, %v905
      %v1028 = vpack.c.b16 %v908, %v907
      %v1029 = vpack.c.b16 %v910, %v909
      %v1030 = vpack.c.b16 %v912, %v911
      %v1031 = vpack.c.b16 %v914, %v913
      %v1032 = vpack.c.b16 %v916, %v915
      %v1033 = vpack.c.b16 %v918, %v917
      %v1034 = vpack.c.b16 %v920, %v919
      %v1035 = vpack.c.b16 %v922, %v921
      %v1036 = vpack.c.b16 %v924, %v923
      %v1037 = vpack.c.b16 %v926, %v925
      %v1038 = vpack.c.b16 %v928, %v927
      %v1039 = vpack.c.b16 %v930, %v929
      %v1040 = vpack.c.b16 %v932, %v931
      %v1041 = vpack.c.b16 %v934, %v933
      %v1042 = vpack.c.b16 %v936, %v935
      %v1043 = vpack.c.b16 %v938, %v937
      %v1044 = vpack.c.b16 %v940, %v939
      %v1045 = vpack.c.b16 %v942, %v941
      %v1046 = vpack.c.b16 %v944, %v943
      %v1047 = vpack.c.b16 %v946, %v945
      %v1048 = vpack.c.b16 %v948, %v947
      %v1049 = vpack.c.b16 %v950, %v949
      %v1050 = vpack.c.b16 %v952, %v951
      %v1051 = vpack.c.b16 %v954, %v953
      %v1052 = vpack.c.b16 %v956, %v955
      %v1053 = vpack.c.b16 %v958, %v957
      %v1054 = vpack.c.b16 %v960, %v959
      %v1055 = vpack.c.b16 %v962, %v961
      %v1056 = vpack.c.b16 %v964, %v963
      %v1057 = vpack.c.b16 %v966, %v965
      %v1058 = vpack.c.b16 %v968, %v967
      %v1059 = vpack.c.b16 %v970, %v969
      %v1060 = vpack.c.b16 %v972, %v971
      %v1061 = vpack.c.b16 %v974, %v973
      %v1062 = vpack.c.b16 %v976, %v975
      %v1063 = vpack.c.b16 %v978, %v977
      %v1064 = vpack.c.b16 %v980, %v979
      %v1065 = vpack.c.b16 %v982, %v981
      %v1066 = vpack.c.b16 %v984, %v983
      %v1067 = vpack.c.b16 %v986, %v985
      %v1068 = vpack.c.b16 %v988, %v987
      %v1069 = vpack.c.b16 %v990, %v989
      %v1070 = vpack.c.b16 %v992, %v991
      %v1071 = vpack.c.b16 %v994, %v993
      %v1072 = vpack.c.b16 %v996, %v995
      %v1073 = vpack.c.b16 %v998, %v997
      %v1074 = vpack.c.b16 %v1000, %v999
      %v1075 = vpack.c.b16 %v1002, %v1001
      %v1076 = vpack.c.b16 %v1004, %v1003
      %v1077 = vpack.c.b16 %v1006, %v1005
      %v1078 = vpack.c.b16 %v1008, %v1007
      %v1079 = vpack.c.b16 %v1010, %v1009
      %v1080 = vpack.c.b16 %v1012, %v1011
      %v1081 = vpack.c.b16 %v1014, %v1013
      %v1082 = vpack.c.b16 %v1016, %v1015
      %v1083 = vpack.c.b16 %v1018, %v1017
      %v1084 = vpack.c.b16 %v1020, %v1019
      %v1089 = vunpack.c.l.b16 %v754
      %v1090 = vunpack.c.l.b16 %v755
      %v1091 = vunpack.c.l.b16 %v756
      %v1092 = vunpack.c.l.b16 %v757
      %v1093 = vpack.c.b16 %v1090, %v1089
      %v1094 = vpack.c.b16 %v1092, %v1091
      %vm1097 = vcmask 261120
      %v1099 = vsel %vm1097, %v1021, 0
      %v1102 = vsel %vm1097, %v1022, 0
      %v1105 = vsel %vm1097, %v1023, 0
      %v1108 = vsel %vm1097, %v1024, 0
      %v1111 = vsel %vm1097, %v1025, 0
      %v1114 = vsel %vm1097, %v1026, 0
      %v1117 = vsel %vm1097, %v1027, 0
      %v1120 = vsel %vm1097, %v1028, 0
      %v1123 = vsel %vm1097, %v1029, 0
      %v1126 = vsel %vm1097, %v1030, 0
      %v1129 = vsel %vm1097, %v1031, 0
      %v1132 = vsel %vm1097, %v1032, 0
      %v1135 = vsel %vm1097, %v1033, 0
      %v1138 = vsel %vm1097, %v1034, 0
      %v1141 = vsel %vm1097, %v1035, 0
      %v1144 = vsel %vm1097, %v1036, 0
      %v1147 = vsel %vm1097, %v1037, 0
      %v1150 = vsel %vm1097, %v1038, 0
      %v1153 = vsel %vm1097, %v1039, 0
      %v1156 = vsel %vm1097, %v1040, 0
      %v1159 = vsel %vm1097, %v1041, 0
      %v1162 = vsel %vm1097, %v1042, 0
      %v1165 = vsel %vm1097, %v1043, 0
      %v1168 = vsel %vm1097, %v1044, 0
      %v1171 = vsel %vm1097, %v1045, 0
      %v1174 = vsel %vm1097, %v1046, 0
      %v1177 = vsel %vm1097, %v1047, 0
      %v1180 = vsel %vm1097, %v1048, 0
      %v1183 = vsel %vm1097, %v1049, 0
      %v1186 = vsel %vm1097, %v1050, 0
      %v1189 = vsel %vm1097, %v1051, 0
      %v1192 = vsel %vm1097, %v1052, 0
      %v1195 = vsel %vm1097, %v1053, 0
      %v1198 = vsel %vm1097, %v1054, 0
      %v1201 = vsel %vm1097, %v1055, 0
      %v1204 = vsel %vm1097, %v1056, 0
      %v1207 = vsel %vm1097, %v1057, 0
      %v1210 = vsel %vm1097, %v1058, 0
      %v1213 = vsel %vm1097, %v1059, 0
      %v1216 = vsel %vm1097, %v1060, 0
      %v1219 = vsel %vm1097, %v1061, 0
      %v1222 = vsel %vm1097, %v1062, 0
      %v1225 = vsel %vm1097, %v1063, 0
      %v1228 = vsel %vm1097, %v1064, 0
      %v1231 = vsel %vm1097, %v1065, 0
      %v1234 = vsel %vm1097, %v1066, 0
      %v1237 = vsel %vm1097, %v1067, 0
      %v1240 = vsel %vm1097, %v1068, 0
      %v1243 = vsel %vm1097, %v1069, 0
      %v1246 = vsel %vm1097, %v1070, 0
      %v1249 = vsel %vm1097, %v1071, 0
      %v1252 = vsel %vm1097, %v1072, 0
      %v1255 = vsel %vm1097, %v1073, 0
      %v1258 = vsel %vm1097, %v1074, 0
      %v1261 = vsel %vm1097, %v1075, 0
      %v1264 = vsel %vm1097, %v1076, 0
      %v1267 = vsel %vm1097, %v1077, 0
      %v1270 = vsel %vm1097, %v1078, 0
      %v1273 = vsel %vm1097, %v1079, 0
      %v1276 = vsel %vm1097, %v1080, 0
      %v1279 = vsel %vm1097, %v1081, 0
      %v1282 = vsel %vm1097, %v1082, 0
      %v1285 = vsel %vm1097, %v1083, 0
      %v1288 = vsel %vm1097, %v1084, 0
      %1290 = vmatprep.subr.bf16.mxu0 0
      %1291 = vmatpush1.bf16.msra.mxu0 0
      %1292 = vmatprep.subr.bf16.mxu0 0
      %1293 = vmatpush1.bf16.msra.mxu0 0
      %1294 = vmatprep.subr.bf16.mxu0 0
      %1295 = vmatpush1.bf16.msra.mxu0 0
      %1296 = vmatprep.subr.bf16.mxu0 0
      %1297 = vmatpush1.bf16.msra.mxu0 0
      %1298 = vmatprep.subr.bf16.mxu0 0
      %1299 = vmatpush1.bf16.msra.mxu0 0
      %1300 = vmatprep.subr.bf16.mxu0 0
      %1301 = vmatpush1.bf16.msra.mxu0 0
      %1302 = vmatprep.subr.bf16.mxu0 0
      %1303 = vmatpush1.bf16.msra.mxu0 %v1094
      %1304 = vmatprep.subr.bf16.mxu0 0
      %1305 = vmatpush1.bf16.msra.mxu0 %v1093
      %1306 = vmatprep.subr.bf16.mxu0 0
      %1307 = vmatpush2.bf16.msra.mxu0 0
      %1308 = vmatprep.subr.bf16.mxu0 0
      %1309 = vmatpush2.bf16.msra.mxu0 0
      %1310 = vmatprep.subr.bf16.mxu0 0
      %1311 = vmatpush2.bf16.msra.mxu0 0
      %1312 = vmatprep.subr.bf16.mxu0 0
      %1313 = vmatpush2.bf16.msra.mxu0 0
      %1314 = vmatprep.subr.bf16.mxu0 0
      %1315 = vmatpush2.bf16.msra.mxu0 0
      %1316 = vmatprep.subr.bf16.mxu0 0
      %1317 = vmatpush2.bf16.msra.mxu0 0
      %1318 = vmatprep.subr.bf16.mxu0 0
      %1319 = vmatpush2.bf16.msra.mxu0 0
      %1320 = vmatprep.subr.bf16.mxu0 0
      %1321 = vmatpush2.bf16.msra.mxu0 0
      %1322 = vmatprep.mubr.bf16.mxu0 0
      %1323 = vmatmul.mubr.bf16.gmra.mxu0 %v1099
      %v1324 = vpop.f32.mrf.mxu0
      %v1325 = vadd.f32 %v763, %v1324
      %v1326 = vpop.f32.mrf.mxu0
      %v1327 = vpop.f32.mrf.mxu0
      %v1328 = vadd.f32 %v763, %v1327
      %v1329 = vpop.f32.mrf.mxu0
      %1330 = vmatprep.mubr.bf16.mxu0 0
      %1331 = vmatmul.mubr.bf16.gmra.mxu0 %v1102
      %v1332 = vpop.f32.mrf.mxu0
      %v1333 = vadd.f32 %v763, %v1332
      %v1334 = vpop.f32.mrf.mxu0
      %v1335 = vpop.f32.mrf.mxu0
      %v1336 = vadd.f32 %v763, %v1335
      %v1337 = vpop.f32.mrf.mxu0
      %1338 = vmatprep.mubr.bf16.mxu0 0
      %1339 = vmatmul.mubr.bf16.gmra.mxu0 %v1105
      %v1340 = vpop.f32.mrf.mxu0
      %v1341 = vadd.f32 %v763, %v1340
      %v1342 = vpop.f32.mrf.mxu0
      %v1343 = vpop.f32.mrf.mxu0
      %v1344 = vadd.f32 %v763, %v1343
      %v1345 = vpop.f32.mrf.mxu0
      %1346 = vmatprep.mubr.bf16.mxu0 0
      %1347 = vmatmul.mubr.bf16.gmra.mxu0 %v1108
      %v1348 = vpop.f32.mrf.mxu0
      %v1349 = vadd.f32 %v763, %v1348
      %v1350 = vpop.f32.mrf.mxu0
      %v1351 = vpop.f32.mrf.mxu0
      %v1352 = vadd.f32 %v763, %v1351
      %v1353 = vpop.f32.mrf.mxu0
      %1354 = vmatprep.mubr.bf16.mxu0 0
      %1355 = vmatmul.mubr.bf16.gmra.mxu0 %v1111
      %v1356 = vpop.f32.mrf.mxu0
      %v1357 = vadd.f32 %v763, %v1356
      %v1358 = vpop.f32.mrf.mxu0
      %v1359 = vpop.f32.mrf.mxu0
      %v1360 = vadd.f32 %v763, %v1359
      %v1361 = vpop.f32.mrf.mxu0
      %1362 = vmatprep.mubr.bf16.mxu0 0
      %1363 = vmatmul.mubr.bf16.gmra.mxu0 %v1114
      %v1364 = vpop.f32.mrf.mxu0
      %v1365 = vadd.f32 %v763, %v1364
      %v1366 = vpop.f32.mrf.mxu0
      %v1367 = vpop.f32.mrf.mxu0
      %v1368 = vadd.f32 %v763, %v1367
      %v1369 = vpop.f32.mrf.mxu0
      %1370 = vmatprep.mubr.bf16.mxu0 0
      %1371 = vmatmul.mubr.bf16.gmra.mxu0 %v1117
      %v1372 = vpop.f32.mrf.mxu0
      %v1373 = vadd.f32 %v763, %v1372
      %v1374 = vpop.f32.mrf.mxu0
      %v1375 = vpop.f32.mrf.mxu0
      %v1376 = vadd.f32 %v763, %v1375
      %v1377 = vpop.f32.mrf.mxu0
      %1378 = vmatprep.mubr.bf16.mxu0 0
      %1379 = vmatmul.mubr.bf16.gmra.mxu0 %v1120
      %v1380 = vpop.f32.mrf.mxu0
      %v1381 = vadd.f32 %v763, %v1380
      %v1382 = vpop.f32.mrf.mxu0
      %v1383 = vpop.f32.mrf.mxu0
      %v1384 = vadd.f32 %v763, %v1383
      %v1385 = vpop.f32.mrf.mxu0
      %1386 = vmatprep.mubr.bf16.mxu0 0
      %1387 = vmatmul.mubr.bf16.gmra.mxu0 %v1123
      %v1388 = vpop.f32.mrf.mxu0
      %v1389 = vadd.f32 %v763, %v1388
      %v1390 = vpop.f32.mrf.mxu0
      %v1391 = vpop.f32.mrf.mxu0
      %v1392 = vadd.f32 %v763, %v1391
      %v1393 = vpop.f32.mrf.mxu0
      %1394 = vmatprep.mubr.bf16.mxu0 0
      %1395 = vmatmul.mubr.bf16.gmra.mxu0 %v1126
      %v1396 = vpop.f32.mrf.mxu0
      %v1397 = vadd.f32 %v763, %v1396
      %v1398 = vpop.f32.mrf.mxu0
      %v1399 = vpop.f32.mrf.mxu0
      %v1400 = vadd.f32 %v763, %v1399
      %v1401 = vpop.f32.mrf.mxu0
      %1402 = vmatprep.mubr.bf16.mxu0 0
      %1403 = vmatmul.mubr.bf16.gmra.mxu0 %v1129
      %v1404 = vpop.f32.mrf.mxu0
      %v1405 = vadd.f32 %v763, %v1404
      %v1406 = vpop.f32.mrf.mxu0
      %v1407 = vpop.f32.mrf.mxu0
      %v1408 = vadd.f32 %v763, %v1407
      %v1409 = vpop.f32.mrf.mxu0
      %1410 = vmatprep.mubr.bf16.mxu0 0
      %1411 = vmatmul.mubr.bf16.gmra.mxu0 %v1132
      %v1412 = vpop.f32.mrf.mxu0
      %v1413 = vadd.f32 %v763, %v1412
      %v1414 = vpop.f32.mrf.mxu0
      %v1415 = vpop.f32.mrf.mxu0
      %v1416 = vadd.f32 %v763, %v1415
      %v1417 = vpop.f32.mrf.mxu0
      %1418 = vmatprep.mubr.bf16.mxu0 0
      %1419 = vmatmul.mubr.bf16.gmra.mxu0 %v1135
      %v1420 = vpop.f32.mrf.mxu0
      %v1421 = vadd.f32 %v763, %v1420
      %v1422 = vpop.f32.mrf.mxu0
      %v1423 = vpop.f32.mrf.mxu0
      %v1424 = vadd.f32 %v763, %v1423
      %v1425 = vpop.f32.mrf.mxu0
      %1426 = vmatprep.mubr.bf16.mxu0 0
      %1427 = vmatmul.mubr.bf16.gmra.mxu0 %v1138
      %v1428 = vpop.f32.mrf.mxu0
      %v1429 = vadd.f32 %v763, %v1428
      %v1430 = vpop.f32.mrf.mxu0
      %v1431 = vpop.f32.mrf.mxu0
      %v1432 = vadd.f32 %v763, %v1431
      %v1433 = vpop.f32.mrf.mxu0
      %1434 = vmatprep.mubr.bf16.mxu0 0
      %1435 = vmatmul.mubr.bf16.gmra.mxu0 %v1141
      %v1436 = vpop.f32.mrf.mxu0
      %v1437 = vadd.f32 %v763, %v1436
      %v1438 = vpop.f32.mrf.mxu0
      %v1439 = vpop.f32.mrf.mxu0
      %v1440 = vadd.f32 %v763, %v1439
      %v1441 = vpop.f32.mrf.mxu0
      %1442 = vmatprep.mubr.bf16.mxu0 0
      %1443 = vmatmul.mubr.bf16.gmra.mxu0 %v1144
      %v1444 = vpop.f32.mrf.mxu0
      %v1445 = vadd.f32 %v763, %v1444
      %v1446 = vpop.f32.mrf.mxu0
      %v1447 = vpop.f32.mrf.mxu0
      %v1448 = vadd.f32 %v763, %v1447
      %v1449 = vpop.f32.mrf.mxu0
      %1450 = vmatprep.mubr.bf16.mxu0 0
      %1451 = vmatmul.mubr.bf16.gmra.mxu0 %v1147
      %v1452 = vpop.f32.mrf.mxu0
      %v1453 = vadd.f32 %v763, %v1452
      %v1454 = vpop.f32.mrf.mxu0
      %v1455 = vpop.f32.mrf.mxu0
      %v1456 = vadd.f32 %v763, %v1455
      %v1457 = vpop.f32.mrf.mxu0
      %1458 = vmatprep.mubr.bf16.mxu0 0
      %1459 = vmatmul.mubr.bf16.gmra.mxu0 %v1150
      %v1460 = vpop.f32.mrf.mxu0
      %v1461 = vadd.f32 %v763, %v1460
      %v1462 = vpop.f32.mrf.mxu0
      %v1463 = vpop.f32.mrf.mxu0
      %v1464 = vadd.f32 %v763, %v1463
      %v1465 = vpop.f32.mrf.mxu0
      %1466 = vmatprep.mubr.bf16.mxu0 0
      %1467 = vmatmul.mubr.bf16.gmra.mxu0 %v1153
      %v1468 = vpop.f32.mrf.mxu0
      %v1469 = vadd.f32 %v763, %v1468
      %v1470 = vpop.f32.mrf.mxu0
      %v1471 = vpop.f32.mrf.mxu0
      %v1472 = vadd.f32 %v763, %v1471
      %v1473 = vpop.f32.mrf.mxu0
      %1474 = vmatprep.mubr.bf16.mxu0 0
      %1475 = vmatmul.mubr.bf16.gmra.mxu0 %v1156
      %v1476 = vpop.f32.mrf.mxu0
      %v1477 = vadd.f32 %v763, %v1476
      %v1478 = vpop.f32.mrf.mxu0
      %v1479 = vpop.f32.mrf.mxu0
      %v1480 = vadd.f32 %v763, %v1479
      %v1481 = vpop.f32.mrf.mxu0
      %1482 = vmatprep.mubr.bf16.mxu0 0
      %1483 = vmatmul.mubr.bf16.gmra.mxu0 %v1159
      %v1484 = vpop.f32.mrf.mxu0
      %v1485 = vadd.f32 %v763, %v1484
      %v1486 = vpop.f32.mrf.mxu0
      %v1487 = vpop.f32.mrf.mxu0
      %v1488 = vadd.f32 %v763, %v1487
      %v1489 = vpop.f32.mrf.mxu0
      %1490 = vmatprep.mubr.bf16.mxu0 0
      %1491 = vmatmul.mubr.bf16.gmra.mxu0 %v1162
      %v1492 = vpop.f32.mrf.mxu0
      %v1493 = vadd.f32 %v763, %v1492
      %v1494 = vpop.f32.mrf.mxu0
      %v1495 = vpop.f32.mrf.mxu0
      %v1496 = vadd.f32 %v763, %v1495
      %v1497 = vpop.f32.mrf.mxu0
      %1498 = vmatprep.mubr.bf16.mxu0 0
      %1499 = vmatmul.mubr.bf16.gmra.mxu0 %v1165
      %v1500 = vpop.f32.mrf.mxu0
      %v1501 = vadd.f32 %v763, %v1500
      %v1502 = vpop.f32.mrf.mxu0
      %v1503 = vpop.f32.mrf.mxu0
      %v1504 = vadd.f32 %v763, %v1503
      %v1505 = vpop.f32.mrf.mxu0
      %1506 = vmatprep.mubr.bf16.mxu0 0
      %1507 = vmatmul.mubr.bf16.gmra.mxu0 %v1168
      %v1508 = vpop.f32.mrf.mxu0
      %v1509 = vadd.f32 %v763, %v1508
      %v1510 = vpop.f32.mrf.mxu0
      %v1511 = vpop.f32.mrf.mxu0
      %v1512 = vadd.f32 %v763, %v1511
      %v1513 = vpop.f32.mrf.mxu0
      %1514 = vmatprep.mubr.bf16.mxu0 0
      %1515 = vmatmul.mubr.bf16.gmra.mxu0 %v1171
      %v1516 = vpop.f32.mrf.mxu0
      %v1517 = vadd.f32 %v763, %v1516
      %v1518 = vpop.f32.mrf.mxu0
      %v1519 = vpop.f32.mrf.mxu0
      %v1520 = vadd.f32 %v763, %v1519
      %v1521 = vpop.f32.mrf.mxu0
      %1522 = vmatprep.mubr.bf16.mxu0 0
      %1523 = vmatmul.mubr.bf16.gmra.mxu0 %v1174
      %v1524 = vpop.f32.mrf.mxu0
      %v1525 = vadd.f32 %v763, %v1524
      %v1526 = vpop.f32.mrf.mxu0
      %v1527 = vpop.f32.mrf.mxu0
      %v1528 = vadd.f32 %v763, %v1527
      %v1529 = vpop.f32.mrf.mxu0
      %1530 = vmatprep.mubr.bf16.mxu0 0
      %1531 = vmatmul.mubr.bf16.gmra.mxu0 %v1177
      %v1532 = vpop.f32.mrf.mxu0
      %v1533 = vadd.f32 %v763, %v1532
      %v1534 = vpop.f32.mrf.mxu0
      %v1535 = vpop.f32.mrf.mxu0
      %v1536 = vadd.f32 %v763, %v1535
      %v1537 = vpop.f32.mrf.mxu0
      %1538 = vmatprep.mubr.bf16.mxu0 0
      %1539 = vmatmul.mubr.bf16.gmra.mxu0 %v1180
      %v1540 = vpop.f32.mrf.mxu0
      %v1541 = vadd.f32 %v763, %v1540
      %v1542 = vpop.f32.mrf.mxu0
      %v1543 = vpop.f32.mrf.mxu0
      %v1544 = vadd.f32 %v763, %v1543
      %v1545 = vpop.f32.mrf.mxu0
      %1546 = vmatprep.mubr.bf16.mxu0 0
      %1547 = vmatmul.mubr.bf16.gmra.mxu0 %v1183
      %v1548 = vpop.f32.mrf.mxu0
      %v1549 = vadd.f32 %v763, %v1548
      %v1550 = vpop.f32.mrf.mxu0
      %v1551 = vpop.f32.mrf.mxu0
      %v1552 = vadd.f32 %v763, %v1551
      %v1553 = vpop.f32.mrf.mxu0
      %1554 = vmatprep.mubr.bf16.mxu0 0
      %1555 = vmatmul.mubr.bf16.gmra.mxu0 %v1186
      %v1556 = vpop.f32.mrf.mxu0
      %v1557 = vadd.f32 %v763, %v1556
      %v1558 = vpop.f32.mrf.mxu0
      %v1559 = vpop.f32.mrf.mxu0
      %v1560 = vadd.f32 %v763, %v1559
      %v1561 = vpop.f32.mrf.mxu0
      %1562 = vmatprep.mubr.bf16.mxu0 0
      %1563 = vmatmul.mubr.bf16.gmra.mxu0 %v1189
      %v1564 = vpop.f32.mrf.mxu0
      %v1565 = vadd.f32 %v763, %v1564
      %v1566 = vpop.f32.mrf.mxu0
      %v1567 = vpop.f32.mrf.mxu0
      %v1568 = vadd.f32 %v763, %v1567
      %v1569 = vpop.f32.mrf.mxu0
      %1570 = vmatprep.mubr.bf16.mxu0 0
      %1571 = vmatmul.mubr.bf16.gmra.mxu0 %v1192
      %v1572 = vpop.f32.mrf.mxu0
      %v1573 = vadd.f32 %v763, %v1572
      %v1574 = vpop.f32.mrf.mxu0
      %v1575 = vpop.f32.mrf.mxu0
      %v1576 = vadd.f32 %v763, %v1575
      %v1577 = vpop.f32.mrf.mxu0
      %1578 = vmatprep.mubr.bf16.mxu0 0
      %1579 = vmatmul.mubr.bf16.gmra.mxu0 %v1195
      %v1580 = vpop.f32.mrf.mxu0
      %v1581 = vadd.f32 %v763, %v1580
      %v1582 = vpop.f32.mrf.mxu0
      %v1583 = vpop.f32.mrf.mxu0
      %v1584 = vadd.f32 %v763, %v1583
      %v1585 = vpop.f32.mrf.mxu0
      %1586 = vmatprep.mubr.bf16.mxu0 0
      %1587 = vmatmul.mubr.bf16.gmra.mxu0 %v1198
      %v1588 = vpop.f32.mrf.mxu0
      %v1589 = vadd.f32 %v763, %v1588
      %v1590 = vpop.f32.mrf.mxu0
      %v1591 = vpop.f32.mrf.mxu0
      %v1592 = vadd.f32 %v763, %v1591
      %v1593 = vpop.f32.mrf.mxu0
      %1594 = vmatprep.mubr.bf16.mxu0 0
      %1595 = vmatmul.mubr.bf16.gmra.mxu0 %v1201
      %v1596 = vpop.f32.mrf.mxu0
      %v1597 = vadd.f32 %v763, %v1596
      %v1598 = vpop.f32.mrf.mxu0
      %v1599 = vpop.f32.mrf.mxu0
      %v1600 = vadd.f32 %v763, %v1599
      %v1601 = vpop.f32.mrf.mxu0
      %1602 = vmatprep.mubr.bf16.mxu0 0
      %1603 = vmatmul.mubr.bf16.gmra.mxu0 %v1204
      %v1604 = vpop.f32.mrf.mxu0
      %v1605 = vadd.f32 %v763, %v1604
      %v1606 = vpop.f32.mrf.mxu0
      %v1607 = vpop.f32.mrf.mxu0
      %v1608 = vadd.f32 %v763, %v1607
      %v1609 = vpop.f32.mrf.mxu0
      %1610 = vmatprep.mubr.bf16.mxu0 0
      %1611 = vmatmul.mubr.bf16.gmra.mxu0 %v1207
      %v1612 = vpop.f32.mrf.mxu0
      %v1613 = vadd.f32 %v763, %v1612
      %v1614 = vpop.f32.mrf.mxu0
      %v1615 = vpop.f32.mrf.mxu0
      %v1616 = vadd.f32 %v763, %v1615
      %v1617 = vpop.f32.mrf.mxu0
      %1618 = vmatprep.mubr.bf16.mxu0 0
      %1619 = vmatmul.mubr.bf16.gmra.mxu0 %v1210
      %v1620 = vpop.f32.mrf.mxu0
      %v1621 = vadd.f32 %v763, %v1620
      %v1622 = vpop.f32.mrf.mxu0
      %v1623 = vpop.f32.mrf.mxu0
      %v1624 = vadd.f32 %v763, %v1623
      %v1625 = vpop.f32.mrf.mxu0
      %1626 = vmatprep.mubr.bf16.mxu0 0
      %1627 = vmatmul.mubr.bf16.gmra.mxu0 %v1213
      %v1628 = vpop.f32.mrf.mxu0
      %v1629 = vadd.f32 %v763, %v1628
      %v1630 = vpop.f32.mrf.mxu0
      %v1631 = vpop.f32.mrf.mxu0
      %v1632 = vadd.f32 %v763, %v1631
      %v1633 = vpop.f32.mrf.mxu0
      %1634 = vmatprep.mubr.bf16.mxu0 0
      %1635 = vmatmul.mubr.bf16.gmra.mxu0 %v1216
      %v1636 = vpop.f32.mrf.mxu0
      %v1637 = vadd.f32 %v763, %v1636
      %v1638 = vpop.f32.mrf.mxu0
      %v1639 = vpop.f32.mrf.mxu0
      %v1640 = vadd.f32 %v763, %v1639
      %v1641 = vpop.f32.mrf.mxu0
      %1642 = vmatprep.mubr.bf16.mxu0 0
      %1643 = vmatmul.mubr.bf16.gmra.mxu0 %v1219
      %v1644 = vpop.f32.mrf.mxu0
      %v1645 = vadd.f32 %v763, %v1644
      %v1646 = vpop.f32.mrf.mxu0
      %v1647 = vpop.f32.mrf.mxu0
      %v1648 = vadd.f32 %v763, %v1647
      %v1649 = vpop.f32.mrf.mxu0
      %1650 = vmatprep.mubr.bf16.mxu0 0
      %1651 = vmatmul.mubr.bf16.gmra.mxu0 %v1222
      %v1652 = vpop.f32.mrf.mxu0
      %v1653 = vadd.f32 %v763, %v1652
      %v1654 = vpop.f32.mrf.mxu0
      %v1655 = vpop.f32.mrf.mxu0
      %v1656 = vadd.f32 %v763, %v1655
      %v1657 = vpop.f32.mrf.mxu0
      %1658 = vmatprep.mubr.bf16.mxu0 0
      %1659 = vmatmul.mubr.bf16.gmra.mxu0 %v1225
      %v1660 = vpop.f32.mrf.mxu0
      %v1661 = vadd.f32 %v763, %v1660
      %v1662 = vpop.f32.mrf.mxu0
      %v1663 = vpop.f32.mrf.mxu0
      %v1664 = vadd.f32 %v763, %v1663
      %v1665 = vpop.f32.mrf.mxu0
      %1666 = vmatprep.mubr.bf16.mxu0 0
      %1667 = vmatmul.mubr.bf16.gmra.mxu0 %v1228
      %v1668 = vpop.f32.mrf.mxu0
      %v1669 = vadd.f32 %v763, %v1668
      %v1670 = vpop.f32.mrf.mxu0
      %v1671 = vpop.f32.mrf.mxu0
      %v1672 = vadd.f32 %v763, %v1671
      %v1673 = vpop.f32.mrf.mxu0
      %1674 = vmatprep.mubr.bf16.mxu0 0
      %1675 = vmatmul.mubr.bf16.gmra.mxu0 %v1231
      %v1676 = vpop.f32.mrf.mxu0
      %v1677 = vadd.f32 %v763, %v1676
      %v1678 = vpop.f32.mrf.mxu0
      %v1679 = vpop.f32.mrf.mxu0
      %v1680 = vadd.f32 %v763, %v1679
      %v1681 = vpop.f32.mrf.mxu0
      %1682 = vmatprep.mubr.bf16.mxu0 0
      %1683 = vmatmul.mubr.bf16.gmra.mxu0 %v1234
      %v1684 = vpop.f32.mrf.mxu0
      %v1685 = vadd.f32 %v763, %v1684
      %v1686 = vpop.f32.mrf.mxu0
      %v1687 = vpop.f32.mrf.mxu0
      %v1688 = vadd.f32 %v763, %v1687
      %v1689 = vpop.f32.mrf.mxu0
      %1690 = vmatprep.mubr.bf16.mxu0 0
      %1691 = vmatmul.mubr.bf16.gmra.mxu0 %v1237
      %v1692 = vpop.f32.mrf.mxu0
      %v1693 = vadd.f32 %v763, %v1692
      %v1694 = vpop.f32.mrf.mxu0
      %v1695 = vpop.f32.mrf.mxu0
      %v1696 = vadd.f32 %v763, %v1695
      %v1697 = vpop.f32.mrf.mxu0
      %1698 = vmatprep.mubr.bf16.mxu0 0
      %1699 = vmatmul.mubr.bf16.gmra.mxu0 %v1240
      %v1700 = vpop.f32.mrf.mxu0
      %v1701 = vadd.f32 %v763, %v1700
      %v1702 = vpop.f32.mrf.mxu0
      %v1703 = vpop.f32.mrf.mxu0
      %v1704 = vadd.f32 %v763, %v1703
      %v1705 = vpop.f32.mrf.mxu0
      %1706 = vmatprep.mubr.bf16.mxu0 0
      %1707 = vmatmul.mubr.bf16.gmra.mxu0 %v1243
      %v1708 = vpop.f32.mrf.mxu0
      %v1709 = vadd.f32 %v763, %v1708
      %v1710 = vpop.f32.mrf.mxu0
      %v1711 = vpop.f32.mrf.mxu0
      %v1712 = vadd.f32 %v763, %v1711
      %v1713 = vpop.f32.mrf.mxu0
      %1714 = vmatprep.mubr.bf16.mxu0 0
      %1715 = vmatmul.mubr.bf16.gmra.mxu0 %v1246
      %v1716 = vpop.f32.mrf.mxu0
      %v1717 = vadd.f32 %v763, %v1716
      %v1718 = vpop.f32.mrf.mxu0
      %v1719 = vpop.f32.mrf.mxu0
      %v1720 = vadd.f32 %v763, %v1719
      %v1721 = vpop.f32.mrf.mxu0
      %1722 = vmatprep.mubr.bf16.mxu0 0
      %1723 = vmatmul.mubr.bf16.gmra.mxu0 %v1249
      %v1724 = vpop.f32.mrf.mxu0
      %v1725 = vadd.f32 %v763, %v1724
      %v1726 = vpop.f32.mrf.mxu0
      %v1727 = vpop.f32.mrf.mxu0
      %v1728 = vadd.f32 %v763, %v1727
      %v1729 = vpop.f32.mrf.mxu0
      %1730 = vmatprep.mubr.bf16.mxu0 0
      %1731 = vmatmul.mubr.bf16.gmra.mxu0 %v1252
      %v1732 = vpop.f32.mrf.mxu0
      %v1733 = vadd.f32 %v763, %v1732
      %v1734 = vpop.f32.mrf.mxu0
      %v1735 = vpop.f32.mrf.mxu0
      %v1736 = vadd.f32 %v763, %v1735
      %v1737 = vpop.f32.mrf.mxu0
      %1738 = vmatprep.mubr.bf16.mxu0 0
      %1739 = vmatmul.mubr.bf16.gmra.mxu0 %v1255
      %v1740 = vpop.f32.mrf.mxu0
      %v1741 = vadd.f32 %v763, %v1740
      %v1742 = vpop.f32.mrf.mxu0
      %v1743 = vpop.f32.mrf.mxu0
      %v1744 = vadd.f32 %v763, %v1743
      %v1745 = vpop.f32.mrf.mxu0
      %1746 = vmatprep.mubr.bf16.mxu0 0
      %1747 = vmatmul.mubr.bf16.gmra.mxu0 %v1258
      %v1748 = vpop.f32.mrf.mxu0
      %v1749 = vadd.f32 %v763, %v1748
      %v1750 = vpop.f32.mrf.mxu0
      %v1751 = vpop.f32.mrf.mxu0
      %v1752 = vadd.f32 %v763, %v1751
      %v1753 = vpop.f32.mrf.mxu0
      %1754 = vmatprep.mubr.bf16.mxu0 0
      %1755 = vmatmul.mubr.bf16.gmra.mxu0 %v1261
      %v1756 = vpop.f32.mrf.mxu0
      %v1757 = vadd.f32 %v763, %v1756
      %v1758 = vpop.f32.mrf.mxu0
      %v1759 = vpop.f32.mrf.mxu0
      %v1760 = vadd.f32 %v763, %v1759
      %v1761 = vpop.f32.mrf.mxu0
      %1762 = vmatprep.mubr.bf16.mxu0 0
      %1763 = vmatmul.mubr.bf16.gmra.mxu0 %v1264
      %v1764 = vpop.f32.mrf.mxu0
      %v1765 = vadd.f32 %v763, %v1764
      %v1766 = vpop.f32.mrf.mxu0
      %v1767 = vpop.f32.mrf.mxu0
      %v1768 = vadd.f32 %v763, %v1767
      %v1769 = vpop.f32.mrf.mxu0
      %1770 = vmatprep.mubr.bf16.mxu0 0
      %1771 = vmatmul.mubr.bf16.gmra.mxu0 %v1267
      %v1772 = vpop.f32.mrf.mxu0
      %v1773 = vadd.f32 %v763, %v1772
      %v1774 = vpop.f32.mrf.mxu0
      %v1775 = vpop.f32.mrf.mxu0
      %v1776 = vadd.f32 %v763, %v1775
      %v1777 = vpop.f32.mrf.mxu0
      %1778 = vmatprep.mubr.bf16.mxu0 0
      %1779 = vmatmul.mubr.bf16.gmra.mxu0 %v1270
      %v1780 = vpop.f32.mrf.mxu0
      %v1781 = vadd.f32 %v763, %v1780
      %v1782 = vpop.f32.mrf.mxu0
      %v1783 = vpop.f32.mrf.mxu0
      %v1784 = vadd.f32 %v763, %v1783
      %v1785 = vpop.f32.mrf.mxu0
      %1786 = vmatprep.mubr.bf16.mxu0 0
      %1787 = vmatmul.mubr.bf16.gmra.mxu0 %v1273
      %v1788 = vpop.f32.mrf.mxu0
      %v1789 = vadd.f32 %v763, %v1788
      %v1790 = vpop.f32.mrf.mxu0
      %v1791 = vpop.f32.mrf.mxu0
      %v1792 = vadd.f32 %v763, %v1791
      %v1793 = vpop.f32.mrf.mxu0
      %1794 = vmatprep.mubr.bf16.mxu0 0
      %1795 = vmatmul.mubr.bf16.gmra.mxu0 %v1276
      %v1796 = vpop.f32.mrf.mxu0
      %v1797 = vadd.f32 %v763, %v1796
      %v1798 = vpop.f32.mrf.mxu0
      %v1799 = vpop.f32.mrf.mxu0
      %v1800 = vadd.f32 %v763, %v1799
      %v1801 = vpop.f32.mrf.mxu0
      %1802 = vmatprep.mubr.bf16.mxu0 0
      %1803 = vmatmul.mubr.bf16.gmra.mxu0 %v1279
      %v1804 = vpop.f32.mrf.mxu0
      %v1805 = vadd.f32 %v763, %v1804
      %v1806 = vpop.f32.mrf.mxu0
      %v1807 = vpop.f32.mrf.mxu0
      %v1808 = vadd.f32 %v763, %v1807
      %v1809 = vpop.f32.mrf.mxu0
      %1810 = vmatprep.mubr.bf16.mxu0 0
      %1811 = vmatmul.mubr.bf16.gmra.mxu0 %v1282
      %v1812 = vpop.f32.mrf.mxu0
      %v1813 = vadd.f32 %v763, %v1812
      %v1814 = vpop.f32.mrf.mxu0
      %v1815 = vpop.f32.mrf.mxu0
      %v1816 = vadd.f32 %v763, %v1815
      %v1817 = vpop.f32.mrf.mxu0
      %1818 = vmatprep.mubr.bf16.mxu0 0
      %1819 = vmatmul.mubr.bf16.gmra.mxu0 %v1285
      %v1820 = vpop.f32.mrf.mxu0
      %v1821 = vadd.f32 %v763, %v1820
      %v1822 = vpop.f32.mrf.mxu0
      %v1823 = vpop.f32.mrf.mxu0
      %v1824 = vadd.f32 %v763, %v1823
      %v1825 = vpop.f32.mrf.mxu0
      %1826 = vmatprep.mubr.bf16.mxu0 0
      %1827 = vmatmul.mubr.bf16.gmra.mxu0 %v1288
      %v1828 = vpop.f32.mrf.mxu0
      %v1829 = vadd.f32 %v763, %v1828
      %v1830 = vpop.f32.mrf.mxu0
      %v1831 = vpop.f32.mrf.mxu0
      %v1832 = vadd.f32 %v763, %v1831
      %v1833 = vpop.f32.mrf.mxu0
      %1834 = vdwg.mxu0
      %v1835 = vmax.f32 %v1325, 0.0
      %v1836 = vmax.f32 %v1328, 0.0
      %v1837 = vmax.f32 %v1333, 0.0
      %v1838 = vmax.f32 %v1336, 0.0
      %v1839 = vmax.f32 %v1341, 0.0
      %v1840 = vmax.f32 %v1344, 0.0
      %v1841 = vmax.f32 %v1349, 0.0
      %v1842 = vmax.f32 %v1352, 0.0
      %v1843 = vmax.f32 %v1357, 0.0
      %v1844 = vmax.f32 %v1360, 0.0
      %v1845 = vmax.f32 %v1365, 0.0
      %v1846 = vmax.f32 %v1368, 0.0
      %v1847 = vmax.f32 %v1373, 0.0
      %v1848 = vmax.f32 %v1376, 0.0
      %v1849 = vmax.f32 %v1381, 0.0
      %v1850 = vmax.f32 %v1384, 0.0
      %v1851 = vmax.f32 %v1389, 0.0
      %v1852 = vmax.f32 %v1392, 0.0
      %v1853 = vmax.f32 %v1397, 0.0
      %v1854 = vmax.f32 %v1400, 0.0
      %v1855 = vmax.f32 %v1405, 0.0
      %v1856 = vmax.f32 %v1408, 0.0
      %v1857 = vmax.f32 %v1413, 0.0
      %v1858 = vmax.f32 %v1416, 0.0
      %v1859 = vmax.f32 %v1421, 0.0
      %v1860 = vmax.f32 %v1424, 0.0
      %v1861 = vmax.f32 %v1429, 0.0
      %v1862 = vmax.f32 %v1432, 0.0
      %v1863 = vmax.f32 %v1437, 0.0
      %v1864 = vmax.f32 %v1440, 0.0
      %v1865 = vmax.f32 %v1445, 0.0
      %v1866 = vmax.f32 %v1448, 0.0
      %v1867 = vmax.f32 %v1453, 0.0
      %v1868 = vmax.f32 %v1456, 0.0
      %v1869 = vmax.f32 %v1461, 0.0
      %v1870 = vmax.f32 %v1464, 0.0
      %v1871 = vmax.f32 %v1469, 0.0
      %v1872 = vmax.f32 %v1472, 0.0
      %v1873 = vmax.f32 %v1477, 0.0
      %v1874 = vmax.f32 %v1480, 0.0
      %v1875 = vmax.f32 %v1485, 0.0
      %v1876 = vmax.f32 %v1488, 0.0
      %v1877 = vmax.f32 %v1493, 0.0
      %v1878 = vmax.f32 %v1496, 0.0
      %v1879 = vmax.f32 %v1501, 0.0
      %v1880 = vmax.f32 %v1504, 0.0
      %v1881 = vmax.f32 %v1509, 0.0
      %v1882 = vmax.f32 %v1512, 0.0
      %v1883 = vmax.f32 %v1517, 0.0
      %v1884 = vmax.f32 %v1520, 0.0
      %v1885 = vmax.f32 %v1525, 0.0
      %v1886 = vmax.f32 %v1528, 0.0
      %v1887 = vmax.f32 %v1533, 0.0
      %v1888 = vmax.f32 %v1536, 0.0
      %v1889 = vmax.f32 %v1541, 0.0
      %v1890 = vmax.f32 %v1544, 0.0
      %v1891 = vmax.f32 %v1549, 0.0
      %v1892 = vmax.f32 %v1552, 0.0
      %v1893 = vmax.f32 %v1557, 0.0
      %v1894 = vmax.f32 %v1560, 0.0
      %v1895 = vmax.f32 %v1565, 0.0
      %v1896 = vmax.f32 %v1568, 0.0
      %v1897 = vmax.f32 %v1573, 0.0
      %v1898 = vmax.f32 %v1576, 0.0
      %v1899 = vmax.f32 %v1581, 0.0
      %v1900 = vmax.f32 %v1584, 0.0
      %v1901 = vmax.f32 %v1589, 0.0
      %v1902 = vmax.f32 %v1592, 0.0
      %v1903 = vmax.f32 %v1597, 0.0
      %v1904 = vmax.f32 %v1600, 0.0
      %v1905 = vmax.f32 %v1605, 0.0
      %v1906 = vmax.f32 %v1608, 0.0
      %v1907 = vmax.f32 %v1613, 0.0
      %v1908 = vmax.f32 %v1616, 0.0
      %v1909 = vmax.f32 %v1621, 0.0
      %v1910 = vmax.f32 %v1624, 0.0
      %v1911 = vmax.f32 %v1629, 0.0
      %v1912 = vmax.f32 %v1632, 0.0
      %v1913 = vmax.f32 %v1637, 0.0
      %v1914 = vmax.f32 %v1640, 0.0
      %v1915 = vmax.f32 %v1645, 0.0
      %v1916 = vmax.f32 %v1648, 0.0
      %v1917 = vmax.f32 %v1653, 0.0
      %v1918 = vmax.f32 %v1656, 0.0
      %v1919 = vmax.f32 %v1661, 0.0
      %v1920 = vmax.f32 %v1664, 0.0
      %v1921 = vmax.f32 %v1669, 0.0
      %v1922 = vmax.f32 %v1672, 0.0
      %v1923 = vmax.f32 %v1677, 0.0
      %v1924 = vmax.f32 %v1680, 0.0
      %v1925 = vmax.f32 %v1685, 0.0
      %v1926 = vmax.f32 %v1688, 0.0
      %v1927 = vmax.f32 %v1693, 0.0
      %v1928 = vmax.f32 %v1696, 0.0
      %v1929 = vmax.f32 %v1701, 0.0
      %v1930 = vmax.f32 %v1704, 0.0
      %v1931 = vmax.f32 %v1709, 0.0
      %v1932 = vmax.f32 %v1712, 0.0
      %v1933 = vmax.f32 %v1717, 0.0
      %v1934 = vmax.f32 %v1720, 0.0
      %v1935 = vmax.f32 %v1725, 0.0
      %v1936 = vmax.f32 %v1728, 0.0
      %v1937 = vmax.f32 %v1733, 0.0
      %v1938 = vmax.f32 %v1736, 0.0
      %v1939 = vmax.f32 %v1741, 0.0
      %v1940 = vmax.f32 %v1744, 0.0
      %v1941 = vmax.f32 %v1749, 0.0
      %v1942 = vmax.f32 %v1752, 0.0
      %v1943 = vmax.f32 %v1757, 0.0
      %v1944 = vmax.f32 %v1760, 0.0
      %v1945 = vmax.f32 %v1765, 0.0
      %v1946 = vmax.f32 %v1768, 0.0
      %v1947 = vmax.f32 %v1773, 0.0
      %v1948 = vmax.f32 %v1776, 0.0
      %v1949 = vmax.f32 %v1781, 0.0
      %v1950 = vmax.f32 %v1784, 0.0
      %v1951 = vmax.f32 %v1789, 0.0
      %v1952 = vmax.f32 %v1792, 0.0
      %v1953 = vmax.f32 %v1797, 0.0
      %v1954 = vmax.f32 %v1800, 0.0
      %v1955 = vmax.f32 %v1805, 0.0
      %v1956 = vmax.f32 %v1808, 0.0
      %v1957 = vmax.f32 %v1813, 0.0
      %v1958 = vmax.f32 %v1816, 0.0
      %v1959 = vmax.f32 %v1821, 0.0
      %v1960 = vmax.f32 %v1824, 0.0
      %v1961 = vmax.f32 %v1829, 0.0
      %v1962 = vmax.f32 %v1832, 0.0
      %v1963 = vmax.f32 %v1835, %v1839
      %v1964 = vmax.f32 %v1836, %v1840
      %v1965 = vmax.f32 %v1837, %v1841
      %v1966 = vmax.f32 %v1838, %v1842
      %v1967 = vmax.f32 %v1843, %v1847
      %v1968 = vmax.f32 %v1844, %v1848
      %v1969 = vmax.f32 %v1845, %v1849
      %v1970 = vmax.f32 %v1846, %v1850
      %v1971 = vmax.f32 %v1851, %v1855
      %v1972 = vmax.f32 %v1852, %v1856
      %v1973 = vmax.f32 %v1853, %v1857
      %v1974 = vmax.f32 %v1854, %v1858
      %v1975 = vmax.f32 %v1859, %v1863
      %v1976 = vmax.f32 %v1860, %v1864
      %v1977 = vmax.f32 %v1861, %v1865
      %v1978 = vmax.f32 %v1862, %v1866
      %v1979 = vmax.f32 %v1867, %v1871
      %v1980 = vmax.f32 %v1868, %v1872
      %v1981 = vmax.f32 %v1869, %v1873
      %v1982 = vmax.f32 %v1870, %v1874
      %v1983 = vmax.f32 %v1875, %v1879
      %v1984 = vmax.f32 %v1876, %v1880
      %v1985 = vmax.f32 %v1877, %v1881
      %v1986 = vmax.f32 %v1878, %v1882
      %v1987 = vmax.f32 %v1883, %v1887
      %v1988 = vmax.f32 %v1884, %v1888
      %v1989 = vmax.f32 %v1885, %v1889
      %v1990 = vmax.f32 %v1886, %v1890
      %v1991 = vmax.f32 %v1891, %v1895
      %v1992 = vmax.f32 %v1892, %v1896
      %v1993 = vmax.f32 %v1893, %v1897
      %v1994 = vmax.f32 %v1894, %v1898
      %v1995 = vmax.f32 %v1899, %v1903
      %v1996 = vmax.f32 %v1900, %v1904
      %v1997 = vmax.f32 %v1901, %v1905
      %v1998 = vmax.f32 %v1902, %v1906
      %v1999 = vmax.f32 %v1907, %v1911
      %v2000 = vmax.f32 %v1908, %v1912
      %v2001 = vmax.f32 %v1909, %v1913
      %v2002 = vmax.f32 %v1910, %v1914
      %v2003 = vmax.f32 %v1915, %v1919
      %v2004 = vmax.f32 %v1916, %v1920
      %v2005 = vmax.f32 %v1917, %v1921
      %v2006 = vmax.f32 %v1918, %v1922
      %v2007 = vmax.f32 %v1923, %v1927
      %v2008 = vmax.f32 %v1924, %v1928
      %v2009 = vmax.f32 %v1925, %v1929
      %v2010 = vmax.f32 %v1926, %v1930
      %v2011 = vmax.f32 %v1931, %v1935
      %v2012 = vmax.f32 %v1932, %v1936
      %v2013 = vmax.f32 %v1933, %v1937
      %v2014 = vmax.f32 %v1934, %v1938
      %v2015 = vmax.f32 %v1939, %v1943
      %v2016 = vmax.f32 %v1940, %v1944
      %v2017 = vmax.f32 %v1941, %v1945
      %v2018 = vmax.f32 %v1942, %v1946
      %v2019 = vmax.f32 %v1947, %v1951
      %v2020 = vmax.f32 %v1948, %v1952
      %v2021 = vmax.f32 %v1949, %v1953
      %v2022 = vmax.f32 %v1950, %v1954
      %v2023 = vmax.f32 %v1955, %v1959
      %v2024 = vmax.f32 %v1956, %v1960
      %v2025 = vmax.f32 %v1957, %v1961
      %v2026 = vmax.f32 %v1958, %v1962
      %2027 = vst [vmem:[#allocation2] sm:$0xff] %v1963
      %2028 = vst [vmem:[#allocation2 + $0x8] sm:$0xff] %v1964
      %2029 = vst [vmem:[#allocation2 + $0x10] sm:$0xff] %v1965
      %2030 = vst [vmem:[#allocation2 + $0x18] sm:$0xff] %v1966
      %2031 = vst [vmem:[#allocation2 + $0x20] sm:$0xff] %v1967
      %2032 = vst [vmem:[#allocation2 + $0x28] sm:$0xff] %v1968
      %2033 = vst [vmem:[#allocation2 + $0x30] sm:$0xff] %v1969
      %2034 = vst [vmem:[#allocation2 + $0x38] sm:$0xff] %v1970
      %2035 = vst [vmem:[#allocation2 + $0x40] sm:$0xff] %v1971
      %2036 = vst [vmem:[#allocation2 + $0x48] sm:$0xff] %v1972
      %2037 = vst [vmem:[#allocation2 + $0x50] sm:$0xff] %v1973
      %2038 = vst [vmem:[#allocation2 + $0x58] sm:$0xff] %v1974
      %2039 = vst [vmem:[#allocation2 + $0x60] sm:$0xff] %v1975
      %2040 = vst [vmem:[#allocation2 + $0x68] sm:$0xff] %v1976
      %2041 = vst [vmem:[#allocation2 + $0x70] sm:$0xff] %v1977
      %2042 = vst [vmem:[#allocation2 + $0x78] sm:$0xff] %v1978
      %2043 = vst [vmem:[#allocation2 + $0x80] sm:$0xff] %v1979
      %2044 = vst [vmem:[#allocation2 + $0x88] sm:$0xff] %v1980
      %2045 = vst [vmem:[#allocation2 + $0x90] sm:$0xff] %v1981
      %2046 = vst [vmem:[#allocation2 + $0x98] sm:$0xff] %v1982
      %2047 = vst [vmem:[#allocation2 + $0xa0] sm:$0xff] %v1983
      %2048 = vst [vmem:[#allocation2 + $0xa8] sm:$0xff] %v1984
      %2049 = vst [vmem:[#allocation2 + $0xb0] sm:$0xff] %v1985
      %2050 = vst [vmem:[#allocation2 + $0xb8] sm:$0xff] %v1986
      %2051 = vst [vmem:[#allocation2 + $0xc0] sm:$0xff] %v1987
      %2052 = vst [vmem:[#allocation2 + $0xc8] sm:$0xff] %v1988
      %2053 = vst [vmem:[#allocation2 + $0xd0] sm:$0xff] %v1989
      %2054 = vst [vmem:[#allocation2 + $0xd8] sm:$0xff] %v1990
      %2055 = vst [vmem:[#allocation2 + $0xe0] sm:$0xff] %v1991
      %2056 = vst [vmem:[#allocation2 + $0xe8] sm:$0xff] %v1992
      %2057 = vst [vmem:[#allocation2 + $0xf0] sm:$0xff] %v1993
      %2058 = vst [vmem:[#allocation2 + $0xf8] sm:$0xff] %v1994
      %2059 = vst [vmem:[#allocation2 + $0x100] sm:$0xff] %v1995
      %2060 = vst [vmem:[#allocation2 + $0x108] sm:$0xff] %v1996
      %2061 = vst [vmem:[#allocation2 + $0x110] sm:$0xff] %v1997
      %2062 = vst [vmem:[#allocation2 + $0x118] sm:$0xff] %v1998
      %2063 = vst [vmem:[#allocation2 + $0x120] sm:$0xff] %v1999
      %2064 = vst [vmem:[#allocation2 + $0x128] sm:$0xff] %v2000
      %2065 = vst [vmem:[#allocation2 + $0x130] sm:$0xff] %v2001
      %2066 = vst [vmem:[#allocation2 + $0x138] sm:$0xff] %v2002
      %2067 = vst [vmem:[#allocation2 + $0x140] sm:$0xff] %v2003
      %2068 = vst [vmem:[#allocation2 + $0x148] sm:$0xff] %v2004
      %2069 = vst [vmem:[#allocation2 + $0x150] sm:$0xff] %v2005
      %2070 = vst [vmem:[#allocation2 + $0x158] sm:$0xff] %v2006
      %2071 = vst [vmem:[#allocation2 + $0x160] sm:$0xff] %v2007
      %2072 = vst [vmem:[#allocation2 + $0x168] sm:$0xff] %v2008
      %2073 = vst [vmem:[#allocation2 + $0x170] sm:$0xff] %v2009
      %2074 = vst [vmem:[#allocation2 + $0x178] sm:$0xff] %v2010
      %2075 = vst [vmem:[#allocation2 + $0x180] sm:$0xff] %v2011
      %2076 = vst [vmem:[#allocation2 + $0x188] sm:$0xff] %v2012
      %2077 = vst [vmem:[#allocation2 + $0x190] sm:$0xff] %v2013
      %2078 = vst [vmem:[#allocation2 + $0x198] sm:$0xff] %v2014
      %2079 = vst [vmem:[#allocation2 + $0x1a0] sm:$0xff] %v2015
      %2080 = vst [vmem:[#allocation2 + $0x1a8] sm:$0xff] %v2016
      %2081 = vst [vmem:[#allocation2 + $0x1b0] sm:$0xff] %v2017
      %2082 = vst [vmem:[#allocation2 + $0x1b8] sm:$0xff] %v2018
      %2083 = vst [vmem:[#allocation2 + $0x1c0] sm:$0xff] %v2019
      %2084 = vst [vmem:[#allocation2 + $0x1c8] sm:$0xff] %v2020
      %2085 = vst [vmem:[#allocation2 + $0x1d0] sm:$0xff] %v2021
      %2086 = vst [vmem:[#allocation2 + $0x1d8] sm:$0xff] %v2022
      %2087 = vst [vmem:[#allocation2 + $0x1e0] sm:$0xff] %v2023
      %2088 = vst [vmem:[#allocation2 + $0x1e8] sm:$0xff] %v2024
      %2089 = vst [vmem:[#allocation2 + $0x1f0] sm:$0xff] %v2025
      %2090 = vst [vmem:[#allocation2 + $0x1f8] sm:$0xff] %v2026
      %v2091 = vld [vmem:[#allocation2] ss:$2 sm:$0xff]
      %s2092 = scalar_lea.vmem [#allocation2], 16
      %v2093 = vld [vmem:[%s2092] ss:$2 sm:$0xff]
      %s2094 = scalar_lea.vmem [#allocation2], 32
      %v2095 = vld [vmem:[%s2094] ss:$2 sm:$0xff]
      %s2096 = scalar_lea.vmem [#allocation2], 48
      %v2097 = vld [vmem:[%s2096] ss:$2 sm:$0xff]
      %s2098 = scalar_lea.vmem [#allocation2], 64
      %v2099 = vld [vmem:[%s2098] ss:$2 sm:$0xff]
      %s2100 = scalar_lea.vmem [#allocation2], 80
      %v2101 = vld [vmem:[%s2100] ss:$2 sm:$0xff]
      %s2102 = scalar_lea.vmem [#allocation2], 96
      %v2103 = vld [vmem:[%s2102] ss:$2 sm:$0xff]
      %s2104 = scalar_lea.vmem [#allocation2], 112
      %v2105 = vld [vmem:[%s2104] ss:$2 sm:$0xff]
      %s2106 = scalar_lea.vmem [#allocation2], 128
      %v2107 = vld [vmem:[%s2106] ss:$2 sm:$0xff]
      %s2108 = scalar_lea.vmem [#allocation2], 144
      %v2109 = vld [vmem:[%s2108] ss:$2 sm:$0xff]
      %s2110 = scalar_lea.vmem [#allocation2], 160
      %v2111 = vld [vmem:[%s2110] ss:$2 sm:$0xff]
      %s2112 = scalar_lea.vmem [#allocation2], 176
      %v2113 = vld [vmem:[%s2112] ss:$2 sm:$0xff]
      %s2114 = scalar_lea.vmem [#allocation2], 192
      %v2115 = vld [vmem:[%s2114] ss:$2 sm:$0xff]
      %s2116 = scalar_lea.vmem [#allocation2], 208
      %v2117 = vld [vmem:[%s2116] ss:$2 sm:$0xff]
      %s2118 = scalar_lea.vmem [#allocation2], 224
      %v2119 = vld [vmem:[%s2118] ss:$2 sm:$0xff]
      %s2120 = scalar_lea.vmem [#allocation2], 240
      %v2121 = vld [vmem:[%s2120] ss:$2 sm:$0xff]
      %s2122 = scalar_lea.vmem [#allocation2], 256
      %v2123 = vld [vmem:[%s2122] ss:$2 sm:$0xff]
      %s2124 = scalar_lea.vmem [#allocation2], 272
      %v2125 = vld [vmem:[%s2124] ss:$2 sm:$0xff]
      %s2126 = scalar_lea.vmem [#allocation2], 288
      %v2127 = vld [vmem:[%s2126] ss:$2 sm:$0xff]
      %s2128 = scalar_lea.vmem [#allocation2], 304
      %v2129 = vld [vmem:[%s2128] ss:$2 sm:$0xff]
      %s2130 = scalar_lea.vmem [#allocation2], 320
      %v2131 = vld [vmem:[%s2130] ss:$2 sm:$0xff]
      %s2132 = scalar_lea.vmem [#allocation2], 336
      %v2133 = vld [vmem:[%s2132] ss:$2 sm:$0xff]
      %s2134 = scalar_lea.vmem [#allocation2], 352
      %v2135 = vld [vmem:[%s2134] ss:$2 sm:$0xff]
      %s2136 = scalar_lea.vmem [#allocation2], 368
      %v2137 = vld [vmem:[%s2136] ss:$2 sm:$0xff]
      %s2138 = scalar_lea.vmem [#allocation2], 384
      %v2139 = vld [vmem:[%s2138] ss:$2 sm:$0xff]
      %s2140 = scalar_lea.vmem [#allocation2], 400
      %v2141 = vld [vmem:[%s2140] ss:$2 sm:$0xff]
      %s2142 = scalar_lea.vmem [#allocation2], 416
      %v2143 = vld [vmem:[%s2142] ss:$2 sm:$0xff]
      %s2144 = scalar_lea.vmem [#allocation2], 432
      %v2145 = vld [vmem:[%s2144] ss:$2 sm:$0xff]
      %s2146 = scalar_lea.vmem [#allocation2], 448
      %v2147 = vld [vmem:[%s2146] ss:$2 sm:$0xff]
      %s2148 = scalar_lea.vmem [#allocation2], 464
      %v2149 = vld [vmem:[%s2148] ss:$2 sm:$0xff]
      %s2150 = scalar_lea.vmem [#allocation2], 480
      %v2151 = vld [vmem:[%s2150] ss:$2 sm:$0xff]
      %s2152 = scalar_lea.vmem [#allocation2], 496
      %v2153 = vld [vmem:[%s2152] ss:$2 sm:$0xff]
      %s2154 = scalar_lea.vmem [#allocation2], 1
      %v2155 = vld [vmem:[%s2154] ss:$2 sm:$0xff]
      %s2156 = scalar_lea.vmem [#allocation2], 17
      %v2157 = vld [vmem:[%s2156] ss:$2 sm:$0xff]
      %s2158 = scalar_lea.vmem [#allocation2], 33
      %v2159 = vld [vmem:[%s2158] ss:$2 sm:$0xff]
      %s2160 = scalar_lea.vmem [#allocation2], 49
      %v2161 = vld [vmem:[%s2160] ss:$2 sm:$0xff]
      %s2162 = scalar_lea.vmem [#allocation2], 65
      %v2163 = vld [vmem:[%s2162] ss:$2 sm:$0xff]
      %s2164 = scalar_lea.vmem [#allocation2], 81
      %v2165 = vld [vmem:[%s2164] ss:$2 sm:$0xff]
      %s2166 = scalar_lea.vmem [#allocation2], 97
      %v2167 = vld [vmem:[%s2166] ss:$2 sm:$0xff]
      %s2168 = scalar_lea.vmem [#allocation2], 113
      %v2169 = vld [vmem:[%s2168] ss:$2 sm:$0xff]
      %s2170 = scalar_lea.vmem [#allocation2], 129
      %v2171 = vld [vmem:[%s2170] ss:$2 sm:$0xff]
      %s2172 = scalar_lea.vmem [#allocation2], 145
      %v2173 = vld [vmem:[%s2172] ss:$2 sm:$0xff]
      %s2174 = scalar_lea.vmem [#allocation2], 161
      %v2175 = vld [vmem:[%s2174] ss:$2 sm:$0xff]
      %s2176 = scalar_lea.vmem [#allocation2], 177
      %v2177 = vld [vmem:[%s2176] ss:$2 sm:$0xff]
      %s2178 = scalar_lea.vmem [#allocation2], 193
      %v2179 = vld [vmem:[%s2178] ss:$2 sm:$0xff]
      %s2180 = scalar_lea.vmem [#allocation2], 209
      %v2181 = vld [vmem:[%s2180] ss:$2 sm:$0xff]
      %s2182 = scalar_lea.vmem [#allocation2], 225
      %v2183 = vld [vmem:[%s2182] ss:$2 sm:$0xff]
      %s2184 = scalar_lea.vmem [#allocation2], 241
      %v2185 = vld [vmem:[%s2184] ss:$2 sm:$0xff]
      %s2186 = scalar_lea.vmem [#allocation2], 257
      %v2187 = vld [vmem:[%s2186] ss:$2 sm:$0xff]
      %s2188 = scalar_lea.vmem [#allocation2], 273
      %v2189 = vld [vmem:[%s2188] ss:$2 sm:$0xff]
      %s2190 = scalar_lea.vmem [#allocation2], 289
      %v2191 = vld [vmem:[%s2190] ss:$2 sm:$0xff]
      %s2192 = scalar_lea.vmem [#allocation2], 305
      %v2193 = vld [vmem:[%s2192] ss:$2 sm:$0xff]
      %s2194 = scalar_lea.vmem [#allocation2], 321
      %v2195 = vld [vmem:[%s2194] ss:$2 sm:$0xff]
      %s2196 = scalar_lea.vmem [#allocation2], 337
      %v2197 = vld [vmem:[%s2196] ss:$2 sm:$0xff]
      %s2198 = scalar_lea.vmem [#allocation2], 353
      %v2199 = vld [vmem:[%s2198] ss:$2 sm:$0xff]
      %s2200 = scalar_lea.vmem [#allocation2], 369
      %v2201 = vld [vmem:[%s2200] ss:$2 sm:$0xff]
      %s2202 = scalar_lea.vmem [#allocation2], 385
      %v2203 = vld [vmem:[%s2202] ss:$2 sm:$0xff]
      %s2204 = scalar_lea.vmem [#allocation2], 401
      %v2205 = vld [vmem:[%s2204] ss:$2 sm:$0xff]
      %s2206 = scalar_lea.vmem [#allocation2], 417
      %v2207 = vld [vmem:[%s2206] ss:$2 sm:$0xff]
      %s2208 = scalar_lea.vmem [#allocation2], 433
      %v2209 = vld [vmem:[%s2208] ss:$2 sm:$0xff]
      %s2210 = scalar_lea.vmem [#allocation2], 449
      %v2211 = vld [vmem:[%s2210] ss:$2 sm:$0xff]
      %s2212 = scalar_lea.vmem [#allocation2], 465
      %v2213 = vld [vmem:[%s2212] ss:$2 sm:$0xff]
      %s2214 = scalar_lea.vmem [#allocation2], 481
      %v2215 = vld [vmem:[%s2214] ss:$2 sm:$0xff]
      %s2216 = scalar_lea.vmem [#allocation2], 497
      %v2217 = vld [vmem:[%s2216] ss:$2 sm:$0xff]
      %v2218 = vmax.f32 %v2091, %v2155
      %v2219 = vmax.f32 %v2093, %v2157
      %v2220 = vmax.f32 %v2095, %v2159
      %v2221 = vmax.f32 %v2097, %v2161
      %v2222 = vmax.f32 %v2099, %v2163
      %v2223 = vmax.f32 %v2101, %v2165
      %v2224 = vmax.f32 %v2103, %v2167
      %v2225 = vmax.f32 %v2105, %v2169
      %v2226 = vmax.f32 %v2107, %v2171
      %v2227 = vmax.f32 %v2109, %v2173
      %v2228 = vmax.f32 %v2111, %v2175
      %v2229 = vmax.f32 %v2113, %v2177
      %v2230 = vmax.f32 %v2115, %v2179
      %v2231 = vmax.f32 %v2117, %v2181
      %v2232 = vmax.f32 %v2119, %v2183
      %v2233 = vmax.f32 %v2121, %v2185
      %v2234 = vmax.f32 %v2123, %v2187
      %v2235 = vmax.f32 %v2125, %v2189
      %v2236 = vmax.f32 %v2127, %v2191
      %v2237 = vmax.f32 %v2129, %v2193
      %v2238 = vmax.f32 %v2131, %v2195
      %v2239 = vmax.f32 %v2133, %v2197
      %v2240 = vmax.f32 %v2135, %v2199
      %v2241 = vmax.f32 %v2137, %v2201
      %v2242 = vmax.f32 %v2139, %v2203
      %v2243 = vmax.f32 %v2141, %v2205
      %v2244 = vmax.f32 %v2143, %v2207
      %v2245 = vmax.f32 %v2145, %v2209
      %v2246 = vmax.f32 %v2147, %v2211
      %v2247 = vmax.f32 %v2149, %v2213
      %v2248 = vmax.f32 %v2151, %v2215
      %v2249 = vmax.f32 %v2153, %v2217
      %s2250 = scalar_lea.vmem [#allocation3], 24
      %2251 = vst [vmem:[%s2250 + $0x1] sm:$0xff] %v2218
      %2252 = vst [vmem:[%s2250 + $0x9] sm:$0xff] %v2219
      %2253 = vst [vmem:[%s2250 + $0x19] sm:$0xff] %v2220
      %2254 = vst [vmem:[%s2250 + $0x21] sm:$0xff] %v2221
      %2255 = vst [vmem:[%s2250 + $0x31] sm:$0xff] %v2222
      %2256 = vst [vmem:[%s2250 + $0x39] sm:$0xff] %v2223
      %2257 = vst [vmem:[%s2250 + $0x49] sm:$0xff] %v2224
      %2258 = vst [vmem:[%s2250 + $0x51] sm:$0xff] %v2225
      %2259 = vst [vmem:[%s2250 + $0x61] sm:$0xff] %v2226
      %2260 = vst [vmem:[%s2250 + $0x69] sm:$0xff] %v2227
      %2261 = vst [vmem:[%s2250 + $0x79] sm:$0xff] %v2228
      %2262 = vst [vmem:[%s2250 + $0x81] sm:$0xff] %v2229
      %2263 = vst [vmem:[%s2250 + $0x91] sm:$0xff] %v2230
      %2264 = vst [vmem:[%s2250 + $0x99] sm:$0xff] %v2231
      %2265 = vst [vmem:[%s2250 + $0xa9] sm:$0xff] %v2232
      %2266 = vst [vmem:[%s2250 + $0xb1] sm:$0xff] %v2233
      %2267 = vst [vmem:[%s2250 + $0xc1] sm:$0xff] %v2234
      %2268 = vst [vmem:[%s2250 + $0xc9] sm:$0xff] %v2235
      %2269 = vst [vmem:[%s2250 + $0xd9] sm:$0xff] %v2236
      %2270 = vst [vmem:[%s2250 + $0xe1] sm:$0xff] %v2237
      %2271 = vst [vmem:[%s2250 + $0xf1] sm:$0xff] %v2238
      %2272 = vst [vmem:[%s2250 + $0xf9] sm:$0xff] %v2239
      %2273 = vst [vmem:[%s2250 + $0x109] sm:$0xff] %v2240
      %2274 = vst [vmem:[%s2250 + $0x111] sm:$0xff] %v2241
      %2275 = vst [vmem:[%s2250 + $0x121] sm:$0xff] %v2242
      %2276 = vst [vmem:[%s2250 + $0x129] sm:$0xff] %v2243
      %2277 = vst [vmem:[%s2250 + $0x139] sm:$0xff] %v2244
      %2278 = vst [vmem:[%s2250 + $0x141] sm:$0xff] %v2245
      %2279 = vst [vmem:[%s2250 + $0x151] sm:$0xff] %v2246
      %2280 = vst [vmem:[%s2250 + $0x159] sm:$0xff] %v2247
      %2281 = vst [vmem:[%s2250 + $0x169] sm:$0xff] %v2248
      %2282 = vst [vmem:[%s2250 + $0x171] sm:$0xff] %v2249
      %v2283 = vld [vmem:[#allocation3] sm:$0xff]
      %v2284 = vld [vmem:[#allocation3 + $0x8] sm:$0xff]
      %v2285 = vld [vmem:[#allocation3 + $0x18] sm:$0xff]
      %v2286 = vld [vmem:[#allocation3 + $0x20] sm:$0xff]
      %v2287 = vld [vmem:[#allocation3 + $0x30] sm:$0xff]
      %v2288 = vld [vmem:[#allocation3 + $0x38] sm:$0xff]
      %v2289 = vld [vmem:[#allocation3 + $0x48] sm:$0xff]
      %v2290 = vld [vmem:[#allocation3 + $0x50] sm:$0xff]
      %v2291 = vld [vmem:[#allocation3 + $0x60] sm:$0xff]
      %v2292 = vld [vmem:[#allocation3 + $0x68] sm:$0xff]
      %v2293 = vld [vmem:[#allocation3 + $0x78] sm:$0xff]
      %v2294 = vld [vmem:[#allocation3 + $0x80] sm:$0xff]
      %v2295 = vld [vmem:[#allocation3 + $0x90] sm:$0xff]
      %v2296 = vld [vmem:[#allocation3 + $0x98] sm:$0xff]
      %v2297 = vld [vmem:[#allocation3 + $0xa8] sm:$0xff]
      %v2298 = vld [vmem:[#allocation3 + $0xb0] sm:$0xff]
      %v2299 = vld [vmem:[#allocation3 + $0xc0] sm:$0xff]
      %v2300 = vld [vmem:[#allocation3 + $0xc8] sm:$0xff]
      %v2301 = vld [vmem:[#allocation3 + $0xd8] sm:$0xff]
      %v2302 = vld [vmem:[#allocation3 + $0xe0] sm:$0xff]
      %v2303 = vld [vmem:[#allocation3 + $0xf0] sm:$0xff]
      %v2304 = vld [vmem:[#allocation3 + $0xf8] sm:$0xff]
      %v2305 = vld [vmem:[#allocation3 + $0x108] sm:$0xff]
      %v2306 = vld [vmem:[#allocation3 + $0x110] sm:$0xff]
      %v2307 = vld [vmem:[#allocation3 + $0x120] sm:$0xff]
      %v2308 = vld [vmem:[#allocation3 + $0x128] sm:$0xff]
      %v2309 = vld [vmem:[#allocation3 + $0x138] sm:$0xff]
      %v2310 = vld [vmem:[#allocation3 + $0x140] sm:$0xff]
      %v2311 = vld [vmem:[#allocation3 + $0x150] sm:$0xff]
      %v2312 = vld [vmem:[#allocation3 + $0x158] sm:$0xff]
      %v2313 = vld [vmem:[#allocation3 + $0x168] sm:$0xff]
      %v2314 = vld [vmem:[#allocation3 + $0x170] sm:$0xff]
      %v2315 = vpack.c.bf16 %v2284, %v2283
      %v2316 = vpack.c.bf16 %v2286, %v2285
      %v2317 = vpack.c.bf16 %v2288, %v2287
      %v2318 = vpack.c.bf16 %v2290, %v2289
      %v2319 = vpack.c.bf16 %v2292, %v2291
      %v2320 = vpack.c.bf16 %v2294, %v2293
      %v2321 = vpack.c.bf16 %v2296, %v2295
      %v2322 = vpack.c.bf16 %v2298, %v2297
      %v2323 = vpack.c.bf16 %v2300, %v2299
      %v2324 = vpack.c.bf16 %v2302, %v2301
      %v2325 = vpack.c.bf16 %v2304, %v2303
      %v2326 = vpack.c.bf16 %v2306, %v2305
      %v2327 = vpack.c.bf16 %v2308, %v2307
      %v2328 = vpack.c.bf16 %v2310, %v2309
      %v2329 = vpack.c.bf16 %v2312, %v2311
      %v2330 = vpack.c.bf16 %v2314, %v2313
      %v2331 = vld [vmem:[%s3] sm:$0xf]
      %v2332 = vld [vmem:[%s3 + $0x4] sm:$0xf]
      %v2333 = vld [vmem:[%s3 + $0x8] sm:$0xf]
      %v2334 = vld [vmem:[%s3 + $0xc] sm:$0xf]
      %v2335 = vld [vmem:[%s3 + $0x10] sm:$0xf]
      %v2336 = vld [vmem:[%s3 + $0x14] sm:$0xf]
      %v2337 = vld [vmem:[%s3 + $0x18] sm:$0xf]
      %v2338 = vld [vmem:[%s3 + $0x1c] sm:$0xf]
      %v2339 = vld [vmem:[%s3 + $0x20] sm:$0xf]
      %v2340 = vld [vmem:[%s3 + $0x24] sm:$0xf]
      %v2341 = vld [vmem:[%s3 + $0x28] sm:$0xf]
      %v2342 = vld [vmem:[%s3 + $0x2c] sm:$0xf]
      %v2343 = vld [vmem:[%s3 + $0x30] sm:$0xf]
      %v2344 = vld [vmem:[%s3 + $0x34] sm:$0xf]
      %v2345 = vld [vmem:[%s3 + $0x38] sm:$0xf]
      %v2346 = vld [vmem:[%s3 + $0x3c] sm:$0xf]
      %v2347 = vld [vmem:[#allocation3 + $0x1] sm:$0xff]
      %v2348 = vld [vmem:[#allocation3 + $0x9] sm:$0xff]
      %v2349 = vld [vmem:[#allocation3 + $0x19] sm:$0xff]
      %v2350 = vld [vmem:[#allocation3 + $0x21] sm:$0xff]
      %v2351 = vld [vmem:[#allocation3 + $0x31] sm:$0xff]
      %v2352 = vld [vmem:[#allocation3 + $0x39] sm:$0xff]
      %v2353 = vld [vmem:[#allocation3 + $0x49] sm:$0xff]
      %v2354 = vld [vmem:[#allocation3 + $0x51] sm:$0xff]
      %v2355 = vld [vmem:[#allocation3 + $0x61] sm:$0xff]
      %v2356 = vld [vmem:[#allocation3 + $0x69] sm:$0xff]
      %v2357 = vld [vmem:[#allocation3 + $0x79] sm:$0xff]
      %v2358 = vld [vmem:[#allocation3 + $0x81] sm:$0xff]
      %v2359 = vld [vmem:[#allocation3 + $0x91] sm:$0xff]
      %v2360 = vld [vmem:[#allocation3 + $0x99] sm:$0xff]
      %v2361 = vld [vmem:[#allocation3 + $0xa9] sm:$0xff]
      %v2362 = vld [vmem:[#allocation3 + $0xb1] sm:$0xff]
      %v2363 = vld [vmem:[#allocation3 + $0xc1] sm:$0xff]
      %v2364 = vld [vmem:[#allocation3 + $0xc9] sm:$0xff]
      %v2365 = vld [vmem:[#allocation3 + $0xd9] sm:$0xff]
      %v2366 = vld [vmem:[#allocation3 + $0xe1] sm:$0xff]
      %v2367 = vld [vmem:[#allocation3 + $0xf1] sm:$0xff]
      %v2368 = vld [vmem:[#allocation3 + $0xf9] sm:$0xff]
      %v2369 = vld [vmem:[#allocation3 + $0x109] sm:$0xff]
      %v2370 = vld [vmem:[#allocation3 + $0x111] sm:$0xff]
      %v2371 = vld [vmem:[#allocation3 + $0x121] sm:$0xff]
      %v2372 = vld [vmem:[#allocation3 + $0x129] sm:$0xff]
      %v2373 = vld [vmem:[#allocation3 + $0x139] sm:$0xff]
      %v2374 = vld [vmem:[#allocation3 + $0x141] sm:$0xff]
      %v2375 = vld [vmem:[#allocation3 + $0x151] sm:$0xff]
      %v2376 = vld [vmem:[#allocation3 + $0x159] sm:$0xff]
      %v2377 = vld [vmem:[#allocation3 + $0x169] sm:$0xff]
      %v2378 = vld [vmem:[#allocation3 + $0x171] sm:$0xff]
      %v2379 = vpack.c.bf16 %v2348, %v2347
      %v2380 = vpack.c.bf16 %v2350, %v2349
      %v2381 = vpack.c.bf16 %v2352, %v2351
      %v2382 = vpack.c.bf16 %v2354, %v2353
      %v2383 = vpack.c.bf16 %v2356, %v2355
      %v2384 = vpack.c.bf16 %v2358, %v2357
      %v2385 = vpack.c.bf16 %v2360, %v2359
      %v2386 = vpack.c.bf16 %v2362, %v2361
      %v2387 = vpack.c.bf16 %v2364, %v2363
      %v2388 = vpack.c.bf16 %v2366, %v2365
      %v2389 = vpack.c.bf16 %v2368, %v2367
      %v2390 = vpack.c.bf16 %v2370, %v2369
      %v2391 = vpack.c.bf16 %v2372, %v2371
      %v2392 = vpack.c.bf16 %v2374, %v2373
      %v2393 = vpack.c.bf16 %v2376, %v2375
      %v2394 = vpack.c.bf16 %v2378, %v2377
      %s2395 = scalar_lea.vmem %s3, 64
      %v2396 = vld [vmem:[%s2395] sm:$0xf]
      %v2397 = vld [vmem:[%s2395 + $0x4] sm:$0xf]
      %v2398 = vld [vmem:[%s2395 + $0x8] sm:$0xf]
      %v2399 = vld [vmem:[%s2395 + $0xc] sm:$0xf]
      %v2400 = vld [vmem:[%s2395 + $0x10] sm:$0xf]
      %v2401 = vld [vmem:[%s2395 + $0x14] sm:$0xf]
      %v2402 = vld [vmem:[%s2395 + $0x18] sm:$0xf]
      %v2403 = vld [vmem:[%s2395 + $0x1c] sm:$0xf]
      %v2404 = vld [vmem:[%s2395 + $0x20] sm:$0xf]
      %v2405 = vld [vmem:[%s2395 + $0x24] sm:$0xf]
      %v2406 = vld [vmem:[%s2395 + $0x28] sm:$0xf]
      %v2407 = vld [vmem:[%s2395 + $0x2c] sm:$0xf]
      %v2408 = vld [vmem:[%s2395 + $0x30] sm:$0xf]
      %v2409 = vld [vmem:[%s2395 + $0x34] sm:$0xf]
      %v2410 = vld [vmem:[%s2395 + $0x38] sm:$0xf]
      %v2411 = vld [vmem:[%s2395 + $0x3c] sm:$0xf]
      %v2428 = vunpack.c.l.b16 %v2396
      %v2429 = vunpack.c.l.b16 %v2397
      %v2430 = vunpack.c.l.b16 %v2398
      %v2431 = vunpack.c.l.b16 %v2399
      %v2432 = vunpack.c.l.b16 %v2400
      %v2433 = vunpack.c.l.b16 %v2401
      %v2434 = vunpack.c.l.b16 %v2402
      %v2435 = vunpack.c.l.b16 %v2403
      %v2436 = vunpack.c.l.b16 %v2404
      %v2437 = vunpack.c.l.b16 %v2405
      %v2438 = vunpack.c.l.b16 %v2406
      %v2439 = vunpack.c.l.b16 %v2407
      %v2440 = vunpack.c.l.b16 %v2408
      %v2441 = vunpack.c.l.b16 %v2409
      %v2442 = vunpack.c.l.b16 %v2410
      %v2443 = vunpack.c.l.b16 %v2411
      %v2444 = vpack.c.b16 %v2429, %v2428
      %v2445 = vpack.c.b16 %v2431, %v2430
      %v2446 = vpack.c.b16 %v2433, %v2432
      %v2447 = vpack.c.b16 %v2435, %v2434
      %v2448 = vpack.c.b16 %v2437, %v2436
      %v2449 = vpack.c.b16 %v2439, %v2438
      %v2450 = vpack.c.b16 %v2441, %v2440
      %v2451 = vpack.c.b16 %v2443, %v2442
      %2460 = vmatprep.subr.bf16.mxu0 0
      %2461 = vmatpush1.bf16.msra.mxu0 %v2451
      %2462 = vmatprep.subr.bf16.mxu0 0
      %2463 = vmatpush1.bf16.msra.mxu0 %v2450
      %2464 = vmatprep.subr.bf16.mxu0 0
      %2465 = vmatpush1.bf16.msra.mxu0 %v2449
      %2466 = vmatprep.subr.bf16.mxu0 0
      %2467 = vmatpush1.bf16.msra.mxu0 %v2448
      %2468 = vmatprep.subr.bf16.mxu0 0
      %2469 = vmatpush1.bf16.msra.mxu0 %v2447
      %2470 = vmatprep.subr.bf16.mxu0 0
      %2471 = vmatpush1.bf16.msra.mxu0 %v2446
      %2472 = vmatprep.subr.bf16.mxu0 0
      %2473 = vmatpush1.bf16.msra.mxu0 %v2445
      %2474 = vmatprep.subr.bf16.mxu0 0
      %2475 = vmatpush1.bf16.msra.mxu0 %v2444
      %2476 = vmatprep.subr.bf16.mxu0 0
      %2477 = vmatpush2.bf16.msra.mxu0 0
      %2478 = vmatprep.subr.bf16.mxu0 0
      %2479 = vmatpush2.bf16.msra.mxu0 0
      %2480 = vmatprep.subr.bf16.mxu0 0
      %2481 = vmatpush2.bf16.msra.mxu0 0
      %2482 = vmatprep.subr.bf16.mxu0 0
      %2483 = vmatpush2.bf16.msra.mxu0 0
      %2484 = vmatprep.subr.bf16.mxu0 0
      %2485 = vmatpush2.bf16.msra.mxu0 0
      %2486 = vmatprep.subr.bf16.mxu0 0
      %2487 = vmatpush2.bf16.msra.mxu0 0
      %2488 = vmatprep.subr.bf16.mxu0 0
      %2489 = vmatpush2.bf16.msra.mxu0 0
      %2490 = vmatprep.subr.bf16.mxu0 0
      %2491 = vmatpush2.bf16.msra.mxu0 0
      %2492 = vmatprep.mubr.bf16.mxu0 0
      %2493 = vmatmul.mubr.bf16.gmra.mxu0 %v2379
      %v2494 = vpop.f32.mrf.mxu0
      %v2495 = vadd.f32 0.0, %v2494
      %v2496 = vpop.f32.mrf.mxu0
      %v2497 = vpop.f32.mrf.mxu0
      %v2498 = vadd.f32 0.0, %v2497
      %v2499 = vpop.f32.mrf.mxu0
      %2500 = vmatprep.mubr.bf16.mxu0 0
      %2501 = vmatmul.mubr.bf16.gmra.mxu0 %v2380
      %v2502 = vpop.f32.mrf.mxu0
      %v2503 = vadd.f32 0.0, %v2502
      %v2504 = vpop.f32.mrf.mxu0
      %v2505 = vpop.f32.mrf.mxu0
      %v2506 = vadd.f32 0.0, %v2505
      %v2507 = vpop.f32.mrf.mxu0
      %2508 = vmatprep.mubr.bf16.mxu0 0
      %2509 = vmatmul.mubr.bf16.gmra.mxu0 %v2381
      %v2510 = vpop.f32.mrf.mxu0
      %v2511 = vadd.f32 0.0, %v2510
      %v2512 = vpop.f32.mrf.mxu0
      %v2513 = vpop.f32.mrf.mxu0
      %v2514 = vadd.f32 0.0, %v2513
      %v2515 = vpop.f32.mrf.mxu0
      %2516 = vmatprep.mubr.bf16.mxu0 0
      %2517 = vmatmul.mubr.bf16.gmra.mxu0 %v2382
      %v2518 = vpop.f32.mrf.mxu0
      %v2519 = vadd.f32 0.0, %v2518
      %v2520 = vpop.f32.mrf.mxu0
      %v2521 = vpop.f32.mrf.mxu0
      %v2522 = vadd.f32 0.0, %v2521
      %v2523 = vpop.f32.mrf.mxu0
      %2524 = vmatprep.mubr.bf16.mxu0 0
      %2525 = vmatmul.mubr.bf16.gmra.mxu0 %v2383
      %v2526 = vpop.f32.mrf.mxu0
      %v2527 = vadd.f32 0.0, %v2526
      %v2528 = vpop.f32.mrf.mxu0
      %v2529 = vpop.f32.mrf.mxu0
      %v2530 = vadd.f32 0.0, %v2529
      %v2531 = vpop.f32.mrf.mxu0
      %2532 = vmatprep.mubr.bf16.mxu0 0
      %2533 = vmatmul.mubr.bf16.gmra.mxu0 %v2384
      %v2534 = vpop.f32.mrf.mxu0
      %v2535 = vadd.f32 0.0, %v2534
      %v2536 = vpop.f32.mrf.mxu0
      %v2537 = vpop.f32.mrf.mxu0
      %v2538 = vadd.f32 0.0, %v2537
      %v2539 = vpop.f32.mrf.mxu0
      %2540 = vmatprep.mubr.bf16.mxu0 0
      %2541 = vmatmul.mubr.bf16.gmra.mxu0 %v2385
      %v2542 = vpop.f32.mrf.mxu0
      %v2543 = vadd.f32 0.0, %v2542
      %v2544 = vpop.f32.mrf.mxu0
      %v2545 = vpop.f32.mrf.mxu0
      %v2546 = vadd.f32 0.0, %v2545
      %v2547 = vpop.f32.mrf.mxu0
      %2548 = vmatprep.mubr.bf16.mxu0 0
      %2549 = vmatmul.mubr.bf16.gmra.mxu0 %v2386
      %v2550 = vpop.f32.mrf.mxu0
      %v2551 = vadd.f32 0.0, %v2550
      %v2552 = vpop.f32.mrf.mxu0
      %v2553 = vpop.f32.mrf.mxu0
      %v2554 = vadd.f32 0.0, %v2553
      %v2555 = vpop.f32.mrf.mxu0
      %2556 = vmatprep.mubr.bf16.mxu0 0
      %2557 = vmatmul.mubr.bf16.gmra.mxu0 %v2387
      %v2558 = vpop.f32.mrf.mxu0
      %v2559 = vadd.f32 0.0, %v2558
      %v2560 = vpop.f32.mrf.mxu0
      %v2561 = vpop.f32.mrf.mxu0
      %v2562 = vadd.f32 0.0, %v2561
      %v2563 = vpop.f32.mrf.mxu0
      %2564 = vmatprep.mubr.bf16.mxu0 0
      %2565 = vmatmul.mubr.bf16.gmra.mxu0 %v2388
      %v2566 = vpop.f32.mrf.mxu0
      %v2567 = vadd.f32 0.0, %v2566
      %v2568 = vpop.f32.mrf.mxu0
      %v2569 = vpop.f32.mrf.mxu0
      %v2570 = vadd.f32 0.0, %v2569
      %v2571 = vpop.f32.mrf.mxu0
      %2572 = vmatprep.mubr.bf16.mxu0 0
      %2573 = vmatmul.mubr.bf16.gmra.mxu0 %v2389
      %v2574 = vpop.f32.mrf.mxu0
      %v2575 = vadd.f32 0.0, %v2574
      %v2576 = vpop.f32.mrf.mxu0
      %v2577 = vpop.f32.mrf.mxu0
      %v2578 = vadd.f32 0.0, %v2577
      %v2579 = vpop.f32.mrf.mxu0
      %2580 = vmatprep.mubr.bf16.mxu0 0
      %2581 = vmatmul.mubr.bf16.gmra.mxu0 %v2390
      %v2582 = vpop.f32.mrf.mxu0
      %v2583 = vadd.f32 0.0, %v2582
      %v2584 = vpop.f32.mrf.mxu0
      %v2585 = vpop.f32.mrf.mxu0
      %v2586 = vadd.f32 0.0, %v2585
      %v2587 = vpop.f32.mrf.mxu0
      %2588 = vmatprep.mubr.bf16.mxu0 0
      %2589 = vmatmul.mubr.bf16.gmra.mxu0 %v2391
      %v2590 = vpop.f32.mrf.mxu0
      %v2591 = vadd.f32 0.0, %v2590
      %v2592 = vpop.f32.mrf.mxu0
      %v2593 = vpop.f32.mrf.mxu0
      %v2594 = vadd.f32 0.0, %v2593
      %v2595 = vpop.f32.mrf.mxu0
      %2596 = vmatprep.mubr.bf16.mxu0 0
      %2597 = vmatmul.mubr.bf16.gmra.mxu0 %v2392
      %v2598 = vpop.f32.mrf.mxu0
      %v2599 = vadd.f32 0.0, %v2598
      %v2600 = vpop.f32.mrf.mxu0
      %v2601 = vpop.f32.mrf.mxu0
      %v2602 = vadd.f32 0.0, %v2601
      %v2603 = vpop.f32.mrf.mxu0
      %2604 = vmatprep.mubr.bf16.mxu0 0
      %2605 = vmatmul.mubr.bf16.gmra.mxu0 %v2393
      %v2606 = vpop.f32.mrf.mxu0
      %v2607 = vadd.f32 0.0, %v2606
      %v2608 = vpop.f32.mrf.mxu0
      %v2609 = vpop.f32.mrf.mxu0
      %v2610 = vadd.f32 0.0, %v2609
      %v2611 = vpop.f32.mrf.mxu0
      %2612 = vmatprep.mubr.bf16.mxu0 0
      %2613 = vmatmul.mubr.bf16.gmra.mxu0 %v2394
      %v2614 = vpop.f32.mrf.mxu0
      %v2615 = vadd.f32 0.0, %v2614
      %v2616 = vpop.f32.mrf.mxu0
      %v2617 = vpop.f32.mrf.mxu0
      %v2618 = vadd.f32 0.0, %v2617
      %v2619 = vpop.f32.mrf.mxu0
      %2620 = vdwg.mxu0
      %v2637 = vunpack.c.l.b16 %v2331
      %v2638 = vunpack.c.l.b16 %v2332
      %v2639 = vunpack.c.l.b16 %v2333
      %v2640 = vunpack.c.l.b16 %v2334
      %v2641 = vunpack.c.l.b16 %v2335
      %v2642 = vunpack.c.l.b16 %v2336
      %v2643 = vunpack.c.l.b16 %v2337
      %v2644 = vunpack.c.l.b16 %v2338
      %v2645 = vunpack.c.l.b16 %v2339
      %v2646 = vunpack.c.l.b16 %v2340
      %v2647 = vunpack.c.l.b16 %v2341
      %v2648 = vunpack.c.l.b16 %v2342
      %v2649 = vunpack.c.l.b16 %v2343
      %v2650 = vunpack.c.l.b16 %v2344
      %v2651 = vunpack.c.l.b16 %v2345
      %v2652 = vunpack.c.l.b16 %v2346
      %v2653 = vpack.c.b16 %v2638, %v2637
      %v2654 = vpack.c.b16 %v2640, %v2639
      %v2655 = vpack.c.b16 %v2642, %v2641
      %v2656 = vpack.c.b16 %v2644, %v2643
      %v2657 = vpack.c.b16 %v2646, %v2645
      %v2658 = vpack.c.b16 %v2648, %v2647
      %v2659 = vpack.c.b16 %v2650, %v2649
      %v2660 = vpack.c.b16 %v2652, %v2651
      %2669 = vmatprep.subr.bf16.mxu0 0
      %2670 = vmatpush1.bf16.msra.mxu0 %v2660
      %2671 = vmatprep.subr.bf16.mxu0 0
      %2672 = vmatpush1.bf16.msra.mxu0 %v2659
      %2673 = vmatprep.subr.bf16.mxu0 0
      %2674 = vmatpush1.bf16.msra.mxu0 %v2658
      %2675 = vmatprep.subr.bf16.mxu0 0
      %2676 = vmatpush1.bf16.msra.mxu0 %v2657
      %2677 = vmatprep.subr.bf16.mxu0 0
      %2678 = vmatpush1.bf16.msra.mxu0 %v2656
      %2679 = vmatprep.subr.bf16.mxu0 0
      %2680 = vmatpush1.bf16.msra.mxu0 %v2655
      %2681 = vmatprep.subr.bf16.mxu0 0
      %2682 = vmatpush1.bf16.msra.mxu0 %v2654
      %2683 = vmatprep.subr.bf16.mxu0 0
      %2684 = vmatpush1.bf16.msra.mxu0 %v2653
      %2685 = vmatprep.subr.bf16.mxu0 0
      %2686 = vmatpush2.bf16.msra.mxu0 0
      %2687 = vmatprep.subr.bf16.mxu0 0
      %2688 = vmatpush2.bf16.msra.mxu0 0
      %2689 = vmatprep.subr.bf16.mxu0 0
      %2690 = vmatpush2.bf16.msra.mxu0 0
      %2691 = vmatprep.subr.bf16.mxu0 0
      %2692 = vmatpush2.bf16.msra.mxu0 0
      %2693 = vmatprep.subr.bf16.mxu0 0
      %2694 = vmatpush2.bf16.msra.mxu0 0
      %2695 = vmatprep.subr.bf16.mxu0 0
      %2696 = vmatpush2.bf16.msra.mxu0 0
      %2697 = vmatprep.subr.bf16.mxu0 0
      %2698 = vmatpush2.bf16.msra.mxu0 0
      %2699 = vmatprep.subr.bf16.mxu0 0
      %2700 = vmatpush2.bf16.msra.mxu0 0
      %2701 = vmatprep.mubr.bf16.mxu0 0
      %2702 = vmatmul.mubr.bf16.gmra.mxu0 %v2315
      %v2703 = vpop.f32.mrf.mxu0
      %v2704 = vadd.f32 %v2495, %v2703
      %v2705 = vpop.f32.mrf.mxu0
      %v2706 = vpop.f32.mrf.mxu0
      %v2707 = vadd.f32 %v2498, %v2706
      %v2708 = vpop.f32.mrf.mxu0
      %2709 = vmatprep.mubr.bf16.mxu0 0
      %2710 = vmatmul.mubr.bf16.gmra.mxu0 %v2316
      %v2711 = vpop.f32.mrf.mxu0
      %v2712 = vadd.f32 %v2503, %v2711
      %v2713 = vpop.f32.mrf.mxu0
      %v2714 = vpop.f32.mrf.mxu0
      %v2715 = vadd.f32 %v2506, %v2714
      %v2716 = vpop.f32.mrf.mxu0
      %2717 = vmatprep.mubr.bf16.mxu0 0
      %2718 = vmatmul.mubr.bf16.gmra.mxu0 %v2317
      %v2719 = vpop.f32.mrf.mxu0
      %v2720 = vadd.f32 %v2511, %v2719
      %v2721 = vpop.f32.mrf.mxu0
      %v2722 = vpop.f32.mrf.mxu0
      %v2723 = vadd.f32 %v2514, %v2722
      %v2724 = vpop.f32.mrf.mxu0
      %2725 = vmatprep.mubr.bf16.mxu0 0
      %2726 = vmatmul.mubr.bf16.gmra.mxu0 %v2318
      %v2727 = vpop.f32.mrf.mxu0
      %v2728 = vadd.f32 %v2519, %v2727
      %v2729 = vpop.f32.mrf.mxu0
      %v2730 = vpop.f32.mrf.mxu0
      %v2731 = vadd.f32 %v2522, %v2730
      %v2732 = vpop.f32.mrf.mxu0
      %2733 = vmatprep.mubr.bf16.mxu0 0
      %2734 = vmatmul.mubr.bf16.gmra.mxu0 %v2319
      %v2735 = vpop.f32.mrf.mxu0
      %v2736 = vadd.f32 %v2527, %v2735
      %v2737 = vpop.f32.mrf.mxu0
      %v2738 = vpop.f32.mrf.mxu0
      %v2739 = vadd.f32 %v2530, %v2738
      %v2740 = vpop.f32.mrf.mxu0
      %2741 = vmatprep.mubr.bf16.mxu0 0
      %2742 = vmatmul.mubr.bf16.gmra.mxu0 %v2320
      %v2743 = vpop.f32.mrf.mxu0
      %v2744 = vadd.f32 %v2535, %v2743
      %v2745 = vpop.f32.mrf.mxu0
      %v2746 = vpop.f32.mrf.mxu0
      %v2747 = vadd.f32 %v2538, %v2746
      %v2748 = vpop.f32.mrf.mxu0
      %2749 = vmatprep.mubr.bf16.mxu0 0
      %2750 = vmatmul.mubr.bf16.gmra.mxu0 %v2321
      %v2751 = vpop.f32.mrf.mxu0
      %v2752 = vadd.f32 %v2543, %v2751
      %v2753 = vpop.f32.mrf.mxu0
      %v2754 = vpop.f32.mrf.mxu0
      %v2755 = vadd.f32 %v2546, %v2754
      %v2756 = vpop.f32.mrf.mxu0
      %2757 = vmatprep.mubr.bf16.mxu0 0
      %2758 = vmatmul.mubr.bf16.gmra.mxu0 %v2322
      %v2759 = vpop.f32.mrf.mxu0
      %v2760 = vadd.f32 %v2551, %v2759
      %v2761 = vpop.f32.mrf.mxu0
      %v2762 = vpop.f32.mrf.mxu0
      %v2763 = vadd.f32 %v2554, %v2762
      %v2764 = vpop.f32.mrf.mxu0
      %2765 = vmatprep.mubr.bf16.mxu0 0
      %2766 = vmatmul.mubr.bf16.gmra.mxu0 %v2323
      %v2767 = vpop.f32.mrf.mxu0
      %v2768 = vadd.f32 %v2559, %v2767
      %v2769 = vpop.f32.mrf.mxu0
      %v2770 = vpop.f32.mrf.mxu0
      %v2771 = vadd.f32 %v2562, %v2770
      %v2772 = vpop.f32.mrf.mxu0
      %2773 = vmatprep.mubr.bf16.mxu0 0
      %2774 = vmatmul.mubr.bf16.gmra.mxu0 %v2324
      %v2775 = vpop.f32.mrf.mxu0
      %v2776 = vadd.f32 %v2567, %v2775
      %v2777 = vpop.f32.mrf.mxu0
      %v2778 = vpop.f32.mrf.mxu0
      %v2779 = vadd.f32 %v2570, %v2778
      %v2780 = vpop.f32.mrf.mxu0
      %2781 = vmatprep.mubr.bf16.mxu0 0
      %2782 = vmatmul.mubr.bf16.gmra.mxu0 %v2325
      %v2783 = vpop.f32.mrf.mxu0
      %v2784 = vadd.f32 %v2575, %v2783
      %v2785 = vpop.f32.mrf.mxu0
      %v2786 = vpop.f32.mrf.mxu0
      %v2787 = vadd.f32 %v2578, %v2786
      %v2788 = vpop.f32.mrf.mxu0
      %2789 = vmatprep.mubr.bf16.mxu0 0
      %2790 = vmatmul.mubr.bf16.gmra.mxu0 %v2326
      %v2791 = vpop.f32.mrf.mxu0
      %v2792 = vadd.f32 %v2583, %v2791
      %v2793 = vpop.f32.mrf.mxu0
      %v2794 = vpop.f32.mrf.mxu0
      %v2795 = vadd.f32 %v2586, %v2794
      %v2796 = vpop.f32.mrf.mxu0
      %2797 = vmatprep.mubr.bf16.mxu0 0
      %2798 = vmatmul.mubr.bf16.gmra.mxu0 %v2327
      %v2799 = vpop.f32.mrf.mxu0
      %v2800 = vadd.f32 %v2591, %v2799
      %v2801 = vpop.f32.mrf.mxu0
      %v2802 = vpop.f32.mrf.mxu0
      %v2803 = vadd.f32 %v2594, %v2802
      %v2804 = vpop.f32.mrf.mxu0
      %2805 = vmatprep.mubr.bf16.mxu0 0
      %2806 = vmatmul.mubr.bf16.gmra.mxu0 %v2328
      %v2807 = vpop.f32.mrf.mxu0
      %v2808 = vadd.f32 %v2599, %v2807
      %v2809 = vpop.f32.mrf.mxu0
      %v2810 = vpop.f32.mrf.mxu0
      %v2811 = vadd.f32 %v2602, %v2810
      %v2812 = vpop.f32.mrf.mxu0
      %2813 = vmatprep.mubr.bf16.mxu0 0
      %2814 = vmatmul.mubr.bf16.gmra.mxu0 %v2329
      %v2815 = vpop.f32.mrf.mxu0
      %v2816 = vadd.f32 %v2607, %v2815
      %v2817 = vpop.f32.mrf.mxu0
      %v2818 = vpop.f32.mrf.mxu0
      %v2819 = vadd.f32 %v2610, %v2818
      %v2820 = vpop.f32.mrf.mxu0
      %2821 = vmatprep.mubr.bf16.mxu0 0
      %2822 = vmatmul.mubr.bf16.gmra.mxu0 %v2330
      %v2823 = vpop.f32.mrf.mxu0
      %v2824 = vadd.f32 %v2615, %v2823
      %v2825 = vpop.f32.mrf.mxu0
      %v2826 = vpop.f32.mrf.mxu0
      %v2827 = vadd.f32 %v2618, %v2826
      %v2828 = vpop.f32.mrf.mxu0
      %2829 = vdwg.mxu0
      %v2830 = vld [vmem:[#allocation3 + $0x2] sm:$0xff]
      %v2831 = vld [vmem:[#allocation3 + $0xa] sm:$0xff]
      %v2832 = vld [vmem:[#allocation3 + $0x1a] sm:$0xff]
      %v2833 = vld [vmem:[#allocation3 + $0x22] sm:$0xff]
      %v2834 = vld [vmem:[#allocation3 + $0x32] sm:$0xff]
      %v2835 = vld [vmem:[#allocation3 + $0x3a] sm:$0xff]
      %v2836 = vld [vmem:[#allocation3 + $0x4a] sm:$0xff]
      %v2837 = vld [vmem:[#allocation3 + $0x52] sm:$0xff]
      %v2838 = vld [vmem:[#allocation3 + $0x62] sm:$0xff]
      %v2839 = vld [vmem:[#allocation3 + $0x6a] sm:$0xff]
      %v2840 = vld [vmem:[#allocation3 + $0x7a] sm:$0xff]
      %v2841 = vld [vmem:[#allocation3 + $0x82] sm:$0xff]
      %v2842 = vld [vmem:[#allocation3 + $0x92] sm:$0xff]
      %v2843 = vld [vmem:[#allocation3 + $0x9a] sm:$0xff]
      %v2844 = vld [vmem:[#allocation3 + $0xaa] sm:$0xff]
      %v2845 = vld [vmem:[#allocation3 + $0xb2] sm:$0xff]
      %v2846 = vld [vmem:[#allocation3 + $0xc2] sm:$0xff]
      %v2847 = vld [vmem:[#allocation3 + $0xca] sm:$0xff]
      %v2848 = vld [vmem:[#allocation3 + $0xda] sm:$0xff]
      %v2849 = vld [vmem:[#allocation3 + $0xe2] sm:$0xff]
      %v2850 = vld [vmem:[#allocation3 + $0xf2] sm:$0xff]
      %v2851 = vld [vmem:[#allocation3 + $0xfa] sm:$0xff]
      %v2852 = vld [vmem:[#allocation3 + $0x10a] sm:$0xff]
      %v2853 = vld [vmem:[#allocation3 + $0x112] sm:$0xff]
      %v2854 = vld [vmem:[#allocation3 + $0x122] sm:$0xff]
      %v2855 = vld [vmem:[#allocation3 + $0x12a] sm:$0xff]
      %v2856 = vld [vmem:[#allocation3 + $0x13a] sm:$0xff]
      %v2857 = vld [vmem:[#allocation3 + $0x142] sm:$0xff]
      %v2858 = vld [vmem:[#allocation3 + $0x152] sm:$0xff]
      %v2859 = vld [vmem:[#allocation3 + $0x15a] sm:$0xff]
      %v2860 = vld [vmem:[#allocation3 + $0x16a] sm:$0xff]
      %v2861 = vld [vmem:[#allocation3 + $0x172] sm:$0xff]
      %v2862 = vpack.c.bf16 %v2831, %v2830
      %v2863 = vpack.c.bf16 %v2833, %v2832
      %v2864 = vpack.c.bf16 %v2835, %v2834
      %v2865 = vpack.c.bf16 %v2837, %v2836
      %v2866 = vpack.c.bf16 %v2839, %v2838
      %v2867 = vpack.c.bf16 %v2841, %v2840
      %v2868 = vpack.c.bf16 %v2843, %v2842
      %v2869 = vpack.c.bf16 %v2845, %v2844
      %v2870 = vpack.c.bf16 %v2847, %v2846
      %v2871 = vpack.c.bf16 %v2849, %v2848
      %v2872 = vpack.c.bf16 %v2851, %v2850
      %v2873 = vpack.c.bf16 %v2853, %v2852
      %v2874 = vpack.c.bf16 %v2855, %v2854
      %v2875 = vpack.c.bf16 %v2857, %v2856
      %v2876 = vpack.c.bf16 %v2859, %v2858
      %v2877 = vpack.c.bf16 %v2861, %v2860
      %s2878 = scalar_lea.vmem %s3, 128
      %v2879 = vld [vmem:[%s2878] sm:$0xf]
      %v2880 = vld [vmem:[%s2878 + $0x4] sm:$0xf]
      %v2881 = vld [vmem:[%s2878 + $0x8] sm:$0xf]
      %v2882 = vld [vmem:[%s2878 + $0xc] sm:$0xf]
      %v2883 = vld [vmem:[%s2878 + $0x10] sm:$0xf]
      %v2884 = vld [vmem:[%s2878 + $0x14] sm:$0xf]
      %v2885 = vld [vmem:[%s2878 + $0x18] sm:$0xf]
      %v2886 = vld [vmem:[%s2878 + $0x1c] sm:$0xf]
      %v2887 = vld [vmem:[%s2878 + $0x20] sm:$0xf]
      %v2888 = vld [vmem:[%s2878 + $0x24] sm:$0xf]
      %v2889 = vld [vmem:[%s2878 + $0x28] sm:$0xf]
      %v2890 = vld [vmem:[%s2878 + $0x2c] sm:$0xf]
      %v2891 = vld [vmem:[%s2878 + $0x30] sm:$0xf]
      %v2892 = vld [vmem:[%s2878 + $0x34] sm:$0xf]
      %v2893 = vld [vmem:[%s2878 + $0x38] sm:$0xf]
      %v2894 = vld [vmem:[%s2878 + $0x3c] sm:$0xf]
      %v2911 = vunpack.c.l.b16 %v2879
      %v2912 = vunpack.c.l.b16 %v2880
      %v2913 = vunpack.c.l.b16 %v2881
      %v2914 = vunpack.c.l.b16 %v2882
      %v2915 = vunpack.c.l.b16 %v2883
      %v2916 = vunpack.c.l.b16 %v2884
      %v2917 = vunpack.c.l.b16 %v2885
      %v2918 = vunpack.c.l.b16 %v2886
      %v2919 = vunpack.c.l.b16 %v2887
      %v2920 = vunpack.c.l.b16 %v2888
      %v2921 = vunpack.c.l.b16 %v2889
      %v2922 = vunpack.c.l.b16 %v2890
      %v2923 = vunpack.c.l.b16 %v2891
      %v2924 = vunpack.c.l.b16 %v2892
      %v2925 = vunpack.c.l.b16 %v2893
      %v2926 = vunpack.c.l.b16 %v2894
      %v2927 = vpack.c.b16 %v2912, %v2911
      %v2928 = vpack.c.b16 %v2914, %v2913
      %v2929 = vpack.c.b16 %v2916, %v2915
      %v2930 = vpack.c.b16 %v2918, %v2917
      %v2931 = vpack.c.b16 %v2920, %v2919
      %v2932 = vpack.c.b16 %v2922, %v2921
      %v2933 = vpack.c.b16 %v2924, %v2923
      %v2934 = vpack.c.b16 %v2926, %v2925
      %2943 = vmatprep.subr.bf16.mxu0 0
      %2944 = vmatpush1.bf16.msra.mxu0 %v2934
      %2945 = vmatprep.subr.bf16.mxu0 0
      %2946 = vmatpush1.bf16.msra.mxu0 %v2933
      %2947 = vmatprep.subr.bf16.mxu0 0
      %2948 = vmatpush1.bf16.msra.mxu0 %v2932
      %2949 = vmatprep.subr.bf16.mxu0 0
      %2950 = vmatpush1.bf16.msra.mxu0 %v2931
      %2951 = vmatprep.subr.bf16.mxu0 0
      %2952 = vmatpush1.bf16.msra.mxu0 %v2930
      %2953 = vmatprep.subr.bf16.mxu0 0
      %2954 = vmatpush1.bf16.msra.mxu0 %v2929
      %2955 = vmatprep.subr.bf16.mxu0 0
      %2956 = vmatpush1.bf16.msra.mxu0 %v2928
      %2957 = vmatprep.subr.bf16.mxu0 0
      %2958 = vmatpush1.bf16.msra.mxu0 %v2927
      %2959 = vmatprep.subr.bf16.mxu0 0
      %2960 = vmatpush2.bf16.msra.mxu0 0
      %2961 = vmatprep.subr.bf16.mxu0 0
      %2962 = vmatpush2.bf16.msra.mxu0 0
      %2963 = vmatprep.subr.bf16.mxu0 0
      %2964 = vmatpush2.bf16.msra.mxu0 0
      %2965 = vmatprep.subr.bf16.mxu0 0
      %2966 = vmatpush2.bf16.msra.mxu0 0
      %2967 = vmatprep.subr.bf16.mxu0 0
      %2968 = vmatpush2.bf16.msra.mxu0 0
      %2969 = vmatprep.subr.bf16.mxu0 0
      %2970 = vmatpush2.bf16.msra.mxu0 0
      %2971 = vmatprep.subr.bf16.mxu0 0
      %2972 = vmatpush2.bf16.msra.mxu0 0
      %2973 = vmatprep.subr.bf16.mxu0 0
      %2974 = vmatpush2.bf16.msra.mxu0 0
      %2975 = vmatprep.mubr.bf16.mxu0 0
      %2976 = vmatmul.mubr.bf16.gmra.mxu0 %v2862
      %v2977 = vpop.f32.mrf.mxu0
      %v2978 = vadd.f32 0.0, %v2977
      %v2979 = vpop.f32.mrf.mxu0
      %v2980 = vpop.f32.mrf.mxu0
      %v2981 = vadd.f32 0.0, %v2980
      %v2982 = vpop.f32.mrf.mxu0
      %2983 = vmatprep.mubr.bf16.mxu0 0
      %2984 = vmatmul.mubr.bf16.gmra.mxu0 %v2863
      %v2985 = vpop.f32.mrf.mxu0
      %v2986 = vadd.f32 0.0, %v2985
      %v2987 = vpop.f32.mrf.mxu0
      %v2988 = vpop.f32.mrf.mxu0
      %v2989 = vadd.f32 0.0, %v2988
      %v2990 = vpop.f32.mrf.mxu0
      %2991 = vmatprep.mubr.bf16.mxu0 0
      %2992 = vmatmul.mubr.bf16.gmra.mxu0 %v2864
      %v2993 = vpop.f32.mrf.mxu0
      %v2994 = vadd.f32 0.0, %v2993
      %v2995 = vpop.f32.mrf.mxu0
      %v2996 = vpop.f32.mrf.mxu0
      %v2997 = vadd.f32 0.0, %v2996
      %v2998 = vpop.f32.mrf.mxu0
      %2999 = vmatprep.mubr.bf16.mxu0 0
      %3000 = vmatmul.mubr.bf16.gmra.mxu0 %v2865
      %v3001 = vpop.f32.mrf.mxu0
      %v3002 = vadd.f32 0.0, %v3001
      %v3003 = vpop.f32.mrf.mxu0
      %v3004 = vpop.f32.mrf.mxu0
      %v3005 = vadd.f32 0.0, %v3004
      %v3006 = vpop.f32.mrf.mxu0
      %3007 = vmatprep.mubr.bf16.mxu0 0
      %3008 = vmatmul.mubr.bf16.gmra.mxu0 %v2866
      %v3009 = vpop.f32.mrf.mxu0
      %v3010 = vadd.f32 0.0, %v3009
      %v3011 = vpop.f32.mrf.mxu0
      %v3012 = vpop.f32.mrf.mxu0
      %v3013 = vadd.f32 0.0, %v3012
      %v3014 = vpop.f32.mrf.mxu0
      %3015 = vmatprep.mubr.bf16.mxu0 0
      %3016 = vmatmul.mubr.bf16.gmra.mxu0 %v2867
      %v3017 = vpop.f32.mrf.mxu0
      %v3018 = vadd.f32 0.0, %v3017
      %v3019 = vpop.f32.mrf.mxu0
      %v3020 = vpop.f32.mrf.mxu0
      %v3021 = vadd.f32 0.0, %v3020
      %v3022 = vpop.f32.mrf.mxu0
      %3023 = vmatprep.mubr.bf16.mxu0 0
      %3024 = vmatmul.mubr.bf16.gmra.mxu0 %v2868
      %v3025 = vpop.f32.mrf.mxu0
      %v3026 = vadd.f32 0.0, %v3025
      %v3027 = vpop.f32.mrf.mxu0
      %v3028 = vpop.f32.mrf.mxu0
      %v3029 = vadd.f32 0.0, %v3028
      %v3030 = vpop.f32.mrf.mxu0
      %3031 = vmatprep.mubr.bf16.mxu0 0
      %3032 = vmatmul.mubr.bf16.gmra.mxu0 %v2869
      %v3033 = vpop.f32.mrf.mxu0
      %v3034 = vadd.f32 0.0, %v3033
      %v3035 = vpop.f32.mrf.mxu0
      %v3036 = vpop.f32.mrf.mxu0
      %v3037 = vadd.f32 0.0, %v3036
      %v3038 = vpop.f32.mrf.mxu0
      %3039 = vmatprep.mubr.bf16.mxu0 0
      %3040 = vmatmul.mubr.bf16.gmra.mxu0 %v2870
      %v3041 = vpop.f32.mrf.mxu0
      %v3042 = vadd.f32 0.0, %v3041
      %v3043 = vpop.f32.mrf.mxu0
      %v3044 = vpop.f32.mrf.mxu0
      %v3045 = vadd.f32 0.0, %v3044
      %v3046 = vpop.f32.mrf.mxu0
      %3047 = vmatprep.mubr.bf16.mxu0 0
      %3048 = vmatmul.mubr.bf16.gmra.mxu0 %v2871
      %v3049 = vpop.f32.mrf.mxu0
      %v3050 = vadd.f32 0.0, %v3049
      %v3051 = vpop.f32.mrf.mxu0
      %v3052 = vpop.f32.mrf.mxu0
      %v3053 = vadd.f32 0.0, %v3052
      %v3054 = vpop.f32.mrf.mxu0
      %3055 = vmatprep.mubr.bf16.mxu0 0
      %3056 = vmatmul.mubr.bf16.gmra.mxu0 %v2872
      %v3057 = vpop.f32.mrf.mxu0
      %v3058 = vadd.f32 0.0, %v3057
      %v3059 = vpop.f32.mrf.mxu0
      %v3060 = vpop.f32.mrf.mxu0
      %v3061 = vadd.f32 0.0, %v3060
      %v3062 = vpop.f32.mrf.mxu0
      %3063 = vmatprep.mubr.bf16.mxu0 0
      %3064 = vmatmul.mubr.bf16.gmra.mxu0 %v2873
      %v3065 = vpop.f32.mrf.mxu0
      %v3066 = vadd.f32 0.0, %v3065
      %v3067 = vpop.f32.mrf.mxu0
      %v3068 = vpop.f32.mrf.mxu0
      %v3069 = vadd.f32 0.0, %v3068
      %v3070 = vpop.f32.mrf.mxu0
      %3071 = vmatprep.mubr.bf16.mxu0 0
      %3072 = vmatmul.mubr.bf16.gmra.mxu0 %v2874
      %v3073 = vpop.f32.mrf.mxu0
      %v3074 = vadd.f32 0.0, %v3073
      %v3075 = vpop.f32.mrf.mxu0
      %v3076 = vpop.f32.mrf.mxu0
      %v3077 = vadd.f32 0.0, %v3076
      %v3078 = vpop.f32.mrf.mxu0
      %3079 = vmatprep.mubr.bf16.mxu0 0
      %3080 = vmatmul.mubr.bf16.gmra.mxu0 %v2875
      %v3081 = vpop.f32.mrf.mxu0
      %v3082 = vadd.f32 0.0, %v3081
      %v3083 = vpop.f32.mrf.mxu0
      %v3084 = vpop.f32.mrf.mxu0
      %v3085 = vadd.f32 0.0, %v3084
      %v3086 = vpop.f32.mrf.mxu0
      %3087 = vmatprep.mubr.bf16.mxu0 0
      %3088 = vmatmul.mubr.bf16.gmra.mxu0 %v2876
      %v3089 = vpop.f32.mrf.mxu0
      %v3090 = vadd.f32 0.0, %v3089
      %v3091 = vpop.f32.mrf.mxu0
      %v3092 = vpop.f32.mrf.mxu0
      %v3093 = vadd.f32 0.0, %v3092
      %v3094 = vpop.f32.mrf.mxu0
      %3095 = vmatprep.mubr.bf16.mxu0 0
      %3096 = vmatmul.mubr.bf16.gmra.mxu0 %v2877
      %v3097 = vpop.f32.mrf.mxu0
      %v3098 = vadd.f32 0.0, %v3097
      %v3099 = vpop.f32.mrf.mxu0
      %v3100 = vpop.f32.mrf.mxu0
      %v3101 = vadd.f32 0.0, %v3100
      %v3102 = vpop.f32.mrf.mxu0
      %3103 = vdwg.mxu0
      %v3104 = vadd.f32 %v2704, %v2978
      %v3105 = vadd.f32 %v2707, %v2981
      %v3106 = vadd.f32 %v2712, %v2986
      %v3107 = vadd.f32 %v2715, %v2989
      %v3108 = vadd.f32 %v2720, %v2994
      %v3109 = vadd.f32 %v2723, %v2997
      %v3110 = vadd.f32 %v2728, %v3002
      %v3111 = vadd.f32 %v2731, %v3005
      %v3112 = vadd.f32 %v2736, %v3010
      %v3113 = vadd.f32 %v2739, %v3013
      %v3114 = vadd.f32 %v2744, %v3018
      %v3115 = vadd.f32 %v2747, %v3021
      %v3116 = vadd.f32 %v2752, %v3026
      %v3117 = vadd.f32 %v2755, %v3029
      %v3118 = vadd.f32 %v2760, %v3034
      %v3119 = vadd.f32 %v2763, %v3037
      %v3120 = vadd.f32 %v2768, %v3042
      %v3121 = vadd.f32 %v2771, %v3045
      %v3122 = vadd.f32 %v2776, %v3050
      %v3123 = vadd.f32 %v2779, %v3053
      %v3124 = vadd.f32 %v2784, %v3058
      %v3125 = vadd.f32 %v2787, %v3061
      %v3126 = vadd.f32 %v2792, %v3066
      %v3127 = vadd.f32 %v2795, %v3069
      %v3128 = vadd.f32 %v2800, %v3074
      %v3129 = vadd.f32 %v2803, %v3077
      %v3130 = vadd.f32 %v2808, %v3082
      %v3131 = vadd.f32 %v2811, %v3085
      %v3132 = vadd.f32 %v2816, %v3090
      %v3133 = vadd.f32 %v2819, %v3093
      %v3134 = vadd.f32 %v2824, %v3098
      %v3135 = vadd.f32 %v2827, %v3101
      %v3136 = vld [vmem:[%s2250] sm:$0xff]
      %v3137 = vld [vmem:[%s2250 + $0x8] sm:$0xff]
      %v3138 = vld [vmem:[%s2250 + $0x18] sm:$0xff]
      %v3139 = vld [vmem:[%s2250 + $0x20] sm:$0xff]
      %v3140 = vld [vmem:[%s2250 + $0x30] sm:$0xff]
      %v3141 = vld [vmem:[%s2250 + $0x38] sm:$0xff]
      %v3142 = vld [vmem:[%s2250 + $0x48] sm:$0xff]
      %v3143 = vld [vmem:[%s2250 + $0x50] sm:$0xff]
      %v3144 = vld [vmem:[%s2250 + $0x60] sm:$0xff]
      %v3145 = vld [vmem:[%s2250 + $0x68] sm:$0xff]
      %v3146 = vld [vmem:[%s2250 + $0x78] sm:$0xff]
      %v3147 = vld [vmem:[%s2250 + $0x80] sm:$0xff]
      %v3148 = vld [vmem:[%s2250 + $0x90] sm:$0xff]
      %v3149 = vld [vmem:[%s2250 + $0x98] sm:$0xff]
      %v3150 = vld [vmem:[%s2250 + $0xa8] sm:$0xff]
      %v3151 = vld [vmem:[%s2250 + $0xb0] sm:$0xff]
      %v3152 = vld [vmem:[%s2250 + $0xc0] sm:$0xff]
      %v3153 = vld [vmem:[%s2250 + $0xc8] sm:$0xff]
      %v3154 = vld [vmem:[%s2250 + $0xd8] sm:$0xff]
      %v3155 = vld [vmem:[%s2250 + $0xe0] sm:$0xff]
      %v3156 = vld [vmem:[%s2250 + $0xf0] sm:$0xff]
      %v3157 = vld [vmem:[%s2250 + $0xf8] sm:$0xff]
      %v3158 = vld [vmem:[%s2250 + $0x108] sm:$0xff]
      %v3159 = vld [vmem:[%s2250 + $0x110] sm:$0xff]
      %v3160 = vld [vmem:[%s2250 + $0x120] sm:$0xff]
      %v3161 = vld [vmem:[%s2250 + $0x128] sm:$0xff]
      %v3162 = vld [vmem:[%s2250 + $0x138] sm:$0xff]
      %v3163 = vld [vmem:[%s2250 + $0x140] sm:$0xff]
      %v3164 = vld [vmem:[%s2250 + $0x150] sm:$0xff]
      %v3165 = vld [vmem:[%s2250 + $0x158] sm:$0xff]
      %v3166 = vld [vmem:[%s2250 + $0x168] sm:$0xff]
      %v3167 = vld [vmem:[%s2250 + $0x170] sm:$0xff]
      %v3168 = vpack.c.bf16 %v3137, %v3136
      %v3169 = vpack.c.bf16 %v3139, %v3138
      %v3170 = vpack.c.bf16 %v3141, %v3140
      %v3171 = vpack.c.bf16 %v3143, %v3142
      %v3172 = vpack.c.bf16 %v3145, %v3144
      %v3173 = vpack.c.bf16 %v3147, %v3146
      %v3174 = vpack.c.bf16 %v3149, %v3148
      %v3175 = vpack.c.bf16 %v3151, %v3150
      %v3176 = vpack.c.bf16 %v3153, %v3152
      %v3177 = vpack.c.bf16 %v3155, %v3154
      %v3178 = vpack.c.bf16 %v3157, %v3156
      %v3179 = vpack.c.bf16 %v3159, %v3158
      %v3180 = vpack.c.bf16 %v3161, %v3160
      %v3181 = vpack.c.bf16 %v3163, %v3162
      %v3182 = vpack.c.bf16 %v3165, %v3164
      %v3183 = vpack.c.bf16 %v3167, %v3166
      %s3184 = scalar_lea.vmem %s3, 192
      %v3185 = vld [vmem:[%s3184] sm:$0xf]
      %v3186 = vld [vmem:[%s3184 + $0x4] sm:$0xf]
      %v3187 = vld [vmem:[%s3184 + $0x8] sm:$0xf]
      %v3188 = vld [vmem:[%s3184 + $0xc] sm:$0xf]
      %v3189 = vld [vmem:[%s3184 + $0x10] sm:$0xf]
      %v3190 = vld [vmem:[%s3184 + $0x14] sm:$0xf]
      %v3191 = vld [vmem:[%s3184 + $0x18] sm:$0xf]
      %v3192 = vld [vmem:[%s3184 + $0x1c] sm:$0xf]
      %v3193 = vld [vmem:[%s3184 + $0x20] sm:$0xf]
      %v3194 = vld [vmem:[%s3184 + $0x24] sm:$0xf]
      %v3195 = vld [vmem:[%s3184 + $0x28] sm:$0xf]
      %v3196 = vld [vmem:[%s3184 + $0x2c] sm:$0xf]
      %v3197 = vld [vmem:[%s3184 + $0x30] sm:$0xf]
      %v3198 = vld [vmem:[%s3184 + $0x34] sm:$0xf]
      %v3199 = vld [vmem:[%s3184 + $0x38] sm:$0xf]
      %v3200 = vld [vmem:[%s3184 + $0x3c] sm:$0xf]
      %v3217 = vunpack.c.l.b16 %v3185
      %v3218 = vunpack.c.l.b16 %v3186
      %v3219 = vunpack.c.l.b16 %v3187
      %v3220 = vunpack.c.l.b16 %v3188
      %v3221 = vunpack.c.l.b16 %v3189
      %v3222 = vunpack.c.l.b16 %v3190
      %v3223 = vunpack.c.l.b16 %v3191
      %v3224 = vunpack.c.l.b16 %v3192
      %v3225 = vunpack.c.l.b16 %v3193
      %v3226 = vunpack.c.l.b16 %v3194
      %v3227 = vunpack.c.l.b16 %v3195
      %v3228 = vunpack.c.l.b16 %v3196
      %v3229 = vunpack.c.l.b16 %v3197
      %v3230 = vunpack.c.l.b16 %v3198
      %v3231 = vunpack.c.l.b16 %v3199
      %v3232 = vunpack.c.l.b16 %v3200
      %v3233 = vpack.c.b16 %v3218, %v3217
      %v3234 = vpack.c.b16 %v3220, %v3219
      %v3235 = vpack.c.b16 %v3222, %v3221
      %v3236 = vpack.c.b16 %v3224, %v3223
      %v3237 = vpack.c.b16 %v3226, %v3225
      %v3238 = vpack.c.b16 %v3228, %v3227
      %v3239 = vpack.c.b16 %v3230, %v3229
      %v3240 = vpack.c.b16 %v3232, %v3231
      %3249 = vmatprep.subr.bf16.mxu0 0
      %3250 = vmatpush1.bf16.msra.mxu0 %v3240
      %3251 = vmatprep.subr.bf16.mxu0 0
      %3252 = vmatpush1.bf16.msra.mxu0 %v3239
      %3253 = vmatprep.subr.bf16.mxu0 0
      %3254 = vmatpush1.bf16.msra.mxu0 %v3238
      %3255 = vmatprep.subr.bf16.mxu0 0
      %3256 = vmatpush1.bf16.msra.mxu0 %v3237
      %3257 = vmatprep.subr.bf16.mxu0 0
      %3258 = vmatpush1.bf16.msra.mxu0 %v3236
      %3259 = vmatprep.subr.bf16.mxu0 0
      %3260 = vmatpush1.bf16.msra.mxu0 %v3235
      %3261 = vmatprep.subr.bf16.mxu0 0
      %3262 = vmatpush1.bf16.msra.mxu0 %v3234
      %3263 = vmatprep.subr.bf16.mxu0 0
      %3264 = vmatpush1.bf16.msra.mxu0 %v3233
      %3265 = vmatprep.subr.bf16.mxu0 0
      %3266 = vmatpush2.bf16.msra.mxu0 0
      %3267 = vmatprep.subr.bf16.mxu0 0
      %3268 = vmatpush2.bf16.msra.mxu0 0
      %3269 = vmatprep.subr.bf16.mxu0 0
      %3270 = vmatpush2.bf16.msra.mxu0 0
      %3271 = vmatprep.subr.bf16.mxu0 0
      %3272 = vmatpush2.bf16.msra.mxu0 0
      %3273 = vmatprep.subr.bf16.mxu0 0
      %3274 = vmatpush2.bf16.msra.mxu0 0
      %3275 = vmatprep.subr.bf16.mxu0 0
      %3276 = vmatpush2.bf16.msra.mxu0 0
      %3277 = vmatprep.subr.bf16.mxu0 0
      %3278 = vmatpush2.bf16.msra.mxu0 0
      %3279 = vmatprep.subr.bf16.mxu0 0
      %3280 = vmatpush2.bf16.msra.mxu0 0
      %3281 = vmatprep.mubr.bf16.mxu0 0
      %3282 = vmatmul.mubr.bf16.gmra.mxu0 %v3168
      %v3283 = vpop.f32.mrf.mxu0
      %v3284 = vadd.f32 0.0, %v3283
      %v3285 = vpop.f32.mrf.mxu0
      %v3286 = vpop.f32.mrf.mxu0
      %v3287 = vadd.f32 0.0, %v3286
      %v3288 = vpop.f32.mrf.mxu0
      %3289 = vmatprep.mubr.bf16.mxu0 0
      %3290 = vmatmul.mubr.bf16.gmra.mxu0 %v3169
      %v3291 = vpop.f32.mrf.mxu0
      %v3292 = vadd.f32 0.0, %v3291
      %v3293 = vpop.f32.mrf.mxu0
      %v3294 = vpop.f32.mrf.mxu0
      %v3295 = vadd.f32 0.0, %v3294
      %v3296 = vpop.f32.mrf.mxu0
      %3297 = vmatprep.mubr.bf16.mxu0 0
      %3298 = vmatmul.mubr.bf16.gmra.mxu0 %v3170
      %v3299 = vpop.f32.mrf.mxu0
      %v3300 = vadd.f32 0.0, %v3299
      %v3301 = vpop.f32.mrf.mxu0
      %v3302 = vpop.f32.mrf.mxu0
      %v3303 = vadd.f32 0.0, %v3302
      %v3304 = vpop.f32.mrf.mxu0
      %3305 = vmatprep.mubr.bf16.mxu0 0
      %3306 = vmatmul.mubr.bf16.gmra.mxu0 %v3171
      %v3307 = vpop.f32.mrf.mxu0
      %v3308 = vadd.f32 0.0, %v3307
      %v3309 = vpop.f32.mrf.mxu0
      %v3310 = vpop.f32.mrf.mxu0
      %v3311 = vadd.f32 0.0, %v3310
      %v3312 = vpop.f32.mrf.mxu0
      %3313 = vmatprep.mubr.bf16.mxu0 0
      %3314 = vmatmul.mubr.bf16.gmra.mxu0 %v3172
      %v3315 = vpop.f32.mrf.mxu0
      %v3316 = vadd.f32 0.0, %v3315
      %v3317 = vpop.f32.mrf.mxu0
      %v3318 = vpop.f32.mrf.mxu0
      %v3319 = vadd.f32 0.0, %v3318
      %v3320 = vpop.f32.mrf.mxu0
      %3321 = vmatprep.mubr.bf16.mxu0 0
      %3322 = vmatmul.mubr.bf16.gmra.mxu0 %v3173
      %v3323 = vpop.f32.mrf.mxu0
      %v3324 = vadd.f32 0.0, %v3323
      %v3325 = vpop.f32.mrf.mxu0
      %v3326 = vpop.f32.mrf.mxu0
      %v3327 = vadd.f32 0.0, %v3326
      %v3328 = vpop.f32.mrf.mxu0
      %3329 = vmatprep.mubr.bf16.mxu0 0
      %3330 = vmatmul.mubr.bf16.gmra.mxu0 %v3174
      %v3331 = vpop.f32.mrf.mxu0
      %v3332 = vadd.f32 0.0, %v3331
      %v3333 = vpop.f32.mrf.mxu0
      %v3334 = vpop.f32.mrf.mxu0
      %v3335 = vadd.f32 0.0, %v3334
      %v3336 = vpop.f32.mrf.mxu0
      %3337 = vmatprep.mubr.bf16.mxu0 0
      %3338 = vmatmul.mubr.bf16.gmra.mxu0 %v3175
      %v3339 = vpop.f32.mrf.mxu0
      %v3340 = vadd.f32 0.0, %v3339
      %v3341 = vpop.f32.mrf.mxu0
      %v3342 = vpop.f32.mrf.mxu0
      %v3343 = vadd.f32 0.0, %v3342
      %v3344 = vpop.f32.mrf.mxu0
      %3345 = vmatprep.mubr.bf16.mxu0 0
      %3346 = vmatmul.mubr.bf16.gmra.mxu0 %v3176
      %v3347 = vpop.f32.mrf.mxu0
      %v3348 = vadd.f32 0.0, %v3347
      %v3349 = vpop.f32.mrf.mxu0
      %v3350 = vpop.f32.mrf.mxu0
      %v3351 = vadd.f32 0.0, %v3350
      %v3352 = vpop.f32.mrf.mxu0
      %3353 = vmatprep.mubr.bf16.mxu0 0
      %3354 = vmatmul.mubr.bf16.gmra.mxu0 %v3177
      %v3355 = vpop.f32.mrf.mxu0
      %v3356 = vadd.f32 0.0, %v3355
      %v3357 = vpop.f32.mrf.mxu0
      %v3358 = vpop.f32.mrf.mxu0
      %v3359 = vadd.f32 0.0, %v3358
      %v3360 = vpop.f32.mrf.mxu0
      %3361 = vmatprep.mubr.bf16.mxu0 0
      %3362 = vmatmul.mubr.bf16.gmra.mxu0 %v3178
      %v3363 = vpop.f32.mrf.mxu0
      %v3364 = vadd.f32 0.0, %v3363
      %v3365 = vpop.f32.mrf.mxu0
      %v3366 = vpop.f32.mrf.mxu0
      %v3367 = vadd.f32 0.0, %v3366
      %v3368 = vpop.f32.mrf.mxu0
      %3369 = vmatprep.mubr.bf16.mxu0 0
      %3370 = vmatmul.mubr.bf16.gmra.mxu0 %v3179
      %v3371 = vpop.f32.mrf.mxu0
      %v3372 = vadd.f32 0.0, %v3371
      %v3373 = vpop.f32.mrf.mxu0
      %v3374 = vpop.f32.mrf.mxu0
      %v3375 = vadd.f32 0.0, %v3374
      %v3376 = vpop.f32.mrf.mxu0
      %3377 = vmatprep.mubr.bf16.mxu0 0
      %3378 = vmatmul.mubr.bf16.gmra.mxu0 %v3180
      %v3379 = vpop.f32.mrf.mxu0
      %v3380 = vadd.f32 0.0, %v3379
      %v3381 = vpop.f32.mrf.mxu0
      %v3382 = vpop.f32.mrf.mxu0
      %v3383 = vadd.f32 0.0, %v3382
      %v3384 = vpop.f32.mrf.mxu0
      %3385 = vmatprep.mubr.bf16.mxu0 0
      %3386 = vmatmul.mubr.bf16.gmra.mxu0 %v3181
      %v3387 = vpop.f32.mrf.mxu0
      %v3388 = vadd.f32 0.0, %v3387
      %v3389 = vpop.f32.mrf.mxu0
      %v3390 = vpop.f32.mrf.mxu0
      %v3391 = vadd.f32 0.0, %v3390
      %v3392 = vpop.f32.mrf.mxu0
      %3393 = vmatprep.mubr.bf16.mxu0 0
      %3394 = vmatmul.mubr.bf16.gmra.mxu0 %v3182
      %v3395 = vpop.f32.mrf.mxu0
      %v3396 = vadd.f32 0.0, %v3395
      %v3397 = vpop.f32.mrf.mxu0
      %v3398 = vpop.f32.mrf.mxu0
      %v3399 = vadd.f32 0.0, %v3398
      %v3400 = vpop.f32.mrf.mxu0
      %3401 = vmatprep.mubr.bf16.mxu0 0
      %3402 = vmatmul.mubr.bf16.gmra.mxu0 %v3183
      %v3403 = vpop.f32.mrf.mxu0
      %v3404 = vadd.f32 0.0, %v3403
      %v3405 = vpop.f32.mrf.mxu0
      %v3406 = vpop.f32.mrf.mxu0
      %v3407 = vadd.f32 0.0, %v3406
      %v3408 = vpop.f32.mrf.mxu0
      %3409 = vdwg.mxu0
      %v3410 = vadd.f32 %v3104, %v3284
      %v3411 = vadd.f32 %v3105, %v3287
      %v3412 = vadd.f32 %v3106, %v3292
      %v3413 = vadd.f32 %v3107, %v3295
      %v3414 = vadd.f32 %v3108, %v3300
      %v3415 = vadd.f32 %v3109, %v3303
      %v3416 = vadd.f32 %v3110, %v3308
      %v3417 = vadd.f32 %v3111, %v3311
      %v3418 = vadd.f32 %v3112, %v3316
      %v3419 = vadd.f32 %v3113, %v3319
      %v3420 = vadd.f32 %v3114, %v3324
      %v3421 = vadd.f32 %v3115, %v3327
      %v3422 = vadd.f32 %v3116, %v3332
      %v3423 = vadd.f32 %v3117, %v3335
      %v3424 = vadd.f32 %v3118, %v3340
      %v3425 = vadd.f32 %v3119, %v3343
      %v3426 = vadd.f32 %v3120, %v3348
      %v3427 = vadd.f32 %v3121, %v3351
      %v3428 = vadd.f32 %v3122, %v3356
      %v3429 = vadd.f32 %v3123, %v3359
      %v3430 = vadd.f32 %v3124, %v3364
      %v3431 = vadd.f32 %v3125, %v3367
      %v3432 = vadd.f32 %v3126, %v3372
      %v3433 = vadd.f32 %v3127, %v3375
      %v3434 = vadd.f32 %v3128, %v3380
      %v3435 = vadd.f32 %v3129, %v3383
      %v3436 = vadd.f32 %v3130, %v3388
      %v3437 = vadd.f32 %v3131, %v3391
      %v3438 = vadd.f32 %v3132, %v3396
      %v3439 = vadd.f32 %v3133, %v3399
      %v3440 = vadd.f32 %v3134, %v3404
      %v3441 = vadd.f32 %v3135, %v3407
      %v3442 = vld [vmem:[%s2250 + $0x1] sm:$0xff]
      %v3443 = vld [vmem:[%s2250 + $0x9] sm:$0xff]
      %v3444 = vld [vmem:[%s2250 + $0x19] sm:$0xff]
      %v3445 = vld [vmem:[%s2250 + $0x21] sm:$0xff]
      %v3446 = vld [vmem:[%s2250 + $0x31] sm:$0xff]
      %v3447 = vld [vmem:[%s2250 + $0x39] sm:$0xff]
      %v3448 = vld [vmem:[%s2250 + $0x49] sm:$0xff]
      %v3449 = vld [vmem:[%s2250 + $0x51] sm:$0xff]
      %v3450 = vld [vmem:[%s2250 + $0x61] sm:$0xff]
      %v3451 = vld [vmem:[%s2250 + $0x69] sm:$0xff]
      %v3452 = vld [vmem:[%s2250 + $0x79] sm:$0xff]
      %v3453 = vld [vmem:[%s2250 + $0x81] sm:$0xff]
      %v3454 = vld [vmem:[%s2250 + $0x91] sm:$0xff]
      %v3455 = vld [vmem:[%s2250 + $0x99] sm:$0xff]
      %v3456 = vld [vmem:[%s2250 + $0xa9] sm:$0xff]
      %v3457 = vld [vmem:[%s2250 + $0xb1] sm:$0xff]
      %v3458 = vld [vmem:[%s2250 + $0xc1] sm:$0xff]
      %v3459 = vld [vmem:[%s2250 + $0xc9] sm:$0xff]
      %v3460 = vld [vmem:[%s2250 + $0xd9] sm:$0xff]
      %v3461 = vld [vmem:[%s2250 + $0xe1] sm:$0xff]
      %v3462 = vld [vmem:[%s2250 + $0xf1] sm:$0xff]
      %v3463 = vld [vmem:[%s2250 + $0xf9] sm:$0xff]
      %v3464 = vld [vmem:[%s2250 + $0x109] sm:$0xff]
      %v3465 = vld [vmem:[%s2250 + $0x111] sm:$0xff]
      %v3466 = vld [vmem:[%s2250 + $0x121] sm:$0xff]
      %v3467 = vld [vmem:[%s2250 + $0x129] sm:$0xff]
      %v3468 = vld [vmem:[%s2250 + $0x139] sm:$0xff]
      %v3469 = vld [vmem:[%s2250 + $0x141] sm:$0xff]
      %v3470 = vld [vmem:[%s2250 + $0x151] sm:$0xff]
      %v3471 = vld [vmem:[%s2250 + $0x159] sm:$0xff]
      %v3472 = vld [vmem:[%s2250 + $0x169] sm:$0xff]
      %v3473 = vld [vmem:[%s2250 + $0x171] sm:$0xff]
      %v3474 = vpack.c.bf16 %v3443, %v3442
      %v3475 = vpack.c.bf16 %v3445, %v3444
      %v3476 = vpack.c.bf16 %v3447, %v3446
      %v3477 = vpack.c.bf16 %v3449, %v3448
      %v3478 = vpack.c.bf16 %v3451, %v3450
      %v3479 = vpack.c.bf16 %v3453, %v3452
      %v3480 = vpack.c.bf16 %v3455, %v3454
      %v3481 = vpack.c.bf16 %v3457, %v3456
      %v3482 = vpack.c.bf16 %v3459, %v3458
      %v3483 = vpack.c.bf16 %v3461, %v3460
      %v3484 = vpack.c.bf16 %v3463, %v3462
      %v3485 = vpack.c.bf16 %v3465, %v3464
      %v3486 = vpack.c.bf16 %v3467, %v3466
      %v3487 = vpack.c.bf16 %v3469, %v3468
      %v3488 = vpack.c.bf16 %v3471, %v3470
      %v3489 = vpack.c.bf16 %v3473, %v3472
      %s3490 = scalar_lea.vmem %s3, 256
      %v3491 = vld [vmem:[%s3490] sm:$0xf]
      %v3492 = vld [vmem:[%s3490 + $0x4] sm:$0xf]
      %v3493 = vld [vmem:[%s3490 + $0x8] sm:$0xf]
      %v3494 = vld [vmem:[%s3490 + $0xc] sm:$0xf]
      %v3495 = vld [vmem:[%s3490 + $0x10] sm:$0xf]
      %v3496 = vld [vmem:[%s3490 + $0x14] sm:$0xf]
      %v3497 = vld [vmem:[%s3490 + $0x18] sm:$0xf]
      %v3498 = vld [vmem:[%s3490 + $0x1c] sm:$0xf]
      %v3499 = vld [vmem:[%s3490 + $0x20] sm:$0xf]
      %v3500 = vld [vmem:[%s3490 + $0x24] sm:$0xf]
      %v3501 = vld [vmem:[%s3490 + $0x28] sm:$0xf]
      %v3502 = vld [vmem:[%s3490 + $0x2c] sm:$0xf]
      %v3503 = vld [vmem:[%s3490 + $0x30] sm:$0xf]
      %v3504 = vld [vmem:[%s3490 + $0x34] sm:$0xf]
      %v3505 = vld [vmem:[%s3490 + $0x38] sm:$0xf]
      %v3506 = vld [vmem:[%s3490 + $0x3c] sm:$0xf]
      %v3523 = vunpack.c.l.b16 %v3491
      %v3524 = vunpack.c.l.b16 %v3492
      %v3525 = vunpack.c.l.b16 %v3493
      %v3526 = vunpack.c.l.b16 %v3494
      %v3527 = vunpack.c.l.b16 %v3495
      %v3528 = vunpack.c.l.b16 %v3496
      %v3529 = vunpack.c.l.b16 %v3497
      %v3530 = vunpack.c.l.b16 %v3498
      %v3531 = vunpack.c.l.b16 %v3499
      %v3532 = vunpack.c.l.b16 %v3500
      %v3533 = vunpack.c.l.b16 %v3501
      %v3534 = vunpack.c.l.b16 %v3502
      %v3535 = vunpack.c.l.b16 %v3503
      %v3536 = vunpack.c.l.b16 %v3504
      %v3537 = vunpack.c.l.b16 %v3505
      %v3538 = vunpack.c.l.b16 %v3506
      %v3539 = vpack.c.b16 %v3524, %v3523
      %v3540 = vpack.c.b16 %v3526, %v3525
      %v3541 = vpack.c.b16 %v3528, %v3527
      %v3542 = vpack.c.b16 %v3530, %v3529
      %v3543 = vpack.c.b16 %v3532, %v3531
      %v3544 = vpack.c.b16 %v3534, %v3533
      %v3545 = vpack.c.b16 %v3536, %v3535
      %v3546 = vpack.c.b16 %v3538, %v3537
      %3555 = vmatprep.subr.bf16.mxu0 0
      %3556 = vmatpush1.bf16.msra.mxu0 %v3546
      %3557 = vmatprep.subr.bf16.mxu0 0
      %3558 = vmatpush1.bf16.msra.mxu0 %v3545
      %3559 = vmatprep.subr.bf16.mxu0 0
      %3560 = vmatpush1.bf16.msra.mxu0 %v3544
      %3561 = vmatprep.subr.bf16.mxu0 0
      %3562 = vmatpush1.bf16.msra.mxu0 %v3543
      %3563 = vmatprep.subr.bf16.mxu0 0
      %3564 = vmatpush1.bf16.msra.mxu0 %v3542
      %3565 = vmatprep.subr.bf16.mxu0 0
      %3566 = vmatpush1.bf16.msra.mxu0 %v3541
      %3567 = vmatprep.subr.bf16.mxu0 0
      %3568 = vmatpush1.bf16.msra.mxu0 %v3540
      %3569 = vmatprep.subr.bf16.mxu0 0
      %3570 = vmatpush1.bf16.msra.mxu0 %v3539
      %3571 = vmatprep.subr.bf16.mxu0 0
      %3572 = vmatpush2.bf16.msra.mxu0 0
      %3573 = vmatprep.subr.bf16.mxu0 0
      %3574 = vmatpush2.bf16.msra.mxu0 0
      %3575 = vmatprep.subr.bf16.mxu0 0
      %3576 = vmatpush2.bf16.msra.mxu0 0
      %3577 = vmatprep.subr.bf16.mxu0 0
      %3578 = vmatpush2.bf16.msra.mxu0 0
      %3579 = vmatprep.subr.bf16.mxu0 0
      %3580 = vmatpush2.bf16.msra.mxu0 0
      %3581 = vmatprep.subr.bf16.mxu0 0
      %3582 = vmatpush2.bf16.msra.mxu0 0
      %3583 = vmatprep.subr.bf16.mxu0 0
      %3584 = vmatpush2.bf16.msra.mxu0 0
      %3585 = vmatprep.subr.bf16.mxu0 0
      %3586 = vmatpush2.bf16.msra.mxu0 0
      %3587 = vmatprep.mubr.bf16.mxu0 0
      %3588 = vmatmul.mubr.bf16.gmra.mxu0 %v3474
      %v3589 = vpop.f32.mrf.mxu0
      %v3590 = vadd.f32 0.0, %v3589
      %v3591 = vpop.f32.mrf.mxu0
      %v3592 = vpop.f32.mrf.mxu0
      %v3593 = vadd.f32 0.0, %v3592
      %v3594 = vpop.f32.mrf.mxu0
      %3595 = vmatprep.mubr.bf16.mxu0 0
      %3596 = vmatmul.mubr.bf16.gmra.mxu0 %v3475
      %v3597 = vpop.f32.mrf.mxu0
      %v3598 = vadd.f32 0.0, %v3597
      %v3599 = vpop.f32.mrf.mxu0
      %v3600 = vpop.f32.mrf.mxu0
      %v3601 = vadd.f32 0.0, %v3600
      %v3602 = vpop.f32.mrf.mxu0
      %3603 = vmatprep.mubr.bf16.mxu0 0
      %3604 = vmatmul.mubr.bf16.gmra.mxu0 %v3476
      %v3605 = vpop.f32.mrf.mxu0
      %v3606 = vadd.f32 0.0, %v3605
      %v3607 = vpop.f32.mrf.mxu0
      %v3608 = vpop.f32.mrf.mxu0
      %v3609 = vadd.f32 0.0, %v3608
      %v3610 = vpop.f32.mrf.mxu0
      %3611 = vmatprep.mubr.bf16.mxu0 0
      %3612 = vmatmul.mubr.bf16.gmra.mxu0 %v3477
      %v3613 = vpop.f32.mrf.mxu0
      %v3614 = vadd.f32 0.0, %v3613
      %v3615 = vpop.f32.mrf.mxu0
      %v3616 = vpop.f32.mrf.mxu0
      %v3617 = vadd.f32 0.0, %v3616
      %v3618 = vpop.f32.mrf.mxu0
      %3619 = vmatprep.mubr.bf16.mxu0 0
      %3620 = vmatmul.mubr.bf16.gmra.mxu0 %v3478
      %v3621 = vpop.f32.mrf.mxu0
      %v3622 = vadd.f32 0.0, %v3621
      %v3623 = vpop.f32.mrf.mxu0
      %v3624 = vpop.f32.mrf.mxu0
      %v3625 = vadd.f32 0.0, %v3624
      %v3626 = vpop.f32.mrf.mxu0
      %3627 = vmatprep.mubr.bf16.mxu0 0
      %3628 = vmatmul.mubr.bf16.gmra.mxu0 %v3479
      %v3629 = vpop.f32.mrf.mxu0
      %v3630 = vadd.f32 0.0, %v3629
      %v3631 = vpop.f32.mrf.mxu0
      %v3632 = vpop.f32.mrf.mxu0
      %v3633 = vadd.f32 0.0, %v3632
      %v3634 = vpop.f32.mrf.mxu0
      %3635 = vmatprep.mubr.bf16.mxu0 0
      %3636 = vmatmul.mubr.bf16.gmra.mxu0 %v3480
      %v3637 = vpop.f32.mrf.mxu0
      %v3638 = vadd.f32 0.0, %v3637
      %v3639 = vpop.f32.mrf.mxu0
      %v3640 = vpop.f32.mrf.mxu0
      %v3641 = vadd.f32 0.0, %v3640
      %v3642 = vpop.f32.mrf.mxu0
      %3643 = vmatprep.mubr.bf16.mxu0 0
      %3644 = vmatmul.mubr.bf16.gmra.mxu0 %v3481
      %v3645 = vpop.f32.mrf.mxu0
      %v3646 = vadd.f32 0.0, %v3645
      %v3647 = vpop.f32.mrf.mxu0
      %v3648 = vpop.f32.mrf.mxu0
      %v3649 = vadd.f32 0.0, %v3648
      %v3650 = vpop.f32.mrf.mxu0
      %3651 = vmatprep.mubr.bf16.mxu0 0
      %3652 = vmatmul.mubr.bf16.gmra.mxu0 %v3482
      %v3653 = vpop.f32.mrf.mxu0
      %v3654 = vadd.f32 0.0, %v3653
      %v3655 = vpop.f32.mrf.mxu0
      %v3656 = vpop.f32.mrf.mxu0
      %v3657 = vadd.f32 0.0, %v3656
      %v3658 = vpop.f32.mrf.mxu0
      %3659 = vmatprep.mubr.bf16.mxu0 0
      %3660 = vmatmul.mubr.bf16.gmra.mxu0 %v3483
      %v3661 = vpop.f32.mrf.mxu0
      %v3662 = vadd.f32 0.0, %v3661
      %v3663 = vpop.f32.mrf.mxu0
      %v3664 = vpop.f32.mrf.mxu0
      %v3665 = vadd.f32 0.0, %v3664
      %v3666 = vpop.f32.mrf.mxu0
      %3667 = vmatprep.mubr.bf16.mxu0 0
      %3668 = vmatmul.mubr.bf16.gmra.mxu0 %v3484
      %v3669 = vpop.f32.mrf.mxu0
      %v3670 = vadd.f32 0.0, %v3669
      %v3671 = vpop.f32.mrf.mxu0
      %v3672 = vpop.f32.mrf.mxu0
      %v3673 = vadd.f32 0.0, %v3672
      %v3674 = vpop.f32.mrf.mxu0
      %3675 = vmatprep.mubr.bf16.mxu0 0
      %3676 = vmatmul.mubr.bf16.gmra.mxu0 %v3485
      %v3677 = vpop.f32.mrf.mxu0
      %v3678 = vadd.f32 0.0, %v3677
      %v3679 = vpop.f32.mrf.mxu0
      %v3680 = vpop.f32.mrf.mxu0
      %v3681 = vadd.f32 0.0, %v3680
      %v3682 = vpop.f32.mrf.mxu0
      %3683 = vmatprep.mubr.bf16.mxu0 0
      %3684 = vmatmul.mubr.bf16.gmra.mxu0 %v3486
      %v3685 = vpop.f32.mrf.mxu0
      %v3686 = vadd.f32 0.0, %v3685
      %v3687 = vpop.f32.mrf.mxu0
      %v3688 = vpop.f32.mrf.mxu0
      %v3689 = vadd.f32 0.0, %v3688
      %v3690 = vpop.f32.mrf.mxu0
      %3691 = vmatprep.mubr.bf16.mxu0 0
      %3692 = vmatmul.mubr.bf16.gmra.mxu0 %v3487
      %v3693 = vpop.f32.mrf.mxu0
      %v3694 = vadd.f32 0.0, %v3693
      %v3695 = vpop.f32.mrf.mxu0
      %v3696 = vpop.f32.mrf.mxu0
      %v3697 = vadd.f32 0.0, %v3696
      %v3698 = vpop.f32.mrf.mxu0
      %3699 = vmatprep.mubr.bf16.mxu0 0
      %3700 = vmatmul.mubr.bf16.gmra.mxu0 %v3488
      %v3701 = vpop.f32.mrf.mxu0
      %v3702 = vadd.f32 0.0, %v3701
      %v3703 = vpop.f32.mrf.mxu0
      %v3704 = vpop.f32.mrf.mxu0
      %v3705 = vadd.f32 0.0, %v3704
      %v3706 = vpop.f32.mrf.mxu0
      %3707 = vmatprep.mubr.bf16.mxu0 0
      %3708 = vmatmul.mubr.bf16.gmra.mxu0 %v3489
      %v3709 = vpop.f32.mrf.mxu0
      %v3710 = vadd.f32 0.0, %v3709
      %v3711 = vpop.f32.mrf.mxu0
      %v3712 = vpop.f32.mrf.mxu0
      %v3713 = vadd.f32 0.0, %v3712
      %v3714 = vpop.f32.mrf.mxu0
      %3715 = vdwg.mxu0
      %v3716 = vadd.f32 %v3410, %v3590
      %v3717 = vadd.f32 %v3411, %v3593
      %v3718 = vadd.f32 %v3412, %v3598
      %v3719 = vadd.f32 %v3413, %v3601
      %v3720 = vadd.f32 %v3414, %v3606
      %v3721 = vadd.f32 %v3415, %v3609
      %v3722 = vadd.f32 %v3416, %v3614
      %v3723 = vadd.f32 %v3417, %v3617
      %v3724 = vadd.f32 %v3418, %v3622
      %v3725 = vadd.f32 %v3419, %v3625
      %v3726 = vadd.f32 %v3420, %v3630
      %v3727 = vadd.f32 %v3421, %v3633
      %v3728 = vadd.f32 %v3422, %v3638
      %v3729 = vadd.f32 %v3423, %v3641
      %v3730 = vadd.f32 %v3424, %v3646
      %v3731 = vadd.f32 %v3425, %v3649
      %v3732 = vadd.f32 %v3426, %v3654
      %v3733 = vadd.f32 %v3427, %v3657
      %v3734 = vadd.f32 %v3428, %v3662
      %v3735 = vadd.f32 %v3429, %v3665
      %v3736 = vadd.f32 %v3430, %v3670
      %v3737 = vadd.f32 %v3431, %v3673
      %v3738 = vadd.f32 %v3432, %v3678
      %v3739 = vadd.f32 %v3433, %v3681
      %v3740 = vadd.f32 %v3434, %v3686
      %v3741 = vadd.f32 %v3435, %v3689
      %v3742 = vadd.f32 %v3436, %v3694
      %v3743 = vadd.f32 %v3437, %v3697
      %v3744 = vadd.f32 %v3438, %v3702
      %v3745 = vadd.f32 %v3439, %v3705
      %v3746 = vadd.f32 %v3440, %v3710
      %v3747 = vadd.f32 %v3441, %v3713
      %v3748 = vld [vmem:[%s2250 + $0x2] sm:$0xff]
      %v3749 = vld [vmem:[%s2250 + $0xa] sm:$0xff]
      %v3750 = vld [vmem:[%s2250 + $0x1a] sm:$0xff]
      %v3751 = vld [vmem:[%s2250 + $0x22] sm:$0xff]
      %v3752 = vld [vmem:[%s2250 + $0x32] sm:$0xff]
      %v3753 = vld [vmem:[%s2250 + $0x3a] sm:$0xff]
      %v3754 = vld [vmem:[%s2250 + $0x4a] sm:$0xff]
      %v3755 = vld [vmem:[%s2250 + $0x52] sm:$0xff]
      %v3756 = vld [vmem:[%s2250 + $0x62] sm:$0xff]
      %v3757 = vld [vmem:[%s2250 + $0x6a] sm:$0xff]
      %v3758 = vld [vmem:[%s2250 + $0x7a] sm:$0xff]
      %v3759 = vld [vmem:[%s2250 + $0x82] sm:$0xff]
      %v3760 = vld [vmem:[%s2250 + $0x92] sm:$0xff]
      %v3761 = vld [vmem:[%s2250 + $0x9a] sm:$0xff]
      %v3762 = vld [vmem:[%s2250 + $0xaa] sm:$0xff]
      %v3763 = vld [vmem:[%s2250 + $0xb2] sm:$0xff]
      %v3764 = vld [vmem:[%s2250 + $0xc2] sm:$0xff]
      %v3765 = vld [vmem:[%s2250 + $0xca] sm:$0xff]
      %v3766 = vld [vmem:[%s2250 + $0xda] sm:$0xff]
      %v3767 = vld [vmem:[%s2250 + $0xe2] sm:$0xff]
      %v3768 = vld [vmem:[%s2250 + $0xf2] sm:$0xff]
      %v3769 = vld [vmem:[%s2250 + $0xfa] sm:$0xff]
      %v3770 = vld [vmem:[%s2250 + $0x10a] sm:$0xff]
      %v3771 = vld [vmem:[%s2250 + $0x112] sm:$0xff]
      %v3772 = vld [vmem:[%s2250 + $0x122] sm:$0xff]
      %v3773 = vld [vmem:[%s2250 + $0x12a] sm:$0xff]
      %v3774 = vld [vmem:[%s2250 + $0x13a] sm:$0xff]
      %v3775 = vld [vmem:[%s2250 + $0x142] sm:$0xff]
      %v3776 = vld [vmem:[%s2250 + $0x152] sm:$0xff]
      %v3777 = vld [vmem:[%s2250 + $0x15a] sm:$0xff]
      %v3778 = vld [vmem:[%s2250 + $0x16a] sm:$0xff]
      %v3779 = vld [vmem:[%s2250 + $0x172] sm:$0xff]
      %v3780 = vpack.c.bf16 %v3749, %v3748
      %v3781 = vpack.c.bf16 %v3751, %v3750
      %v3782 = vpack.c.bf16 %v3753, %v3752
      %v3783 = vpack.c.bf16 %v3755, %v3754
      %v3784 = vpack.c.bf16 %v3757, %v3756
      %v3785 = vpack.c.bf16 %v3759, %v3758
      %v3786 = vpack.c.bf16 %v3761, %v3760
      %v3787 = vpack.c.bf16 %v3763, %v3762
      %v3788 = vpack.c.bf16 %v3765, %v3764
      %v3789 = vpack.c.bf16 %v3767, %v3766
      %v3790 = vpack.c.bf16 %v3769, %v3768
      %v3791 = vpack.c.bf16 %v3771, %v3770
      %v3792 = vpack.c.bf16 %v3773, %v3772
      %v3793 = vpack.c.bf16 %v3775, %v3774
      %v3794 = vpack.c.bf16 %v3777, %v3776
      %v3795 = vpack.c.bf16 %v3779, %v3778
      %s3796 = scalar_lea.vmem %s3, 320
      %v3797 = vld [vmem:[%s3796] sm:$0xf]
      %v3798 = vld [vmem:[%s3796 + $0x4] sm:$0xf]
      %v3799 = vld [vmem:[%s3796 + $0x8] sm:$0xf]
      %v3800 = vld [vmem:[%s3796 + $0xc] sm:$0xf]
      %v3801 = vld [vmem:[%s3796 + $0x10] sm:$0xf]
      %v3802 = vld [vmem:[%s3796 + $0x14] sm:$0xf]
      %v3803 = vld [vmem:[%s3796 + $0x18] sm:$0xf]
      %v3804 = vld [vmem:[%s3796 + $0x1c] sm:$0xf]
      %v3805 = vld [vmem:[%s3796 + $0x20] sm:$0xf]
      %v3806 = vld [vmem:[%s3796 + $0x24] sm:$0xf]
      %v3807 = vld [vmem:[%s3796 + $0x28] sm:$0xf]
      %v3808 = vld [vmem:[%s3796 + $0x2c] sm:$0xf]
      %v3809 = vld [vmem:[%s3796 + $0x30] sm:$0xf]
      %v3810 = vld [vmem:[%s3796 + $0x34] sm:$0xf]
      %v3811 = vld [vmem:[%s3796 + $0x38] sm:$0xf]
      %v3812 = vld [vmem:[%s3796 + $0x3c] sm:$0xf]
      %v3829 = vunpack.c.l.b16 %v3797
      %v3830 = vunpack.c.l.b16 %v3798
      %v3831 = vunpack.c.l.b16 %v3799
      %v3832 = vunpack.c.l.b16 %v3800
      %v3833 = vunpack.c.l.b16 %v3801
      %v3834 = vunpack.c.l.b16 %v3802
      %v3835 = vunpack.c.l.b16 %v3803
      %v3836 = vunpack.c.l.b16 %v3804
      %v3837 = vunpack.c.l.b16 %v3805
      %v3838 = vunpack.c.l.b16 %v3806
      %v3839 = vunpack.c.l.b16 %v3807
      %v3840 = vunpack.c.l.b16 %v3808
      %v3841 = vunpack.c.l.b16 %v3809
      %v3842 = vunpack.c.l.b16 %v3810
      %v3843 = vunpack.c.l.b16 %v3811
      %v3844 = vunpack.c.l.b16 %v3812
      %v3845 = vpack.c.b16 %v3830, %v3829
      %v3846 = vpack.c.b16 %v3832, %v3831
      %v3847 = vpack.c.b16 %v3834, %v3833
      %v3848 = vpack.c.b16 %v3836, %v3835
      %v3849 = vpack.c.b16 %v3838, %v3837
      %v3850 = vpack.c.b16 %v3840, %v3839
      %v3851 = vpack.c.b16 %v3842, %v3841
      %v3852 = vpack.c.b16 %v3844, %v3843
      %3861 = vmatprep.subr.bf16.mxu0 0
      %3862 = vmatpush1.bf16.msra.mxu0 %v3852
      %3863 = vmatprep.subr.bf16.mxu0 0
      %3864 = vmatpush1.bf16.msra.mxu0 %v3851
      %3865 = vmatprep.subr.bf16.mxu0 0
      %3866 = vmatpush1.bf16.msra.mxu0 %v3850
      %3867 = vmatprep.subr.bf16.mxu0 0
      %3868 = vmatpush1.bf16.msra.mxu0 %v3849
      %3869 = vmatprep.subr.bf16.mxu0 0
      %3870 = vmatpush1.bf16.msra.mxu0 %v3848
      %3871 = vmatprep.subr.bf16.mxu0 0
      %3872 = vmatpush1.bf16.msra.mxu0 %v3847
      %3873 = vmatprep.subr.bf16.mxu0 0
      %3874 = vmatpush1.bf16.msra.mxu0 %v3846
      %3875 = vmatprep.subr.bf16.mxu0 0
      %3876 = vmatpush1.bf16.msra.mxu0 %v3845
      %3877 = vmatprep.subr.bf16.mxu0 0
      %3878 = vmatpush2.bf16.msra.mxu0 0
      %3879 = vmatprep.subr.bf16.mxu0 0
      %3880 = vmatpush2.bf16.msra.mxu0 0
      %3881 = vmatprep.subr.bf16.mxu0 0
      %3882 = vmatpush2.bf16.msra.mxu0 0
      %3883 = vmatprep.subr.bf16.mxu0 0
      %3884 = vmatpush2.bf16.msra.mxu0 0
      %3885 = vmatprep.subr.bf16.mxu0 0
      %3886 = vmatpush2.bf16.msra.mxu0 0
      %3887 = vmatprep.subr.bf16.mxu0 0
      %3888 = vmatpush2.bf16.msra.mxu0 0
      %3889 = vmatprep.subr.bf16.mxu0 0
      %3890 = vmatpush2.bf16.msra.mxu0 0
      %3891 = vmatprep.subr.bf16.mxu0 0
      %3892 = vmatpush2.bf16.msra.mxu0 0
      %3893 = vmatprep.mubr.bf16.mxu0 0
      %3894 = vmatmul.mubr.bf16.gmra.mxu0 %v3780
      %v3895 = vpop.f32.mrf.mxu0
      %v3896 = vadd.f32 0.0, %v3895
      %v3897 = vpop.f32.mrf.mxu0
      %v3898 = vpop.f32.mrf.mxu0
      %v3899 = vadd.f32 0.0, %v3898
      %v3900 = vpop.f32.mrf.mxu0
      %3901 = vmatprep.mubr.bf16.mxu0 0
      %3902 = vmatmul.mubr.bf16.gmra.mxu0 %v3781
      %v3903 = vpop.f32.mrf.mxu0
      %v3904 = vadd.f32 0.0, %v3903
      %v3905 = vpop.f32.mrf.mxu0
      %v3906 = vpop.f32.mrf.mxu0
      %v3907 = vadd.f32 0.0, %v3906
      %v3908 = vpop.f32.mrf.mxu0
      %3909 = vmatprep.mubr.bf16.mxu0 0
      %3910 = vmatmul.mubr.bf16.gmra.mxu0 %v3782
      %v3911 = vpop.f32.mrf.mxu0
      %v3912 = vadd.f32 0.0, %v3911
      %v3913 = vpop.f32.mrf.mxu0
      %v3914 = vpop.f32.mrf.mxu0
      %v3915 = vadd.f32 0.0, %v3914
      %v3916 = vpop.f32.mrf.mxu0
      %3917 = vmatprep.mubr.bf16.mxu0 0
      %3918 = vmatmul.mubr.bf16.gmra.mxu0 %v3783
      %v3919 = vpop.f32.mrf.mxu0
      %v3920 = vadd.f32 0.0, %v3919
      %v3921 = vpop.f32.mrf.mxu0
      %v3922 = vpop.f32.mrf.mxu0
      %v3923 = vadd.f32 0.0, %v3922
      %v3924 = vpop.f32.mrf.mxu0
      %3925 = vmatprep.mubr.bf16.mxu0 0
      %3926 = vmatmul.mubr.bf16.gmra.mxu0 %v3784
      %v3927 = vpop.f32.mrf.mxu0
      %v3928 = vadd.f32 0.0, %v3927
      %v3929 = vpop.f32.mrf.mxu0
      %v3930 = vpop.f32.mrf.mxu0
      %v3931 = vadd.f32 0.0, %v3930
      %v3932 = vpop.f32.mrf.mxu0
      %3933 = vmatprep.mubr.bf16.mxu0 0
      %3934 = vmatmul.mubr.bf16.gmra.mxu0 %v3785
      %v3935 = vpop.f32.mrf.mxu0
      %v3936 = vadd.f32 0.0, %v3935
      %v3937 = vpop.f32.mrf.mxu0
      %v3938 = vpop.f32.mrf.mxu0
      %v3939 = vadd.f32 0.0, %v3938
      %v3940 = vpop.f32.mrf.mxu0
      %3941 = vmatprep.mubr.bf16.mxu0 0
      %3942 = vmatmul.mubr.bf16.gmra.mxu0 %v3786
      %v3943 = vpop.f32.mrf.mxu0
      %v3944 = vadd.f32 0.0, %v3943
      %v3945 = vpop.f32.mrf.mxu0
      %v3946 = vpop.f32.mrf.mxu0
      %v3947 = vadd.f32 0.0, %v3946
      %v3948 = vpop.f32.mrf.mxu0
      %3949 = vmatprep.mubr.bf16.mxu0 0
      %3950 = vmatmul.mubr.bf16.gmra.mxu0 %v3787
      %v3951 = vpop.f32.mrf.mxu0
      %v3952 = vadd.f32 0.0, %v3951
      %v3953 = vpop.f32.mrf.mxu0
      %v3954 = vpop.f32.mrf.mxu0
      %v3955 = vadd.f32 0.0, %v3954
      %v3956 = vpop.f32.mrf.mxu0
      %3957 = vmatprep.mubr.bf16.mxu0 0
      %3958 = vmatmul.mubr.bf16.gmra.mxu0 %v3788
      %v3959 = vpop.f32.mrf.mxu0
      %v3960 = vadd.f32 0.0, %v3959
      %v3961 = vpop.f32.mrf.mxu0
      %v3962 = vpop.f32.mrf.mxu0
      %v3963 = vadd.f32 0.0, %v3962
      %v3964 = vpop.f32.mrf.mxu0
      %3965 = vmatprep.mubr.bf16.mxu0 0
      %3966 = vmatmul.mubr.bf16.gmra.mxu0 %v3789
      %v3967 = vpop.f32.mrf.mxu0
      %v3968 = vadd.f32 0.0, %v3967
      %v3969 = vpop.f32.mrf.mxu0
      %v3970 = vpop.f32.mrf.mxu0
      %v3971 = vadd.f32 0.0, %v3970
      %v3972 = vpop.f32.mrf.mxu0
      %3973 = vmatprep.mubr.bf16.mxu0 0
      %3974 = vmatmul.mubr.bf16.gmra.mxu0 %v3790
      %v3975 = vpop.f32.mrf.mxu0
      %v3976 = vadd.f32 0.0, %v3975
      %v3977 = vpop.f32.mrf.mxu0
      %v3978 = vpop.f32.mrf.mxu0
      %v3979 = vadd.f32 0.0, %v3978
      %v3980 = vpop.f32.mrf.mxu0
      %3981 = vmatprep.mubr.bf16.mxu0 0
      %3982 = vmatmul.mubr.bf16.gmra.mxu0 %v3791
      %v3983 = vpop.f32.mrf.mxu0
      %v3984 = vadd.f32 0.0, %v3983
      %v3985 = vpop.f32.mrf.mxu0
      %v3986 = vpop.f32.mrf.mxu0
      %v3987 = vadd.f32 0.0, %v3986
      %v3988 = vpop.f32.mrf.mxu0
      %3989 = vmatprep.mubr.bf16.mxu0 0
      %3990 = vmatmul.mubr.bf16.gmra.mxu0 %v3792
      %v3991 = vpop.f32.mrf.mxu0
      %v3992 = vadd.f32 0.0, %v3991
      %v3993 = vpop.f32.mrf.mxu0
      %v3994 = vpop.f32.mrf.mxu0
      %v3995 = vadd.f32 0.0, %v3994
      %v3996 = vpop.f32.mrf.mxu0
      %3997 = vmatprep.mubr.bf16.mxu0 0
      %3998 = vmatmul.mubr.bf16.gmra.mxu0 %v3793
      %v3999 = vpop.f32.mrf.mxu0
      %v4000 = vadd.f32 0.0, %v3999
      %v4001 = vpop.f32.mrf.mxu0
      %v4002 = vpop.f32.mrf.mxu0
      %v4003 = vadd.f32 0.0, %v4002
      %v4004 = vpop.f32.mrf.mxu0
      %4005 = vmatprep.mubr.bf16.mxu0 0
      %4006 = vmatmul.mubr.bf16.gmra.mxu0 %v3794
      %v4007 = vpop.f32.mrf.mxu0
      %v4008 = vadd.f32 0.0, %v4007
      %v4009 = vpop.f32.mrf.mxu0
      %v4010 = vpop.f32.mrf.mxu0
      %v4011 = vadd.f32 0.0, %v4010
      %v4012 = vpop.f32.mrf.mxu0
      %4013 = vmatprep.mubr.bf16.mxu0 0
      %4014 = vmatmul.mubr.bf16.gmra.mxu0 %v3795
      %v4015 = vpop.f32.mrf.mxu0
      %v4016 = vadd.f32 0.0, %v4015
      %v4017 = vpop.f32.mrf.mxu0
      %v4018 = vpop.f32.mrf.mxu0
      %v4019 = vadd.f32 0.0, %v4018
      %v4020 = vpop.f32.mrf.mxu0
      %4021 = vdwg.mxu0
      %v4022 = vadd.f32 %v3716, %v3896
      %v4023 = vadd.f32 %v3717, %v3899
      %v4024 = vadd.f32 %v3718, %v3904
      %v4025 = vadd.f32 %v3719, %v3907
      %v4026 = vadd.f32 %v3720, %v3912
      %v4027 = vadd.f32 %v3721, %v3915
      %v4028 = vadd.f32 %v3722, %v3920
      %v4029 = vadd.f32 %v3723, %v3923
      %v4030 = vadd.f32 %v3724, %v3928
      %v4031 = vadd.f32 %v3725, %v3931
      %v4032 = vadd.f32 %v3726, %v3936
      %v4033 = vadd.f32 %v3727, %v3939
      %v4034 = vadd.f32 %v3728, %v3944
      %v4035 = vadd.f32 %v3729, %v3947
      %v4036 = vadd.f32 %v3730, %v3952
      %v4037 = vadd.f32 %v3731, %v3955
      %v4038 = vadd.f32 %v3732, %v3960
      %v4039 = vadd.f32 %v3733, %v3963
      %v4040 = vadd.f32 %v3734, %v3968
      %v4041 = vadd.f32 %v3735, %v3971
      %v4042 = vadd.f32 %v3736, %v3976
      %v4043 = vadd.f32 %v3737, %v3979
      %v4044 = vadd.f32 %v3738, %v3984
      %v4045 = vadd.f32 %v3739, %v3987
      %v4046 = vadd.f32 %v3740, %v3992
      %v4047 = vadd.f32 %v3741, %v3995
      %v4048 = vadd.f32 %v3742, %v4000
      %v4049 = vadd.f32 %v3743, %v4003
      %v4050 = vadd.f32 %v3744, %v4008
      %v4051 = vadd.f32 %v3745, %v4011
      %v4052 = vadd.f32 %v3746, %v4016
      %v4053 = vadd.f32 %v3747, %v4019
      %s4054 = scalar_lea.vmem [#allocation3], 48
      %v4055 = vld [vmem:[%s4054] sm:$0xff]
      %v4056 = vld [vmem:[%s4054 + $0x8] sm:$0xff]
      %v4057 = vld [vmem:[%s4054 + $0x18] sm:$0xff]
      %v4058 = vld [vmem:[%s4054 + $0x20] sm:$0xff]
      %v4059 = vld [vmem:[%s4054 + $0x30] sm:$0xff]
      %v4060 = vld [vmem:[%s4054 + $0x38] sm:$0xff]
      %v4061 = vld [vmem:[%s4054 + $0x48] sm:$0xff]
      %v4062 = vld [vmem:[%s4054 + $0x50] sm:$0xff]
      %v4063 = vld [vmem:[%s4054 + $0x60] sm:$0xff]
      %v4064 = vld [vmem:[%s4054 + $0x68] sm:$0xff]
      %v4065 = vld [vmem:[%s4054 + $0x78] sm:$0xff]
      %v4066 = vld [vmem:[%s4054 + $0x80] sm:$0xff]
      %v4067 = vld [vmem:[%s4054 + $0x90] sm:$0xff]
      %v4068 = vld [vmem:[%s4054 + $0x98] sm:$0xff]
      %v4069 = vld [vmem:[%s4054 + $0xa8] sm:$0xff]
      %v4070 = vld [vmem:[%s4054 + $0xb0] sm:$0xff]
      %v4071 = vld [vmem:[%s4054 + $0xc0] sm:$0xff]
      %v4072 = vld [vmem:[%s4054 + $0xc8] sm:$0xff]
      %v4073 = vld [vmem:[%s4054 + $0xd8] sm:$0xff]
      %v4074 = vld [vmem:[%s4054 + $0xe0] sm:$0xff]
      %v4075 = vld [vmem:[%s4054 + $0xf0] sm:$0xff]
      %v4076 = vld [vmem:[%s4054 + $0xf8] sm:$0xff]
      %v4077 = vld [vmem:[%s4054 + $0x108] sm:$0xff]
      %v4078 = vld [vmem:[%s4054 + $0x110] sm:$0xff]
      %v4079 = vld [vmem:[%s4054 + $0x120] sm:$0xff]
      %v4080 = vld [vmem:[%s4054 + $0x128] sm:$0xff]
      %v4081 = vld [vmem:[%s4054 + $0x138] sm:$0xff]
      %v4082 = vld [vmem:[%s4054 + $0x140] sm:$0xff]
      %v4083 = vld [vmem:[%s4054 + $0x150] sm:$0xff]
      %v4084 = vld [vmem:[%s4054 + $0x158] sm:$0xff]
      %v4085 = vld [vmem:[%s4054 + $0x168] sm:$0xff]
      %v4086 = vld [vmem:[%s4054 + $0x170] sm:$0xff]
      %v4087 = vpack.c.bf16 %v4056, %v4055
      %v4088 = vpack.c.bf16 %v4058, %v4057
      %v4089 = vpack.c.bf16 %v4060, %v4059
      %v4090 = vpack.c.bf16 %v4062, %v4061
      %v4091 = vpack.c.bf16 %v4064, %v4063
      %v4092 = vpack.c.bf16 %v4066, %v4065
      %v4093 = vpack.c.bf16 %v4068, %v4067
      %v4094 = vpack.c.bf16 %v4070, %v4069
      %v4095 = vpack.c.bf16 %v4072, %v4071
      %v4096 = vpack.c.bf16 %v4074, %v4073
      %v4097 = vpack.c.bf16 %v4076, %v4075
      %v4098 = vpack.c.bf16 %v4078, %v4077
      %v4099 = vpack.c.bf16 %v4080, %v4079
      %v4100 = vpack.c.bf16 %v4082, %v4081
      %v4101 = vpack.c.bf16 %v4084, %v4083
      %v4102 = vpack.c.bf16 %v4086, %v4085
      %s4103 = scalar_lea.vmem %s3, 384
      %v4104 = vld [vmem:[%s4103] sm:$0xf]
      %v4105 = vld [vmem:[%s4103 + $0x4] sm:$0xf]
      %v4106 = vld [vmem:[%s4103 + $0x8] sm:$0xf]
      %v4107 = vld [vmem:[%s4103 + $0xc] sm:$0xf]
      %v4108 = vld [vmem:[%s4103 + $0x10] sm:$0xf]
      %v4109 = vld [vmem:[%s4103 + $0x14] sm:$0xf]
      %v4110 = vld [vmem:[%s4103 + $0x18] sm:$0xf]
      %v4111 = vld [vmem:[%s4103 + $0x1c] sm:$0xf]
      %v4112 = vld [vmem:[%s4103 + $0x20] sm:$0xf]
      %v4113 = vld [vmem:[%s4103 + $0x24] sm:$0xf]
      %v4114 = vld [vmem:[%s4103 + $0x28] sm:$0xf]
      %v4115 = vld [vmem:[%s4103 + $0x2c] sm:$0xf]
      %v4116 = vld [vmem:[%s4103 + $0x30] sm:$0xf]
      %v4117 = vld [vmem:[%s4103 + $0x34] sm:$0xf]
      %v4118 = vld [vmem:[%s4103 + $0x38] sm:$0xf]
      %v4119 = vld [vmem:[%s4103 + $0x3c] sm:$0xf]
      %v4136 = vunpack.c.l.b16 %v4104
      %v4137 = vunpack.c.l.b16 %v4105
      %v4138 = vunpack.c.l.b16 %v4106
      %v4139 = vunpack.c.l.b16 %v4107
      %v4140 = vunpack.c.l.b16 %v4108
      %v4141 = vunpack.c.l.b16 %v4109
      %v4142 = vunpack.c.l.b16 %v4110
      %v4143 = vunpack.c.l.b16 %v4111
      %v4144 = vunpack.c.l.b16 %v4112
      %v4145 = vunpack.c.l.b16 %v4113
      %v4146 = vunpack.c.l.b16 %v4114
      %v4147 = vunpack.c.l.b16 %v4115
      %v4148 = vunpack.c.l.b16 %v4116
      %v4149 = vunpack.c.l.b16 %v4117
      %v4150 = vunpack.c.l.b16 %v4118
      %v4151 = vunpack.c.l.b16 %v4119
      %v4152 = vpack.c.b16 %v4137, %v4136
      %v4153 = vpack.c.b16 %v4139, %v4138
      %v4154 = vpack.c.b16 %v4141, %v4140
      %v4155 = vpack.c.b16 %v4143, %v4142
      %v4156 = vpack.c.b16 %v4145, %v4144
      %v4157 = vpack.c.b16 %v4147, %v4146
      %v4158 = vpack.c.b16 %v4149, %v4148
      %v4159 = vpack.c.b16 %v4151, %v4150
      %4168 = vmatprep.subr.bf16.mxu0 0
      %4169 = vmatpush1.bf16.msra.mxu0 %v4159
      %4170 = vmatprep.subr.bf16.mxu0 0
      %4171 = vmatpush1.bf16.msra.mxu0 %v4158
      %4172 = vmatprep.subr.bf16.mxu0 0
      %4173 = vmatpush1.bf16.msra.mxu0 %v4157
      %4174 = vmatprep.subr.bf16.mxu0 0
      %4175 = vmatpush1.bf16.msra.mxu0 %v4156
      %4176 = vmatprep.subr.bf16.mxu0 0
      %4177 = vmatpush1.bf16.msra.mxu0 %v4155
      %4178 = vmatprep.subr.bf16.mxu0 0
      %4179 = vmatpush1.bf16.msra.mxu0 %v4154
      %4180 = vmatprep.subr.bf16.mxu0 0
      %4181 = vmatpush1.bf16.msra.mxu0 %v4153
      %4182 = vmatprep.subr.bf16.mxu0 0
      %4183 = vmatpush1.bf16.msra.mxu0 %v4152
      %4184 = vmatprep.subr.bf16.mxu0 0
      %4185 = vmatpush2.bf16.msra.mxu0 0
      %4186 = vmatprep.subr.bf16.mxu0 0
      %4187 = vmatpush2.bf16.msra.mxu0 0
      %4188 = vmatprep.subr.bf16.mxu0 0
      %4189 = vmatpush2.bf16.msra.mxu0 0
      %4190 = vmatprep.subr.bf16.mxu0 0
      %4191 = vmatpush2.bf16.msra.mxu0 0
      %4192 = vmatprep.subr.bf16.mxu0 0
      %4193 = vmatpush2.bf16.msra.mxu0 0
      %4194 = vmatprep.subr.bf16.mxu0 0
      %4195 = vmatpush2.bf16.msra.mxu0 0
      %4196 = vmatprep.subr.bf16.mxu0 0
      %4197 = vmatpush2.bf16.msra.mxu0 0
      %4198 = vmatprep.subr.bf16.mxu0 0
      %4199 = vmatpush2.bf16.msra.mxu0 0
      %4200 = vmatprep.mubr.bf16.mxu0 0
      %4201 = vmatmul.mubr.bf16.gmra.mxu0 %v4087
      %v4202 = vpop.f32.mrf.mxu0
      %v4203 = vadd.f32 0.0, %v4202
      %v4204 = vpop.f32.mrf.mxu0
      %v4205 = vpop.f32.mrf.mxu0
      %v4206 = vadd.f32 0.0, %v4205
      %v4207 = vpop.f32.mrf.mxu0
      %4208 = vmatprep.mubr.bf16.mxu0 0
      %4209 = vmatmul.mubr.bf16.gmra.mxu0 %v4088
      %v4210 = vpop.f32.mrf.mxu0
      %v4211 = vadd.f32 0.0, %v4210
      %v4212 = vpop.f32.mrf.mxu0
      %v4213 = vpop.f32.mrf.mxu0
      %v4214 = vadd.f32 0.0, %v4213
      %v4215 = vpop.f32.mrf.mxu0
      %4216 = vmatprep.mubr.bf16.mxu0 0
      %4217 = vmatmul.mubr.bf16.gmra.mxu0 %v4089
      %v4218 = vpop.f32.mrf.mxu0
      %v4219 = vadd.f32 0.0, %v4218
      %v4220 = vpop.f32.mrf.mxu0
      %v4221 = vpop.f32.mrf.mxu0
      %v4222 = vadd.f32 0.0, %v4221
      %v4223 = vpop.f32.mrf.mxu0
      %4224 = vmatprep.mubr.bf16.mxu0 0
      %4225 = vmatmul.mubr.bf16.gmra.mxu0 %v4090
      %v4226 = vpop.f32.mrf.mxu0
      %v4227 = vadd.f32 0.0, %v4226
      %v4228 = vpop.f32.mrf.mxu0
      %v4229 = vpop.f32.mrf.mxu0
      %v4230 = vadd.f32 0.0, %v4229
      %v4231 = vpop.f32.mrf.mxu0
      %4232 = vmatprep.mubr.bf16.mxu0 0
      %4233 = vmatmul.mubr.bf16.gmra.mxu0 %v4091
      %v4234 = vpop.f32.mrf.mxu0
      %v4235 = vadd.f32 0.0, %v4234
      %v4236 = vpop.f32.mrf.mxu0
      %v4237 = vpop.f32.mrf.mxu0
      %v4238 = vadd.f32 0.0, %v4237
      %v4239 = vpop.f32.mrf.mxu0
      %4240 = vmatprep.mubr.bf16.mxu0 0
      %4241 = vmatmul.mubr.bf16.gmra.mxu0 %v4092
      %v4242 = vpop.f32.mrf.mxu0
      %v4243 = vadd.f32 0.0, %v4242
      %v4244 = vpop.f32.mrf.mxu0
      %v4245 = vpop.f32.mrf.mxu0
      %v4246 = vadd.f32 0.0, %v4245
      %v4247 = vpop.f32.mrf.mxu0
      %4248 = vmatprep.mubr.bf16.mxu0 0
      %4249 = vmatmul.mubr.bf16.gmra.mxu0 %v4093
      %v4250 = vpop.f32.mrf.mxu0
      %v4251 = vadd.f32 0.0, %v4250
      %v4252 = vpop.f32.mrf.mxu0
      %v4253 = vpop.f32.mrf.mxu0
      %v4254 = vadd.f32 0.0, %v4253
      %v4255 = vpop.f32.mrf.mxu0
      %4256 = vmatprep.mubr.bf16.mxu0 0
      %4257 = vmatmul.mubr.bf16.gmra.mxu0 %v4094
      %v4258 = vpop.f32.mrf.mxu0
      %v4259 = vadd.f32 0.0, %v4258
      %v4260 = vpop.f32.mrf.mxu0
      %v4261 = vpop.f32.mrf.mxu0
      %v4262 = vadd.f32 0.0, %v4261
      %v4263 = vpop.f32.mrf.mxu0
      %4264 = vmatprep.mubr.bf16.mxu0 0
      %4265 = vmatmul.mubr.bf16.gmra.mxu0 %v4095
      %v4266 = vpop.f32.mrf.mxu0
      %v4267 = vadd.f32 0.0, %v4266
      %v4268 = vpop.f32.mrf.mxu0
      %v4269 = vpop.f32.mrf.mxu0
      %v4270 = vadd.f32 0.0, %v4269
      %v4271 = vpop.f32.mrf.mxu0
      %4272 = vmatprep.mubr.bf16.mxu0 0
      %4273 = vmatmul.mubr.bf16.gmra.mxu0 %v4096
      %v4274 = vpop.f32.mrf.mxu0
      %v4275 = vadd.f32 0.0, %v4274
      %v4276 = vpop.f32.mrf.mxu0
      %v4277 = vpop.f32.mrf.mxu0
      %v4278 = vadd.f32 0.0, %v4277
      %v4279 = vpop.f32.mrf.mxu0
      %4280 = vmatprep.mubr.bf16.mxu0 0
      %4281 = vmatmul.mubr.bf16.gmra.mxu0 %v4097
      %v4282 = vpop.f32.mrf.mxu0
      %v4283 = vadd.f32 0.0, %v4282
      %v4284 = vpop.f32.mrf.mxu0
      %v4285 = vpop.f32.mrf.mxu0
      %v4286 = vadd.f32 0.0, %v4285
      %v4287 = vpop.f32.mrf.mxu0
      %4288 = vmatprep.mubr.bf16.mxu0 0
      %4289 = vmatmul.mubr.bf16.gmra.mxu0 %v4098
      %v4290 = vpop.f32.mrf.mxu0
      %v4291 = vadd.f32 0.0, %v4290
      %v4292 = vpop.f32.mrf.mxu0
      %v4293 = vpop.f32.mrf.mxu0
      %v4294 = vadd.f32 0.0, %v4293
      %v4295 = vpop.f32.mrf.mxu0
      %4296 = vmatprep.mubr.bf16.mxu0 0
      %4297 = vmatmul.mubr.bf16.gmra.mxu0 %v4099
      %v4298 = vpop.f32.mrf.mxu0
      %v4299 = vadd.f32 0.0, %v4298
      %v4300 = vpop.f32.mrf.mxu0
      %v4301 = vpop.f32.mrf.mxu0
      %v4302 = vadd.f32 0.0, %v4301
      %v4303 = vpop.f32.mrf.mxu0
      %4304 = vmatprep.mubr.bf16.mxu0 0
      %4305 = vmatmul.mubr.bf16.gmra.mxu0 %v4100
      %v4306 = vpop.f32.mrf.mxu0
      %v4307 = vadd.f32 0.0, %v4306
      %v4308 = vpop.f32.mrf.mxu0
      %v4309 = vpop.f32.mrf.mxu0
      %v4310 = vadd.f32 0.0, %v4309
      %v4311 = vpop.f32.mrf.mxu0
      %4312 = vmatprep.mubr.bf16.mxu0 0
      %4313 = vmatmul.mubr.bf16.gmra.mxu0 %v4101
      %v4314 = vpop.f32.mrf.mxu0
      %v4315 = vadd.f32 0.0, %v4314
      %v4316 = vpop.f32.mrf.mxu0
      %v4317 = vpop.f32.mrf.mxu0
      %v4318 = vadd.f32 0.0, %v4317
      %v4319 = vpop.f32.mrf.mxu0
      %4320 = vmatprep.mubr.bf16.mxu0 0
      %4321 = vmatmul.mubr.bf16.gmra.mxu0 %v4102
      %v4322 = vpop.f32.mrf.mxu0
      %v4323 = vadd.f32 0.0, %v4322
      %v4324 = vpop.f32.mrf.mxu0
      %v4325 = vpop.f32.mrf.mxu0
      %v4326 = vadd.f32 0.0, %v4325
      %v4327 = vpop.f32.mrf.mxu0
      %4328 = vdwg.mxu0
      %v4329 = vadd.f32 %v4022, %v4203
      %v4330 = vadd.f32 %v4023, %v4206
      %v4331 = vadd.f32 %v4024, %v4211
      %v4332 = vadd.f32 %v4025, %v4214
      %v4333 = vadd.f32 %v4026, %v4219
      %v4334 = vadd.f32 %v4027, %v4222
      %v4335 = vadd.f32 %v4028, %v4227
      %v4336 = vadd.f32 %v4029, %v4230
      %v4337 = vadd.f32 %v4030, %v4235
      %v4338 = vadd.f32 %v4031, %v4238
      %v4339 = vadd.f32 %v4032, %v4243
      %v4340 = vadd.f32 %v4033, %v4246
      %v4341 = vadd.f32 %v4034, %v4251
      %v4342 = vadd.f32 %v4035, %v4254
      %v4343 = vadd.f32 %v4036, %v4259
      %v4344 = vadd.f32 %v4037, %v4262
      %v4345 = vadd.f32 %v4038, %v4267
      %v4346 = vadd.f32 %v4039, %v4270
      %v4347 = vadd.f32 %v4040, %v4275
      %v4348 = vadd.f32 %v4041, %v4278
      %v4349 = vadd.f32 %v4042, %v4283
      %v4350 = vadd.f32 %v4043, %v4286
      %v4351 = vadd.f32 %v4044, %v4291
      %v4352 = vadd.f32 %v4045, %v4294
      %v4353 = vadd.f32 %v4046, %v4299
      %v4354 = vadd.f32 %v4047, %v4302
      %v4355 = vadd.f32 %v4048, %v4307
      %v4356 = vadd.f32 %v4049, %v4310
      %v4357 = vadd.f32 %v4050, %v4315
      %v4358 = vadd.f32 %v4051, %v4318
      %v4359 = vadd.f32 %v4052, %v4323
      %v4360 = vadd.f32 %v4053, %v4326
      %v4361 = vld [vmem:[%s4054 + $0x1] sm:$0xff]
      %v4362 = vld [vmem:[%s4054 + $0x9] sm:$0xff]
      %v4363 = vld [vmem:[%s4054 + $0x19] sm:$0xff]
      %v4364 = vld [vmem:[%s4054 + $0x21] sm:$0xff]
      %v4365 = vld [vmem:[%s4054 + $0x31] sm:$0xff]
      %v4366 = vld [vmem:[%s4054 + $0x39] sm:$0xff]
      %v4367 = vld [vmem:[%s4054 + $0x49] sm:$0xff]
      %v4368 = vld [vmem:[%s4054 + $0x51] sm:$0xff]
      %v4369 = vld [vmem:[%s4054 + $0x61] sm:$0xff]
      %v4370 = vld [vmem:[%s4054 + $0x69] sm:$0xff]
      %v4371 = vld [vmem:[%s4054 + $0x79] sm:$0xff]
      %v4372 = vld [vmem:[%s4054 + $0x81] sm:$0xff]
      %v4373 = vld [vmem:[%s4054 + $0x91] sm:$0xff]
      %v4374 = vld [vmem:[%s4054 + $0x99] sm:$0xff]
      %v4375 = vld [vmem:[%s4054 + $0xa9] sm:$0xff]
      %v4376 = vld [vmem:[%s4054 + $0xb1] sm:$0xff]
      %v4377 = vld [vmem:[%s4054 + $0xc1] sm:$0xff]
      %v4378 = vld [vmem:[%s4054 + $0xc9] sm:$0xff]
      %v4379 = vld [vmem:[%s4054 + $0xd9] sm:$0xff]
      %v4380 = vld [vmem:[%s4054 + $0xe1] sm:$0xff]
      %v4381 = vld [vmem:[%s4054 + $0xf1] sm:$0xff]
      %v4382 = vld [vmem:[%s4054 + $0xf9] sm:$0xff]
      %v4383 = vld [vmem:[%s4054 + $0x109] sm:$0xff]
      %v4384 = vld [vmem:[%s4054 + $0x111] sm:$0xff]
      %v4385 = vld [vmem:[%s4054 + $0x121] sm:$0xff]
      %v4386 = vld [vmem:[%s4054 + $0x129] sm:$0xff]
      %v4387 = vld [vmem:[%s4054 + $0x139] sm:$0xff]
      %v4388 = vld [vmem:[%s4054 + $0x141] sm:$0xff]
      %v4389 = vld [vmem:[%s4054 + $0x151] sm:$0xff]
      %v4390 = vld [vmem:[%s4054 + $0x159] sm:$0xff]
      %v4391 = vld [vmem:[%s4054 + $0x169] sm:$0xff]
      %v4392 = vld [vmem:[%s4054 + $0x171] sm:$0xff]
      %v4393 = vpack.c.bf16 %v4362, %v4361
      %v4394 = vpack.c.bf16 %v4364, %v4363
      %v4395 = vpack.c.bf16 %v4366, %v4365
      %v4396 = vpack.c.bf16 %v4368, %v4367
      %v4397 = vpack.c.bf16 %v4370, %v4369
      %v4398 = vpack.c.bf16 %v4372, %v4371
      %v4399 = vpack.c.bf16 %v4374, %v4373
      %v4400 = vpack.c.bf16 %v4376, %v4375
      %v4401 = vpack.c.bf16 %v4378, %v4377
      %v4402 = vpack.c.bf16 %v4380, %v4379
      %v4403 = vpack.c.bf16 %v4382, %v4381
      %v4404 = vpack.c.bf16 %v4384, %v4383
      %v4405 = vpack.c.bf16 %v4386, %v4385
      %v4406 = vpack.c.bf16 %v4388, %v4387
      %v4407 = vpack.c.bf16 %v4390, %v4389
      %v4408 = vpack.c.bf16 %v4392, %v4391
      %s4409 = scalar_lea.vmem %s3, 448
      %v4410 = vld [vmem:[%s4409] sm:$0xf]
      %v4411 = vld [vmem:[%s4409 + $0x4] sm:$0xf]
      %v4412 = vld [vmem:[%s4409 + $0x8] sm:$0xf]
      %v4413 = vld [vmem:[%s4409 + $0xc] sm:$0xf]
      %v4414 = vld [vmem:[%s4409 + $0x10] sm:$0xf]
      %v4415 = vld [vmem:[%s4409 + $0x14] sm:$0xf]
      %v4416 = vld [vmem:[%s4409 + $0x18] sm:$0xf]
      %v4417 = vld [vmem:[%s4409 + $0x1c] sm:$0xf]
      %v4418 = vld [vmem:[%s4409 + $0x20] sm:$0xf]
      %v4419 = vld [vmem:[%s4409 + $0x24] sm:$0xf]
      %v4420 = vld [vmem:[%s4409 + $0x28] sm:$0xf]
      %v4421 = vld [vmem:[%s4409 + $0x2c] sm:$0xf]
      %v4422 = vld [vmem:[%s4409 + $0x30] sm:$0xf]
      %v4423 = vld [vmem:[%s4409 + $0x34] sm:$0xf]
      %v4424 = vld [vmem:[%s4409 + $0x38] sm:$0xf]
      %v4425 = vld [vmem:[%s4409 + $0x3c] sm:$0xf]
      %v4442 = vunpack.c.l.b16 %v4410
      %v4443 = vunpack.c.l.b16 %v4411
      %v4444 = vunpack.c.l.b16 %v4412
      %v4445 = vunpack.c.l.b16 %v4413
      %v4446 = vunpack.c.l.b16 %v4414
      %v4447 = vunpack.c.l.b16 %v4415
      %v4448 = vunpack.c.l.b16 %v4416
      %v4449 = vunpack.c.l.b16 %v4417
      %v4450 = vunpack.c.l.b16 %v4418
      %v4451 = vunpack.c.l.b16 %v4419
      %v4452 = vunpack.c.l.b16 %v4420
      %v4453 = vunpack.c.l.b16 %v4421
      %v4454 = vunpack.c.l.b16 %v4422
      %v4455 = vunpack.c.l.b16 %v4423
      %v4456 = vunpack.c.l.b16 %v4424
      %v4457 = vunpack.c.l.b16 %v4425
      %v4458 = vpack.c.b16 %v4443, %v4442
      %v4459 = vpack.c.b16 %v4445, %v4444
      %v4460 = vpack.c.b16 %v4447, %v4446
      %v4461 = vpack.c.b16 %v4449, %v4448
      %v4462 = vpack.c.b16 %v4451, %v4450
      %v4463 = vpack.c.b16 %v4453, %v4452
      %v4464 = vpack.c.b16 %v4455, %v4454
      %v4465 = vpack.c.b16 %v4457, %v4456
      %4474 = vmatprep.subr.bf16.mxu0 0
      %4475 = vmatpush1.bf16.msra.mxu0 %v4465
      %4476 = vmatprep.subr.bf16.mxu0 0
      %4477 = vmatpush1.bf16.msra.mxu0 %v4464
      %4478 = vmatprep.subr.bf16.mxu0 0
      %4479 = vmatpush1.bf16.msra.mxu0 %v4463
      %4480 = vmatprep.subr.bf16.mxu0 0
      %4481 = vmatpush1.bf16.msra.mxu0 %v4462
      %4482 = vmatprep.subr.bf16.mxu0 0
      %4483 = vmatpush1.bf16.msra.mxu0 %v4461
      %4484 = vmatprep.subr.bf16.mxu0 0
      %4485 = vmatpush1.bf16.msra.mxu0 %v4460
      %4486 = vmatprep.subr.bf16.mxu0 0
      %4487 = vmatpush1.bf16.msra.mxu0 %v4459
      %4488 = vmatprep.subr.bf16.mxu0 0
      %4489 = vmatpush1.bf16.msra.mxu0 %v4458
      %4490 = vmatprep.subr.bf16.mxu0 0
      %4491 = vmatpush2.bf16.msra.mxu0 0
      %4492 = vmatprep.subr.bf16.mxu0 0
      %4493 = vmatpush2.bf16.msra.mxu0 0
      %4494 = vmatprep.subr.bf16.mxu0 0
      %4495 = vmatpush2.bf16.msra.mxu0 0
      %4496 = vmatprep.subr.bf16.mxu0 0
      %4497 = vmatpush2.bf16.msra.mxu0 0
      %4498 = vmatprep.subr.bf16.mxu0 0
      %4499 = vmatpush2.bf16.msra.mxu0 0
      %4500 = vmatprep.subr.bf16.mxu0 0
      %4501 = vmatpush2.bf16.msra.mxu0 0
      %4502 = vmatprep.subr.bf16.mxu0 0
      %4503 = vmatpush2.bf16.msra.mxu0 0
      %4504 = vmatprep.subr.bf16.mxu0 0
      %4505 = vmatpush2.bf16.msra.mxu0 0
      %4506 = vmatprep.mubr.bf16.mxu0 0
      %4507 = vmatmul.mubr.bf16.gmra.mxu0 %v4393
      %v4508 = vpop.f32.mrf.mxu0
      %v4509 = vadd.f32 0.0, %v4508
      %v4510 = vpop.f32.mrf.mxu0
      %v4511 = vpop.f32.mrf.mxu0
      %v4512 = vadd.f32 0.0, %v4511
      %v4513 = vpop.f32.mrf.mxu0
      %4514 = vmatprep.mubr.bf16.mxu0 0
      %4515 = vmatmul.mubr.bf16.gmra.mxu0 %v4394
      %v4516 = vpop.f32.mrf.mxu0
      %v4517 = vadd.f32 0.0, %v4516
      %v4518 = vpop.f32.mrf.mxu0
      %v4519 = vpop.f32.mrf.mxu0
      %v4520 = vadd.f32 0.0, %v4519
      %v4521 = vpop.f32.mrf.mxu0
      %4522 = vmatprep.mubr.bf16.mxu0 0
      %4523 = vmatmul.mubr.bf16.gmra.mxu0 %v4395
      %v4524 = vpop.f32.mrf.mxu0
      %v4525 = vadd.f32 0.0, %v4524
      %v4526 = vpop.f32.mrf.mxu0
      %v4527 = vpop.f32.mrf.mxu0
      %v4528 = vadd.f32 0.0, %v4527
      %v4529 = vpop.f32.mrf.mxu0
      %4530 = vmatprep.mubr.bf16.mxu0 0
      %4531 = vmatmul.mubr.bf16.gmra.mxu0 %v4396
      %v4532 = vpop.f32.mrf.mxu0
      %v4533 = vadd.f32 0.0, %v4532
      %v4534 = vpop.f32.mrf.mxu0
      %v4535 = vpop.f32.mrf.mxu0
      %v4536 = vadd.f32 0.0, %v4535
      %v4537 = vpop.f32.mrf.mxu0
      %4538 = vmatprep.mubr.bf16.mxu0 0
      %4539 = vmatmul.mubr.bf16.gmra.mxu0 %v4397
      %v4540 = vpop.f32.mrf.mxu0
      %v4541 = vadd.f32 0.0, %v4540
      %v4542 = vpop.f32.mrf.mxu0
      %v4543 = vpop.f32.mrf.mxu0
      %v4544 = vadd.f32 0.0, %v4543
      %v4545 = vpop.f32.mrf.mxu0
      %4546 = vmatprep.mubr.bf16.mxu0 0
      %4547 = vmatmul.mubr.bf16.gmra.mxu0 %v4398
      %v4548 = vpop.f32.mrf.mxu0
      %v4549 = vadd.f32 0.0, %v4548
      %v4550 = vpop.f32.mrf.mxu0
      %v4551 = vpop.f32.mrf.mxu0
      %v4552 = vadd.f32 0.0, %v4551
      %v4553 = vpop.f32.mrf.mxu0
      %4554 = vmatprep.mubr.bf16.mxu0 0
      %4555 = vmatmul.mubr.bf16.gmra.mxu0 %v4399
      %v4556 = vpop.f32.mrf.mxu0
      %v4557 = vadd.f32 0.0, %v4556
      %v4558 = vpop.f32.mrf.mxu0
      %v4559 = vpop.f32.mrf.mxu0
      %v4560 = vadd.f32 0.0, %v4559
      %v4561 = vpop.f32.mrf.mxu0
      %4562 = vmatprep.mubr.bf16.mxu0 0
      %4563 = vmatmul.mubr.bf16.gmra.mxu0 %v4400
      %v4564 = vpop.f32.mrf.mxu0
      %v4565 = vadd.f32 0.0, %v4564
      %v4566 = vpop.f32.mrf.mxu0
      %v4567 = vpop.f32.mrf.mxu0
      %v4568 = vadd.f32 0.0, %v4567
      %v4569 = vpop.f32.mrf.mxu0
      %4570 = vmatprep.mubr.bf16.mxu0 0
      %4571 = vmatmul.mubr.bf16.gmra.mxu0 %v4401
      %v4572 = vpop.f32.mrf.mxu0
      %v4573 = vadd.f32 0.0, %v4572
      %v4574 = vpop.f32.mrf.mxu0
      %v4575 = vpop.f32.mrf.mxu0
      %v4576 = vadd.f32 0.0, %v4575
      %v4577 = vpop.f32.mrf.mxu0
      %4578 = vmatprep.mubr.bf16.mxu0 0
      %4579 = vmatmul.mubr.bf16.gmra.mxu0 %v4402
      %v4580 = vpop.f32.mrf.mxu0
      %v4581 = vadd.f32 0.0, %v4580
      %v4582 = vpop.f32.mrf.mxu0
      %v4583 = vpop.f32.mrf.mxu0
      %v4584 = vadd.f32 0.0, %v4583
      %v4585 = vpop.f32.mrf.mxu0
      %4586 = vmatprep.mubr.bf16.mxu0 0
      %4587 = vmatmul.mubr.bf16.gmra.mxu0 %v4403
      %v4588 = vpop.f32.mrf.mxu0
      %v4589 = vadd.f32 0.0, %v4588
      %v4590 = vpop.f32.mrf.mxu0
      %v4591 = vpop.f32.mrf.mxu0
      %v4592 = vadd.f32 0.0, %v4591
      %v4593 = vpop.f32.mrf.mxu0
      %4594 = vmatprep.mubr.bf16.mxu0 0
      %4595 = vmatmul.mubr.bf16.gmra.mxu0 %v4404
      %v4596 = vpop.f32.mrf.mxu0
      %v4597 = vadd.f32 0.0, %v4596
      %v4598 = vpop.f32.mrf.mxu0
      %v4599 = vpop.f32.mrf.mxu0
      %v4600 = vadd.f32 0.0, %v4599
      %v4601 = vpop.f32.mrf.mxu0
      %4602 = vmatprep.mubr.bf16.mxu0 0
      %4603 = vmatmul.mubr.bf16.gmra.mxu0 %v4405
      %v4604 = vpop.f32.mrf.mxu0
      %v4605 = vadd.f32 0.0, %v4604
      %v4606 = vpop.f32.mrf.mxu0
      %v4607 = vpop.f32.mrf.mxu0
      %v4608 = vadd.f32 0.0, %v4607
      %v4609 = vpop.f32.mrf.mxu0
      %4610 = vmatprep.mubr.bf16.mxu0 0
      %4611 = vmatmul.mubr.bf16.gmra.mxu0 %v4406
      %v4612 = vpop.f32.mrf.mxu0
      %v4613 = vadd.f32 0.0, %v4612
      %v4614 = vpop.f32.mrf.mxu0
      %v4615 = vpop.f32.mrf.mxu0
      %v4616 = vadd.f32 0.0, %v4615
      %v4617 = vpop.f32.mrf.mxu0
      %4618 = vmatprep.mubr.bf16.mxu0 0
      %4619 = vmatmul.mubr.bf16.gmra.mxu0 %v4407
      %v4620 = vpop.f32.mrf.mxu0
      %v4621 = vadd.f32 0.0, %v4620
      %v4622 = vpop.f32.mrf.mxu0
      %v4623 = vpop.f32.mrf.mxu0
      %v4624 = vadd.f32 0.0, %v4623
      %v4625 = vpop.f32.mrf.mxu0
      %4626 = vmatprep.mubr.bf16.mxu0 0
      %4627 = vmatmul.mubr.bf16.gmra.mxu0 %v4408
      %v4628 = vpop.f32.mrf.mxu0
      %v4629 = vadd.f32 0.0, %v4628
      %v4630 = vpop.f32.mrf.mxu0
      %v4631 = vpop.f32.mrf.mxu0
      %v4632 = vadd.f32 0.0, %v4631
      %v4633 = vpop.f32.mrf.mxu0
      %4634 = vdwg.mxu0
      %v4635 = vadd.f32 %v4329, %v4509
      %v4636 = vadd.f32 %v4330, %v4512
      %v4637 = vadd.f32 %v4331, %v4517
      %v4638 = vadd.f32 %v4332, %v4520
      %v4639 = vadd.f32 %v4333, %v4525
      %v4640 = vadd.f32 %v4334, %v4528
      %v4641 = vadd.f32 %v4335, %v4533
      %v4642 = vadd.f32 %v4336, %v4536
      %v4643 = vadd.f32 %v4337, %v4541
      %v4644 = vadd.f32 %v4338, %v4544
      %v4645 = vadd.f32 %v4339, %v4549
      %v4646 = vadd.f32 %v4340, %v4552
      %v4647 = vadd.f32 %v4341, %v4557
      %v4648 = vadd.f32 %v4342, %v4560
      %v4649 = vadd.f32 %v4343, %v4565
      %v4650 = vadd.f32 %v4344, %v4568
      %v4651 = vadd.f32 %v4345, %v4573
      %v4652 = vadd.f32 %v4346, %v4576
      %v4653 = vadd.f32 %v4347, %v4581
      %v4654 = vadd.f32 %v4348, %v4584
      %v4655 = vadd.f32 %v4349, %v4589
      %v4656 = vadd.f32 %v4350, %v4592
      %v4657 = vadd.f32 %v4351, %v4597
      %v4658 = vadd.f32 %v4352, %v4600
      %v4659 = vadd.f32 %v4353, %v4605
      %v4660 = vadd.f32 %v4354, %v4608
      %v4661 = vadd.f32 %v4355, %v4613
      %v4662 = vadd.f32 %v4356, %v4616
      %v4663 = vadd.f32 %v4357, %v4621
      %v4664 = vadd.f32 %v4358, %v4624
      %v4665 = vadd.f32 %v4359, %v4629
      %v4666 = vadd.f32 %v4360, %v4632
      %v4667 = vld [vmem:[%s4054 + $0x2] sm:$0xff]
      %v4668 = vld [vmem:[%s4054 + $0xa] sm:$0xff]
      %v4669 = vld [vmem:[%s4054 + $0x1a] sm:$0xff]
      %v4670 = vld [vmem:[%s4054 + $0x22] sm:$0xff]
      %v4671 = vld [vmem:[%s4054 + $0x32] sm:$0xff]
      %v4672 = vld [vmem:[%s4054 + $0x3a] sm:$0xff]
      %v4673 = vld [vmem:[%s4054 + $0x4a] sm:$0xff]
      %v4674 = vld [vmem:[%s4054 + $0x52] sm:$0xff]
      %v4675 = vld [vmem:[%s4054 + $0x62] sm:$0xff]
      %v4676 = vld [vmem:[%s4054 + $0x6a] sm:$0xff]
      %v4677 = vld [vmem:[%s4054 + $0x7a] sm:$0xff]
      %v4678 = vld [vmem:[%s4054 + $0x82] sm:$0xff]
      %v4679 = vld [vmem:[%s4054 + $0x92] sm:$0xff]
      %v4680 = vld [vmem:[%s4054 + $0x9a] sm:$0xff]
      %v4681 = vld [vmem:[%s4054 + $0xaa] sm:$0xff]
      %v4682 = vld [vmem:[%s4054 + $0xb2] sm:$0xff]
      %v4683 = vld [vmem:[%s4054 + $0xc2] sm:$0xff]
      %v4684 = vld [vmem:[%s4054 + $0xca] sm:$0xff]
      %v4685 = vld [vmem:[%s4054 + $0xda] sm:$0xff]
      %v4686 = vld [vmem:[%s4054 + $0xe2] sm:$0xff]
      %v4687 = vld [vmem:[%s4054 + $0xf2] sm:$0xff]
      %v4688 = vld [vmem:[%s4054 + $0xfa] sm:$0xff]
      %v4689 = vld [vmem:[%s4054 + $0x10a] sm:$0xff]
      %v4690 = vld [vmem:[%s4054 + $0x112] sm:$0xff]
      %v4691 = vld [vmem:[%s4054 + $0x122] sm:$0xff]
      %v4692 = vld [vmem:[%s4054 + $0x12a] sm:$0xff]
      %v4693 = vld [vmem:[%s4054 + $0x13a] sm:$0xff]
      %v4694 = vld [vmem:[%s4054 + $0x142] sm:$0xff]
      %v4695 = vld [vmem:[%s4054 + $0x152] sm:$0xff]
      %v4696 = vld [vmem:[%s4054 + $0x15a] sm:$0xff]
      %v4697 = vld [vmem:[%s4054 + $0x16a] sm:$0xff]
      %v4698 = vld [vmem:[%s4054 + $0x172] sm:$0xff]
      %v4699 = vpack.c.bf16 %v4668, %v4667
      %v4700 = vpack.c.bf16 %v4670, %v4669
      %v4701 = vpack.c.bf16 %v4672, %v4671
      %v4702 = vpack.c.bf16 %v4674, %v4673
      %v4703 = vpack.c.bf16 %v4676, %v4675
      %v4704 = vpack.c.bf16 %v4678, %v4677
      %v4705 = vpack.c.bf16 %v4680, %v4679
      %v4706 = vpack.c.bf16 %v4682, %v4681
      %v4707 = vpack.c.bf16 %v4684, %v4683
      %v4708 = vpack.c.bf16 %v4686, %v4685
      %v4709 = vpack.c.bf16 %v4688, %v4687
      %v4710 = vpack.c.bf16 %v4690, %v4689
      %v4711 = vpack.c.bf16 %v4692, %v4691
      %v4712 = vpack.c.bf16 %v4694, %v4693
      %v4713 = vpack.c.bf16 %v4696, %v4695
      %v4714 = vpack.c.bf16 %v4698, %v4697
      %s4715 = scalar_lea.vmem %s3, 512
      %v4716 = vld [vmem:[%s4715] sm:$0xf]
      %v4717 = vld [vmem:[%s4715 + $0x4] sm:$0xf]
      %v4718 = vld [vmem:[%s4715 + $0x8] sm:$0xf]
      %v4719 = vld [vmem:[%s4715 + $0xc] sm:$0xf]
      %v4720 = vld [vmem:[%s4715 + $0x10] sm:$0xf]
      %v4721 = vld [vmem:[%s4715 + $0x14] sm:$0xf]
      %v4722 = vld [vmem:[%s4715 + $0x18] sm:$0xf]
      %v4723 = vld [vmem:[%s4715 + $0x1c] sm:$0xf]
      %v4724 = vld [vmem:[%s4715 + $0x20] sm:$0xf]
      %v4725 = vld [vmem:[%s4715 + $0x24] sm:$0xf]
      %v4726 = vld [vmem:[%s4715 + $0x28] sm:$0xf]
      %v4727 = vld [vmem:[%s4715 + $0x2c] sm:$0xf]
      %v4728 = vld [vmem:[%s4715 + $0x30] sm:$0xf]
      %v4729 = vld [vmem:[%s4715 + $0x34] sm:$0xf]
      %v4730 = vld [vmem:[%s4715 + $0x38] sm:$0xf]
      %v4731 = vld [vmem:[%s4715 + $0x3c] sm:$0xf]
      %v4748 = vunpack.c.l.b16 %v4716
      %v4749 = vunpack.c.l.b16 %v4717
      %v4750 = vunpack.c.l.b16 %v4718
      %v4751 = vunpack.c.l.b16 %v4719
      %v4752 = vunpack.c.l.b16 %v4720
      %v4753 = vunpack.c.l.b16 %v4721
      %v4754 = vunpack.c.l.b16 %v4722
      %v4755 = vunpack.c.l.b16 %v4723
      %v4756 = vunpack.c.l.b16 %v4724
      %v4757 = vunpack.c.l.b16 %v4725
      %v4758 = vunpack.c.l.b16 %v4726
      %v4759 = vunpack.c.l.b16 %v4727
      %v4760 = vunpack.c.l.b16 %v4728
      %v4761 = vunpack.c.l.b16 %v4729
      %v4762 = vunpack.c.l.b16 %v4730
      %v4763 = vunpack.c.l.b16 %v4731
      %v4764 = vpack.c.b16 %v4749, %v4748
      %v4765 = vpack.c.b16 %v4751, %v4750
      %v4766 = vpack.c.b16 %v4753, %v4752
      %v4767 = vpack.c.b16 %v4755, %v4754
      %v4768 = vpack.c.b16 %v4757, %v4756
      %v4769 = vpack.c.b16 %v4759, %v4758
      %v4770 = vpack.c.b16 %v4761, %v4760
      %v4771 = vpack.c.b16 %v4763, %v4762
      %4780 = vmatprep.subr.bf16.mxu0 0
      %4781 = vmatpush1.bf16.msra.mxu0 %v4771
      %4782 = vmatprep.subr.bf16.mxu0 0
      %4783 = vmatpush1.bf16.msra.mxu0 %v4770
      %4784 = vmatprep.subr.bf16.mxu0 0
      %4785 = vmatpush1.bf16.msra.mxu0 %v4769
      %4786 = vmatprep.subr.bf16.mxu0 0
      %4787 = vmatpush1.bf16.msra.mxu0 %v4768
      %4788 = vmatprep.subr.bf16.mxu0 0
      %4789 = vmatpush1.bf16.msra.mxu0 %v4767
      %4790 = vmatprep.subr.bf16.mxu0 0
      %4791 = vmatpush1.bf16.msra.mxu0 %v4766
      %4792 = vmatprep.subr.bf16.mxu0 0
      %4793 = vmatpush1.bf16.msra.mxu0 %v4765
      %4794 = vmatprep.subr.bf16.mxu0 0
      %4795 = vmatpush1.bf16.msra.mxu0 %v4764
      %4796 = vmatprep.subr.bf16.mxu0 0
      %4797 = vmatpush2.bf16.msra.mxu0 0
      %4798 = vmatprep.subr.bf16.mxu0 0
      %4799 = vmatpush2.bf16.msra.mxu0 0
      %4800 = vmatprep.subr.bf16.mxu0 0
      %4801 = vmatpush2.bf16.msra.mxu0 0
      %4802 = vmatprep.subr.bf16.mxu0 0
      %4803 = vmatpush2.bf16.msra.mxu0 0
      %4804 = vmatprep.subr.bf16.mxu0 0
      %4805 = vmatpush2.bf16.msra.mxu0 0
      %4806 = vmatprep.subr.bf16.mxu0 0
      %4807 = vmatpush2.bf16.msra.mxu0 0
      %4808 = vmatprep.subr.bf16.mxu0 0
      %4809 = vmatpush2.bf16.msra.mxu0 0
      %4810 = vmatprep.subr.bf16.mxu0 0
      %4811 = vmatpush2.bf16.msra.mxu0 0
      %4812 = vmatprep.mubr.bf16.mxu0 0
      %4813 = vmatmul.mubr.bf16.gmra.mxu0 %v4699
      %v4814 = vpop.f32.mrf.mxu0
      %v4815 = vadd.f32 0.0, %v4814
      %v4816 = vpop.f32.mrf.mxu0
      %v4817 = vpop.f32.mrf.mxu0
      %v4818 = vadd.f32 0.0, %v4817
      %v4819 = vpop.f32.mrf.mxu0
      %4820 = vmatprep.mubr.bf16.mxu0 0
      %4821 = vmatmul.mubr.bf16.gmra.mxu0 %v4700
      %v4822 = vpop.f32.mrf.mxu0
      %v4823 = vadd.f32 0.0, %v4822
      %v4824 = vpop.f32.mrf.mxu0
      %v4825 = vpop.f32.mrf.mxu0
      %v4826 = vadd.f32 0.0, %v4825
      %v4827 = vpop.f32.mrf.mxu0
      %4828 = vmatprep.mubr.bf16.mxu0 0
      %4829 = vmatmul.mubr.bf16.gmra.mxu0 %v4701
      %v4830 = vpop.f32.mrf.mxu0
      %v4831 = vadd.f32 0.0, %v4830
      %v4832 = vpop.f32.mrf.mxu0
      %v4833 = vpop.f32.mrf.mxu0
      %v4834 = vadd.f32 0.0, %v4833
      %v4835 = vpop.f32.mrf.mxu0
      %4836 = vmatprep.mubr.bf16.mxu0 0
      %4837 = vmatmul.mubr.bf16.gmra.mxu0 %v4702
      %v4838 = vpop.f32.mrf.mxu0
      %v4839 = vadd.f32 0.0, %v4838
      %v4840 = vpop.f32.mrf.mxu0
      %v4841 = vpop.f32.mrf.mxu0
      %v4842 = vadd.f32 0.0, %v4841
      %v4843 = vpop.f32.mrf.mxu0
      %4844 = vmatprep.mubr.bf16.mxu0 0
      %4845 = vmatmul.mubr.bf16.gmra.mxu0 %v4703
      %v4846 = vpop.f32.mrf.mxu0
      %v4847 = vadd.f32 0.0, %v4846
      %v4848 = vpop.f32.mrf.mxu0
      %v4849 = vpop.f32.mrf.mxu0
      %v4850 = vadd.f32 0.0, %v4849
      %v4851 = vpop.f32.mrf.mxu0
      %4852 = vmatprep.mubr.bf16.mxu0 0
      %4853 = vmatmul.mubr.bf16.gmra.mxu0 %v4704
      %v4854 = vpop.f32.mrf.mxu0
      %v4855 = vadd.f32 0.0, %v4854
      %v4856 = vpop.f32.mrf.mxu0
      %v4857 = vpop.f32.mrf.mxu0
      %v4858 = vadd.f32 0.0, %v4857
      %v4859 = vpop.f32.mrf.mxu0
      %4860 = vmatprep.mubr.bf16.mxu0 0
      %4861 = vmatmul.mubr.bf16.gmra.mxu0 %v4705
      %v4862 = vpop.f32.mrf.mxu0
      %v4863 = vadd.f32 0.0, %v4862
      %v4864 = vpop.f32.mrf.mxu0
      %v4865 = vpop.f32.mrf.mxu0
      %v4866 = vadd.f32 0.0, %v4865
      %v4867 = vpop.f32.mrf.mxu0
      %4868 = vmatprep.mubr.bf16.mxu0 0
      %4869 = vmatmul.mubr.bf16.gmra.mxu0 %v4706
      %v4870 = vpop.f32.mrf.mxu0
      %v4871 = vadd.f32 0.0, %v4870
      %v4872 = vpop.f32.mrf.mxu0
      %v4873 = vpop.f32.mrf.mxu0
      %v4874 = vadd.f32 0.0, %v4873
      %v4875 = vpop.f32.mrf.mxu0
      %4876 = vmatprep.mubr.bf16.mxu0 0
      %4877 = vmatmul.mubr.bf16.gmra.mxu0 %v4707
      %v4878 = vpop.f32.mrf.mxu0
      %v4879 = vadd.f32 0.0, %v4878
      %v4880 = vpop.f32.mrf.mxu0
      %v4881 = vpop.f32.mrf.mxu0
      %v4882 = vadd.f32 0.0, %v4881
      %v4883 = vpop.f32.mrf.mxu0
      %4884 = vmatprep.mubr.bf16.mxu0 0
      %4885 = vmatmul.mubr.bf16.gmra.mxu0 %v4708
      %v4886 = vpop.f32.mrf.mxu0
      %v4887 = vadd.f32 0.0, %v4886
      %v4888 = vpop.f32.mrf.mxu0
      %v4889 = vpop.f32.mrf.mxu0
      %v4890 = vadd.f32 0.0, %v4889
      %v4891 = vpop.f32.mrf.mxu0
      %4892 = vmatprep.mubr.bf16.mxu0 0
      %4893 = vmatmul.mubr.bf16.gmra.mxu0 %v4709
      %v4894 = vpop.f32.mrf.mxu0
      %v4895 = vadd.f32 0.0, %v4894
      %v4896 = vpop.f32.mrf.mxu0
      %v4897 = vpop.f32.mrf.mxu0
      %v4898 = vadd.f32 0.0, %v4897
      %v4899 = vpop.f32.mrf.mxu0
      %4900 = vmatprep.mubr.bf16.mxu0 0
      %4901 = vmatmul.mubr.bf16.gmra.mxu0 %v4710
      %v4902 = vpop.f32.mrf.mxu0
      %v4903 = vadd.f32 0.0, %v4902
      %v4904 = vpop.f32.mrf.mxu0
      %v4905 = vpop.f32.mrf.mxu0
      %v4906 = vadd.f32 0.0, %v4905
      %v4907 = vpop.f32.mrf.mxu0
      %4908 = vmatprep.mubr.bf16.mxu0 0
      %4909 = vmatmul.mubr.bf16.gmra.mxu0 %v4711
      %v4910 = vpop.f32.mrf.mxu0
      %v4911 = vadd.f32 0.0, %v4910
      %v4912 = vpop.f32.mrf.mxu0
      %v4913 = vpop.f32.mrf.mxu0
      %v4914 = vadd.f32 0.0, %v4913
      %v4915 = vpop.f32.mrf.mxu0
      %4916 = vmatprep.mubr.bf16.mxu0 0
      %4917 = vmatmul.mubr.bf16.gmra.mxu0 %v4712
      %v4918 = vpop.f32.mrf.mxu0
      %v4919 = vadd.f32 0.0, %v4918
      %v4920 = vpop.f32.mrf.mxu0
      %v4921 = vpop.f32.mrf.mxu0
      %v4922 = vadd.f32 0.0, %v4921
      %v4923 = vpop.f32.mrf.mxu0
      %4924 = vmatprep.mubr.bf16.mxu0 0
      %4925 = vmatmul.mubr.bf16.gmra.mxu0 %v4713
      %v4926 = vpop.f32.mrf.mxu0
      %v4927 = vadd.f32 0.0, %v4926
      %v4928 = vpop.f32.mrf.mxu0
      %v4929 = vpop.f32.mrf.mxu0
      %v4930 = vadd.f32 0.0, %v4929
      %v4931 = vpop.f32.mrf.mxu0
      %4932 = vmatprep.mubr.bf16.mxu0 0
      %4933 = vmatmul.mubr.bf16.gmra.mxu0 %v4714
      %v4934 = vpop.f32.mrf.mxu0
      %v4935 = vadd.f32 0.0, %v4934
      %v4936 = vpop.f32.mrf.mxu0
      %v4937 = vpop.f32.mrf.mxu0
      %v4938 = vadd.f32 0.0, %v4937
      %v4939 = vpop.f32.mrf.mxu0
      %4940 = vdwg.mxu0
      %v4941 = vadd.f32 %v4635, %v4815
      %v4942 = vadd.f32 %v4636, %v4818
      %v4943 = vadd.f32 %v4637, %v4823
      %v4944 = vadd.f32 %v4638, %v4826
      %v4945 = vadd.f32 %v4639, %v4831
      %v4946 = vadd.f32 %v4640, %v4834
      %v4947 = vadd.f32 %v4641, %v4839
      %v4948 = vadd.f32 %v4642, %v4842
      %v4949 = vadd.f32 %v4643, %v4847
      %v4950 = vadd.f32 %v4644, %v4850
      %v4951 = vadd.f32 %v4645, %v4855
      %v4952 = vadd.f32 %v4646, %v4858
      %v4953 = vadd.f32 %v4647, %v4863
      %v4954 = vadd.f32 %v4648, %v4866
      %v4955 = vadd.f32 %v4649, %v4871
      %v4956 = vadd.f32 %v4650, %v4874
      %v4957 = vadd.f32 %v4651, %v4879
      %v4958 = vadd.f32 %v4652, %v4882
      %v4959 = vadd.f32 %v4653, %v4887
      %v4960 = vadd.f32 %v4654, %v4890
      %v4961 = vadd.f32 %v4655, %v4895
      %v4962 = vadd.f32 %v4656, %v4898
      %v4963 = vadd.f32 %v4657, %v4903
      %v4964 = vadd.f32 %v4658, %v4906
      %v4965 = vadd.f32 %v4659, %v4911
      %v4966 = vadd.f32 %v4660, %v4914
      %v4967 = vadd.f32 %v4661, %v4919
      %v4968 = vadd.f32 %v4662, %v4922
      %v4969 = vadd.f32 %v4663, %v4927
      %v4970 = vadd.f32 %v4664, %v4930
      %v4971 = vadd.f32 %v4665, %v4935
      %v4972 = vadd.f32 %v4666, %v4938
      %v4973 = vld [vmem:[%s4] sm:$0x1]
      %v4975 = vlaneseq
      %v4976 = vshrl.u32 %v4975, 7
      %v4977 = vsub.s32 0, %v4976
      %v4978 = vrot.slane %v4973, %v4977
      %v4980 = vadd.f32 %v4941, %v4978
      %v4981 = vadd.f32 %v4942, %v4978
      %v4982 = vadd.f32 %v4943, %v4978
      %v4983 = vadd.f32 %v4944, %v4978
      %v4984 = vadd.f32 %v4945, %v4978
      %v4985 = vadd.f32 %v4946, %v4978
      %v4986 = vadd.f32 %v4947, %v4978
      %v4987 = vadd.f32 %v4948, %v4978
      %v4988 = vadd.f32 %v4949, %v4978
      %v4989 = vadd.f32 %v4950, %v4978
      %v4990 = vadd.f32 %v4951, %v4978
      %v4991 = vadd.f32 %v4952, %v4978
      %v4992 = vadd.f32 %v4953, %v4978
      %v4993 = vadd.f32 %v4954, %v4978
      %v4994 = vadd.f32 %v4955, %v4978
      %v4995 = vadd.f32 %v4956, %v4978
      %v4996 = vadd.f32 %v4957, %v4978
      %v4997 = vadd.f32 %v4958, %v4978
      %v4998 = vadd.f32 %v4959, %v4978
      %v4999 = vadd.f32 %v4960, %v4978
      %v5000 = vadd.f32 %v4961, %v4978
      %v5001 = vadd.f32 %v4962, %v4978
      %v5002 = vadd.f32 %v4963, %v4978
      %v5003 = vadd.f32 %v4964, %v4978
      %v5004 = vadd.f32 %v4965, %v4978
      %v5005 = vadd.f32 %v4966, %v4978
      %v5006 = vadd.f32 %v4967, %v4978
      %v5007 = vadd.f32 %v4968, %v4978
      %v5008 = vadd.f32 %v4969, %v4978
      %v5009 = vadd.f32 %v4970, %v4978
      %v5010 = vadd.f32 %v4971, %v4978
      %v5011 = vadd.f32 %v4972, %v4978
      %v5012 = vmax.f32 %v4980, 0.0
      %v5013 = vmax.f32 %v4981, 0.0
      %v5014 = vmax.f32 %v4982, 0.0
      %v5015 = vmax.f32 %v4983, 0.0
      %v5016 = vmax.f32 %v4984, 0.0
      %v5017 = vmax.f32 %v4985, 0.0
      %v5018 = vmax.f32 %v4986, 0.0
      %v5019 = vmax.f32 %v4987, 0.0
      %v5020 = vmax.f32 %v4988, 0.0
      %v5021 = vmax.f32 %v4989, 0.0
      %v5022 = vmax.f32 %v4990, 0.0
      %v5023 = vmax.f32 %v4991, 0.0
      %v5024 = vmax.f32 %v4992, 0.0
      %v5025 = vmax.f32 %v4993, 0.0
      %v5026 = vmax.f32 %v4994, 0.0
      %v5027 = vmax.f32 %v4995, 0.0
      %v5028 = vmax.f32 %v4996, 0.0
      %v5029 = vmax.f32 %v4997, 0.0
      %v5030 = vmax.f32 %v4998, 0.0
      %v5031 = vmax.f32 %v4999, 0.0
      %v5032 = vmax.f32 %v5000, 0.0
      %v5033 = vmax.f32 %v5001, 0.0
      %v5034 = vmax.f32 %v5002, 0.0
      %v5035 = vmax.f32 %v5003, 0.0
      %v5036 = vmax.f32 %v5004, 0.0
      %v5037 = vmax.f32 %v5005, 0.0
      %v5038 = vmax.f32 %v5006, 0.0
      %v5039 = vmax.f32 %v5007, 0.0
      %v5040 = vmax.f32 %v5008, 0.0
      %v5041 = vmax.f32 %v5009, 0.0
      %v5042 = vmax.f32 %v5010, 0.0
      %v5043 = vmax.f32 %v5011, 0.0
      %s5044 = scalar_lea.vmem [#allocation4], 24
      %5045 = vst [vmem:[%s5044 + $0x1] sm:$0xff] %v5012
      %5046 = vst [vmem:[%s5044 + $0x9] sm:$0xff] %v5013
      %5047 = vst [vmem:[%s5044 + $0x19] sm:$0xff] %v5014
      %5048 = vst [vmem:[%s5044 + $0x21] sm:$0xff] %v5015
      %5049 = vst [vmem:[%s5044 + $0x31] sm:$0xff] %v5016
      %5050 = vst [vmem:[%s5044 + $0x39] sm:$0xff] %v5017
      %5051 = vst [vmem:[%s5044 + $0x49] sm:$0xff] %v5018
      %5052 = vst [vmem:[%s5044 + $0x51] sm:$0xff] %v5019
      %5053 = vst [vmem:[%s5044 + $0x61] sm:$0xff] %v5020
      %5054 = vst [vmem:[%s5044 + $0x69] sm:$0xff] %v5021
      %5055 = vst [vmem:[%s5044 + $0x79] sm:$0xff] %v5022
      %5056 = vst [vmem:[%s5044 + $0x81] sm:$0xff] %v5023
      %5057 = vst [vmem:[%s5044 + $0x91] sm:$0xff] %v5024
      %5058 = vst [vmem:[%s5044 + $0x99] sm:$0xff] %v5025
      %5059 = vst [vmem:[%s5044 + $0xa9] sm:$0xff] %v5026
      %5060 = vst [vmem:[%s5044 + $0xb1] sm:$0xff] %v5027
      %5061 = vst [vmem:[%s5044 + $0xc1] sm:$0xff] %v5028
      %5062 = vst [vmem:[%s5044 + $0xc9] sm:$0xff] %v5029
      %5063 = vst [vmem:[%s5044 + $0xd9] sm:$0xff] %v5030
      %5064 = vst [vmem:[%s5044 + $0xe1] sm:$0xff] %v5031
      %5065 = vst [vmem:[%s5044 + $0xf1] sm:$0xff] %v5032
      %5066 = vst [vmem:[%s5044 + $0xf9] sm:$0xff] %v5033
      %5067 = vst [vmem:[%s5044 + $0x109] sm:$0xff] %v5034
      %5068 = vst [vmem:[%s5044 + $0x111] sm:$0xff] %v5035
      %5069 = vst [vmem:[%s5044 + $0x121] sm:$0xff] %v5036
      %5070 = vst [vmem:[%s5044 + $0x129] sm:$0xff] %v5037
      %5071 = vst [vmem:[%s5044 + $0x139] sm:$0xff] %v5038
      %5072 = vst [vmem:[%s5044 + $0x141] sm:$0xff] %v5039
      %5073 = vst [vmem:[%s5044 + $0x151] sm:$0xff] %v5040
      %5074 = vst [vmem:[%s5044 + $0x159] sm:$0xff] %v5041
      %5075 = vst [vmem:[%s5044 + $0x169] sm:$0xff] %v5042
      %5076 = vst [vmem:[%s5044 + $0x171] sm:$0xff] %v5043
      %v5077 = vld [vmem:[#allocation4] sm:$0xff]
      %v5078 = vld [vmem:[#allocation4 + $0x8] sm:$0xff]
      %v5079 = vld [vmem:[#allocation4 + $0x18] sm:$0xff]
      %v5080 = vld [vmem:[#allocation4 + $0x20] sm:$0xff]
      %v5081 = vld [vmem:[#allocation4 + $0x30] sm:$0xff]
      %v5082 = vld [vmem:[#allocation4 + $0x38] sm:$0xff]
      %v5083 = vld [vmem:[#allocation4 + $0x48] sm:$0xff]
      %v5084 = vld [vmem:[#allocation4 + $0x50] sm:$0xff]
      %v5085 = vld [vmem:[#allocation4 + $0x60] sm:$0xff]
      %v5086 = vld [vmem:[#allocation4 + $0x68] sm:$0xff]
      %v5087 = vld [vmem:[#allocation4 + $0x78] sm:$0xff]
      %v5088 = vld [vmem:[#allocation4 + $0x80] sm:$0xff]
      %v5089 = vld [vmem:[#allocation4 + $0x90] sm:$0xff]
      %v5090 = vld [vmem:[#allocation4 + $0x98] sm:$0xff]
      %v5091 = vld [vmem:[#allocation4 + $0xa8] sm:$0xff]
      %v5092 = vld [vmem:[#allocation4 + $0xb0] sm:$0xff]
      %v5093 = vld [vmem:[#allocation4 + $0xc0] sm:$0xff]
      %v5094 = vld [vmem:[#allocation4 + $0xc8] sm:$0xff]
      %v5095 = vld [vmem:[#allocation4 + $0xd8] sm:$0xff]
      %v5096 = vld [vmem:[#allocation4 + $0xe0] sm:$0xff]
      %v5097 = vld [vmem:[#allocation4 + $0xf0] sm:$0xff]
      %v5098 = vld [vmem:[#allocation4 + $0xf8] sm:$0xff]
      %v5099 = vld [vmem:[#allocation4 + $0x108] sm:$0xff]
      %v5100 = vld [vmem:[#allocation4 + $0x110] sm:$0xff]
      %v5101 = vld [vmem:[#allocation4 + $0x120] sm:$0xff]
      %v5102 = vld [vmem:[#allocation4 + $0x128] sm:$0xff]
      %v5103 = vld [vmem:[#allocation4 + $0x138] sm:$0xff]
      %v5104 = vld [vmem:[#allocation4 + $0x140] sm:$0xff]
      %v5105 = vld [vmem:[#allocation4 + $0x150] sm:$0xff]
      %v5106 = vld [vmem:[#allocation4 + $0x158] sm:$0xff]
      %v5107 = vld [vmem:[#allocation4 + $0x168] sm:$0xff]
      %v5108 = vld [vmem:[#allocation4 + $0x170] sm:$0xff]
      %v5109 = vpack.c.bf16 %v5078, %v5077
      %v5110 = vpack.c.bf16 %v5080, %v5079
      %v5111 = vpack.c.bf16 %v5082, %v5081
      %v5112 = vpack.c.bf16 %v5084, %v5083
      %v5113 = vpack.c.bf16 %v5086, %v5085
      %v5114 = vpack.c.bf16 %v5088, %v5087
      %v5115 = vpack.c.bf16 %v5090, %v5089
      %v5116 = vpack.c.bf16 %v5092, %v5091
      %v5117 = vpack.c.bf16 %v5094, %v5093
      %v5118 = vpack.c.bf16 %v5096, %v5095
      %v5119 = vpack.c.bf16 %v5098, %v5097
      %v5120 = vpack.c.bf16 %v5100, %v5099
      %v5121 = vpack.c.bf16 %v5102, %v5101
      %v5122 = vpack.c.bf16 %v5104, %v5103
      %v5123 = vpack.c.bf16 %v5106, %v5105
      %v5124 = vpack.c.bf16 %v5108, %v5107
      %v5125 = vld [vmem:[%s5] sm:$0xf]
      %v5126 = vld [vmem:[%s5 + $0x4] sm:$0xf]
      %v5127 = vld [vmem:[%s5 + $0x8] sm:$0xf]
      %v5128 = vld [vmem:[%s5 + $0xc] sm:$0xf]
      %v5129 = vld [vmem:[%s5 + $0x10] sm:$0xf]
      %v5130 = vld [vmem:[%s5 + $0x14] sm:$0xf]
      %v5131 = vld [vmem:[%s5 + $0x18] sm:$0xf]
      %v5132 = vld [vmem:[%s5 + $0x1c] sm:$0xf]
      %v5133 = vld [vmem:[%s5 + $0x20] sm:$0xf]
      %v5134 = vld [vmem:[%s5 + $0x24] sm:$0xf]
      %v5135 = vld [vmem:[%s5 + $0x28] sm:$0xf]
      %v5136 = vld [vmem:[%s5 + $0x2c] sm:$0xf]
      %v5137 = vld [vmem:[%s5 + $0x30] sm:$0xf]
      %v5138 = vld [vmem:[%s5 + $0x34] sm:$0xf]
      %v5139 = vld [vmem:[%s5 + $0x38] sm:$0xf]
      %v5140 = vld [vmem:[%s5 + $0x3c] sm:$0xf]
      %v5141 = vld [vmem:[#allocation4 + $0x1] sm:$0xff]
      %v5142 = vld [vmem:[#allocation4 + $0x9] sm:$0xff]
      %v5143 = vld [vmem:[#allocation4 + $0x19] sm:$0xff]
      %v5144 = vld [vmem:[#allocation4 + $0x21] sm:$0xff]
      %v5145 = vld [vmem:[#allocation4 + $0x31] sm:$0xff]
      %v5146 = vld [vmem:[#allocation4 + $0x39] sm:$0xff]
      %v5147 = vld [vmem:[#allocation4 + $0x49] sm:$0xff]
      %v5148 = vld [vmem:[#allocation4 + $0x51] sm:$0xff]
      %v5149 = vld [vmem:[#allocation4 + $0x61] sm:$0xff]
      %v5150 = vld [vmem:[#allocation4 + $0x69] sm:$0xff]
      %v5151 = vld [vmem:[#allocation4 + $0x79] sm:$0xff]
      %v5152 = vld [vmem:[#allocation4 + $0x81] sm:$0xff]
      %v5153 = vld [vmem:[#allocation4 + $0x91] sm:$0xff]
      %v5154 = vld [vmem:[#allocation4 + $0x99] sm:$0xff]
      %v5155 = vld [vmem:[#allocation4 + $0xa9] sm:$0xff]
      %v5156 = vld [vmem:[#allocation4 + $0xb1] sm:$0xff]
      %v5157 = vld [vmem:[#allocation4 + $0xc1] sm:$0xff]
      %v5158 = vld [vmem:[#allocation4 + $0xc9] sm:$0xff]
      %v5159 = vld [vmem:[#allocation4 + $0xd9] sm:$0xff]
      %v5160 = vld [vmem:[#allocation4 + $0xe1] sm:$0xff]
      %v5161 = vld [vmem:[#allocation4 + $0xf1] sm:$0xff]
      %v5162 = vld [vmem:[#allocation4 + $0xf9] sm:$0xff]
      %v5163 = vld [vmem:[#allocation4 + $0x109] sm:$0xff]
      %v5164 = vld [vmem:[#allocation4 + $0x111] sm:$0xff]
      %v5165 = vld [vmem:[#allocation4 + $0x121] sm:$0xff]
      %v5166 = vld [vmem:[#allocation4 + $0x129] sm:$0xff]
      %v5167 = vld [vmem:[#allocation4 + $0x139] sm:$0xff]
      %v5168 = vld [vmem:[#allocation4 + $0x141] sm:$0xff]
      %v5169 = vld [vmem:[#allocation4 + $0x151] sm:$0xff]
      %v5170 = vld [vmem:[#allocation4 + $0x159] sm:$0xff]
      %v5171 = vld [vmem:[#allocation4 + $0x169] sm:$0xff]
      %v5172 = vld [vmem:[#allocation4 + $0x171] sm:$0xff]
      %v5173 = vpack.c.bf16 %v5142, %v5141
      %v5174 = vpack.c.bf16 %v5144, %v5143
      %v5175 = vpack.c.bf16 %v5146, %v5145
      %v5176 = vpack.c.bf16 %v5148, %v5147
      %v5177 = vpack.c.bf16 %v5150, %v5149
      %v5178 = vpack.c.bf16 %v5152, %v5151
      %v5179 = vpack.c.bf16 %v5154, %v5153
      %v5180 = vpack.c.bf16 %v5156, %v5155
      %v5181 = vpack.c.bf16 %v5158, %v5157
      %v5182 = vpack.c.bf16 %v5160, %v5159
      %v5183 = vpack.c.bf16 %v5162, %v5161
      %v5184 = vpack.c.bf16 %v5164, %v5163
      %v5185 = vpack.c.bf16 %v5166, %v5165
      %v5186 = vpack.c.bf16 %v5168, %v5167
      %v5187 = vpack.c.bf16 %v5170, %v5169
      %v5188 = vpack.c.bf16 %v5172, %v5171
      %s5189 = scalar_lea.vmem %s5, 64
      %v5190 = vld [vmem:[%s5189] sm:$0xf]
      %v5191 = vld [vmem:[%s5189 + $0x4] sm:$0xf]
      %v5192 = vld [vmem:[%s5189 + $0x8] sm:$0xf]
      %v5193 = vld [vmem:[%s5189 + $0xc] sm:$0xf]
      %v5194 = vld [vmem:[%s5189 + $0x10] sm:$0xf]
      %v5195 = vld [vmem:[%s5189 + $0x14] sm:$0xf]
      %v5196 = vld [vmem:[%s5189 + $0x18] sm:$0xf]
      %v5197 = vld [vmem:[%s5189 + $0x1c] sm:$0xf]
      %v5198 = vld [vmem:[%s5189 + $0x20] sm:$0xf]
      %v5199 = vld [vmem:[%s5189 + $0x24] sm:$0xf]
      %v5200 = vld [vmem:[%s5189 + $0x28] sm:$0xf]
      %v5201 = vld [vmem:[%s5189 + $0x2c] sm:$0xf]
      %v5202 = vld [vmem:[%s5189 + $0x30] sm:$0xf]
      %v5203 = vld [vmem:[%s5189 + $0x34] sm:$0xf]
      %v5204 = vld [vmem:[%s5189 + $0x38] sm:$0xf]
      %v5205 = vld [vmem:[%s5189 + $0x3c] sm:$0xf]
      %v5222 = vunpack.c.l.b16 %v5190
      %v5223 = vunpack.c.l.b16 %v5191
      %v5224 = vunpack.c.l.b16 %v5192
      %v5225 = vunpack.c.l.b16 %v5193
      %v5226 = vunpack.c.l.b16 %v5194
      %v5227 = vunpack.c.l.b16 %v5195
      %v5228 = vunpack.c.l.b16 %v5196
      %v5229 = vunpack.c.l.b16 %v5197
      %v5230 = vunpack.c.l.b16 %v5198
      %v5231 = vunpack.c.l.b16 %v5199
      %v5232 = vunpack.c.l.b16 %v5200
      %v5233 = vunpack.c.l.b16 %v5201
      %v5234 = vunpack.c.l.b16 %v5202
      %v5235 = vunpack.c.l.b16 %v5203
      %v5236 = vunpack.c.l.b16 %v5204
      %v5237 = vunpack.c.l.b16 %v5205
      %v5238 = vpack.c.b16 %v5223, %v5222
      %v5239 = vpack.c.b16 %v5225, %v5224
      %v5240 = vpack.c.b16 %v5227, %v5226
      %v5241 = vpack.c.b16 %v5229, %v5228
      %v5242 = vpack.c.b16 %v5231, %v5230
      %v5243 = vpack.c.b16 %v5233, %v5232
      %v5244 = vpack.c.b16 %v5235, %v5234
      %v5245 = vpack.c.b16 %v5237, %v5236
      %5254 = vmatprep.subr.bf16.mxu0 0
      %5255 = vmatpush1.bf16.msra.mxu0 %v5245
      %5256 = vmatprep.subr.bf16.mxu0 0
      %5257 = vmatpush1.bf16.msra.mxu0 %v5244
      %5258 = vmatprep.subr.bf16.mxu0 0
      %5259 = vmatpush1.bf16.msra.mxu0 %v5243
      %5260 = vmatprep.subr.bf16.mxu0 0
      %5261 = vmatpush1.bf16.msra.mxu0 %v5242
      %5262 = vmatprep.subr.bf16.mxu0 0
      %5263 = vmatpush1.bf16.msra.mxu0 %v5241
      %5264 = vmatprep.subr.bf16.mxu0 0
      %5265 = vmatpush1.bf16.msra.mxu0 %v5240
      %5266 = vmatprep.subr.bf16.mxu0 0
      %5267 = vmatpush1.bf16.msra.mxu0 %v5239
      %5268 = vmatprep.subr.bf16.mxu0 0
      %5269 = vmatpush1.bf16.msra.mxu0 %v5238
      %5270 = vmatprep.subr.bf16.mxu0 0
      %5271 = vmatpush2.bf16.msra.mxu0 0
      %5272 = vmatprep.subr.bf16.mxu0 0
      %5273 = vmatpush2.bf16.msra.mxu0 0
      %5274 = vmatprep.subr.bf16.mxu0 0
      %5275 = vmatpush2.bf16.msra.mxu0 0
      %5276 = vmatprep.subr.bf16.mxu0 0
      %5277 = vmatpush2.bf16.msra.mxu0 0
      %5278 = vmatprep.subr.bf16.mxu0 0
      %5279 = vmatpush2.bf16.msra.mxu0 0
      %5280 = vmatprep.subr.bf16.mxu0 0
      %5281 = vmatpush2.bf16.msra.mxu0 0
      %5282 = vmatprep.subr.bf16.mxu0 0
      %5283 = vmatpush2.bf16.msra.mxu0 0
      %5284 = vmatprep.subr.bf16.mxu0 0
      %5285 = vmatpush2.bf16.msra.mxu0 0
      %5286 = vmatprep.mubr.bf16.mxu0 0
      %5287 = vmatmul.mubr.bf16.gmra.mxu0 %v5173
      %v5288 = vpop.f32.mrf.mxu0
      %v5289 = vadd.f32 0.0, %v5288
      %v5290 = vpop.f32.mrf.mxu0
      %v5291 = vpop.f32.mrf.mxu0
      %v5292 = vadd.f32 0.0, %v5291
      %v5293 = vpop.f32.mrf.mxu0
      %5294 = vmatprep.mubr.bf16.mxu0 0
      %5295 = vmatmul.mubr.bf16.gmra.mxu0 %v5174
      %v5296 = vpop.f32.mrf.mxu0
      %v5297 = vadd.f32 0.0, %v5296
      %v5298 = vpop.f32.mrf.mxu0
      %v5299 = vpop.f32.mrf.mxu0
      %v5300 = vadd.f32 0.0, %v5299
      %v5301 = vpop.f32.mrf.mxu0
      %5302 = vmatprep.mubr.bf16.mxu0 0
      %5303 = vmatmul.mubr.bf16.gmra.mxu0 %v5175
      %v5304 = vpop.f32.mrf.mxu0
      %v5305 = vadd.f32 0.0, %v5304
      %v5306 = vpop.f32.mrf.mxu0
      %v5307 = vpop.f32.mrf.mxu0
      %v5308 = vadd.f32 0.0, %v5307
      %v5309 = vpop.f32.mrf.mxu0
      %5310 = vmatprep.mubr.bf16.mxu0 0
      %5311 = vmatmul.mubr.bf16.gmra.mxu0 %v5176
      %v5312 = vpop.f32.mrf.mxu0
      %v5313 = vadd.f32 0.0, %v5312
      %v5314 = vpop.f32.mrf.mxu0
      %v5315 = vpop.f32.mrf.mxu0
      %v5316 = vadd.f32 0.0, %v5315
      %v5317 = vpop.f32.mrf.mxu0
      %5318 = vmatprep.mubr.bf16.mxu0 0
      %5319 = vmatmul.mubr.bf16.gmra.mxu0 %v5177
      %v5320 = vpop.f32.mrf.mxu0
      %v5321 = vadd.f32 0.0, %v5320
      %v5322 = vpop.f32.mrf.mxu0
      %v5323 = vpop.f32.mrf.mxu0
      %v5324 = vadd.f32 0.0, %v5323
      %v5325 = vpop.f32.mrf.mxu0
      %5326 = vmatprep.mubr.bf16.mxu0 0
      %5327 = vmatmul.mubr.bf16.gmra.mxu0 %v5178
      %v5328 = vpop.f32.mrf.mxu0
      %v5329 = vadd.f32 0.0, %v5328
      %v5330 = vpop.f32.mrf.mxu0
      %v5331 = vpop.f32.mrf.mxu0
      %v5332 = vadd.f32 0.0, %v5331
      %v5333 = vpop.f32.mrf.mxu0
      %5334 = vmatprep.mubr.bf16.mxu0 0
      %5335 = vmatmul.mubr.bf16.gmra.mxu0 %v5179
      %v5336 = vpop.f32.mrf.mxu0
      %v5337 = vadd.f32 0.0, %v5336
      %v5338 = vpop.f32.mrf.mxu0
      %v5339 = vpop.f32.mrf.mxu0
      %v5340 = vadd.f32 0.0, %v5339
      %v5341 = vpop.f32.mrf.mxu0
      %5342 = vmatprep.mubr.bf16.mxu0 0
      %5343 = vmatmul.mubr.bf16.gmra.mxu0 %v5180
      %v5344 = vpop.f32.mrf.mxu0
      %v5345 = vadd.f32 0.0, %v5344
      %v5346 = vpop.f32.mrf.mxu0
      %v5347 = vpop.f32.mrf.mxu0
      %v5348 = vadd.f32 0.0, %v5347
      %v5349 = vpop.f32.mrf.mxu0
      %5350 = vmatprep.mubr.bf16.mxu0 0
      %5351 = vmatmul.mubr.bf16.gmra.mxu0 %v5181
      %v5352 = vpop.f32.mrf.mxu0
      %v5353 = vadd.f32 0.0, %v5352
      %v5354 = vpop.f32.mrf.mxu0
      %v5355 = vpop.f32.mrf.mxu0
      %v5356 = vadd.f32 0.0, %v5355
      %v5357 = vpop.f32.mrf.mxu0
      %5358 = vmatprep.mubr.bf16.mxu0 0
      %5359 = vmatmul.mubr.bf16.gmra.mxu0 %v5182
      %v5360 = vpop.f32.mrf.mxu0
      %v5361 = vadd.f32 0.0, %v5360
      %v5362 = vpop.f32.mrf.mxu0
      %v5363 = vpop.f32.mrf.mxu0
      %v5364 = vadd.f32 0.0, %v5363
      %v5365 = vpop.f32.mrf.mxu0
      %5366 = vmatprep.mubr.bf16.mxu0 0
      %5367 = vmatmul.mubr.bf16.gmra.mxu0 %v5183
      %v5368 = vpop.f32.mrf.mxu0
      %v5369 = vadd.f32 0.0, %v5368
      %v5370 = vpop.f32.mrf.mxu0
      %v5371 = vpop.f32.mrf.mxu0
      %v5372 = vadd.f32 0.0, %v5371
      %v5373 = vpop.f32.mrf.mxu0
      %5374 = vmatprep.mubr.bf16.mxu0 0
      %5375 = vmatmul.mubr.bf16.gmra.mxu0 %v5184
      %v5376 = vpop.f32.mrf.mxu0
      %v5377 = vadd.f32 0.0, %v5376
      %v5378 = vpop.f32.mrf.mxu0
      %v5379 = vpop.f32.mrf.mxu0
      %v5380 = vadd.f32 0.0, %v5379
      %v5381 = vpop.f32.mrf.mxu0
      %5382 = vmatprep.mubr.bf16.mxu0 0
      %5383 = vmatmul.mubr.bf16.gmra.mxu0 %v5185
      %v5384 = vpop.f32.mrf.mxu0
      %v5385 = vadd.f32 0.0, %v5384
      %v5386 = vpop.f32.mrf.mxu0
      %v5387 = vpop.f32.mrf.mxu0
      %v5388 = vadd.f32 0.0, %v5387
      %v5389 = vpop.f32.mrf.mxu0
      %5390 = vmatprep.mubr.bf16.mxu0 0
      %5391 = vmatmul.mubr.bf16.gmra.mxu0 %v5186
      %v5392 = vpop.f32.mrf.mxu0
      %v5393 = vadd.f32 0.0, %v5392
      %v5394 = vpop.f32.mrf.mxu0
      %v5395 = vpop.f32.mrf.mxu0
      %v5396 = vadd.f32 0.0, %v5395
      %v5397 = vpop.f32.mrf.mxu0
      %5398 = vmatprep.mubr.bf16.mxu0 0
      %5399 = vmatmul.mubr.bf16.gmra.mxu0 %v5187
      %v5400 = vpop.f32.mrf.mxu0
      %v5401 = vadd.f32 0.0, %v5400
      %v5402 = vpop.f32.mrf.mxu0
      %v5403 = vpop.f32.mrf.mxu0
      %v5404 = vadd.f32 0.0, %v5403
      %v5405 = vpop.f32.mrf.mxu0
      %5406 = vmatprep.mubr.bf16.mxu0 0
      %5407 = vmatmul.mubr.bf16.gmra.mxu0 %v5188
      %v5408 = vpop.f32.mrf.mxu0
      %v5409 = vadd.f32 0.0, %v5408
      %v5410 = vpop.f32.mrf.mxu0
      %v5411 = vpop.f32.mrf.mxu0
      %v5412 = vadd.f32 0.0, %v5411
      %v5413 = vpop.f32.mrf.mxu0
      %5414 = vdwg.mxu0
      %v5431 = vunpack.c.l.b16 %v5125
      %v5432 = vunpack.c.l.b16 %v5126
      %v5433 = vunpack.c.l.b16 %v5127
      %v5434 = vunpack.c.l.b16 %v5128
      %v5435 = vunpack.c.l.b16 %v5129
      %v5436 = vunpack.c.l.b16 %v5130
      %v5437 = vunpack.c.l.b16 %v5131
      %v5438 = vunpack.c.l.b16 %v5132
      %v5439 = vunpack.c.l.b16 %v5133
      %v5440 = vunpack.c.l.b16 %v5134
      %v5441 = vunpack.c.l.b16 %v5135
      %v5442 = vunpack.c.l.b16 %v5136
      %v5443 = vunpack.c.l.b16 %v5137
      %v5444 = vunpack.c.l.b16 %v5138
      %v5445 = vunpack.c.l.b16 %v5139
      %v5446 = vunpack.c.l.b16 %v5140
      %v5447 = vpack.c.b16 %v5432, %v5431
      %v5448 = vpack.c.b16 %v5434, %v5433
      %v5449 = vpack.c.b16 %v5436, %v5435
      %v5450 = vpack.c.b16 %v5438, %v5437
      %v5451 = vpack.c.b16 %v5440, %v5439
      %v5452 = vpack.c.b16 %v5442, %v5441
      %v5453 = vpack.c.b16 %v5444, %v5443
      %v5454 = vpack.c.b16 %v5446, %v5445
      %5463 = vmatprep.subr.bf16.mxu0 0
      %5464 = vmatpush1.bf16.msra.mxu0 %v5454
      %5465 = vmatprep.subr.bf16.mxu0 0
      %5466 = vmatpush1.bf16.msra.mxu0 %v5453
      %5467 = vmatprep.subr.bf16.mxu0 0
      %5468 = vmatpush1.bf16.msra.mxu0 %v5452
      %5469 = vmatprep.subr.bf16.mxu0 0
      %5470 = vmatpush1.bf16.msra.mxu0 %v5451
      %5471 = vmatprep.subr.bf16.mxu0 0
      %5472 = vmatpush1.bf16.msra.mxu0 %v5450
      %5473 = vmatprep.subr.bf16.mxu0 0
      %5474 = vmatpush1.bf16.msra.mxu0 %v5449
      %5475 = vmatprep.subr.bf16.mxu0 0
      %5476 = vmatpush1.bf16.msra.mxu0 %v5448
      %5477 = vmatprep.subr.bf16.mxu0 0
      %5478 = vmatpush1.bf16.msra.mxu0 %v5447
      %5479 = vmatprep.subr.bf16.mxu0 0
      %5480 = vmatpush2.bf16.msra.mxu0 0
      %5481 = vmatprep.subr.bf16.mxu0 0
      %5482 = vmatpush2.bf16.msra.mxu0 0
      %5483 = vmatprep.subr.bf16.mxu0 0
      %5484 = vmatpush2.bf16.msra.mxu0 0
      %5485 = vmatprep.subr.bf16.mxu0 0
      %5486 = vmatpush2.bf16.msra.mxu0 0
      %5487 = vmatprep.subr.bf16.mxu0 0
      %5488 = vmatpush2.bf16.msra.mxu0 0
      %5489 = vmatprep.subr.bf16.mxu0 0
      %5490 = vmatpush2.bf16.msra.mxu0 0
      %5491 = vmatprep.subr.bf16.mxu0 0
      %5492 = vmatpush2.bf16.msra.mxu0 0
      %5493 = vmatprep.subr.bf16.mxu0 0
      %5494 = vmatpush2.bf16.msra.mxu0 0
      %5495 = vmatprep.mubr.bf16.mxu0 0
      %5496 = vmatmul.mubr.bf16.gmra.mxu0 %v5109
      %v5497 = vpop.f32.mrf.mxu0
      %v5498 = vadd.f32 %v5289, %v5497
      %v5499 = vpop.f32.mrf.mxu0
      %v5500 = vpop.f32.mrf.mxu0
      %v5501 = vadd.f32 %v5292, %v5500
      %v5502 = vpop.f32.mrf.mxu0
      %5503 = vmatprep.mubr.bf16.mxu0 0
      %5504 = vmatmul.mubr.bf16.gmra.mxu0 %v5110
      %v5505 = vpop.f32.mrf.mxu0
      %v5506 = vadd.f32 %v5297, %v5505
      %v5507 = vpop.f32.mrf.mxu0
      %v5508 = vpop.f32.mrf.mxu0
      %v5509 = vadd.f32 %v5300, %v5508
      %v5510 = vpop.f32.mrf.mxu0
      %5511 = vmatprep.mubr.bf16.mxu0 0
      %5512 = vmatmul.mubr.bf16.gmra.mxu0 %v5111
      %v5513 = vpop.f32.mrf.mxu0
      %v5514 = vadd.f32 %v5305, %v5513
      %v5515 = vpop.f32.mrf.mxu0
      %v5516 = vpop.f32.mrf.mxu0
      %v5517 = vadd.f32 %v5308, %v5516
      %v5518 = vpop.f32.mrf.mxu0
      %5519 = vmatprep.mubr.bf16.mxu0 0
      %5520 = vmatmul.mubr.bf16.gmra.mxu0 %v5112
      %v5521 = vpop.f32.mrf.mxu0
      %v5522 = vadd.f32 %v5313, %v5521
      %v5523 = vpop.f32.mrf.mxu0
      %v5524 = vpop.f32.mrf.mxu0
      %v5525 = vadd.f32 %v5316, %v5524
      %v5526 = vpop.f32.mrf.mxu0
      %5527 = vmatprep.mubr.bf16.mxu0 0
      %5528 = vmatmul.mubr.bf16.gmra.mxu0 %v5113
      %v5529 = vpop.f32.mrf.mxu0
      %v5530 = vadd.f32 %v5321, %v5529
      %v5531 = vpop.f32.mrf.mxu0
      %v5532 = vpop.f32.mrf.mxu0
      %v5533 = vadd.f32 %v5324, %v5532
      %v5534 = vpop.f32.mrf.mxu0
      %5535 = vmatprep.mubr.bf16.mxu0 0
      %5536 = vmatmul.mubr.bf16.gmra.mxu0 %v5114
      %v5537 = vpop.f32.mrf.mxu0
      %v5538 = vadd.f32 %v5329, %v5537
      %v5539 = vpop.f32.mrf.mxu0
      %v5540 = vpop.f32.mrf.mxu0
      %v5541 = vadd.f32 %v5332, %v5540
      %v5542 = vpop.f32.mrf.mxu0
      %5543 = vmatprep.mubr.bf16.mxu0 0
      %5544 = vmatmul.mubr.bf16.gmra.mxu0 %v5115
      %v5545 = vpop.f32.mrf.mxu0
      %v5546 = vadd.f32 %v5337, %v5545
      %v5547 = vpop.f32.mrf.mxu0
      %v5548 = vpop.f32.mrf.mxu0
      %v5549 = vadd.f32 %v5340, %v5548
      %v5550 = vpop.f32.mrf.mxu0
      %5551 = vmatprep.mubr.bf16.mxu0 0
      %5552 = vmatmul.mubr.bf16.gmra.mxu0 %v5116
      %v5553 = vpop.f32.mrf.mxu0
      %v5554 = vadd.f32 %v5345, %v5553
      %v5555 = vpop.f32.mrf.mxu0
      %v5556 = vpop.f32.mrf.mxu0
      %v5557 = vadd.f32 %v5348, %v5556
      %v5558 = vpop.f32.mrf.mxu0
      %5559 = vmatprep.mubr.bf16.mxu0 0
      %5560 = vmatmul.mubr.bf16.gmra.mxu0 %v5117
      %v5561 = vpop.f32.mrf.mxu0
      %v5562 = vadd.f32 %v5353, %v5561
      %v5563 = vpop.f32.mrf.mxu0
      %v5564 = vpop.f32.mrf.mxu0
      %v5565 = vadd.f32 %v5356, %v5564
      %v5566 = vpop.f32.mrf.mxu0
      %5567 = vmatprep.mubr.bf16.mxu0 0
      %5568 = vmatmul.mubr.bf16.gmra.mxu0 %v5118
      %v5569 = vpop.f32.mrf.mxu0
      %v5570 = vadd.f32 %v5361, %v5569
      %v5571 = vpop.f32.mrf.mxu0
      %v5572 = vpop.f32.mrf.mxu0
      %v5573 = vadd.f32 %v5364, %v5572
      %v5574 = vpop.f32.mrf.mxu0
      %5575 = vmatprep.mubr.bf16.mxu0 0
      %5576 = vmatmul.mubr.bf16.gmra.mxu0 %v5119
      %v5577 = vpop.f32.mrf.mxu0
      %v5578 = vadd.f32 %v5369, %v5577
      %v5579 = vpop.f32.mrf.mxu0
      %v5580 = vpop.f32.mrf.mxu0
      %v5581 = vadd.f32 %v5372, %v5580
      %v5582 = vpop.f32.mrf.mxu0
      %5583 = vmatprep.mubr.bf16.mxu0 0
      %5584 = vmatmul.mubr.bf16.gmra.mxu0 %v5120
      %v5585 = vpop.f32.mrf.mxu0
      %v5586 = vadd.f32 %v5377, %v5585
      %v5587 = vpop.f32.mrf.mxu0
      %v5588 = vpop.f32.mrf.mxu0
      %v5589 = vadd.f32 %v5380, %v5588
      %v5590 = vpop.f32.mrf.mxu0
      %5591 = vmatprep.mubr.bf16.mxu0 0
      %5592 = vmatmul.mubr.bf16.gmra.mxu0 %v5121
      %v5593 = vpop.f32.mrf.mxu0
      %v5594 = vadd.f32 %v5385, %v5593
      %v5595 = vpop.f32.mrf.mxu0
      %v5596 = vpop.f32.mrf.mxu0
      %v5597 = vadd.f32 %v5388, %v5596
      %v5598 = vpop.f32.mrf.mxu0
      %5599 = vmatprep.mubr.bf16.mxu0 0
      %5600 = vmatmul.mubr.bf16.gmra.mxu0 %v5122
      %v5601 = vpop.f32.mrf.mxu0
      %v5602 = vadd.f32 %v5393, %v5601
      %v5603 = vpop.f32.mrf.mxu0
      %v5604 = vpop.f32.mrf.mxu0
      %v5605 = vadd.f32 %v5396, %v5604
      %v5606 = vpop.f32.mrf.mxu0
      %5607 = vmatprep.mubr.bf16.mxu0 0
      %5608 = vmatmul.mubr.bf16.gmra.mxu0 %v5123
      %v5609 = vpop.f32.mrf.mxu0
      %v5610 = vadd.f32 %v5401, %v5609
      %v5611 = vpop.f32.mrf.mxu0
      %v5612 = vpop.f32.mrf.mxu0
      %v5613 = vadd.f32 %v5404, %v5612
      %v5614 = vpop.f32.mrf.mxu0
      %5615 = vmatprep.mubr.bf16.mxu0 0
      %5616 = vmatmul.mubr.bf16.gmra.mxu0 %v5124
      %v5617 = vpop.f32.mrf.mxu0
      %v5618 = vadd.f32 %v5409, %v5617
      %v5619 = vpop.f32.mrf.mxu0
      %v5620 = vpop.f32.mrf.mxu0
      %v5621 = vadd.f32 %v5412, %v5620
      %v5622 = vpop.f32.mrf.mxu0
      %5623 = vdwg.mxu0
      %v5624 = vld [vmem:[#allocation4 + $0x2] sm:$0xff]
      %v5625 = vld [vmem:[#allocation4 + $0xa] sm:$0xff]
      %v5626 = vld [vmem:[#allocation4 + $0x1a] sm:$0xff]
      %v5627 = vld [vmem:[#allocation4 + $0x22] sm:$0xff]
      %v5628 = vld [vmem:[#allocation4 + $0x32] sm:$0xff]
      %v5629 = vld [vmem:[#allocation4 + $0x3a] sm:$0xff]
      %v5630 = vld [vmem:[#allocation4 + $0x4a] sm:$0xff]
      %v5631 = vld [vmem:[#allocation4 + $0x52] sm:$0xff]
      %v5632 = vld [vmem:[#allocation4 + $0x62] sm:$0xff]
      %v5633 = vld [vmem:[#allocation4 + $0x6a] sm:$0xff]
      %v5634 = vld [vmem:[#allocation4 + $0x7a] sm:$0xff]
      %v5635 = vld [vmem:[#allocation4 + $0x82] sm:$0xff]
      %v5636 = vld [vmem:[#allocation4 + $0x92] sm:$0xff]
      %v5637 = vld [vmem:[#allocation4 + $0x9a] sm:$0xff]
      %v5638 = vld [vmem:[#allocation4 + $0xaa] sm:$0xff]
      %v5639 = vld [vmem:[#allocation4 + $0xb2] sm:$0xff]
      %v5640 = vld [vmem:[#allocation4 + $0xc2] sm:$0xff]
      %v5641 = vld [vmem:[#allocation4 + $0xca] sm:$0xff]
      %v5642 = vld [vmem:[#allocation4 + $0xda] sm:$0xff]
      %v5643 = vld [vmem:[#allocation4 + $0xe2] sm:$0xff]
      %v5644 = vld [vmem:[#allocation4 + $0xf2] sm:$0xff]
      %v5645 = vld [vmem:[#allocation4 + $0xfa] sm:$0xff]
      %v5646 = vld [vmem:[#allocation4 + $0x10a] sm:$0xff]
      %v5647 = vld [vmem:[#allocation4 + $0x112] sm:$0xff]
      %v5648 = vld [vmem:[#allocation4 + $0x122] sm:$0xff]
      %v5649 = vld [vmem:[#allocation4 + $0x12a] sm:$0xff]
      %v5650 = vld [vmem:[#allocation4 + $0x13a] sm:$0xff]
      %v5651 = vld [vmem:[#allocation4 + $0x142] sm:$0xff]
      %v5652 = vld [vmem:[#allocation4 + $0x152] sm:$0xff]
      %v5653 = vld [vmem:[#allocation4 + $0x15a] sm:$0xff]
      %v5654 = vld [vmem:[#allocation4 + $0x16a] sm:$0xff]
      %v5655 = vld [vmem:[#allocation4 + $0x172] sm:$0xff]
      %v5656 = vpack.c.bf16 %v5625, %v5624
      %v5657 = vpack.c.bf16 %v5627, %v5626
      %v5658 = vpack.c.bf16 %v5629, %v5628
      %v5659 = vpack.c.bf16 %v5631, %v5630
      %v5660 = vpack.c.bf16 %v5633, %v5632
      %v5661 = vpack.c.bf16 %v5635, %v5634
      %v5662 = vpack.c.bf16 %v5637, %v5636
      %v5663 = vpack.c.bf16 %v5639, %v5638
      %v5664 = vpack.c.bf16 %v5641, %v5640
      %v5665 = vpack.c.bf16 %v5643, %v5642
      %v5666 = vpack.c.bf16 %v5645, %v5644
      %v5667 = vpack.c.bf16 %v5647, %v5646
      %v5668 = vpack.c.bf16 %v5649, %v5648
      %v5669 = vpack.c.bf16 %v5651, %v5650
      %v5670 = vpack.c.bf16 %v5653, %v5652
      %v5671 = vpack.c.bf16 %v5655, %v5654
      %s5672 = scalar_lea.vmem %s5, 128
      %v5673 = vld [vmem:[%s5672] sm:$0xf]
      %v5674 = vld [vmem:[%s5672 + $0x4] sm:$0xf]
      %v5675 = vld [vmem:[%s5672 + $0x8] sm:$0xf]
      %v5676 = vld [vmem:[%s5672 + $0xc] sm:$0xf]
      %v5677 = vld [vmem:[%s5672 + $0x10] sm:$0xf]
      %v5678 = vld [vmem:[%s5672 + $0x14] sm:$0xf]
      %v5679 = vld [vmem:[%s5672 + $0x18] sm:$0xf]
      %v5680 = vld [vmem:[%s5672 + $0x1c] sm:$0xf]
      %v5681 = vld [vmem:[%s5672 + $0x20] sm:$0xf]
      %v5682 = vld [vmem:[%s5672 + $0x24] sm:$0xf]
      %v5683 = vld [vmem:[%s5672 + $0x28] sm:$0xf]
      %v5684 = vld [vmem:[%s5672 + $0x2c] sm:$0xf]
      %v5685 = vld [vmem:[%s5672 + $0x30] sm:$0xf]
      %v5686 = vld [vmem:[%s5672 + $0x34] sm:$0xf]
      %v5687 = vld [vmem:[%s5672 + $0x38] sm:$0xf]
      %v5688 = vld [vmem:[%s5672 + $0x3c] sm:$0xf]
      %v5705 = vunpack.c.l.b16 %v5673
      %v5706 = vunpack.c.l.b16 %v5674
      %v5707 = vunpack.c.l.b16 %v5675
      %v5708 = vunpack.c.l.b16 %v5676
      %v5709 = vunpack.c.l.b16 %v5677
      %v5710 = vunpack.c.l.b16 %v5678
      %v5711 = vunpack.c.l.b16 %v5679
      %v5712 = vunpack.c.l.b16 %v5680
      %v5713 = vunpack.c.l.b16 %v5681
      %v5714 = vunpack.c.l.b16 %v5682
      %v5715 = vunpack.c.l.b16 %v5683
      %v5716 = vunpack.c.l.b16 %v5684
      %v5717 = vunpack.c.l.b16 %v5685
      %v5718 = vunpack.c.l.b16 %v5686
      %v5719 = vunpack.c.l.b16 %v5687
      %v5720 = vunpack.c.l.b16 %v5688
      %v5721 = vpack.c.b16 %v5706, %v5705
      %v5722 = vpack.c.b16 %v5708, %v5707
      %v5723 = vpack.c.b16 %v5710, %v5709
      %v5724 = vpack.c.b16 %v5712, %v5711
      %v5725 = vpack.c.b16 %v5714, %v5713
      %v5726 = vpack.c.b16 %v5716, %v5715
      %v5727 = vpack.c.b16 %v5718, %v5717
      %v5728 = vpack.c.b16 %v5720, %v5719
      %5737 = vmatprep.subr.bf16.mxu0 0
      %5738 = vmatpush1.bf16.msra.mxu0 %v5728
      %5739 = vmatprep.subr.bf16.mxu0 0
      %5740 = vmatpush1.bf16.msra.mxu0 %v5727
      %5741 = vmatprep.subr.bf16.mxu0 0
      %5742 = vmatpush1.bf16.msra.mxu0 %v5726
      %5743 = vmatprep.subr.bf16.mxu0 0
      %5744 = vmatpush1.bf16.msra.mxu0 %v5725
      %5745 = vmatprep.subr.bf16.mxu0 0
      %5746 = vmatpush1.bf16.msra.mxu0 %v5724
      %5747 = vmatprep.subr.bf16.mxu0 0
      %5748 = vmatpush1.bf16.msra.mxu0 %v5723
      %5749 = vmatprep.subr.bf16.mxu0 0
      %5750 = vmatpush1.bf16.msra.mxu0 %v5722
      %5751 = vmatprep.subr.bf16.mxu0 0
      %5752 = vmatpush1.bf16.msra.mxu0 %v5721
      %5753 = vmatprep.subr.bf16.mxu0 0
      %5754 = vmatpush2.bf16.msra.mxu0 0
      %5755 = vmatprep.subr.bf16.mxu0 0
      %5756 = vmatpush2.bf16.msra.mxu0 0
      %5757 = vmatprep.subr.bf16.mxu0 0
      %5758 = vmatpush2.bf16.msra.mxu0 0
      %5759 = vmatprep.subr.bf16.mxu0 0
      %5760 = vmatpush2.bf16.msra.mxu0 0
      %5761 = vmatprep.subr.bf16.mxu0 0
      %5762 = vmatpush2.bf16.msra.mxu0 0
      %5763 = vmatprep.subr.bf16.mxu0 0
      %5764 = vmatpush2.bf16.msra.mxu0 0
      %5765 = vmatprep.subr.bf16.mxu0 0
      %5766 = vmatpush2.bf16.msra.mxu0 0
      %5767 = vmatprep.subr.bf16.mxu0 0
      %5768 = vmatpush2.bf16.msra.mxu0 0
      %5769 = vmatprep.mubr.bf16.mxu0 0
      %5770 = vmatmul.mubr.bf16.gmra.mxu0 %v5656
      %v5771 = vpop.f32.mrf.mxu0
      %v5772 = vadd.f32 0.0, %v5771
      %v5773 = vpop.f32.mrf.mxu0
      %v5774 = vpop.f32.mrf.mxu0
      %v5775 = vadd.f32 0.0, %v5774
      %v5776 = vpop.f32.mrf.mxu0
      %5777 = vmatprep.mubr.bf16.mxu0 0
      %5778 = vmatmul.mubr.bf16.gmra.mxu0 %v5657
      %v5779 = vpop.f32.mrf.mxu0
      %v5780 = vadd.f32 0.0, %v5779
      %v5781 = vpop.f32.mrf.mxu0
      %v5782 = vpop.f32.mrf.mxu0
      %v5783 = vadd.f32 0.0, %v5782
      %v5784 = vpop.f32.mrf.mxu0
      %5785 = vmatprep.mubr.bf16.mxu0 0
      %5786 = vmatmul.mubr.bf16.gmra.mxu0 %v5658
      %v5787 = vpop.f32.mrf.mxu0
      %v5788 = vadd.f32 0.0, %v5787
      %v5789 = vpop.f32.mrf.mxu0
      %v5790 = vpop.f32.mrf.mxu0
      %v5791 = vadd.f32 0.0, %v5790
      %v5792 = vpop.f32.mrf.mxu0
      %5793 = vmatprep.mubr.bf16.mxu0 0
      %5794 = vmatmul.mubr.bf16.gmra.mxu0 %v5659
      %v5795 = vpop.f32.mrf.mxu0
      %v5796 = vadd.f32 0.0, %v5795
      %v5797 = vpop.f32.mrf.mxu0
      %v5798 = vpop.f32.mrf.mxu0
      %v5799 = vadd.f32 0.0, %v5798
      %v5800 = vpop.f32.mrf.mxu0
      %5801 = vmatprep.mubr.bf16.mxu0 0
      %5802 = vmatmul.mubr.bf16.gmra.mxu0 %v5660
      %v5803 = vpop.f32.mrf.mxu0
      %v5804 = vadd.f32 0.0, %v5803
      %v5805 = vpop.f32.mrf.mxu0
      %v5806 = vpop.f32.mrf.mxu0
      %v5807 = vadd.f32 0.0, %v5806
      %v5808 = vpop.f32.mrf.mxu0
      %5809 = vmatprep.mubr.bf16.mxu0 0
      %5810 = vmatmul.mubr.bf16.gmra.mxu0 %v5661
      %v5811 = vpop.f32.mrf.mxu0
      %v5812 = vadd.f32 0.0, %v5811
      %v5813 = vpop.f32.mrf.mxu0
      %v5814 = vpop.f32.mrf.mxu0
      %v5815 = vadd.f32 0.0, %v5814
      %v5816 = vpop.f32.mrf.mxu0
      %5817 = vmatprep.mubr.bf16.mxu0 0
      %5818 = vmatmul.mubr.bf16.gmra.mxu0 %v5662
      %v5819 = vpop.f32.mrf.mxu0
      %v5820 = vadd.f32 0.0, %v5819
      %v5821 = vpop.f32.mrf.mxu0
      %v5822 = vpop.f32.mrf.mxu0
      %v5823 = vadd.f32 0.0, %v5822
      %v5824 = vpop.f32.mrf.mxu0
      %5825 = vmatprep.mubr.bf16.mxu0 0
      %5826 = vmatmul.mubr.bf16.gmra.mxu0 %v5663
      %v5827 = vpop.f32.mrf.mxu0
      %v5828 = vadd.f32 0.0, %v5827
      %v5829 = vpop.f32.mrf.mxu0
      %v5830 = vpop.f32.mrf.mxu0
      %v5831 = vadd.f32 0.0, %v5830
      %v5832 = vpop.f32.mrf.mxu0
      %5833 = vmatprep.mubr.bf16.mxu0 0
      %5834 = vmatmul.mubr.bf16.gmra.mxu0 %v5664
      %v5835 = vpop.f32.mrf.mxu0
      %v5836 = vadd.f32 0.0, %v5835
      %v5837 = vpop.f32.mrf.mxu0
      %v5838 = vpop.f32.mrf.mxu0
      %v5839 = vadd.f32 0.0, %v5838
      %v5840 = vpop.f32.mrf.mxu0
      %5841 = vmatprep.mubr.bf16.mxu0 0
      %5842 = vmatmul.mubr.bf16.gmra.mxu0 %v5665
      %v5843 = vpop.f32.mrf.mxu0
      %v5844 = vadd.f32 0.0, %v5843
      %v5845 = vpop.f32.mrf.mxu0
      %v5846 = vpop.f32.mrf.mxu0
      %v5847 = vadd.f32 0.0, %v5846
      %v5848 = vpop.f32.mrf.mxu0
      %5849 = vmatprep.mubr.bf16.mxu0 0
      %5850 = vmatmul.mubr.bf16.gmra.mxu0 %v5666
      %v5851 = vpop.f32.mrf.mxu0
      %v5852 = vadd.f32 0.0, %v5851
      %v5853 = vpop.f32.mrf.mxu0
      %v5854 = vpop.f32.mrf.mxu0
      %v5855 = vadd.f32 0.0, %v5854
      %v5856 = vpop.f32.mrf.mxu0
      %5857 = vmatprep.mubr.bf16.mxu0 0
      %5858 = vmatmul.mubr.bf16.gmra.mxu0 %v5667
      %v5859 = vpop.f32.mrf.mxu0
      %v5860 = vadd.f32 0.0, %v5859
      %v5861 = vpop.f32.mrf.mxu0
      %v5862 = vpop.f32.mrf.mxu0
      %v5863 = vadd.f32 0.0, %v5862
      %v5864 = vpop.f32.mrf.mxu0
      %5865 = vmatprep.mubr.bf16.mxu0 0
      %5866 = vmatmul.mubr.bf16.gmra.mxu0 %v5668
      %v5867 = vpop.f32.mrf.mxu0
      %v5868 = vadd.f32 0.0, %v5867
      %v5869 = vpop.f32.mrf.mxu0
      %v5870 = vpop.f32.mrf.mxu0
      %v5871 = vadd.f32 0.0, %v5870
      %v5872 = vpop.f32.mrf.mxu0
      %5873 = vmatprep.mubr.bf16.mxu0 0
      %5874 = vmatmul.mubr.bf16.gmra.mxu0 %v5669
      %v5875 = vpop.f32.mrf.mxu0
      %v5876 = vadd.f32 0.0, %v5875
      %v5877 = vpop.f32.mrf.mxu0
      %v5878 = vpop.f32.mrf.mxu0
      %v5879 = vadd.f32 0.0, %v5878
      %v5880 = vpop.f32.mrf.mxu0
      %5881 = vmatprep.mubr.bf16.mxu0 0
      %5882 = vmatmul.mubr.bf16.gmra.mxu0 %v5670
      %v5883 = vpop.f32.mrf.mxu0
      %v5884 = vadd.f32 0.0, %v5883
      %v5885 = vpop.f32.mrf.mxu0
      %v5886 = vpop.f32.mrf.mxu0
      %v5887 = vadd.f32 0.0, %v5886
      %v5888 = vpop.f32.mrf.mxu0
      %5889 = vmatprep.mubr.bf16.mxu0 0
      %5890 = vmatmul.mubr.bf16.gmra.mxu0 %v5671
      %v5891 = vpop.f32.mrf.mxu0
      %v5892 = vadd.f32 0.0, %v5891
      %v5893 = vpop.f32.mrf.mxu0
      %v5894 = vpop.f32.mrf.mxu0
      %v5895 = vadd.f32 0.0, %v5894
      %v5896 = vpop.f32.mrf.mxu0
      %5897 = vdwg.mxu0
      %v5898 = vadd.f32 %v5498, %v5772
      %v5899 = vadd.f32 %v5501, %v5775
      %v5900 = vadd.f32 %v5506, %v5780
      %v5901 = vadd.f32 %v5509, %v5783
      %v5902 = vadd.f32 %v5514, %v5788
      %v5903 = vadd.f32 %v5517, %v5791
      %v5904 = vadd.f32 %v5522, %v5796
      %v5905 = vadd.f32 %v5525, %v5799
      %v5906 = vadd.f32 %v5530, %v5804
      %v5907 = vadd.f32 %v5533, %v5807
      %v5908 = vadd.f32 %v5538, %v5812
      %v5909 = vadd.f32 %v5541, %v5815
      %v5910 = vadd.f32 %v5546, %v5820
      %v5911 = vadd.f32 %v5549, %v5823
      %v5912 = vadd.f32 %v5554, %v5828
      %v5913 = vadd.f32 %v5557, %v5831
      %v5914 = vadd.f32 %v5562, %v5836
      %v5915 = vadd.f32 %v5565, %v5839
      %v5916 = vadd.f32 %v5570, %v5844
      %v5917 = vadd.f32 %v5573, %v5847
      %v5918 = vadd.f32 %v5578, %v5852
      %v5919 = vadd.f32 %v5581, %v5855
      %v5920 = vadd.f32 %v5586, %v5860
      %v5921 = vadd.f32 %v5589, %v5863
      %v5922 = vadd.f32 %v5594, %v5868
      %v5923 = vadd.f32 %v5597, %v5871
      %v5924 = vadd.f32 %v5602, %v5876
      %v5925 = vadd.f32 %v5605, %v5879
      %v5926 = vadd.f32 %v5610, %v5884
      %v5927 = vadd.f32 %v5613, %v5887
      %v5928 = vadd.f32 %v5618, %v5892
      %v5929 = vadd.f32 %v5621, %v5895
      %v5930 = vld [vmem:[%s5044] sm:$0xff]
      %v5931 = vld [vmem:[%s5044 + $0x8] sm:$0xff]
      %v5932 = vld [vmem:[%s5044 + $0x18] sm:$0xff]
      %v5933 = vld [vmem:[%s5044 + $0x20] sm:$0xff]
      %v5934 = vld [vmem:[%s5044 + $0x30] sm:$0xff]
      %v5935 = vld [vmem:[%s5044 + $0x38] sm:$0xff]
      %v5936 = vld [vmem:[%s5044 + $0x48] sm:$0xff]
      %v5937 = vld [vmem:[%s5044 + $0x50] sm:$0xff]
      %v5938 = vld [vmem:[%s5044 + $0x60] sm:$0xff]
      %v5939 = vld [vmem:[%s5044 + $0x68] sm:$0xff]
      %v5940 = vld [vmem:[%s5044 + $0x78] sm:$0xff]
      %v5941 = vld [vmem:[%s5044 + $0x80] sm:$0xff]
      %v5942 = vld [vmem:[%s5044 + $0x90] sm:$0xff]
      %v5943 = vld [vmem:[%s5044 + $0x98] sm:$0xff]
      %v5944 = vld [vmem:[%s5044 + $0xa8] sm:$0xff]
      %v5945 = vld [vmem:[%s5044 + $0xb0] sm:$0xff]
      %v5946 = vld [vmem:[%s5044 + $0xc0] sm:$0xff]
      %v5947 = vld [vmem:[%s5044 + $0xc8] sm:$0xff]
      %v5948 = vld [vmem:[%s5044 + $0xd8] sm:$0xff]
      %v5949 = vld [vmem:[%s5044 + $0xe0] sm:$0xff]
      %v5950 = vld [vmem:[%s5044 + $0xf0] sm:$0xff]
      %v5951 = vld [vmem:[%s5044 + $0xf8] sm:$0xff]
      %v5952 = vld [vmem:[%s5044 + $0x108] sm:$0xff]
      %v5953 = vld [vmem:[%s5044 + $0x110] sm:$0xff]
      %v5954 = vld [vmem:[%s5044 + $0x120] sm:$0xff]
      %v5955 = vld [vmem:[%s5044 + $0x128] sm:$0xff]
      %v5956 = vld [vmem:[%s5044 + $0x138] sm:$0xff]
      %v5957 = vld [vmem:[%s5044 + $0x140] sm:$0xff]
      %v5958 = vld [vmem:[%s5044 + $0x150] sm:$0xff]
      %v5959 = vld [vmem:[%s5044 + $0x158] sm:$0xff]
      %v5960 = vld [vmem:[%s5044 + $0x168] sm:$0xff]
      %v5961 = vld [vmem:[%s5044 + $0x170] sm:$0xff]
      %v5962 = vpack.c.bf16 %v5931, %v5930
      %v5963 = vpack.c.bf16 %v5933, %v5932
      %v5964 = vpack.c.bf16 %v5935, %v5934
      %v5965 = vpack.c.bf16 %v5937, %v5936
      %v5966 = vpack.c.bf16 %v5939, %v5938
      %v5967 = vpack.c.bf16 %v5941, %v5940
      %v5968 = vpack.c.bf16 %v5943, %v5942
      %v5969 = vpack.c.bf16 %v5945, %v5944
      %v5970 = vpack.c.bf16 %v5947, %v5946
      %v5971 = vpack.c.bf16 %v5949, %v5948
      %v5972 = vpack.c.bf16 %v5951, %v5950
      %v5973 = vpack.c.bf16 %v5953, %v5952
      %v5974 = vpack.c.bf16 %v5955, %v5954
      %v5975 = vpack.c.bf16 %v5957, %v5956
      %v5976 = vpack.c.bf16 %v5959, %v5958
      %v5977 = vpack.c.bf16 %v5961, %v5960
      %s5978 = scalar_lea.vmem %s5, 192
      %v5979 = vld [vmem:[%s5978] sm:$0xf]
      %v5980 = vld [vmem:[%s5978 + $0x4] sm:$0xf]
      %v5981 = vld [vmem:[%s5978 + $0x8] sm:$0xf]
      %v5982 = vld [vmem:[%s5978 + $0xc] sm:$0xf]
      %v5983 = vld [vmem:[%s5978 + $0x10] sm:$0xf]
      %v5984 = vld [vmem:[%s5978 + $0x14] sm:$0xf]
      %v5985 = vld [vmem:[%s5978 + $0x18] sm:$0xf]
      %v5986 = vld [vmem:[%s5978 + $0x1c] sm:$0xf]
      %v5987 = vld [vmem:[%s5978 + $0x20] sm:$0xf]
      %v5988 = vld [vmem:[%s5978 + $0x24] sm:$0xf]
      %v5989 = vld [vmem:[%s5978 + $0x28] sm:$0xf]
      %v5990 = vld [vmem:[%s5978 + $0x2c] sm:$0xf]
      %v5991 = vld [vmem:[%s5978 + $0x30] sm:$0xf]
      %v5992 = vld [vmem:[%s5978 + $0x34] sm:$0xf]
      %v5993 = vld [vmem:[%s5978 + $0x38] sm:$0xf]
      %v5994 = vld [vmem:[%s5978 + $0x3c] sm:$0xf]
      %v6011 = vunpack.c.l.b16 %v5979
      %v6012 = vunpack.c.l.b16 %v5980
      %v6013 = vunpack.c.l.b16 %v5981
      %v6014 = vunpack.c.l.b16 %v5982
      %v6015 = vunpack.c.l.b16 %v5983
      %v6016 = vunpack.c.l.b16 %v5984
      %v6017 = vunpack.c.l.b16 %v5985
      %v6018 = vunpack.c.l.b16 %v5986
      %v6019 = vunpack.c.l.b16 %v5987
      %v6020 = vunpack.c.l.b16 %v5988
      %v6021 = vunpack.c.l.b16 %v5989
      %v6022 = vunpack.c.l.b16 %v5990
      %v6023 = vunpack.c.l.b16 %v5991
      %v6024 = vunpack.c.l.b16 %v5992
      %v6025 = vunpack.c.l.b16 %v5993
      %v6026 = vunpack.c.l.b16 %v5994
      %v6027 = vpack.c.b16 %v6012, %v6011
      %v6028 = vpack.c.b16 %v6014, %v6013
      %v6029 = vpack.c.b16 %v6016, %v6015
      %v6030 = vpack.c.b16 %v6018, %v6017
      %v6031 = vpack.c.b16 %v6020, %v6019
      %v6032 = vpack.c.b16 %v6022, %v6021
      %v6033 = vpack.c.b16 %v6024, %v6023
      %v6034 = vpack.c.b16 %v6026, %v6025
      %6043 = vmatprep.subr.bf16.mxu0 0
      %6044 = vmatpush1.bf16.msra.mxu0 %v6034
      %6045 = vmatprep.subr.bf16.mxu0 0
      %6046 = vmatpush1.bf16.msra.mxu0 %v6033
      %6047 = vmatprep.subr.bf16.mxu0 0
      %6048 = vmatpush1.bf16.msra.mxu0 %v6032
      %6049 = vmatprep.subr.bf16.mxu0 0
      %6050 = vmatpush1.bf16.msra.mxu0 %v6031
      %6051 = vmatprep.subr.bf16.mxu0 0
      %6052 = vmatpush1.bf16.msra.mxu0 %v6030
      %6053 = vmatprep.subr.bf16.mxu0 0
      %6054 = vmatpush1.bf16.msra.mxu0 %v6029
      %6055 = vmatprep.subr.bf16.mxu0 0
      %6056 = vmatpush1.bf16.msra.mxu0 %v6028
      %6057 = vmatprep.subr.bf16.mxu0 0
      %6058 = vmatpush1.bf16.msra.mxu0 %v6027
      %6059 = vmatprep.subr.bf16.mxu0 0
      %6060 = vmatpush2.bf16.msra.mxu0 0
      %6061 = vmatprep.subr.bf16.mxu0 0
      %6062 = vmatpush2.bf16.msra.mxu0 0
      %6063 = vmatprep.subr.bf16.mxu0 0
      %6064 = vmatpush2.bf16.msra.mxu0 0
      %6065 = vmatprep.subr.bf16.mxu0 0
      %6066 = vmatpush2.bf16.msra.mxu0 0
      %6067 = vmatprep.subr.bf16.mxu0 0
      %6068 = vmatpush2.bf16.msra.mxu0 0
      %6069 = vmatprep.subr.bf16.mxu0 0
      %6070 = vmatpush2.bf16.msra.mxu0 0
      %6071 = vmatprep.subr.bf16.mxu0 0
      %6072 = vmatpush2.bf16.msra.mxu0 0
      %6073 = vmatprep.subr.bf16.mxu0 0
      %6074 = vmatpush2.bf16.msra.mxu0 0
      %6075 = vmatprep.mubr.bf16.mxu0 0
      %6076 = vmatmul.mubr.bf16.gmra.mxu0 %v5962
      %v6077 = vpop.f32.mrf.mxu0
      %v6078 = vadd.f32 0.0, %v6077
      %v6079 = vpop.f32.mrf.mxu0
      %v6080 = vpop.f32.mrf.mxu0
      %v6081 = vadd.f32 0.0, %v6080
      %v6082 = vpop.f32.mrf.mxu0
      %6083 = vmatprep.mubr.bf16.mxu0 0
      %6084 = vmatmul.mubr.bf16.gmra.mxu0 %v5963
      %v6085 = vpop.f32.mrf.mxu0
      %v6086 = vadd.f32 0.0, %v6085
      %v6087 = vpop.f32.mrf.mxu0
      %v6088 = vpop.f32.mrf.mxu0
      %v6089 = vadd.f32 0.0, %v6088
      %v6090 = vpop.f32.mrf.mxu0
      %6091 = vmatprep.mubr.bf16.mxu0 0
      %6092 = vmatmul.mubr.bf16.gmra.mxu0 %v5964
      %v6093 = vpop.f32.mrf.mxu0
      %v6094 = vadd.f32 0.0, %v6093
      %v6095 = vpop.f32.mrf.mxu0
      %v6096 = vpop.f32.mrf.mxu0
      %v6097 = vadd.f32 0.0, %v6096
      %v6098 = vpop.f32.mrf.mxu0
      %6099 = vmatprep.mubr.bf16.mxu0 0
      %6100 = vmatmul.mubr.bf16.gmra.mxu0 %v5965
      %v6101 = vpop.f32.mrf.mxu0
      %v6102 = vadd.f32 0.0, %v6101
      %v6103 = vpop.f32.mrf.mxu0
      %v6104 = vpop.f32.mrf.mxu0
      %v6105 = vadd.f32 0.0, %v6104
      %v6106 = vpop.f32.mrf.mxu0
      %6107 = vmatprep.mubr.bf16.mxu0 0
      %6108 = vmatmul.mubr.bf16.gmra.mxu0 %v5966
      %v6109 = vpop.f32.mrf.mxu0
      %v6110 = vadd.f32 0.0, %v6109
      %v6111 = vpop.f32.mrf.mxu0
      %v6112 = vpop.f32.mrf.mxu0
      %v6113 = vadd.f32 0.0, %v6112
      %v6114 = vpop.f32.mrf.mxu0
      %6115 = vmatprep.mubr.bf16.mxu0 0
      %6116 = vmatmul.mubr.bf16.gmra.mxu0 %v5967
      %v6117 = vpop.f32.mrf.mxu0
      %v6118 = vadd.f32 0.0, %v6117
      %v6119 = vpop.f32.mrf.mxu0
      %v6120 = vpop.f32.mrf.mxu0
      %v6121 = vadd.f32 0.0, %v6120
      %v6122 = vpop.f32.mrf.mxu0
      %6123 = vmatprep.mubr.bf16.mxu0 0
      %6124 = vmatmul.mubr.bf16.gmra.mxu0 %v5968
      %v6125 = vpop.f32.mrf.mxu0
      %v6126 = vadd.f32 0.0, %v6125
      %v6127 = vpop.f32.mrf.mxu0
      %v6128 = vpop.f32.mrf.mxu0
      %v6129 = vadd.f32 0.0, %v6128
      %v6130 = vpop.f32.mrf.mxu0
      %6131 = vmatprep.mubr.bf16.mxu0 0
      %6132 = vmatmul.mubr.bf16.gmra.mxu0 %v5969
      %v6133 = vpop.f32.mrf.mxu0
      %v6134 = vadd.f32 0.0, %v6133
      %v6135 = vpop.f32.mrf.mxu0
      %v6136 = vpop.f32.mrf.mxu0
      %v6137 = vadd.f32 0.0, %v6136
      %v6138 = vpop.f32.mrf.mxu0
      %6139 = vmatprep.mubr.bf16.mxu0 0
      %6140 = vmatmul.mubr.bf16.gmra.mxu0 %v5970
      %v6141 = vpop.f32.mrf.mxu0
      %v6142 = vadd.f32 0.0, %v6141
      %v6143 = vpop.f32.mrf.mxu0
      %v6144 = vpop.f32.mrf.mxu0
      %v6145 = vadd.f32 0.0, %v6144
      %v6146 = vpop.f32.mrf.mxu0
      %6147 = vmatprep.mubr.bf16.mxu0 0
      %6148 = vmatmul.mubr.bf16.gmra.mxu0 %v5971
      %v6149 = vpop.f32.mrf.mxu0
      %v6150 = vadd.f32 0.0, %v6149
      %v6151 = vpop.f32.mrf.mxu0
      %v6152 = vpop.f32.mrf.mxu0
      %v6153 = vadd.f32 0.0, %v6152
      %v6154 = vpop.f32.mrf.mxu0
      %6155 = vmatprep.mubr.bf16.mxu0 0
      %6156 = vmatmul.mubr.bf16.gmra.mxu0 %v5972
      %v6157 = vpop.f32.mrf.mxu0
      %v6158 = vadd.f32 0.0, %v6157
      %v6159 = vpop.f32.mrf.mxu0
      %v6160 = vpop.f32.mrf.mxu0
      %v6161 = vadd.f32 0.0, %v6160
      %v6162 = vpop.f32.mrf.mxu0
      %6163 = vmatprep.mubr.bf16.mxu0 0
      %6164 = vmatmul.mubr.bf16.gmra.mxu0 %v5973
      %v6165 = vpop.f32.mrf.mxu0
      %v6166 = vadd.f32 0.0, %v6165
      %v6167 = vpop.f32.mrf.mxu0
      %v6168 = vpop.f32.mrf.mxu0
      %v6169 = vadd.f32 0.0, %v6168
      %v6170 = vpop.f32.mrf.mxu0
      %6171 = vmatprep.mubr.bf16.mxu0 0
      %6172 = vmatmul.mubr.bf16.gmra.mxu0 %v5974
      %v6173 = vpop.f32.mrf.mxu0
      %v6174 = vadd.f32 0.0, %v6173
      %v6175 = vpop.f32.mrf.mxu0
      %v6176 = vpop.f32.mrf.mxu0
      %v6177 = vadd.f32 0.0, %v6176
      %v6178 = vpop.f32.mrf.mxu0
      %6179 = vmatprep.mubr.bf16.mxu0 0
      %6180 = vmatmul.mubr.bf16.gmra.mxu0 %v5975
      %v6181 = vpop.f32.mrf.mxu0
      %v6182 = vadd.f32 0.0, %v6181
      %v6183 = vpop.f32.mrf.mxu0
      %v6184 = vpop.f32.mrf.mxu0
      %v6185 = vadd.f32 0.0, %v6184
      %v6186 = vpop.f32.mrf.mxu0
      %6187 = vmatprep.mubr.bf16.mxu0 0
      %6188 = vmatmul.mubr.bf16.gmra.mxu0 %v5976
      %v6189 = vpop.f32.mrf.mxu0
      %v6190 = vadd.f32 0.0, %v6189
      %v6191 = vpop.f32.mrf.mxu0
      %v6192 = vpop.f32.mrf.mxu0
      %v6193 = vadd.f32 0.0, %v6192
      %v6194 = vpop.f32.mrf.mxu0
      %6195 = vmatprep.mubr.bf16.mxu0 0
      %6196 = vmatmul.mubr.bf16.gmra.mxu0 %v5977
      %v6197 = vpop.f32.mrf.mxu0
      %v6198 = vadd.f32 0.0, %v6197
      %v6199 = vpop.f32.mrf.mxu0
      %v6200 = vpop.f32.mrf.mxu0
      %v6201 = vadd.f32 0.0, %v6200
      %v6202 = vpop.f32.mrf.mxu0
      %6203 = vdwg.mxu0
      %v6204 = vadd.f32 %v5898, %v6078
      %v6205 = vadd.f32 %v5899, %v6081
      %v6206 = vadd.f32 %v5900, %v6086
      %v6207 = vadd.f32 %v5901, %v6089
      %v6208 = vadd.f32 %v5902, %v6094
      %v6209 = vadd.f32 %v5903, %v6097
      %v6210 = vadd.f32 %v5904, %v6102
      %v6211 = vadd.f32 %v5905, %v6105
      %v6212 = vadd.f32 %v5906, %v6110
      %v6213 = vadd.f32 %v5907, %v6113
      %v6214 = vadd.f32 %v5908, %v6118
      %v6215 = vadd.f32 %v5909, %v6121
      %v6216 = vadd.f32 %v5910, %v6126
      %v6217 = vadd.f32 %v5911, %v6129
      %v6218 = vadd.f32 %v5912, %v6134
      %v6219 = vadd.f32 %v5913, %v6137
      %v6220 = vadd.f32 %v5914, %v6142
      %v6221 = vadd.f32 %v5915, %v6145
      %v6222 = vadd.f32 %v5916, %v6150
      %v6223 = vadd.f32 %v5917, %v6153
      %v6224 = vadd.f32 %v5918, %v6158
      %v6225 = vadd.f32 %v5919, %v6161
      %v6226 = vadd.f32 %v5920, %v6166
      %v6227 = vadd.f32 %v5921, %v6169
      %v6228 = vadd.f32 %v5922, %v6174
      %v6229 = vadd.f32 %v5923, %v6177
      %v6230 = vadd.f32 %v5924, %v6182
      %v6231 = vadd.f32 %v5925, %v6185
      %v6232 = vadd.f32 %v5926, %v6190
      %v6233 = vadd.f32 %v5927, %v6193
      %v6234 = vadd.f32 %v5928, %v6198
      %v6235 = vadd.f32 %v5929, %v6201
      %v6236 = vld [vmem:[%s5044 + $0x1] sm:$0xff]
      %v6237 = vld [vmem:[%s5044 + $0x9] sm:$0xff]
      %v6238 = vld [vmem:[%s5044 + $0x19] sm:$0xff]
      %v6239 = vld [vmem:[%s5044 + $0x21] sm:$0xff]
      %v6240 = vld [vmem:[%s5044 + $0x31] sm:$0xff]
      %v6241 = vld [vmem:[%s5044 + $0x39] sm:$0xff]
      %v6242 = vld [vmem:[%s5044 + $0x49] sm:$0xff]
      %v6243 = vld [vmem:[%s5044 + $0x51] sm:$0xff]
      %v6244 = vld [vmem:[%s5044 + $0x61] sm:$0xff]
      %v6245 = vld [vmem:[%s5044 + $0x69] sm:$0xff]
      %v6246 = vld [vmem:[%s5044 + $0x79] sm:$0xff]
      %v6247 = vld [vmem:[%s5044 + $0x81] sm:$0xff]
      %v6248 = vld [vmem:[%s5044 + $0x91] sm:$0xff]
      %v6249 = vld [vmem:[%s5044 + $0x99] sm:$0xff]
      %v6250 = vld [vmem:[%s5044 + $0xa9] sm:$0xff]
      %v6251 = vld [vmem:[%s5044 + $0xb1] sm:$0xff]
      %v6252 = vld [vmem:[%s5044 + $0xc1] sm:$0xff]
      %v6253 = vld [vmem:[%s5044 + $0xc9] sm:$0xff]
      %v6254 = vld [vmem:[%s5044 + $0xd9] sm:$0xff]
      %v6255 = vld [vmem:[%s5044 + $0xe1] sm:$0xff]
      %v6256 = vld [vmem:[%s5044 + $0xf1] sm:$0xff]
      %v6257 = vld [vmem:[%s5044 + $0xf9] sm:$0xff]
      %v6258 = vld [vmem:[%s5044 + $0x109] sm:$0xff]
      %v6259 = vld [vmem:[%s5044 + $0x111] sm:$0xff]
      %v6260 = vld [vmem:[%s5044 + $0x121] sm:$0xff]
      %v6261 = vld [vmem:[%s5044 + $0x129] sm:$0xff]
      %v6262 = vld [vmem:[%s5044 + $0x139] sm:$0xff]
      %v6263 = vld [vmem:[%s5044 + $0x141] sm:$0xff]
      %v6264 = vld [vmem:[%s5044 + $0x151] sm:$0xff]
      %v6265 = vld [vmem:[%s5044 + $0x159] sm:$0xff]
      %v6266 = vld [vmem:[%s5044 + $0x169] sm:$0xff]
      %v6267 = vld [vmem:[%s5044 + $0x171] sm:$0xff]
      %v6268 = vpack.c.bf16 %v6237, %v6236
      %v6269 = vpack.c.bf16 %v6239, %v6238
      %v6270 = vpack.c.bf16 %v6241, %v6240
      %v6271 = vpack.c.bf16 %v6243, %v6242
      %v6272 = vpack.c.bf16 %v6245, %v6244
      %v6273 = vpack.c.bf16 %v6247, %v6246
      %v6274 = vpack.c.bf16 %v6249, %v6248
      %v6275 = vpack.c.bf16 %v6251, %v6250
      %v6276 = vpack.c.bf16 %v6253, %v6252
      %v6277 = vpack.c.bf16 %v6255, %v6254
      %v6278 = vpack.c.bf16 %v6257, %v6256
      %v6279 = vpack.c.bf16 %v6259, %v6258
      %v6280 = vpack.c.bf16 %v6261, %v6260
      %v6281 = vpack.c.bf16 %v6263, %v6262
      %v6282 = vpack.c.bf16 %v6265, %v6264
      %v6283 = vpack.c.bf16 %v6267, %v6266
      %s6284 = scalar_lea.vmem %s5, 256
      %v6285 = vld [vmem:[%s6284] sm:$0xf]
      %v6286 = vld [vmem:[%s6284 + $0x4] sm:$0xf]
      %v6287 = vld [vmem:[%s6284 + $0x8] sm:$0xf]
      %v6288 = vld [vmem:[%s6284 + $0xc] sm:$0xf]
      %v6289 = vld [vmem:[%s6284 + $0x10] sm:$0xf]
      %v6290 = vld [vmem:[%s6284 + $0x14] sm:$0xf]
      %v6291 = vld [vmem:[%s6284 + $0x18] sm:$0xf]
      %v6292 = vld [vmem:[%s6284 + $0x1c] sm:$0xf]
      %v6293 = vld [vmem:[%s6284 + $0x20] sm:$0xf]
      %v6294 = vld [vmem:[%s6284 + $0x24] sm:$0xf]
      %v6295 = vld [vmem:[%s6284 + $0x28] sm:$0xf]
      %v6296 = vld [vmem:[%s6284 + $0x2c] sm:$0xf]
      %v6297 = vld [vmem:[%s6284 + $0x30] sm:$0xf]
      %v6298 = vld [vmem:[%s6284 + $0x34] sm:$0xf]
      %v6299 = vld [vmem:[%s6284 + $0x38] sm:$0xf]
      %v6300 = vld [vmem:[%s6284 + $0x3c] sm:$0xf]
      %v6317 = vunpack.c.l.b16 %v6285
      %v6318 = vunpack.c.l.b16 %v6286
      %v6319 = vunpack.c.l.b16 %v6287
      %v6320 = vunpack.c.l.b16 %v6288
      %v6321 = vunpack.c.l.b16 %v6289
      %v6322 = vunpack.c.l.b16 %v6290
      %v6323 = vunpack.c.l.b16 %v6291
      %v6324 = vunpack.c.l.b16 %v6292
      %v6325 = vunpack.c.l.b16 %v6293
      %v6326 = vunpack.c.l.b16 %v6294
      %v6327 = vunpack.c.l.b16 %v6295
      %v6328 = vunpack.c.l.b16 %v6296
      %v6329 = vunpack.c.l.b16 %v6297
      %v6330 = vunpack.c.l.b16 %v6298
      %v6331 = vunpack.c.l.b16 %v6299
      %v6332 = vunpack.c.l.b16 %v6300
      %v6333 = vpack.c.b16 %v6318, %v6317
      %v6334 = vpack.c.b16 %v6320, %v6319
      %v6335 = vpack.c.b16 %v6322, %v6321
      %v6336 = vpack.c.b16 %v6324, %v6323
      %v6337 = vpack.c.b16 %v6326, %v6325
      %v6338 = vpack.c.b16 %v6328, %v6327
      %v6339 = vpack.c.b16 %v6330, %v6329
      %v6340 = vpack.c.b16 %v6332, %v6331
      %6349 = vmatprep.subr.bf16.mxu0 0
      %6350 = vmatpush1.bf16.msra.mxu0 %v6340
      %6351 = vmatprep.subr.bf16.mxu0 0
      %6352 = vmatpush1.bf16.msra.mxu0 %v6339
      %6353 = vmatprep.subr.bf16.mxu0 0
      %6354 = vmatpush1.bf16.msra.mxu0 %v6338
      %6355 = vmatprep.subr.bf16.mxu0 0
      %6356 = vmatpush1.bf16.msra.mxu0 %v6337
      %6357 = vmatprep.subr.bf16.mxu0 0
      %6358 = vmatpush1.bf16.msra.mxu0 %v6336
      %6359 = vmatprep.subr.bf16.mxu0 0
      %6360 = vmatpush1.bf16.msra.mxu0 %v6335
      %6361 = vmatprep.subr.bf16.mxu0 0
      %6362 = vmatpush1.bf16.msra.mxu0 %v6334
      %6363 = vmatprep.subr.bf16.mxu0 0
      %6364 = vmatpush1.bf16.msra.mxu0 %v6333
      %6365 = vmatprep.subr.bf16.mxu0 0
      %6366 = vmatpush2.bf16.msra.mxu0 0
      %6367 = vmatprep.subr.bf16.mxu0 0
      %6368 = vmatpush2.bf16.msra.mxu0 0
      %6369 = vmatprep.subr.bf16.mxu0 0
      %6370 = vmatpush2.bf16.msra.mxu0 0
      %6371 = vmatprep.subr.bf16.mxu0 0
      %6372 = vmatpush2.bf16.msra.mxu0 0
      %6373 = vmatprep.subr.bf16.mxu0 0
      %6374 = vmatpush2.bf16.msra.mxu0 0
      %6375 = vmatprep.subr.bf16.mxu0 0
      %6376 = vmatpush2.bf16.msra.mxu0 0
      %6377 = vmatprep.subr.bf16.mxu0 0
      %6378 = vmatpush2.bf16.msra.mxu0 0
      %6379 = vmatprep.subr.bf16.mxu0 0
      %6380 = vmatpush2.bf16.msra.mxu0 0
      %6381 = vmatprep.mubr.bf16.mxu0 0
      %6382 = vmatmul.mubr.bf16.gmra.mxu0 %v6268
      %v6383 = vpop.f32.mrf.mxu0
      %v6384 = vadd.f32 0.0, %v6383
      %v6385 = vpop.f32.mrf.mxu0
      %v6386 = vpop.f32.mrf.mxu0
      %v6387 = vadd.f32 0.0, %v6386
      %v6388 = vpop.f32.mrf.mxu0
      %6389 = vmatprep.mubr.bf16.mxu0 0
      %6390 = vmatmul.mubr.bf16.gmra.mxu0 %v6269
      %v6391 = vpop.f32.mrf.mxu0
      %v6392 = vadd.f32 0.0, %v6391
      %v6393 = vpop.f32.mrf.mxu0
      %v6394 = vpop.f32.mrf.mxu0
      %v6395 = vadd.f32 0.0, %v6394
      %v6396 = vpop.f32.mrf.mxu0
      %6397 = vmatprep.mubr.bf16.mxu0 0
      %6398 = vmatmul.mubr.bf16.gmra.mxu0 %v6270
      %v6399 = vpop.f32.mrf.mxu0
      %v6400 = vadd.f32 0.0, %v6399
      %v6401 = vpop.f32.mrf.mxu0
      %v6402 = vpop.f32.mrf.mxu0
      %v6403 = vadd.f32 0.0, %v6402
      %v6404 = vpop.f32.mrf.mxu0
      %6405 = vmatprep.mubr.bf16.mxu0 0
      %6406 = vmatmul.mubr.bf16.gmra.mxu0 %v6271
      %v6407 = vpop.f32.mrf.mxu0
      %v6408 = vadd.f32 0.0, %v6407
      %v6409 = vpop.f32.mrf.mxu0
      %v6410 = vpop.f32.mrf.mxu0
      %v6411 = vadd.f32 0.0, %v6410
      %v6412 = vpop.f32.mrf.mxu0
      %6413 = vmatprep.mubr.bf16.mxu0 0
      %6414 = vmatmul.mubr.bf16.gmra.mxu0 %v6272
      %v6415 = vpop.f32.mrf.mxu0
      %v6416 = vadd.f32 0.0, %v6415
      %v6417 = vpop.f32.mrf.mxu0
      %v6418 = vpop.f32.mrf.mxu0
      %v6419 = vadd.f32 0.0, %v6418
      %v6420 = vpop.f32.mrf.mxu0
      %6421 = vmatprep.mubr.bf16.mxu0 0
      %6422 = vmatmul.mubr.bf16.gmra.mxu0 %v6273
      %v6423 = vpop.f32.mrf.mxu0
      %v6424 = vadd.f32 0.0, %v6423
      %v6425 = vpop.f32.mrf.mxu0
      %v6426 = vpop.f32.mrf.mxu0
      %v6427 = vadd.f32 0.0, %v6426
      %v6428 = vpop.f32.mrf.mxu0
      %6429 = vmatprep.mubr.bf16.mxu0 0
      %6430 = vmatmul.mubr.bf16.gmra.mxu0 %v6274
      %v6431 = vpop.f32.mrf.mxu0
      %v6432 = vadd.f32 0.0, %v6431
      %v6433 = vpop.f32.mrf.mxu0
      %v6434 = vpop.f32.mrf.mxu0
      %v6435 = vadd.f32 0.0, %v6434
      %v6436 = vpop.f32.mrf.mxu0
      %6437 = vmatprep.mubr.bf16.mxu0 0
      %6438 = vmatmul.mubr.bf16.gmra.mxu0 %v6275
      %v6439 = vpop.f32.mrf.mxu0
      %v6440 = vadd.f32 0.0, %v6439
      %v6441 = vpop.f32.mrf.mxu0
      %v6442 = vpop.f32.mrf.mxu0
      %v6443 = vadd.f32 0.0, %v6442
      %v6444 = vpop.f32.mrf.mxu0
      %6445 = vmatprep.mubr.bf16.mxu0 0
      %6446 = vmatmul.mubr.bf16.gmra.mxu0 %v6276
      %v6447 = vpop.f32.mrf.mxu0
      %v6448 = vadd.f32 0.0, %v6447
      %v6449 = vpop.f32.mrf.mxu0
      %v6450 = vpop.f32.mrf.mxu0
      %v6451 = vadd.f32 0.0, %v6450
      %v6452 = vpop.f32.mrf.mxu0
      %6453 = vmatprep.mubr.bf16.mxu0 0
      %6454 = vmatmul.mubr.bf16.gmra.mxu0 %v6277
      %v6455 = vpop.f32.mrf.mxu0
      %v6456 = vadd.f32 0.0, %v6455
      %v6457 = vpop.f32.mrf.mxu0
      %v6458 = vpop.f32.mrf.mxu0
      %v6459 = vadd.f32 0.0, %v6458
      %v6460 = vpop.f32.mrf.mxu0
      %6461 = vmatprep.mubr.bf16.mxu0 0
      %6462 = vmatmul.mubr.bf16.gmra.mxu0 %v6278
      %v6463 = vpop.f32.mrf.mxu0
      %v6464 = vadd.f32 0.0, %v6463
      %v6465 = vpop.f32.mrf.mxu0
      %v6466 = vpop.f32.mrf.mxu0
      %v6467 = vadd.f32 0.0, %v6466
      %v6468 = vpop.f32.mrf.mxu0
      %6469 = vmatprep.mubr.bf16.mxu0 0
      %6470 = vmatmul.mubr.bf16.gmra.mxu0 %v6279
      %v6471 = vpop.f32.mrf.mxu0
      %v6472 = vadd.f32 0.0, %v6471
      %v6473 = vpop.f32.mrf.mxu0
      %v6474 = vpop.f32.mrf.mxu0
      %v6475 = vadd.f32 0.0, %v6474
      %v6476 = vpop.f32.mrf.mxu0
      %6477 = vmatprep.mubr.bf16.mxu0 0
      %6478 = vmatmul.mubr.bf16.gmra.mxu0 %v6280
      %v6479 = vpop.f32.mrf.mxu0
      %v6480 = vadd.f32 0.0, %v6479
      %v6481 = vpop.f32.mrf.mxu0
      %v6482 = vpop.f32.mrf.mxu0
      %v6483 = vadd.f32 0.0, %v6482
      %v6484 = vpop.f32.mrf.mxu0
      %6485 = vmatprep.mubr.bf16.mxu0 0
      %6486 = vmatmul.mubr.bf16.gmra.mxu0 %v6281
      %v6487 = vpop.f32.mrf.mxu0
      %v6488 = vadd.f32 0.0, %v6487
      %v6489 = vpop.f32.mrf.mxu0
      %v6490 = vpop.f32.mrf.mxu0
      %v6491 = vadd.f32 0.0, %v6490
      %v6492 = vpop.f32.mrf.mxu0
      %6493 = vmatprep.mubr.bf16.mxu0 0
      %6494 = vmatmul.mubr.bf16.gmra.mxu0 %v6282
      %v6495 = vpop.f32.mrf.mxu0
      %v6496 = vadd.f32 0.0, %v6495
      %v6497 = vpop.f32.mrf.mxu0
      %v6498 = vpop.f32.mrf.mxu0
      %v6499 = vadd.f32 0.0, %v6498
      %v6500 = vpop.f32.mrf.mxu0
      %6501 = vmatprep.mubr.bf16.mxu0 0
      %6502 = vmatmul.mubr.bf16.gmra.mxu0 %v6283
      %v6503 = vpop.f32.mrf.mxu0
      %v6504 = vadd.f32 0.0, %v6503
      %v6505 = vpop.f32.mrf.mxu0
      %v6506 = vpop.f32.mrf.mxu0
      %v6507 = vadd.f32 0.0, %v6506
      %v6508 = vpop.f32.mrf.mxu0
      %6509 = vdwg.mxu0
      %v6510 = vadd.f32 %v6204, %v6384
      %v6511 = vadd.f32 %v6205, %v6387
      %v6512 = vadd.f32 %v6206, %v6392
      %v6513 = vadd.f32 %v6207, %v6395
      %v6514 = vadd.f32 %v6208, %v6400
      %v6515 = vadd.f32 %v6209, %v6403
      %v6516 = vadd.f32 %v6210, %v6408
      %v6517 = vadd.f32 %v6211, %v6411
      %v6518 = vadd.f32 %v6212, %v6416
      %v6519 = vadd.f32 %v6213, %v6419
      %v6520 = vadd.f32 %v6214, %v6424
      %v6521 = vadd.f32 %v6215, %v6427
      %v6522 = vadd.f32 %v6216, %v6432
      %v6523 = vadd.f32 %v6217, %v6435
      %v6524 = vadd.f32 %v6218, %v6440
      %v6525 = vadd.f32 %v6219, %v6443
      %v6526 = vadd.f32 %v6220, %v6448
      %v6527 = vadd.f32 %v6221, %v6451
      %v6528 = vadd.f32 %v6222, %v6456
      %v6529 = vadd.f32 %v6223, %v6459
      %v6530 = vadd.f32 %v6224, %v6464
      %v6531 = vadd.f32 %v6225, %v6467
      %v6532 = vadd.f32 %v6226, %v6472
      %v6533 = vadd.f32 %v6227, %v6475
      %v6534 = vadd.f32 %v6228, %v6480
      %v6535 = vadd.f32 %v6229, %v6483
      %v6536 = vadd.f32 %v6230, %v6488
      %v6537 = vadd.f32 %v6231, %v6491
      %v6538 = vadd.f32 %v6232, %v6496
      %v6539 = vadd.f32 %v6233, %v6499
      %v6540 = vadd.f32 %v6234, %v6504
      %v6541 = vadd.f32 %v6235, %v6507
      %v6542 = vld [vmem:[%s5044 + $0x2] sm:$0xff]
      %v6543 = vld [vmem:[%s5044 + $0xa] sm:$0xff]
      %v6544 = vld [vmem:[%s5044 + $0x1a] sm:$0xff]
      %v6545 = vld [vmem:[%s5044 + $0x22] sm:$0xff]
      %v6546 = vld [vmem:[%s5044 + $0x32] sm:$0xff]
      %v6547 = vld [vmem:[%s5044 + $0x3a] sm:$0xff]
      %v6548 = vld [vmem:[%s5044 + $0x4a] sm:$0xff]
      %v6549 = vld [vmem:[%s5044 + $0x52] sm:$0xff]
      %v6550 = vld [vmem:[%s5044 + $0x62] sm:$0xff]
      %v6551 = vld [vmem:[%s5044 + $0x6a] sm:$0xff]
      %v6552 = vld [vmem:[%s5044 + $0x7a] sm:$0xff]
      %v6553 = vld [vmem:[%s5044 + $0x82] sm:$0xff]
      %v6554 = vld [vmem:[%s5044 + $0x92] sm:$0xff]
      %v6555 = vld [vmem:[%s5044 + $0x9a] sm:$0xff]
      %v6556 = vld [vmem:[%s5044 + $0xaa] sm:$0xff]
      %v6557 = vld [vmem:[%s5044 + $0xb2] sm:$0xff]
      %v6558 = vld [vmem:[%s5044 + $0xc2] sm:$0xff]
      %v6559 = vld [vmem:[%s5044 + $0xca] sm:$0xff]
      %v6560 = vld [vmem:[%s5044 + $0xda] sm:$0xff]
      %v6561 = vld [vmem:[%s5044 + $0xe2] sm:$0xff]
      %v6562 = vld [vmem:[%s5044 + $0xf2] sm:$0xff]
      %v6563 = vld [vmem:[%s5044 + $0xfa] sm:$0xff]
      %v6564 = vld [vmem:[%s5044 + $0x10a] sm:$0xff]
      %v6565 = vld [vmem:[%s5044 + $0x112] sm:$0xff]
      %v6566 = vld [vmem:[%s5044 + $0x122] sm:$0xff]
      %v6567 = vld [vmem:[%s5044 + $0x12a] sm:$0xff]
      %v6568 = vld [vmem:[%s5044 + $0x13a] sm:$0xff]
      %v6569 = vld [vmem:[%s5044 + $0x142] sm:$0xff]
      %v6570 = vld [vmem:[%s5044 + $0x152] sm:$0xff]
      %v6571 = vld [vmem:[%s5044 + $0x15a] sm:$0xff]
      %v6572 = vld [vmem:[%s5044 + $0x16a] sm:$0xff]
      %v6573 = vld [vmem:[%s5044 + $0x172] sm:$0xff]
      %v6574 = vpack.c.bf16 %v6543, %v6542
      %v6575 = vpack.c.bf16 %v6545, %v6544
      %v6576 = vpack.c.bf16 %v6547, %v6546
      %v6577 = vpack.c.bf16 %v6549, %v6548
      %v6578 = vpack.c.bf16 %v6551, %v6550
      %v6579 = vpack.c.bf16 %v6553, %v6552
      %v6580 = vpack.c.bf16 %v6555, %v6554
      %v6581 = vpack.c.bf16 %v6557, %v6556
      %v6582 = vpack.c.bf16 %v6559, %v6558
      %v6583 = vpack.c.bf16 %v6561, %v6560
      %v6584 = vpack.c.bf16 %v6563, %v6562
      %v6585 = vpack.c.bf16 %v6565, %v6564
      %v6586 = vpack.c.bf16 %v6567, %v6566
      %v6587 = vpack.c.bf16 %v6569, %v6568
      %v6588 = vpack.c.bf16 %v6571, %v6570
      %v6589 = vpack.c.bf16 %v6573, %v6572
      %s6590 = scalar_lea.vmem %s5, 320
      %v6591 = vld [vmem:[%s6590] sm:$0xf]
      %v6592 = vld [vmem:[%s6590 + $0x4] sm:$0xf]
      %v6593 = vld [vmem:[%s6590 + $0x8] sm:$0xf]
      %v6594 = vld [vmem:[%s6590 + $0xc] sm:$0xf]
      %v6595 = vld [vmem:[%s6590 + $0x10] sm:$0xf]
      %v6596 = vld [vmem:[%s6590 + $0x14] sm:$0xf]
      %v6597 = vld [vmem:[%s6590 + $0x18] sm:$0xf]
      %v6598 = vld [vmem:[%s6590 + $0x1c] sm:$0xf]
      %v6599 = vld [vmem:[%s6590 + $0x20] sm:$0xf]
      %v6600 = vld [vmem:[%s6590 + $0x24] sm:$0xf]
      %v6601 = vld [vmem:[%s6590 + $0x28] sm:$0xf]
      %v6602 = vld [vmem:[%s6590 + $0x2c] sm:$0xf]
      %v6603 = vld [vmem:[%s6590 + $0x30] sm:$0xf]
      %v6604 = vld [vmem:[%s6590 + $0x34] sm:$0xf]
      %v6605 = vld [vmem:[%s6590 + $0x38] sm:$0xf]
      %v6606 = vld [vmem:[%s6590 + $0x3c] sm:$0xf]
      %v6623 = vunpack.c.l.b16 %v6591
      %v6624 = vunpack.c.l.b16 %v6592
      %v6625 = vunpack.c.l.b16 %v6593
      %v6626 = vunpack.c.l.b16 %v6594
      %v6627 = vunpack.c.l.b16 %v6595
      %v6628 = vunpack.c.l.b16 %v6596
      %v6629 = vunpack.c.l.b16 %v6597
      %v6630 = vunpack.c.l.b16 %v6598
      %v6631 = vunpack.c.l.b16 %v6599
      %v6632 = vunpack.c.l.b16 %v6600
      %v6633 = vunpack.c.l.b16 %v6601
      %v6634 = vunpack.c.l.b16 %v6602
      %v6635 = vunpack.c.l.b16 %v6603
      %v6636 = vunpack.c.l.b16 %v6604
      %v6637 = vunpack.c.l.b16 %v6605
      %v6638 = vunpack.c.l.b16 %v6606
      %v6639 = vpack.c.b16 %v6624, %v6623
      %v6640 = vpack.c.b16 %v6626, %v6625
      %v6641 = vpack.c.b16 %v6628, %v6627
      %v6642 = vpack.c.b16 %v6630, %v6629
      %v6643 = vpack.c.b16 %v6632, %v6631
      %v6644 = vpack.c.b16 %v6634, %v6633
      %v6645 = vpack.c.b16 %v6636, %v6635
      %v6646 = vpack.c.b16 %v6638, %v6637
      %6655 = vmatprep.subr.bf16.mxu0 0
      %6656 = vmatpush1.bf16.msra.mxu0 %v6646
      %6657 = vmatprep.subr.bf16.mxu0 0
      %6658 = vmatpush1.bf16.msra.mxu0 %v6645
      %6659 = vmatprep.subr.bf16.mxu0 0
      %6660 = vmatpush1.bf16.msra.mxu0 %v6644
      %6661 = vmatprep.subr.bf16.mxu0 0
      %6662 = vmatpush1.bf16.msra.mxu0 %v6643
      %6663 = vmatprep.subr.bf16.mxu0 0
      %6664 = vmatpush1.bf16.msra.mxu0 %v6642
      %6665 = vmatprep.subr.bf16.mxu0 0
      %6666 = vmatpush1.bf16.msra.mxu0 %v6641
      %6667 = vmatprep.subr.bf16.mxu0 0
      %6668 = vmatpush1.bf16.msra.mxu0 %v6640
      %6669 = vmatprep.subr.bf16.mxu0 0
      %6670 = vmatpush1.bf16.msra.mxu0 %v6639
      %6671 = vmatprep.subr.bf16.mxu0 0
      %6672 = vmatpush2.bf16.msra.mxu0 0
      %6673 = vmatprep.subr.bf16.mxu0 0
      %6674 = vmatpush2.bf16.msra.mxu0 0
      %6675 = vmatprep.subr.bf16.mxu0 0
      %6676 = vmatpush2.bf16.msra.mxu0 0
      %6677 = vmatprep.subr.bf16.mxu0 0
      %6678 = vmatpush2.bf16.msra.mxu0 0
      %6679 = vmatprep.subr.bf16.mxu0 0
      %6680 = vmatpush2.bf16.msra.mxu0 0
      %6681 = vmatprep.subr.bf16.mxu0 0
      %6682 = vmatpush2.bf16.msra.mxu0 0
      %6683 = vmatprep.subr.bf16.mxu0 0
      %6684 = vmatpush2.bf16.msra.mxu0 0
      %6685 = vmatprep.subr.bf16.mxu0 0
      %6686 = vmatpush2.bf16.msra.mxu0 0
      %6687 = vmatprep.mubr.bf16.mxu0 0
      %6688 = vmatmul.mubr.bf16.gmra.mxu0 %v6574
      %v6689 = vpop.f32.mrf.mxu0
      %v6690 = vadd.f32 0.0, %v6689
      %v6691 = vpop.f32.mrf.mxu0
      %v6692 = vpop.f32.mrf.mxu0
      %v6693 = vadd.f32 0.0, %v6692
      %v6694 = vpop.f32.mrf.mxu0
      %6695 = vmatprep.mubr.bf16.mxu0 0
      %6696 = vmatmul.mubr.bf16.gmra.mxu0 %v6575
      %v6697 = vpop.f32.mrf.mxu0
      %v6698 = vadd.f32 0.0, %v6697
      %v6699 = vpop.f32.mrf.mxu0
      %v6700 = vpop.f32.mrf.mxu0
      %v6701 = vadd.f32 0.0, %v6700
      %v6702 = vpop.f32.mrf.mxu0
      %6703 = vmatprep.mubr.bf16.mxu0 0
      %6704 = vmatmul.mubr.bf16.gmra.mxu0 %v6576
      %v6705 = vpop.f32.mrf.mxu0
      %v6706 = vadd.f32 0.0, %v6705
      %v6707 = vpop.f32.mrf.mxu0
      %v6708 = vpop.f32.mrf.mxu0
      %v6709 = vadd.f32 0.0, %v6708
      %v6710 = vpop.f32.mrf.mxu0
      %6711 = vmatprep.mubr.bf16.mxu0 0
      %6712 = vmatmul.mubr.bf16.gmra.mxu0 %v6577
      %v6713 = vpop.f32.mrf.mxu0
      %v6714 = vadd.f32 0.0, %v6713
      %v6715 = vpop.f32.mrf.mxu0
      %v6716 = vpop.f32.mrf.mxu0
      %v6717 = vadd.f32 0.0, %v6716
      %v6718 = vpop.f32.mrf.mxu0
      %6719 = vmatprep.mubr.bf16.mxu0 0
      %6720 = vmatmul.mubr.bf16.gmra.mxu0 %v6578
      %v6721 = vpop.f32.mrf.mxu0
      %v6722 = vadd.f32 0.0, %v6721
      %v6723 = vpop.f32.mrf.mxu0
      %v6724 = vpop.f32.mrf.mxu0
      %v6725 = vadd.f32 0.0, %v6724
      %v6726 = vpop.f32.mrf.mxu0
      %6727 = vmatprep.mubr.bf16.mxu0 0
      %6728 = vmatmul.mubr.bf16.gmra.mxu0 %v6579
      %v6729 = vpop.f32.mrf.mxu0
      %v6730 = vadd.f32 0.0, %v6729
      %v6731 = vpop.f32.mrf.mxu0
      %v6732 = vpop.f32.mrf.mxu0
      %v6733 = vadd.f32 0.0, %v6732
      %v6734 = vpop.f32.mrf.mxu0
      %6735 = vmatprep.mubr.bf16.mxu0 0
      %6736 = vmatmul.mubr.bf16.gmra.mxu0 %v6580
      %v6737 = vpop.f32.mrf.mxu0
      %v6738 = vadd.f32 0.0, %v6737
      %v6739 = vpop.f32.mrf.mxu0
      %v6740 = vpop.f32.mrf.mxu0
      %v6741 = vadd.f32 0.0, %v6740
      %v6742 = vpop.f32.mrf.mxu0
      %6743 = vmatprep.mubr.bf16.mxu0 0
      %6744 = vmatmul.mubr.bf16.gmra.mxu0 %v6581
      %v6745 = vpop.f32.mrf.mxu0
      %v6746 = vadd.f32 0.0, %v6745
      %v6747 = vpop.f32.mrf.mxu0
      %v6748 = vpop.f32.mrf.mxu0
      %v6749 = vadd.f32 0.0, %v6748
      %v6750 = vpop.f32.mrf.mxu0
      %6751 = vmatprep.mubr.bf16.mxu0 0
      %6752 = vmatmul.mubr.bf16.gmra.mxu0 %v6582
      %v6753 = vpop.f32.mrf.mxu0
      %v6754 = vadd.f32 0.0, %v6753
      %v6755 = vpop.f32.mrf.mxu0
      %v6756 = vpop.f32.mrf.mxu0
      %v6757 = vadd.f32 0.0, %v6756
      %v6758 = vpop.f32.mrf.mxu0
      %6759 = vmatprep.mubr.bf16.mxu0 0
      %6760 = vmatmul.mubr.bf16.gmra.mxu0 %v6583
      %v6761 = vpop.f32.mrf.mxu0
      %v6762 = vadd.f32 0.0, %v6761
      %v6763 = vpop.f32.mrf.mxu0
      %v6764 = vpop.f32.mrf.mxu0
      %v6765 = vadd.f32 0.0, %v6764
      %v6766 = vpop.f32.mrf.mxu0
      %6767 = vmatprep.mubr.bf16.mxu0 0
      %6768 = vmatmul.mubr.bf16.gmra.mxu0 %v6584
      %v6769 = vpop.f32.mrf.mxu0
      %v6770 = vadd.f32 0.0, %v6769
      %v6771 = vpop.f32.mrf.mxu0
      %v6772 = vpop.f32.mrf.mxu0
      %v6773 = vadd.f32 0.0, %v6772
      %v6774 = vpop.f32.mrf.mxu0
      %6775 = vmatprep.mubr.bf16.mxu0 0
      %6776 = vmatmul.mubr.bf16.gmra.mxu0 %v6585
      %v6777 = vpop.f32.mrf.mxu0
      %v6778 = vadd.f32 0.0, %v6777
      %v6779 = vpop.f32.mrf.mxu0
      %v6780 = vpop.f32.mrf.mxu0
      %v6781 = vadd.f32 0.0, %v6780
      %v6782 = vpop.f32.mrf.mxu0
      %6783 = vmatprep.mubr.bf16.mxu0 0
      %6784 = vmatmul.mubr.bf16.gmra.mxu0 %v6586
      %v6785 = vpop.f32.mrf.mxu0
      %v6786 = vadd.f32 0.0, %v6785
      %v6787 = vpop.f32.mrf.mxu0
      %v6788 = vpop.f32.mrf.mxu0
      %v6789 = vadd.f32 0.0, %v6788
      %v6790 = vpop.f32.mrf.mxu0
      %6791 = vmatprep.mubr.bf16.mxu0 0
      %6792 = vmatmul.mubr.bf16.gmra.mxu0 %v6587
      %v6793 = vpop.f32.mrf.mxu0
      %v6794 = vadd.f32 0.0, %v6793
      %v6795 = vpop.f32.mrf.mxu0
      %v6796 = vpop.f32.mrf.mxu0
      %v6797 = vadd.f32 0.0, %v6796
      %v6798 = vpop.f32.mrf.mxu0
      %6799 = vmatprep.mubr.bf16.mxu0 0
      %6800 = vmatmul.mubr.bf16.gmra.mxu0 %v6588
      %v6801 = vpop.f32.mrf.mxu0
      %v6802 = vadd.f32 0.0, %v6801
      %v6803 = vpop.f32.mrf.mxu0
      %v6804 = vpop.f32.mrf.mxu0
      %v6805 = vadd.f32 0.0, %v6804
      %v6806 = vpop.f32.mrf.mxu0
      %6807 = vmatprep.mubr.bf16.mxu0 0
      %6808 = vmatmul.mubr.bf16.gmra.mxu0 %v6589
      %v6809 = vpop.f32.mrf.mxu0
      %v6810 = vadd.f32 0.0, %v6809
      %v6811 = vpop.f32.mrf.mxu0
      %v6812 = vpop.f32.mrf.mxu0
      %v6813 = vadd.f32 0.0, %v6812
      %v6814 = vpop.f32.mrf.mxu0
      %6815 = vdwg.mxu0
      %v6816 = vadd.f32 %v6510, %v6690
      %v6817 = vadd.f32 %v6511, %v6693
      %v6818 = vadd.f32 %v6512, %v6698
      %v6819 = vadd.f32 %v6513, %v6701
      %v6820 = vadd.f32 %v6514, %v6706
      %v6821 = vadd.f32 %v6515, %v6709
      %v6822 = vadd.f32 %v6516, %v6714
      %v6823 = vadd.f32 %v6517, %v6717
      %v6824 = vadd.f32 %v6518, %v6722
      %v6825 = vadd.f32 %v6519, %v6725
      %v6826 = vadd.f32 %v6520, %v6730
      %v6827 = vadd.f32 %v6521, %v6733
      %v6828 = vadd.f32 %v6522, %v6738
      %v6829 = vadd.f32 %v6523, %v6741
      %v6830 = vadd.f32 %v6524, %v6746
      %v6831 = vadd.f32 %v6525, %v6749
      %v6832 = vadd.f32 %v6526, %v6754
      %v6833 = vadd.f32 %v6527, %v6757
      %v6834 = vadd.f32 %v6528, %v6762
      %v6835 = vadd.f32 %v6529, %v6765
      %v6836 = vadd.f32 %v6530, %v6770
      %v6837 = vadd.f32 %v6531, %v6773
      %v6838 = vadd.f32 %v6532, %v6778
      %v6839 = vadd.f32 %v6533, %v6781
      %v6840 = vadd.f32 %v6534, %v6786
      %v6841 = vadd.f32 %v6535, %v6789
      %v6842 = vadd.f32 %v6536, %v6794
      %v6843 = vadd.f32 %v6537, %v6797
      %v6844 = vadd.f32 %v6538, %v6802
      %v6845 = vadd.f32 %v6539, %v6805
      %v6846 = vadd.f32 %v6540, %v6810
      %v6847 = vadd.f32 %v6541, %v6813
      %s6848 = scalar_lea.vmem [#allocation4], 48
      %v6849 = vld [vmem:[%s6848] sm:$0xff]
      %v6850 = vld [vmem:[%s6848 + $0x8] sm:$0xff]
      %v6851 = vld [vmem:[%s6848 + $0x18] sm:$0xff]
      %v6852 = vld [vmem:[%s6848 + $0x20] sm:$0xff]
      %v6853 = vld [vmem:[%s6848 + $0x30] sm:$0xff]
      %v6854 = vld [vmem:[%s6848 + $0x38] sm:$0xff]
      %v6855 = vld [vmem:[%s6848 + $0x48] sm:$0xff]
      %v6856 = vld [vmem:[%s6848 + $0x50] sm:$0xff]
      %v6857 = vld [vmem:[%s6848 + $0x60] sm:$0xff]
      %v6858 = vld [vmem:[%s6848 + $0x68] sm:$0xff]
      %v6859 = vld [vmem:[%s6848 + $0x78] sm:$0xff]
      %v6860 = vld [vmem:[%s6848 + $0x80] sm:$0xff]
      %v6861 = vld [vmem:[%s6848 + $0x90] sm:$0xff]
      %v6862 = vld [vmem:[%s6848 + $0x98] sm:$0xff]
      %v6863 = vld [vmem:[%s6848 + $0xa8] sm:$0xff]
      %v6864 = vld [vmem:[%s6848 + $0xb0] sm:$0xff]
      %v6865 = vld [vmem:[%s6848 + $0xc0] sm:$0xff]
      %v6866 = vld [vmem:[%s6848 + $0xc8] sm:$0xff]
      %v6867 = vld [vmem:[%s6848 + $0xd8] sm:$0xff]
      %v6868 = vld [vmem:[%s6848 + $0xe0] sm:$0xff]
      %v6869 = vld [vmem:[%s6848 + $0xf0] sm:$0xff]
      %v6870 = vld [vmem:[%s6848 + $0xf8] sm:$0xff]
      %v6871 = vld [vmem:[%s6848 + $0x108] sm:$0xff]
      %v6872 = vld [vmem:[%s6848 + $0x110] sm:$0xff]
      %v6873 = vld [vmem:[%s6848 + $0x120] sm:$0xff]
      %v6874 = vld [vmem:[%s6848 + $0x128] sm:$0xff]
      %v6875 = vld [vmem:[%s6848 + $0x138] sm:$0xff]
      %v6876 = vld [vmem:[%s6848 + $0x140] sm:$0xff]
      %v6877 = vld [vmem:[%s6848 + $0x150] sm:$0xff]
      %v6878 = vld [vmem:[%s6848 + $0x158] sm:$0xff]
      %v6879 = vld [vmem:[%s6848 + $0x168] sm:$0xff]
      %v6880 = vld [vmem:[%s6848 + $0x170] sm:$0xff]
      %v6881 = vpack.c.bf16 %v6850, %v6849
      %v6882 = vpack.c.bf16 %v6852, %v6851
      %v6883 = vpack.c.bf16 %v6854, %v6853
      %v6884 = vpack.c.bf16 %v6856, %v6855
      %v6885 = vpack.c.bf16 %v6858, %v6857
      %v6886 = vpack.c.bf16 %v6860, %v6859
      %v6887 = vpack.c.bf16 %v6862, %v6861
      %v6888 = vpack.c.bf16 %v6864, %v6863
      %v6889 = vpack.c.bf16 %v6866, %v6865
      %v6890 = vpack.c.bf16 %v6868, %v6867
      %v6891 = vpack.c.bf16 %v6870, %v6869
      %v6892 = vpack.c.bf16 %v6872, %v6871
      %v6893 = vpack.c.bf16 %v6874, %v6873
      %v6894 = vpack.c.bf16 %v6876, %v6875
      %v6895 = vpack.c.bf16 %v6878, %v6877
      %v6896 = vpack.c.bf16 %v6880, %v6879
      %s6897 = scalar_lea.vmem %s5, 384
      %v6898 = vld [vmem:[%s6897] sm:$0xf]
      %v6899 = vld [vmem:[%s6897 + $0x4] sm:$0xf]
      %v6900 = vld [vmem:[%s6897 + $0x8] sm:$0xf]
      %v6901 = vld [vmem:[%s6897 + $0xc] sm:$0xf]
      %v6902 = vld [vmem:[%s6897 + $0x10] sm:$0xf]
      %v6903 = vld [vmem:[%s6897 + $0x14] sm:$0xf]
      %v6904 = vld [vmem:[%s6897 + $0x18] sm:$0xf]
      %v6905 = vld [vmem:[%s6897 + $0x1c] sm:$0xf]
      %v6906 = vld [vmem:[%s6897 + $0x20] sm:$0xf]
      %v6907 = vld [vmem:[%s6897 + $0x24] sm:$0xf]
      %v6908 = vld [vmem:[%s6897 + $0x28] sm:$0xf]
      %v6909 = vld [vmem:[%s6897 + $0x2c] sm:$0xf]
      %v6910 = vld [vmem:[%s6897 + $0x30] sm:$0xf]
      %v6911 = vld [vmem:[%s6897 + $0x34] sm:$0xf]
      %v6912 = vld [vmem:[%s6897 + $0x38] sm:$0xf]
      %v6913 = vld [vmem:[%s6897 + $0x3c] sm:$0xf]
      %v6930 = vunpack.c.l.b16 %v6898
      %v6931 = vunpack.c.l.b16 %v6899
      %v6932 = vunpack.c.l.b16 %v6900
      %v6933 = vunpack.c.l.b16 %v6901
      %v6934 = vunpack.c.l.b16 %v6902
      %v6935 = vunpack.c.l.b16 %v6903
      %v6936 = vunpack.c.l.b16 %v6904
      %v6937 = vunpack.c.l.b16 %v6905
      %v6938 = vunpack.c.l.b16 %v6906
      %v6939 = vunpack.c.l.b16 %v6907
      %v6940 = vunpack.c.l.b16 %v6908
      %v6941 = vunpack.c.l.b16 %v6909
      %v6942 = vunpack.c.l.b16 %v6910
      %v6943 = vunpack.c.l.b16 %v6911
      %v6944 = vunpack.c.l.b16 %v6912
      %v6945 = vunpack.c.l.b16 %v6913
      %v6946 = vpack.c.b16 %v6931, %v6930
      %v6947 = vpack.c.b16 %v6933, %v6932
      %v6948 = vpack.c.b16 %v6935, %v6934
      %v6949 = vpack.c.b16 %v6937, %v6936
      %v6950 = vpack.c.b16 %v6939, %v6938
      %v6951 = vpack.c.b16 %v6941, %v6940
      %v6952 = vpack.c.b16 %v6943, %v6942
      %v6953 = vpack.c.b16 %v6945, %v6944
      %6962 = vmatprep.subr.bf16.mxu0 0
      %6963 = vmatpush1.bf16.msra.mxu0 %v6953
      %6964 = vmatprep.subr.bf16.mxu0 0
      %6965 = vmatpush1.bf16.msra.mxu0 %v6952
      %6966 = vmatprep.subr.bf16.mxu0 0
      %6967 = vmatpush1.bf16.msra.mxu0 %v6951
      %6968 = vmatprep.subr.bf16.mxu0 0
      %6969 = vmatpush1.bf16.msra.mxu0 %v6950
      %6970 = vmatprep.subr.bf16.mxu0 0
      %6971 = vmatpush1.bf16.msra.mxu0 %v6949
      %6972 = vmatprep.subr.bf16.mxu0 0
      %6973 = vmatpush1.bf16.msra.mxu0 %v6948
      %6974 = vmatprep.subr.bf16.mxu0 0
      %6975 = vmatpush1.bf16.msra.mxu0 %v6947
      %6976 = vmatprep.subr.bf16.mxu0 0
      %6977 = vmatpush1.bf16.msra.mxu0 %v6946
      %6978 = vmatprep.subr.bf16.mxu0 0
      %6979 = vmatpush2.bf16.msra.mxu0 0
      %6980 = vmatprep.subr.bf16.mxu0 0
      %6981 = vmatpush2.bf16.msra.mxu0 0
      %6982 = vmatprep.subr.bf16.mxu0 0
      %6983 = vmatpush2.bf16.msra.mxu0 0
      %6984 = vmatprep.subr.bf16.mxu0 0
      %6985 = vmatpush2.bf16.msra.mxu0 0
      %6986 = vmatprep.subr.bf16.mxu0 0
      %6987 = vmatpush2.bf16.msra.mxu0 0
      %6988 = vmatprep.subr.bf16.mxu0 0
      %6989 = vmatpush2.bf16.msra.mxu0 0
      %6990 = vmatprep.subr.bf16.mxu0 0
      %6991 = vmatpush2.bf16.msra.mxu0 0
      %6992 = vmatprep.subr.bf16.mxu0 0
      %6993 = vmatpush2.bf16.msra.mxu0 0
      %6994 = vmatprep.mubr.bf16.mxu0 0
      %6995 = vmatmul.mubr.bf16.gmra.mxu0 %v6881
      %v6996 = vpop.f32.mrf.mxu0
      %v6997 = vadd.f32 0.0, %v6996
      %v6998 = vpop.f32.mrf.mxu0
      %v6999 = vpop.f32.mrf.mxu0
      %v7000 = vadd.f32 0.0, %v6999
      %v7001 = vpop.f32.mrf.mxu0
      %7002 = vmatprep.mubr.bf16.mxu0 0
      %7003 = vmatmul.mubr.bf16.gmra.mxu0 %v6882
      %v7004 = vpop.f32.mrf.mxu0
      %v7005 = vadd.f32 0.0, %v7004
      %v7006 = vpop.f32.mrf.mxu0
      %v7007 = vpop.f32.mrf.mxu0
      %v7008 = vadd.f32 0.0, %v7007
      %v7009 = vpop.f32.mrf.mxu0
      %7010 = vmatprep.mubr.bf16.mxu0 0
      %7011 = vmatmul.mubr.bf16.gmra.mxu0 %v6883
      %v7012 = vpop.f32.mrf.mxu0
      %v7013 = vadd.f32 0.0, %v7012
      %v7014 = vpop.f32.mrf.mxu0
      %v7015 = vpop.f32.mrf.mxu0
      %v7016 = vadd.f32 0.0, %v7015
      %v7017 = vpop.f32.mrf.mxu0
      %7018 = vmatprep.mubr.bf16.mxu0 0
      %7019 = vmatmul.mubr.bf16.gmra.mxu0 %v6884
      %v7020 = vpop.f32.mrf.mxu0
      %v7021 = vadd.f32 0.0, %v7020
      %v7022 = vpop.f32.mrf.mxu0
      %v7023 = vpop.f32.mrf.mxu0
      %v7024 = vadd.f32 0.0, %v7023
      %v7025 = vpop.f32.mrf.mxu0
      %7026 = vmatprep.mubr.bf16.mxu0 0
      %7027 = vmatmul.mubr.bf16.gmra.mxu0 %v6885
      %v7028 = vpop.f32.mrf.mxu0
      %v7029 = vadd.f32 0.0, %v7028
      %v7030 = vpop.f32.mrf.mxu0
      %v7031 = vpop.f32.mrf.mxu0
      %v7032 = vadd.f32 0.0, %v7031
      %v7033 = vpop.f32.mrf.mxu0
      %7034 = vmatprep.mubr.bf16.mxu0 0
      %7035 = vmatmul.mubr.bf16.gmra.mxu0 %v6886
      %v7036 = vpop.f32.mrf.mxu0
      %v7037 = vadd.f32 0.0, %v7036
      %v7038 = vpop.f32.mrf.mxu0
      %v7039 = vpop.f32.mrf.mxu0
      %v7040 = vadd.f32 0.0, %v7039
      %v7041 = vpop.f32.mrf.mxu0
      %7042 = vmatprep.mubr.bf16.mxu0 0
      %7043 = vmatmul.mubr.bf16.gmra.mxu0 %v6887
      %v7044 = vpop.f32.mrf.mxu0
      %v7045 = vadd.f32 0.0, %v7044
      %v7046 = vpop.f32.mrf.mxu0
      %v7047 = vpop.f32.mrf.mxu0
      %v7048 = vadd.f32 0.0, %v7047
      %v7049 = vpop.f32.mrf.mxu0
      %7050 = vmatprep.mubr.bf16.mxu0 0
      %7051 = vmatmul.mubr.bf16.gmra.mxu0 %v6888
      %v7052 = vpop.f32.mrf.mxu0
      %v7053 = vadd.f32 0.0, %v7052
      %v7054 = vpop.f32.mrf.mxu0
      %v7055 = vpop.f32.mrf.mxu0
      %v7056 = vadd.f32 0.0, %v7055
      %v7057 = vpop.f32.mrf.mxu0
      %7058 = vmatprep.mubr.bf16.mxu0 0
      %7059 = vmatmul.mubr.bf16.gmra.mxu0 %v6889
      %v7060 = vpop.f32.mrf.mxu0
      %v7061 = vadd.f32 0.0, %v7060
      %v7062 = vpop.f32.mrf.mxu0
      %v7063 = vpop.f32.mrf.mxu0
      %v7064 = vadd.f32 0.0, %v7063
      %v7065 = vpop.f32.mrf.mxu0
      %7066 = vmatprep.mubr.bf16.mxu0 0
      %7067 = vmatmul.mubr.bf16.gmra.mxu0 %v6890
      %v7068 = vpop.f32.mrf.mxu0
      %v7069 = vadd.f32 0.0, %v7068
      %v7070 = vpop.f32.mrf.mxu0
      %v7071 = vpop.f32.mrf.mxu0
      %v7072 = vadd.f32 0.0, %v7071
      %v7073 = vpop.f32.mrf.mxu0
      %7074 = vmatprep.mubr.bf16.mxu0 0
      %7075 = vmatmul.mubr.bf16.gmra.mxu0 %v6891
      %v7076 = vpop.f32.mrf.mxu0
      %v7077 = vadd.f32 0.0, %v7076
      %v7078 = vpop.f32.mrf.mxu0
      %v7079 = vpop.f32.mrf.mxu0
      %v7080 = vadd.f32 0.0, %v7079
      %v7081 = vpop.f32.mrf.mxu0
      %7082 = vmatprep.mubr.bf16.mxu0 0
      %7083 = vmatmul.mubr.bf16.gmra.mxu0 %v6892
      %v7084 = vpop.f32.mrf.mxu0
      %v7085 = vadd.f32 0.0, %v7084
      %v7086 = vpop.f32.mrf.mxu0
      %v7087 = vpop.f32.mrf.mxu0
      %v7088 = vadd.f32 0.0, %v7087
      %v7089 = vpop.f32.mrf.mxu0
      %7090 = vmatprep.mubr.bf16.mxu0 0
      %7091 = vmatmul.mubr.bf16.gmra.mxu0 %v6893
      %v7092 = vpop.f32.mrf.mxu0
      %v7093 = vadd.f32 0.0, %v7092
      %v7094 = vpop.f32.mrf.mxu0
      %v7095 = vpop.f32.mrf.mxu0
      %v7096 = vadd.f32 0.0, %v7095
      %v7097 = vpop.f32.mrf.mxu0
      %7098 = vmatprep.mubr.bf16.mxu0 0
      %7099 = vmatmul.mubr.bf16.gmra.mxu0 %v6894
      %v7100 = vpop.f32.mrf.mxu0
      %v7101 = vadd.f32 0.0, %v7100
      %v7102 = vpop.f32.mrf.mxu0
      %v7103 = vpop.f32.mrf.mxu0
      %v7104 = vadd.f32 0.0, %v7103
      %v7105 = vpop.f32.mrf.mxu0
      %7106 = vmatprep.mubr.bf16.mxu0 0
      %7107 = vmatmul.mubr.bf16.gmra.mxu0 %v6895
      %v7108 = vpop.f32.mrf.mxu0
      %v7109 = vadd.f32 0.0, %v7108
      %v7110 = vpop.f32.mrf.mxu0
      %v7111 = vpop.f32.mrf.mxu0
      %v7112 = vadd.f32 0.0, %v7111
      %v7113 = vpop.f32.mrf.mxu0
      %7114 = vmatprep.mubr.bf16.mxu0 0
      %7115 = vmatmul.mubr.bf16.gmra.mxu0 %v6896
      %v7116 = vpop.f32.mrf.mxu0
      %v7117 = vadd.f32 0.0, %v7116
      %v7118 = vpop.f32.mrf.mxu0
      %v7119 = vpop.f32.mrf.mxu0
      %v7120 = vadd.f32 0.0, %v7119
      %v7121 = vpop.f32.mrf.mxu0
      %7122 = vdwg.mxu0
      %v7123 = vadd.f32 %v6816, %v6997
      %v7124 = vadd.f32 %v6817, %v7000
      %v7125 = vadd.f32 %v6818, %v7005
      %v7126 = vadd.f32 %v6819, %v7008
      %v7127 = vadd.f32 %v6820, %v7013
      %v7128 = vadd.f32 %v6821, %v7016
      %v7129 = vadd.f32 %v6822, %v7021
      %v7130 = vadd.f32 %v6823, %v7024
      %v7131 = vadd.f32 %v6824, %v7029
      %v7132 = vadd.f32 %v6825, %v7032
      %v7133 = vadd.f32 %v6826, %v7037
      %v7134 = vadd.f32 %v6827, %v7040
      %v7135 = vadd.f32 %v6828, %v7045
      %v7136 = vadd.f32 %v6829, %v7048
      %v7137 = vadd.f32 %v6830, %v7053
      %v7138 = vadd.f32 %v6831, %v7056
      %v7139 = vadd.f32 %v6832, %v7061
      %v7140 = vadd.f32 %v6833, %v7064
      %v7141 = vadd.f32 %v6834, %v7069
      %v7142 = vadd.f32 %v6835, %v7072
      %v7143 = vadd.f32 %v6836, %v7077
      %v7144 = vadd.f32 %v6837, %v7080
      %v7145 = vadd.f32 %v6838, %v7085
      %v7146 = vadd.f32 %v6839, %v7088
      %v7147 = vadd.f32 %v6840, %v7093
      %v7148 = vadd.f32 %v6841, %v7096
      %v7149 = vadd.f32 %v6842, %v7101
      %v7150 = vadd.f32 %v6843, %v7104
      %v7151 = vadd.f32 %v6844, %v7109
      %v7152 = vadd.f32 %v6845, %v7112
      %v7153 = vadd.f32 %v6846, %v7117
      %v7154 = vadd.f32 %v6847, %v7120
      %v7155 = vld [vmem:[%s6848 + $0x1] sm:$0xff]
      %v7156 = vld [vmem:[%s6848 + $0x9] sm:$0xff]
      %v7157 = vld [vmem:[%s6848 + $0x19] sm:$0xff]
      %v7158 = vld [vmem:[%s6848 + $0x21] sm:$0xff]
      %v7159 = vld [vmem:[%s6848 + $0x31] sm:$0xff]
      %v7160 = vld [vmem:[%s6848 + $0x39] sm:$0xff]
      %v7161 = vld [vmem:[%s6848 + $0x49] sm:$0xff]
      %v7162 = vld [vmem:[%s6848 + $0x51] sm:$0xff]
      %v7163 = vld [vmem:[%s6848 + $0x61] sm:$0xff]
      %v7164 = vld [vmem:[%s6848 + $0x69] sm:$0xff]
      %v7165 = vld [vmem:[%s6848 + $0x79] sm:$0xff]
      %v7166 = vld [vmem:[%s6848 + $0x81] sm:$0xff]
      %v7167 = vld [vmem:[%s6848 + $0x91] sm:$0xff]
      %v7168 = vld [vmem:[%s6848 + $0x99] sm:$0xff]
      %v7169 = vld [vmem:[%s6848 + $0xa9] sm:$0xff]
      %v7170 = vld [vmem:[%s6848 + $0xb1] sm:$0xff]
      %v7171 = vld [vmem:[%s6848 + $0xc1] sm:$0xff]
      %v7172 = vld [vmem:[%s6848 + $0xc9] sm:$0xff]
      %v7173 = vld [vmem:[%s6848 + $0xd9] sm:$0xff]
      %v7174 = vld [vmem:[%s6848 + $0xe1] sm:$0xff]
      %v7175 = vld [vmem:[%s6848 + $0xf1] sm:$0xff]
      %v7176 = vld [vmem:[%s6848 + $0xf9] sm:$0xff]
      %v7177 = vld [vmem:[%s6848 + $0x109] sm:$0xff]
      %v7178 = vld [vmem:[%s6848 + $0x111] sm:$0xff]
      %v7179 = vld [vmem:[%s6848 + $0x121] sm:$0xff]
      %v7180 = vld [vmem:[%s6848 + $0x129] sm:$0xff]
      %v7181 = vld [vmem:[%s6848 + $0x139] sm:$0xff]
      %v7182 = vld [vmem:[%s6848 + $0x141] sm:$0xff]
      %v7183 = vld [vmem:[%s6848 + $0x151] sm:$0xff]
      %v7184 = vld [vmem:[%s6848 + $0x159] sm:$0xff]
      %v7185 = vld [vmem:[%s6848 + $0x169] sm:$0xff]
      %v7186 = vld [vmem:[%s6848 + $0x171] sm:$0xff]
      %v7187 = vpack.c.bf16 %v7156, %v7155
      %v7188 = vpack.c.bf16 %v7158, %v7157
      %v7189 = vpack.c.bf16 %v7160, %v7159
      %v7190 = vpack.c.bf16 %v7162, %v7161
      %v7191 = vpack.c.bf16 %v7164, %v7163
      %v7192 = vpack.c.bf16 %v7166, %v7165
      %v7193 = vpack.c.bf16 %v7168, %v7167
      %v7194 = vpack.c.bf16 %v7170, %v7169
      %v7195 = vpack.c.bf16 %v7172, %v7171
      %v7196 = vpack.c.bf16 %v7174, %v7173
      %v7197 = vpack.c.bf16 %v7176, %v7175
      %v7198 = vpack.c.bf16 %v7178, %v7177
      %v7199 = vpack.c.bf16 %v7180, %v7179
      %v7200 = vpack.c.bf16 %v7182, %v7181
      %v7201 = vpack.c.bf16 %v7184, %v7183
      %v7202 = vpack.c.bf16 %v7186, %v7185
      %s7203 = scalar_lea.vmem %s5, 448
      %v7204 = vld [vmem:[%s7203] sm:$0xf]
      %v7205 = vld [vmem:[%s7203 + $0x4] sm:$0xf]
      %v7206 = vld [vmem:[%s7203 + $0x8] sm:$0xf]
      %v7207 = vld [vmem:[%s7203 + $0xc] sm:$0xf]
      %v7208 = vld [vmem:[%s7203 + $0x10] sm:$0xf]
      %v7209 = vld [vmem:[%s7203 + $0x14] sm:$0xf]
      %v7210 = vld [vmem:[%s7203 + $0x18] sm:$0xf]
      %v7211 = vld [vmem:[%s7203 + $0x1c] sm:$0xf]
      %v7212 = vld [vmem:[%s7203 + $0x20] sm:$0xf]
      %v7213 = vld [vmem:[%s7203 + $0x24] sm:$0xf]
      %v7214 = vld [vmem:[%s7203 + $0x28] sm:$0xf]
      %v7215 = vld [vmem:[%s7203 + $0x2c] sm:$0xf]
      %v7216 = vld [vmem:[%s7203 + $0x30] sm:$0xf]
      %v7217 = vld [vmem:[%s7203 + $0x34] sm:$0xf]
      %v7218 = vld [vmem:[%s7203 + $0x38] sm:$0xf]
      %v7219 = vld [vmem:[%s7203 + $0x3c] sm:$0xf]
      %v7236 = vunpack.c.l.b16 %v7204
      %v7237 = vunpack.c.l.b16 %v7205
      %v7238 = vunpack.c.l.b16 %v7206
      %v7239 = vunpack.c.l.b16 %v7207
      %v7240 = vunpack.c.l.b16 %v7208
      %v7241 = vunpack.c.l.b16 %v7209
      %v7242 = vunpack.c.l.b16 %v7210
      %v7243 = vunpack.c.l.b16 %v7211
      %v7244 = vunpack.c.l.b16 %v7212
      %v7245 = vunpack.c.l.b16 %v7213
      %v7246 = vunpack.c.l.b16 %v7214
      %v7247 = vunpack.c.l.b16 %v7215
      %v7248 = vunpack.c.l.b16 %v7216
      %v7249 = vunpack.c.l.b16 %v7217
      %v7250 = vunpack.c.l.b16 %v7218
      %v7251 = vunpack.c.l.b16 %v7219
      %v7252 = vpack.c.b16 %v7237, %v7236
      %v7253 = vpack.c.b16 %v7239, %v7238
      %v7254 = vpack.c.b16 %v7241, %v7240
      %v7255 = vpack.c.b16 %v7243, %v7242
      %v7256 = vpack.c.b16 %v7245, %v7244
      %v7257 = vpack.c.b16 %v7247, %v7246
      %v7258 = vpack.c.b16 %v7249, %v7248
      %v7259 = vpack.c.b16 %v7251, %v7250
      %7268 = vmatprep.subr.bf16.mxu0 0
      %7269 = vmatpush1.bf16.msra.mxu0 %v7259
      %7270 = vmatprep.subr.bf16.mxu0 0
      %7271 = vmatpush1.bf16.msra.mxu0 %v7258
      %7272 = vmatprep.subr.bf16.mxu0 0
      %7273 = vmatpush1.bf16.msra.mxu0 %v7257
      %7274 = vmatprep.subr.bf16.mxu0 0
      %7275 = vmatpush1.bf16.msra.mxu0 %v7256
      %7276 = vmatprep.subr.bf16.mxu0 0
      %7277 = vmatpush1.bf16.msra.mxu0 %v7255
      %7278 = vmatprep.subr.bf16.mxu0 0
      %7279 = vmatpush1.bf16.msra.mxu0 %v7254
      %7280 = vmatprep.subr.bf16.mxu0 0
      %7281 = vmatpush1.bf16.msra.mxu0 %v7253
      %7282 = vmatprep.subr.bf16.mxu0 0
      %7283 = vmatpush1.bf16.msra.mxu0 %v7252
      %7284 = vmatprep.subr.bf16.mxu0 0
      %7285 = vmatpush2.bf16.msra.mxu0 0
      %7286 = vmatprep.subr.bf16.mxu0 0
      %7287 = vmatpush2.bf16.msra.mxu0 0
      %7288 = vmatprep.subr.bf16.mxu0 0
      %7289 = vmatpush2.bf16.msra.mxu0 0
      %7290 = vmatprep.subr.bf16.mxu0 0
      %7291 = vmatpush2.bf16.msra.mxu0 0
      %7292 = vmatprep.subr.bf16.mxu0 0
      %7293 = vmatpush2.bf16.msra.mxu0 0
      %7294 = vmatprep.subr.bf16.mxu0 0
      %7295 = vmatpush2.bf16.msra.mxu0 0
      %7296 = vmatprep.subr.bf16.mxu0 0
      %7297 = vmatpush2.bf16.msra.mxu0 0
      %7298 = vmatprep.subr.bf16.mxu0 0
      %7299 = vmatpush2.bf16.msra.mxu0 0
      %7300 = vmatprep.mubr.bf16.mxu0 0
      %7301 = vmatmul.mubr.bf16.gmra.mxu0 %v7187
      %v7302 = vpop.f32.mrf.mxu0
      %v7303 = vadd.f32 0.0, %v7302
      %v7304 = vpop.f32.mrf.mxu0
      %v7305 = vpop.f32.mrf.mxu0
      %v7306 = vadd.f32 0.0, %v7305
      %v7307 = vpop.f32.mrf.mxu0
      %7308 = vmatprep.mubr.bf16.mxu0 0
      %7309 = vmatmul.mubr.bf16.gmra.mxu0 %v7188
      %v7310 = vpop.f32.mrf.mxu0
      %v7311 = vadd.f32 0.0, %v7310
      %v7312 = vpop.f32.mrf.mxu0
      %v7313 = vpop.f32.mrf.mxu0
      %v7314 = vadd.f32 0.0, %v7313
      %v7315 = vpop.f32.mrf.mxu0
      %7316 = vmatprep.mubr.bf16.mxu0 0
      %7317 = vmatmul.mubr.bf16.gmra.mxu0 %v7189
      %v7318 = vpop.f32.mrf.mxu0
      %v7319 = vadd.f32 0.0, %v7318
      %v7320 = vpop.f32.mrf.mxu0
      %v7321 = vpop.f32.mrf.mxu0
      %v7322 = vadd.f32 0.0, %v7321
      %v7323 = vpop.f32.mrf.mxu0
      %7324 = vmatprep.mubr.bf16.mxu0 0
      %7325 = vmatmul.mubr.bf16.gmra.mxu0 %v7190
      %v7326 = vpop.f32.mrf.mxu0
      %v7327 = vadd.f32 0.0, %v7326
      %v7328 = vpop.f32.mrf.mxu0
      %v7329 = vpop.f32.mrf.mxu0
      %v7330 = vadd.f32 0.0, %v7329
      %v7331 = vpop.f32.mrf.mxu0
      %7332 = vmatprep.mubr.bf16.mxu0 0
      %7333 = vmatmul.mubr.bf16.gmra.mxu0 %v7191
      %v7334 = vpop.f32.mrf.mxu0
      %v7335 = vadd.f32 0.0, %v7334
      %v7336 = vpop.f32.mrf.mxu0
      %v7337 = vpop.f32.mrf.mxu0
      %v7338 = vadd.f32 0.0, %v7337
      %v7339 = vpop.f32.mrf.mxu0
      %7340 = vmatprep.mubr.bf16.mxu0 0
      %7341 = vmatmul.mubr.bf16.gmra.mxu0 %v7192
      %v7342 = vpop.f32.mrf.mxu0
      %v7343 = vadd.f32 0.0, %v7342
      %v7344 = vpop.f32.mrf.mxu0
      %v7345 = vpop.f32.mrf.mxu0
      %v7346 = vadd.f32 0.0, %v7345
      %v7347 = vpop.f32.mrf.mxu0
      %7348 = vmatprep.mubr.bf16.mxu0 0
      %7349 = vmatmul.mubr.bf16.gmra.mxu0 %v7193
      %v7350 = vpop.f32.mrf.mxu0
      %v7351 = vadd.f32 0.0, %v7350
      %v7352 = vpop.f32.mrf.mxu0
      %v7353 = vpop.f32.mrf.mxu0
      %v7354 = vadd.f32 0.0, %v7353
      %v7355 = vpop.f32.mrf.mxu0
      %7356 = vmatprep.mubr.bf16.mxu0 0
      %7357 = vmatmul.mubr.bf16.gmra.mxu0 %v7194
      %v7358 = vpop.f32.mrf.mxu0
      %v7359 = vadd.f32 0.0, %v7358
      %v7360 = vpop.f32.mrf.mxu0
      %v7361 = vpop.f32.mrf.mxu0
      %v7362 = vadd.f32 0.0, %v7361
      %v7363 = vpop.f32.mrf.mxu0
      %7364 = vmatprep.mubr.bf16.mxu0 0
      %7365 = vmatmul.mubr.bf16.gmra.mxu0 %v7195
      %v7366 = vpop.f32.mrf.mxu0
      %v7367 = vadd.f32 0.0, %v7366
      %v7368 = vpop.f32.mrf.mxu0
      %v7369 = vpop.f32.mrf.mxu0
      %v7370 = vadd.f32 0.0, %v7369
      %v7371 = vpop.f32.mrf.mxu0
      %7372 = vmatprep.mubr.bf16.mxu0 0
      %7373 = vmatmul.mubr.bf16.gmra.mxu0 %v7196
      %v7374 = vpop.f32.mrf.mxu0
      %v7375 = vadd.f32 0.0, %v7374
      %v7376 = vpop.f32.mrf.mxu0
      %v7377 = vpop.f32.mrf.mxu0
      %v7378 = vadd.f32 0.0, %v7377
      %v7379 = vpop.f32.mrf.mxu0
      %7380 = vmatprep.mubr.bf16.mxu0 0
      %7381 = vmatmul.mubr.bf16.gmra.mxu0 %v7197
      %v7382 = vpop.f32.mrf.mxu0
      %v7383 = vadd.f32 0.0, %v7382
      %v7384 = vpop.f32.mrf.mxu0
      %v7385 = vpop.f32.mrf.mxu0
      %v7386 = vadd.f32 0.0, %v7385
      %v7387 = vpop.f32.mrf.mxu0
      %7388 = vmatprep.mubr.bf16.mxu0 0
      %7389 = vmatmul.mubr.bf16.gmra.mxu0 %v7198
      %v7390 = vpop.f32.mrf.mxu0
      %v7391 = vadd.f32 0.0, %v7390
      %v7392 = vpop.f32.mrf.mxu0
      %v7393 = vpop.f32.mrf.mxu0
      %v7394 = vadd.f32 0.0, %v7393
      %v7395 = vpop.f32.mrf.mxu0
      %7396 = vmatprep.mubr.bf16.mxu0 0
      %7397 = vmatmul.mubr.bf16.gmra.mxu0 %v7199
      %v7398 = vpop.f32.mrf.mxu0
      %v7399 = vadd.f32 0.0, %v7398
      %v7400 = vpop.f32.mrf.mxu0
      %v7401 = vpop.f32.mrf.mxu0
      %v7402 = vadd.f32 0.0, %v7401
      %v7403 = vpop.f32.mrf.mxu0
      %7404 = vmatprep.mubr.bf16.mxu0 0
      %7405 = vmatmul.mubr.bf16.gmra.mxu0 %v7200
      %v7406 = vpop.f32.mrf.mxu0
      %v7407 = vadd.f32 0.0, %v7406
      %v7408 = vpop.f32.mrf.mxu0
      %v7409 = vpop.f32.mrf.mxu0
      %v7410 = vadd.f32 0.0, %v7409
      %v7411 = vpop.f32.mrf.mxu0
      %7412 = vmatprep.mubr.bf16.mxu0 0
      %7413 = vmatmul.mubr.bf16.gmra.mxu0 %v7201
      %v7414 = vpop.f32.mrf.mxu0
      %v7415 = vadd.f32 0.0, %v7414
      %v7416 = vpop.f32.mrf.mxu0
      %v7417 = vpop.f32.mrf.mxu0
      %v7418 = vadd.f32 0.0, %v7417
      %v7419 = vpop.f32.mrf.mxu0
      %7420 = vmatprep.mubr.bf16.mxu0 0
      %7421 = vmatmul.mubr.bf16.gmra.mxu0 %v7202
      %v7422 = vpop.f32.mrf.mxu0
      %v7423 = vadd.f32 0.0, %v7422
      %v7424 = vpop.f32.mrf.mxu0
      %v7425 = vpop.f32.mrf.mxu0
      %v7426 = vadd.f32 0.0, %v7425
      %v7427 = vpop.f32.mrf.mxu0
      %7428 = vdwg.mxu0
      %v7429 = vadd.f32 %v7123, %v7303
      %v7430 = vadd.f32 %v7124, %v7306
      %v7431 = vadd.f32 %v7125, %v7311
      %v7432 = vadd.f32 %v7126, %v7314
      %v7433 = vadd.f32 %v7127, %v7319
      %v7434 = vadd.f32 %v7128, %v7322
      %v7435 = vadd.f32 %v7129, %v7327
      %v7436 = vadd.f32 %v7130, %v7330
      %v7437 = vadd.f32 %v7131, %v7335
      %v7438 = vadd.f32 %v7132, %v7338
      %v7439 = vadd.f32 %v7133, %v7343
      %v7440 = vadd.f32 %v7134, %v7346
      %v7441 = vadd.f32 %v7135, %v7351
      %v7442 = vadd.f32 %v7136, %v7354
      %v7443 = vadd.f32 %v7137, %v7359
      %v7444 = vadd.f32 %v7138, %v7362
      %v7445 = vadd.f32 %v7139, %v7367
      %v7446 = vadd.f32 %v7140, %v7370
      %v7447 = vadd.f32 %v7141, %v7375
      %v7448 = vadd.f32 %v7142, %v7378
      %v7449 = vadd.f32 %v7143, %v7383
      %v7450 = vadd.f32 %v7144, %v7386
      %v7451 = vadd.f32 %v7145, %v7391
      %v7452 = vadd.f32 %v7146, %v7394
      %v7453 = vadd.f32 %v7147, %v7399
      %v7454 = vadd.f32 %v7148, %v7402
      %v7455 = vadd.f32 %v7149, %v7407
      %v7456 = vadd.f32 %v7150, %v7410
      %v7457 = vadd.f32 %v7151, %v7415
      %v7458 = vadd.f32 %v7152, %v7418
      %v7459 = vadd.f32 %v7153, %v7423
      %v7460 = vadd.f32 %v7154, %v7426
      %v7461 = vld [vmem:[%s6848 + $0x2] sm:$0xff]
      %v7462 = vld [vmem:[%s6848 + $0xa] sm:$0xff]
      %v7463 = vld [vmem:[%s6848 + $0x1a] sm:$0xff]
      %v7464 = vld [vmem:[%s6848 + $0x22] sm:$0xff]
      %v7465 = vld [vmem:[%s6848 + $0x32] sm:$0xff]
      %v7466 = vld [vmem:[%s6848 + $0x3a] sm:$0xff]
      %v7467 = vld [vmem:[%s6848 + $0x4a] sm:$0xff]
      %v7468 = vld [vmem:[%s6848 + $0x52] sm:$0xff]
      %v7469 = vld [vmem:[%s6848 + $0x62] sm:$0xff]
      %v7470 = vld [vmem:[%s6848 + $0x6a] sm:$0xff]
      %v7471 = vld [vmem:[%s6848 + $0x7a] sm:$0xff]
      %v7472 = vld [vmem:[%s6848 + $0x82] sm:$0xff]
      %v7473 = vld [vmem:[%s6848 + $0x92] sm:$0xff]
      %v7474 = vld [vmem:[%s6848 + $0x9a] sm:$0xff]
      %v7475 = vld [vmem:[%s6848 + $0xaa] sm:$0xff]
      %v7476 = vld [vmem:[%s6848 + $0xb2] sm:$0xff]
      %v7477 = vld [vmem:[%s6848 + $0xc2] sm:$0xff]
      %v7478 = vld [vmem:[%s6848 + $0xca] sm:$0xff]
      %v7479 = vld [vmem:[%s6848 + $0xda] sm:$0xff]
      %v7480 = vld [vmem:[%s6848 + $0xe2] sm:$0xff]
      %v7481 = vld [vmem:[%s6848 + $0xf2] sm:$0xff]
      %v7482 = vld [vmem:[%s6848 + $0xfa] sm:$0xff]
      %v7483 = vld [vmem:[%s6848 + $0x10a] sm:$0xff]
      %v7484 = vld [vmem:[%s6848 + $0x112] sm:$0xff]
      %v7485 = vld [vmem:[%s6848 + $0x122] sm:$0xff]
      %v7486 = vld [vmem:[%s6848 + $0x12a] sm:$0xff]
      %v7487 = vld [vmem:[%s6848 + $0x13a] sm:$0xff]
      %v7488 = vld [vmem:[%s6848 + $0x142] sm:$0xff]
      %v7489 = vld [vmem:[%s6848 + $0x152] sm:$0xff]
      %v7490 = vld [vmem:[%s6848 + $0x15a] sm:$0xff]
      %v7491 = vld [vmem:[%s6848 + $0x16a] sm:$0xff]
      %v7492 = vld [vmem:[%s6848 + $0x172] sm:$0xff]
      %v7493 = vpack.c.bf16 %v7462, %v7461
      %v7494 = vpack.c.bf16 %v7464, %v7463
      %v7495 = vpack.c.bf16 %v7466, %v7465
      %v7496 = vpack.c.bf16 %v7468, %v7467
      %v7497 = vpack.c.bf16 %v7470, %v7469
      %v7498 = vpack.c.bf16 %v7472, %v7471
      %v7499 = vpack.c.bf16 %v7474, %v7473
      %v7500 = vpack.c.bf16 %v7476, %v7475
      %v7501 = vpack.c.bf16 %v7478, %v7477
      %v7502 = vpack.c.bf16 %v7480, %v7479
      %v7503 = vpack.c.bf16 %v7482, %v7481
      %v7504 = vpack.c.bf16 %v7484, %v7483
      %v7505 = vpack.c.bf16 %v7486, %v7485
      %v7506 = vpack.c.bf16 %v7488, %v7487
      %v7507 = vpack.c.bf16 %v7490, %v7489
      %v7508 = vpack.c.bf16 %v7492, %v7491
      %s7509 = scalar_lea.vmem %s5, 512
      %v7510 = vld [vmem:[%s7509] sm:$0xf]
      %v7511 = vld [vmem:[%s7509 + $0x4] sm:$0xf]
      %v7512 = vld [vmem:[%s7509 + $0x8] sm:$0xf]
      %v7513 = vld [vmem:[%s7509 + $0xc] sm:$0xf]
      %v7514 = vld [vmem:[%s7509 + $0x10] sm:$0xf]
      %v7515 = vld [vmem:[%s7509 + $0x14] sm:$0xf]
      %v7516 = vld [vmem:[%s7509 + $0x18] sm:$0xf]
      %v7517 = vld [vmem:[%s7509 + $0x1c] sm:$0xf]
      %v7518 = vld [vmem:[%s7509 + $0x20] sm:$0xf]
      %v7519 = vld [vmem:[%s7509 + $0x24] sm:$0xf]
      %v7520 = vld [vmem:[%s7509 + $0x28] sm:$0xf]
      %v7521 = vld [vmem:[%s7509 + $0x2c] sm:$0xf]
      %v7522 = vld [vmem:[%s7509 + $0x30] sm:$0xf]
      %v7523 = vld [vmem:[%s7509 + $0x34] sm:$0xf]
      %v7524 = vld [vmem:[%s7509 + $0x38] sm:$0xf]
      %v7525 = vld [vmem:[%s7509 + $0x3c] sm:$0xf]
      %v7542 = vunpack.c.l.b16 %v7510
      %v7543 = vunpack.c.l.b16 %v7511
      %v7544 = vunpack.c.l.b16 %v7512
      %v7545 = vunpack.c.l.b16 %v7513
      %v7546 = vunpack.c.l.b16 %v7514
      %v7547 = vunpack.c.l.b16 %v7515
      %v7548 = vunpack.c.l.b16 %v7516
      %v7549 = vunpack.c.l.b16 %v7517
      %v7550 = vunpack.c.l.b16 %v7518
      %v7551 = vunpack.c.l.b16 %v7519
      %v7552 = vunpack.c.l.b16 %v7520
      %v7553 = vunpack.c.l.b16 %v7521
      %v7554 = vunpack.c.l.b16 %v7522
      %v7555 = vunpack.c.l.b16 %v7523
      %v7556 = vunpack.c.l.b16 %v7524
      %v7557 = vunpack.c.l.b16 %v7525
      %v7558 = vpack.c.b16 %v7543, %v7542
      %v7559 = vpack.c.b16 %v7545, %v7544
      %v7560 = vpack.c.b16 %v7547, %v7546
      %v7561 = vpack.c.b16 %v7549, %v7548
      %v7562 = vpack.c.b16 %v7551, %v7550
      %v7563 = vpack.c.b16 %v7553, %v7552
      %v7564 = vpack.c.b16 %v7555, %v7554
      %v7565 = vpack.c.b16 %v7557, %v7556
      %7574 = vmatprep.subr.bf16.mxu0 0
      %7575 = vmatpush1.bf16.msra.mxu0 %v7565
      %7576 = vmatprep.subr.bf16.mxu0 0
      %7577 = vmatpush1.bf16.msra.mxu0 %v7564
      %7578 = vmatprep.subr.bf16.mxu0 0
      %7579 = vmatpush1.bf16.msra.mxu0 %v7563
      %7580 = vmatprep.subr.bf16.mxu0 0
      %7581 = vmatpush1.bf16.msra.mxu0 %v7562
      %7582 = vmatprep.subr.bf16.mxu0 0
      %7583 = vmatpush1.bf16.msra.mxu0 %v7561
      %7584 = vmatprep.subr.bf16.mxu0 0
      %7585 = vmatpush1.bf16.msra.mxu0 %v7560
      %7586 = vmatprep.subr.bf16.mxu0 0
      %7587 = vmatpush1.bf16.msra.mxu0 %v7559
      %7588 = vmatprep.subr.bf16.mxu0 0
      %7589 = vmatpush1.bf16.msra.mxu0 %v7558
      %7590 = vmatprep.subr.bf16.mxu0 0
      %7591 = vmatpush2.bf16.msra.mxu0 0
      %7592 = vmatprep.subr.bf16.mxu0 0
      %7593 = vmatpush2.bf16.msra.mxu0 0
      %7594 = vmatprep.subr.bf16.mxu0 0
      %7595 = vmatpush2.bf16.msra.mxu0 0
      %7596 = vmatprep.subr.bf16.mxu0 0
      %7597 = vmatpush2.bf16.msra.mxu0 0
      %7598 = vmatprep.subr.bf16.mxu0 0
      %7599 = vmatpush2.bf16.msra.mxu0 0
      %7600 = vmatprep.subr.bf16.mxu0 0
      %7601 = vmatpush2.bf16.msra.mxu0 0
      %7602 = vmatprep.subr.bf16.mxu0 0
      %7603 = vmatpush2.bf16.msra.mxu0 0
      %7604 = vmatprep.subr.bf16.mxu0 0
      %7605 = vmatpush2.bf16.msra.mxu0 0
      %7606 = vmatprep.mubr.bf16.mxu0 0
      %7607 = vmatmul.mubr.bf16.gmra.mxu0 %v7493
      %v7608 = vpop.f32.mrf.mxu0
      %v7609 = vadd.f32 0.0, %v7608
      %v7610 = vpop.f32.mrf.mxu0
      %v7611 = vpop.f32.mrf.mxu0
      %v7612 = vadd.f32 0.0, %v7611
      %v7613 = vpop.f32.mrf.mxu0
      %7614 = vmatprep.mubr.bf16.mxu0 0
      %7615 = vmatmul.mubr.bf16.gmra.mxu0 %v7494
      %v7616 = vpop.f32.mrf.mxu0
      %v7617 = vadd.f32 0.0, %v7616
      %v7618 = vpop.f32.mrf.mxu0
      %v7619 = vpop.f32.mrf.mxu0
      %v7620 = vadd.f32 0.0, %v7619
      %v7621 = vpop.f32.mrf.mxu0
      %7622 = vmatprep.mubr.bf16.mxu0 0
      %7623 = vmatmul.mubr.bf16.gmra.mxu0 %v7495
      %v7624 = vpop.f32.mrf.mxu0
      %v7625 = vadd.f32 0.0, %v7624
      %v7626 = vpop.f32.mrf.mxu0
      %v7627 = vpop.f32.mrf.mxu0
      %v7628 = vadd.f32 0.0, %v7627
      %v7629 = vpop.f32.mrf.mxu0
      %7630 = vmatprep.mubr.bf16.mxu0 0
      %7631 = vmatmul.mubr.bf16.gmra.mxu0 %v7496
      %v7632 = vpop.f32.mrf.mxu0
      %v7633 = vadd.f32 0.0, %v7632
      %v7634 = vpop.f32.mrf.mxu0
      %v7635 = vpop.f32.mrf.mxu0
      %v7636 = vadd.f32 0.0, %v7635
      %v7637 = vpop.f32.mrf.mxu0
      %7638 = vmatprep.mubr.bf16.mxu0 0
      %7639 = vmatmul.mubr.bf16.gmra.mxu0 %v7497
      %v7640 = vpop.f32.mrf.mxu0
      %v7641 = vadd.f32 0.0, %v7640
      %v7642 = vpop.f32.mrf.mxu0
      %v7643 = vpop.f32.mrf.mxu0
      %v7644 = vadd.f32 0.0, %v7643
      %v7645 = vpop.f32.mrf.mxu0
      %7646 = vmatprep.mubr.bf16.mxu0 0
      %7647 = vmatmul.mubr.bf16.gmra.mxu0 %v7498
      %v7648 = vpop.f32.mrf.mxu0
      %v7649 = vadd.f32 0.0, %v7648
      %v7650 = vpop.f32.mrf.mxu0
      %v7651 = vpop.f32.mrf.mxu0
      %v7652 = vadd.f32 0.0, %v7651
      %v7653 = vpop.f32.mrf.mxu0
      %7654 = vmatprep.mubr.bf16.mxu0 0
      %7655 = vmatmul.mubr.bf16.gmra.mxu0 %v7499
      %v7656 = vpop.f32.mrf.mxu0
      %v7657 = vadd.f32 0.0, %v7656
      %v7658 = vpop.f32.mrf.mxu0
      %v7659 = vpop.f32.mrf.mxu0
      %v7660 = vadd.f32 0.0, %v7659
      %v7661 = vpop.f32.mrf.mxu0
      %7662 = vmatprep.mubr.bf16.mxu0 0
      %7663 = vmatmul.mubr.bf16.gmra.mxu0 %v7500
      %v7664 = vpop.f32.mrf.mxu0
      %v7665 = vadd.f32 0.0, %v7664
      %v7666 = vpop.f32.mrf.mxu0
      %v7667 = vpop.f32.mrf.mxu0
      %v7668 = vadd.f32 0.0, %v7667
      %v7669 = vpop.f32.mrf.mxu0
      %7670 = vmatprep.mubr.bf16.mxu0 0
      %7671 = vmatmul.mubr.bf16.gmra.mxu0 %v7501
      %v7672 = vpop.f32.mrf.mxu0
      %v7673 = vadd.f32 0.0, %v7672
      %v7674 = vpop.f32.mrf.mxu0
      %v7675 = vpop.f32.mrf.mxu0
      %v7676 = vadd.f32 0.0, %v7675
      %v7677 = vpop.f32.mrf.mxu0
      %7678 = vmatprep.mubr.bf16.mxu0 0
      %7679 = vmatmul.mubr.bf16.gmra.mxu0 %v7502
      %v7680 = vpop.f32.mrf.mxu0
      %v7681 = vadd.f32 0.0, %v7680
      %v7682 = vpop.f32.mrf.mxu0
      %v7683 = vpop.f32.mrf.mxu0
      %v7684 = vadd.f32 0.0, %v7683
      %v7685 = vpop.f32.mrf.mxu0
      %7686 = vmatprep.mubr.bf16.mxu0 0
      %7687 = vmatmul.mubr.bf16.gmra.mxu0 %v7503
      %v7688 = vpop.f32.mrf.mxu0
      %v7689 = vadd.f32 0.0, %v7688
      %v7690 = vpop.f32.mrf.mxu0
      %v7691 = vpop.f32.mrf.mxu0
      %v7692 = vadd.f32 0.0, %v7691
      %v7693 = vpop.f32.mrf.mxu0
      %7694 = vmatprep.mubr.bf16.mxu0 0
      %7695 = vmatmul.mubr.bf16.gmra.mxu0 %v7504
      %v7696 = vpop.f32.mrf.mxu0
      %v7697 = vadd.f32 0.0, %v7696
      %v7698 = vpop.f32.mrf.mxu0
      %v7699 = vpop.f32.mrf.mxu0
      %v7700 = vadd.f32 0.0, %v7699
      %v7701 = vpop.f32.mrf.mxu0
      %7702 = vmatprep.mubr.bf16.mxu0 0
      %7703 = vmatmul.mubr.bf16.gmra.mxu0 %v7505
      %v7704 = vpop.f32.mrf.mxu0
      %v7705 = vadd.f32 0.0, %v7704
      %v7706 = vpop.f32.mrf.mxu0
      %v7707 = vpop.f32.mrf.mxu0
      %v7708 = vadd.f32 0.0, %v7707
      %v7709 = vpop.f32.mrf.mxu0
      %7710 = vmatprep.mubr.bf16.mxu0 0
      %7711 = vmatmul.mubr.bf16.gmra.mxu0 %v7506
      %v7712 = vpop.f32.mrf.mxu0
      %v7713 = vadd.f32 0.0, %v7712
      %v7714 = vpop.f32.mrf.mxu0
      %v7715 = vpop.f32.mrf.mxu0
      %v7716 = vadd.f32 0.0, %v7715
      %v7717 = vpop.f32.mrf.mxu0
      %7718 = vmatprep.mubr.bf16.mxu0 0
      %7719 = vmatmul.mubr.bf16.gmra.mxu0 %v7507
      %v7720 = vpop.f32.mrf.mxu0
      %v7721 = vadd.f32 0.0, %v7720
      %v7722 = vpop.f32.mrf.mxu0
      %v7723 = vpop.f32.mrf.mxu0
      %v7724 = vadd.f32 0.0, %v7723
      %v7725 = vpop.f32.mrf.mxu0
      %7726 = vmatprep.mubr.bf16.mxu0 0
      %7727 = vmatmul.mubr.bf16.gmra.mxu0 %v7508
      %v7728 = vpop.f32.mrf.mxu0
      %v7729 = vadd.f32 0.0, %v7728
      %v7730 = vpop.f32.mrf.mxu0
      %v7731 = vpop.f32.mrf.mxu0
      %v7732 = vadd.f32 0.0, %v7731
      %v7733 = vpop.f32.mrf.mxu0
      %7734 = vdwg.mxu0
      %v7735 = vadd.f32 %v7429, %v7609
      %v7736 = vadd.f32 %v7430, %v7612
      %v7737 = vadd.f32 %v7431, %v7617
      %v7738 = vadd.f32 %v7432, %v7620
      %v7739 = vadd.f32 %v7433, %v7625
      %v7740 = vadd.f32 %v7434, %v7628
      %v7741 = vadd.f32 %v7435, %v7633
      %v7742 = vadd.f32 %v7436, %v7636
      %v7743 = vadd.f32 %v7437, %v7641
      %v7744 = vadd.f32 %v7438, %v7644
      %v7745 = vadd.f32 %v7439, %v7649
      %v7746 = vadd.f32 %v7440, %v7652
      %v7747 = vadd.f32 %v7441, %v7657
      %v7748 = vadd.f32 %v7442, %v7660
      %v7749 = vadd.f32 %v7443, %v7665
      %v7750 = vadd.f32 %v7444, %v7668
      %v7751 = vadd.f32 %v7445, %v7673
      %v7752 = vadd.f32 %v7446, %v7676
      %v7753 = vadd.f32 %v7447, %v7681
      %v7754 = vadd.f32 %v7448, %v7684
      %v7755 = vadd.f32 %v7449, %v7689
      %v7756 = vadd.f32 %v7450, %v7692
      %v7757 = vadd.f32 %v7451, %v7697
      %v7758 = vadd.f32 %v7452, %v7700
      %v7759 = vadd.f32 %v7453, %v7705
      %v7760 = vadd.f32 %v7454, %v7708
      %v7761 = vadd.f32 %v7455, %v7713
      %v7762 = vadd.f32 %v7456, %v7716
      %v7763 = vadd.f32 %v7457, %v7721
      %v7764 = vadd.f32 %v7458, %v7724
      %v7765 = vadd.f32 %v7459, %v7729
      %v7766 = vadd.f32 %v7460, %v7732
      %v7767 = vld [vmem:[%s2250 + $0x1] sm:$0xff]
      %v7768 = vld [vmem:[%s2250 + $0x9] sm:$0xff]
      %v7769 = vld [vmem:[%s2250 + $0x19] sm:$0xff]
      %v7770 = vld [vmem:[%s2250 + $0x21] sm:$0xff]
      %v7771 = vld [vmem:[%s2250 + $0x31] sm:$0xff]
      %v7772 = vld [vmem:[%s2250 + $0x39] sm:$0xff]
      %v7773 = vld [vmem:[%s2250 + $0x49] sm:$0xff]
      %v7774 = vld [vmem:[%s2250 + $0x51] sm:$0xff]
      %v7775 = vld [vmem:[%s2250 + $0x61] sm:$0xff]
      %v7776 = vld [vmem:[%s2250 + $0x69] sm:$0xff]
      %v7777 = vld [vmem:[%s2250 + $0x79] sm:$0xff]
      %v7778 = vld [vmem:[%s2250 + $0x81] sm:$0xff]
      %v7779 = vld [vmem:[%s2250 + $0x91] sm:$0xff]
      %v7780 = vld [vmem:[%s2250 + $0x99] sm:$0xff]
      %v7781 = vld [vmem:[%s2250 + $0xa9] sm:$0xff]
      %v7782 = vld [vmem:[%s2250 + $0xb1] sm:$0xff]
      %v7783 = vld [vmem:[%s2250 + $0xc1] sm:$0xff]
      %v7784 = vld [vmem:[%s2250 + $0xc9] sm:$0xff]
      %v7785 = vld [vmem:[%s2250 + $0xd9] sm:$0xff]
      %v7786 = vld [vmem:[%s2250 + $0xe1] sm:$0xff]
      %v7787 = vld [vmem:[%s2250 + $0xf1] sm:$0xff]
      %v7788 = vld [vmem:[%s2250 + $0xf9] sm:$0xff]
      %v7789 = vld [vmem:[%s2250 + $0x109] sm:$0xff]
      %v7790 = vld [vmem:[%s2250 + $0x111] sm:$0xff]
      %v7791 = vld [vmem:[%s2250 + $0x121] sm:$0xff]
      %v7792 = vld [vmem:[%s2250 + $0x129] sm:$0xff]
      %v7793 = vld [vmem:[%s2250 + $0x139] sm:$0xff]
      %v7794 = vld [vmem:[%s2250 + $0x141] sm:$0xff]
      %v7795 = vld [vmem:[%s2250 + $0x151] sm:$0xff]
      %v7796 = vld [vmem:[%s2250 + $0x159] sm:$0xff]
      %v7797 = vld [vmem:[%s2250 + $0x169] sm:$0xff]
      %v7798 = vld [vmem:[%s2250 + $0x171] sm:$0xff]
      %v7799 = vld [vmem:[%s6] sm:$0x1]
      %v7801 = vlaneseq
      %v7802 = vshrl.u32 %v7801, 7
      %v7803 = vsub.s32 0, %v7802
      %v7804 = vrot.slane %v7799, %v7803
      %v7806 = vadd.f32 %v7735, %v7804
      %v7807 = vadd.f32 %v7736, %v7804
      %v7808 = vadd.f32 %v7737, %v7804
      %v7809 = vadd.f32 %v7738, %v7804
      %v7810 = vadd.f32 %v7739, %v7804
      %v7811 = vadd.f32 %v7740, %v7804
      %v7812 = vadd.f32 %v7741, %v7804
      %v7813 = vadd.f32 %v7742, %v7804
      %v7814 = vadd.f32 %v7743, %v7804
      %v7815 = vadd.f32 %v7744, %v7804
      %v7816 = vadd.f32 %v7745, %v7804
      %v7817 = vadd.f32 %v7746, %v7804
      %v7818 = vadd.f32 %v7747, %v7804
      %v7819 = vadd.f32 %v7748, %v7804
      %v7820 = vadd.f32 %v7749, %v7804
      %v7821 = vadd.f32 %v7750, %v7804
      %v7822 = vadd.f32 %v7751, %v7804
      %v7823 = vadd.f32 %v7752, %v7804
      %v7824 = vadd.f32 %v7753, %v7804
      %v7825 = vadd.f32 %v7754, %v7804
      %v7826 = vadd.f32 %v7755, %v7804
      %v7827 = vadd.f32 %v7756, %v7804
      %v7828 = vadd.f32 %v7757, %v7804
      %v7829 = vadd.f32 %v7758, %v7804
      %v7830 = vadd.f32 %v7759, %v7804
      %v7831 = vadd.f32 %v7760, %v7804
      %v7832 = vadd.f32 %v7761, %v7804
      %v7833 = vadd.f32 %v7762, %v7804
      %v7834 = vadd.f32 %v7763, %v7804
      %v7835 = vadd.f32 %v7764, %v7804
      %v7836 = vadd.f32 %v7765, %v7804
      %v7837 = vadd.f32 %v7766, %v7804
      %v7838 = vadd.f32 %v7806, %v7767
      %v7839 = vadd.f32 %v7807, %v7768
      %v7840 = vadd.f32 %v7808, %v7769
      %v7841 = vadd.f32 %v7809, %v7770
      %v7842 = vadd.f32 %v7810, %v7771
      %v7843 = vadd.f32 %v7811, %v7772
      %v7844 = vadd.f32 %v7812, %v7773
      %v7845 = vadd.f32 %v7813, %v7774
      %v7846 = vadd.f32 %v7814, %v7775
      %v7847 = vadd.f32 %v7815, %v7776
      %v7848 = vadd.f32 %v7816, %v7777
      %v7849 = vadd.f32 %v7817, %v7778
      %v7850 = vadd.f32 %v7818, %v7779
      %v7851 = vadd.f32 %v7819, %v7780
      %v7852 = vadd.f32 %v7820, %v7781
      %v7853 = vadd.f32 %v7821, %v7782
      %v7854 = vadd.f32 %v7822, %v7783
      %v7855 = vadd.f32 %v7823, %v7784
      %v7856 = vadd.f32 %v7824, %v7785
      %v7857 = vadd.f32 %v7825, %v7786
      %v7858 = vadd.f32 %v7826, %v7787
      %v7859 = vadd.f32 %v7827, %v7788
      %v7860 = vadd.f32 %v7828, %v7789
      %v7861 = vadd.f32 %v7829, %v7790
      %v7862 = vadd.f32 %v7830, %v7791
      %v7863 = vadd.f32 %v7831, %v7792
      %v7864 = vadd.f32 %v7832, %v7793
      %v7865 = vadd.f32 %v7833, %v7794
      %v7866 = vadd.f32 %v7834, %v7795
      %v7867 = vadd.f32 %v7835, %v7796
      %v7868 = vadd.f32 %v7836, %v7797
      %v7869 = vadd.f32 %v7837, %v7798
      %v7870 = vmax.f32 %v7838, 0.0
      %v7871 = vmax.f32 %v7839, 0.0
      %v7872 = vmax.f32 %v7840, 0.0
      %v7873 = vmax.f32 %v7841, 0.0
      %v7874 = vmax.f32 %v7842, 0.0
      %v7875 = vmax.f32 %v7843, 0.0
      %v7876 = vmax.f32 %v7844, 0.0
      %v7877 = vmax.f32 %v7845, 0.0
      %v7878 = vmax.f32 %v7846, 0.0
      %v7879 = vmax.f32 %v7847, 0.0
      %v7880 = vmax.f32 %v7848, 0.0
      %v7881 = vmax.f32 %v7849, 0.0
      %v7882 = vmax.f32 %v7850, 0.0
      %v7883 = vmax.f32 %v7851, 0.0
      %v7884 = vmax.f32 %v7852, 0.0
      %v7885 = vmax.f32 %v7853, 0.0
      %v7886 = vmax.f32 %v7854, 0.0
      %v7887 = vmax.f32 %v7855, 0.0
      %v7888 = vmax.f32 %v7856, 0.0
      %v7889 = vmax.f32 %v7857, 0.0
      %v7890 = vmax.f32 %v7858, 0.0
      %v7891 = vmax.f32 %v7859, 0.0
      %v7892 = vmax.f32 %v7860, 0.0
      %v7893 = vmax.f32 %v7861, 0.0
      %v7894 = vmax.f32 %v7862, 0.0
      %v7895 = vmax.f32 %v7863, 0.0
      %v7896 = vmax.f32 %v7864, 0.0
      %v7897 = vmax.f32 %v7865, 0.0
      %v7898 = vmax.f32 %v7866, 0.0
      %v7899 = vmax.f32 %v7867, 0.0
      %v7900 = vmax.f32 %v7868, 0.0
      %v7901 = vmax.f32 %v7869, 0.0
      %7902 = vst [vmem:[%s2250 + $0x1] sm:$0xff] %v7870
      %7903 = vst [vmem:[%s2250 + $0x9] sm:$0xff] %v7871
      %7904 = vst [vmem:[%s2250 + $0x19] sm:$0xff] %v7872
      %7905 = vst [vmem:[%s2250 + $0x21] sm:$0xff] %v7873
      %7906 = vst [vmem:[%s2250 + $0x31] sm:$0xff] %v7874
      %7907 = vst [vmem:[%s2250 + $0x39] sm:$0xff] %v7875
      %7908 = vst [vmem:[%s2250 + $0x49] sm:$0xff] %v7876
      %7909 = vst [vmem:[%s2250 + $0x51] sm:$0xff] %v7877
      %7910 = vst [vmem:[%s2250 + $0x61] sm:$0xff] %v7878
      %7911 = vst [vmem:[%s2250 + $0x69] sm:$0xff] %v7879
      %7912 = vst [vmem:[%s2250 + $0x79] sm:$0xff] %v7880
      %7913 = vst [vmem:[%s2250 + $0x81] sm:$0xff] %v7881
      %7914 = vst [vmem:[%s2250 + $0x91] sm:$0xff] %v7882
      %7915 = vst [vmem:[%s2250 + $0x99] sm:$0xff] %v7883
      %7916 = vst [vmem:[%s2250 + $0xa9] sm:$0xff] %v7884
      %7917 = vst [vmem:[%s2250 + $0xb1] sm:$0xff] %v7885
      %7918 = vst [vmem:[%s2250 + $0xc1] sm:$0xff] %v7886
      %7919 = vst [vmem:[%s2250 + $0xc9] sm:$0xff] %v7887
      %7920 = vst [vmem:[%s2250 + $0xd9] sm:$0xff] %v7888
      %7921 = vst [vmem:[%s2250 + $0xe1] sm:$0xff] %v7889
      %7922 = vst [vmem:[%s2250 + $0xf1] sm:$0xff] %v7890
      %7923 = vst [vmem:[%s2250 + $0xf9] sm:$0xff] %v7891
      %7924 = vst [vmem:[%s2250 + $0x109] sm:$0xff] %v7892
      %7925 = vst [vmem:[%s2250 + $0x111] sm:$0xff] %v7893
      %7926 = vst [vmem:[%s2250 + $0x121] sm:$0xff] %v7894
      %7927 = vst [vmem:[%s2250 + $0x129] sm:$0xff] %v7895
      %7928 = vst [vmem:[%s2250 + $0x139] sm:$0xff] %v7896
      %7929 = vst [vmem:[%s2250 + $0x141] sm:$0xff] %v7897
      %7930 = vst [vmem:[%s2250 + $0x151] sm:$0xff] %v7898
      %7931 = vst [vmem:[%s2250 + $0x159] sm:$0xff] %v7899
      %7932 = vst [vmem:[%s2250 + $0x169] sm:$0xff] %v7900
      %7933 = vst [vmem:[%s2250 + $0x171] sm:$0xff] %v7901
      %v7934 = vld [vmem:[#allocation3] ss:$2 sm:$0xff]
      %s7935 = scalar_lea.vmem [#allocation3], 48
      %v7936 = vld [vmem:[%s7935] ss:$2 sm:$0xff]
      %s7937 = scalar_lea.vmem [#allocation3], 96
      %v7938 = vld [vmem:[%s7937] ss:$2 sm:$0xff]
      %s7939 = scalar_lea.vmem [#allocation3], 144
      %v7940 = vld [vmem:[%s7939] ss:$2 sm:$0xff]
      %s7941 = scalar_lea.vmem [#allocation3], 192
      %v7942 = vld [vmem:[%s7941] ss:$2 sm:$0xff]
      %s7943 = scalar_lea.vmem [#allocation3], 240
      %v7944 = vld [vmem:[%s7943] ss:$2 sm:$0xff]
      %s7945 = scalar_lea.vmem [#allocation3], 288
      %v7946 = vld [vmem:[%s7945] ss:$2 sm:$0xff]
      %s7947 = scalar_lea.vmem [#allocation3], 336
      %v7948 = vld [vmem:[%s7947] ss:$2 sm:$0xff]
      %v7949 = vpack.c.bf16 %v7936, %v7934
      %v7950 = vpack.c.bf16 %v7940, %v7938
      %v7951 = vpack.c.bf16 %v7944, %v7942
      %v7952 = vpack.c.bf16 %v7948, %v7946
      %v7953 = vld [vmem:[%s7] sm:$0xf]
      %v7954 = vld [vmem:[%s7 + $0x4] sm:$0xf]
      %v7955 = vld [vmem:[%s7 + $0x8] sm:$0xf]
      %v7956 = vld [vmem:[%s7 + $0xc] sm:$0xf]
      %v7957 = vld [vmem:[%s7 + $0x10] sm:$0xf]
      %v7958 = vld [vmem:[%s7 + $0x14] sm:$0xf]
      %v7959 = vld [vmem:[%s7 + $0x18] sm:$0xf]
      %v7960 = vld [vmem:[%s7 + $0x1c] sm:$0xf]
      %v7961 = vld [vmem:[%s7 + $0x20] sm:$0xf]
      %v7962 = vld [vmem:[%s7 + $0x24] sm:$0xf]
      %v7963 = vld [vmem:[%s7 + $0x28] sm:$0xf]
      %v7964 = vld [vmem:[%s7 + $0x2c] sm:$0xf]
      %v7965 = vld [vmem:[%s7 + $0x30] sm:$0xf]
      %v7966 = vld [vmem:[%s7 + $0x34] sm:$0xf]
      %v7967 = vld [vmem:[%s7 + $0x38] sm:$0xf]
      %v7968 = vld [vmem:[%s7 + $0x3c] sm:$0xf]
      %s7969 = scalar_lea.vmem [#allocation3], 1
      %v7970 = vld [vmem:[%s7969] ss:$2 sm:$0xff]
      %s7971 = scalar_lea.vmem [#allocation3], 49
      %v7972 = vld [vmem:[%s7971] ss:$2 sm:$0xff]
      %s7973 = scalar_lea.vmem [#allocation3], 97
      %v7974 = vld [vmem:[%s7973] ss:$2 sm:$0xff]
      %s7975 = scalar_lea.vmem [#allocation3], 145
      %v7976 = vld [vmem:[%s7975] ss:$2 sm:$0xff]
      %s7977 = scalar_lea.vmem [#allocation3], 193
      %v7978 = vld [vmem:[%s7977] ss:$2 sm:$0xff]
      %s7979 = scalar_lea.vmem [#allocation3], 241
      %v7980 = vld [vmem:[%s7979] ss:$2 sm:$0xff]
      %s7981 = scalar_lea.vmem [#allocation3], 289
      %v7982 = vld [vmem:[%s7981] ss:$2 sm:$0xff]
      %s7983 = scalar_lea.vmem [#allocation3], 337
      %v7984 = vld [vmem:[%s7983] ss:$2 sm:$0xff]
      %v7985 = vpack.c.bf16 %v7972, %v7970
      %v7986 = vpack.c.bf16 %v7976, %v7974
      %v7987 = vpack.c.bf16 %v7980, %v7978
      %v7988 = vpack.c.bf16 %v7984, %v7982
      %s7989 = scalar_lea.vmem %s7, 64
      %v7990 = vld [vmem:[%s7989] sm:$0xf]
      %v7991 = vld [vmem:[%s7989 + $0x4] sm:$0xf]
      %v7992 = vld [vmem:[%s7989 + $0x8] sm:$0xf]
      %v7993 = vld [vmem:[%s7989 + $0xc] sm:$0xf]
      %v7994 = vld [vmem:[%s7989 + $0x10] sm:$0xf]
      %v7995 = vld [vmem:[%s7989 + $0x14] sm:$0xf]
      %v7996 = vld [vmem:[%s7989 + $0x18] sm:$0xf]
      %v7997 = vld [vmem:[%s7989 + $0x1c] sm:$0xf]
      %v7998 = vld [vmem:[%s7989 + $0x20] sm:$0xf]
      %v7999 = vld [vmem:[%s7989 + $0x24] sm:$0xf]
      %v8000 = vld [vmem:[%s7989 + $0x28] sm:$0xf]
      %v8001 = vld [vmem:[%s7989 + $0x2c] sm:$0xf]
      %v8002 = vld [vmem:[%s7989 + $0x30] sm:$0xf]
      %v8003 = vld [vmem:[%s7989 + $0x34] sm:$0xf]
      %v8004 = vld [vmem:[%s7989 + $0x38] sm:$0xf]
      %v8005 = vld [vmem:[%s7989 + $0x3c] sm:$0xf]
      %v8022 = vunpack.c.l.b16 %v7990
      %v8023 = vunpack.c.l.b16 %v7991
      %v8024 = vunpack.c.l.b16 %v7992
      %v8025 = vunpack.c.l.b16 %v7993
      %v8026 = vunpack.c.l.b16 %v7994
      %v8027 = vunpack.c.l.b16 %v7995
      %v8028 = vunpack.c.l.b16 %v7996
      %v8029 = vunpack.c.l.b16 %v7997
      %v8030 = vunpack.c.l.b16 %v7998
      %v8031 = vunpack.c.l.b16 %v7999
      %v8032 = vunpack.c.l.b16 %v8000
      %v8033 = vunpack.c.l.b16 %v8001
      %v8034 = vunpack.c.l.b16 %v8002
      %v8035 = vunpack.c.l.b16 %v8003
      %v8036 = vunpack.c.l.b16 %v8004
      %v8037 = vunpack.c.l.b16 %v8005
      %v8038 = vpack.c.b16 %v8023, %v8022
      %v8039 = vpack.c.b16 %v8025, %v8024
      %v8040 = vpack.c.b16 %v8027, %v8026
      %v8041 = vpack.c.b16 %v8029, %v8028
      %v8042 = vpack.c.b16 %v8031, %v8030
      %v8043 = vpack.c.b16 %v8033, %v8032
      %v8044 = vpack.c.b16 %v8035, %v8034
      %v8045 = vpack.c.b16 %v8037, %v8036
      %8054 = vmatprep.subr.bf16.mxu0 0
      %8055 = vmatpush1.bf16.msra.mxu0 %v8045
      %8056 = vmatprep.subr.bf16.mxu0 0
      %8057 = vmatpush1.bf16.msra.mxu0 %v8044
      %8058 = vmatprep.subr.bf16.mxu0 0
      %8059 = vmatpush1.bf16.msra.mxu0 %v8043
      %8060 = vmatprep.subr.bf16.mxu0 0
      %8061 = vmatpush1.bf16.msra.mxu0 %v8042
      %8062 = vmatprep.subr.bf16.mxu0 0
      %8063 = vmatpush1.bf16.msra.mxu0 %v8041
      %8064 = vmatprep.subr.bf16.mxu0 0
      %8065 = vmatpush1.bf16.msra.mxu0 %v8040
      %8066 = vmatprep.subr.bf16.mxu0 0
      %8067 = vmatpush1.bf16.msra.mxu0 %v8039
      %8068 = vmatprep.subr.bf16.mxu0 0
      %8069 = vmatpush1.bf16.msra.mxu0 %v8038
      %8070 = vmatprep.subr.bf16.mxu0 0
      %8071 = vmatpush2.bf16.msra.mxu0 0
      %8072 = vmatprep.subr.bf16.mxu0 0
      %8073 = vmatpush2.bf16.msra.mxu0 0
      %8074 = vmatprep.subr.bf16.mxu0 0
      %8075 = vmatpush2.bf16.msra.mxu0 0
      %8076 = vmatprep.subr.bf16.mxu0 0
      %8077 = vmatpush2.bf16.msra.mxu0 0
      %8078 = vmatprep.subr.bf16.mxu0 0
      %8079 = vmatpush2.bf16.msra.mxu0 0
      %8080 = vmatprep.subr.bf16.mxu0 0
      %8081 = vmatpush2.bf16.msra.mxu0 0
      %8082 = vmatprep.subr.bf16.mxu0 0
      %8083 = vmatpush2.bf16.msra.mxu0 0
      %8084 = vmatprep.subr.bf16.mxu0 0
      %8085 = vmatpush2.bf16.msra.mxu0 0
      %8086 = vmatprep.mubr.bf16.mxu0 0
      %8087 = vmatmul.mubr.bf16.gmra.mxu0 %v7985
      %v8088 = vpop.f32.mrf.mxu0
      %v8089 = vadd.f32 0.0, %v8088
      %v8090 = vpop.f32.mrf.mxu0
      %v8091 = vpop.f32.mrf.mxu0
      %v8092 = vadd.f32 0.0, %v8091
      %v8093 = vpop.f32.mrf.mxu0
      %8094 = vmatprep.mubr.bf16.mxu0 0
      %8095 = vmatmul.mubr.bf16.gmra.mxu0 %v7986
      %v8096 = vpop.f32.mrf.mxu0
      %v8097 = vadd.f32 0.0, %v8096
      %v8098 = vpop.f32.mrf.mxu0
      %v8099 = vpop.f32.mrf.mxu0
      %v8100 = vadd.f32 0.0, %v8099
      %v8101 = vpop.f32.mrf.mxu0
      %8102 = vmatprep.mubr.bf16.mxu0 0
      %8103 = vmatmul.mubr.bf16.gmra.mxu0 %v7987
      %v8104 = vpop.f32.mrf.mxu0
      %v8105 = vadd.f32 0.0, %v8104
      %v8106 = vpop.f32.mrf.mxu0
      %v8107 = vpop.f32.mrf.mxu0
      %v8108 = vadd.f32 0.0, %v8107
      %v8109 = vpop.f32.mrf.mxu0
      %8110 = vmatprep.mubr.bf16.mxu0 0
      %8111 = vmatmul.mubr.bf16.gmra.mxu0 %v7988
      %v8112 = vpop.f32.mrf.mxu0
      %v8113 = vadd.f32 0.0, %v8112
      %v8114 = vpop.f32.mrf.mxu0
      %v8115 = vpop.f32.mrf.mxu0
      %v8116 = vadd.f32 0.0, %v8115
      %v8117 = vpop.f32.mrf.mxu0
      %8118 = vdwg.mxu0
      %v8135 = vunpack.c.l.b16 %v7953
      %v8136 = vunpack.c.l.b16 %v7954
      %v8137 = vunpack.c.l.b16 %v7955
      %v8138 = vunpack.c.l.b16 %v7956
      %v8139 = vunpack.c.l.b16 %v7957
      %v8140 = vunpack.c.l.b16 %v7958
      %v8141 = vunpack.c.l.b16 %v7959
      %v8142 = vunpack.c.l.b16 %v7960
      %v8143 = vunpack.c.l.b16 %v7961
      %v8144 = vunpack.c.l.b16 %v7962
      %v8145 = vunpack.c.l.b16 %v7963
      %v8146 = vunpack.c.l.b16 %v7964
      %v8147 = vunpack.c.l.b16 %v7965
      %v8148 = vunpack.c.l.b16 %v7966
      %v8149 = vunpack.c.l.b16 %v7967
      %v8150 = vunpack.c.l.b16 %v7968
      %v8151 = vpack.c.b16 %v8136, %v8135
      %v8152 = vpack.c.b16 %v8138, %v8137
      %v8153 = vpack.c.b16 %v8140, %v8139
      %v8154 = vpack.c.b16 %v8142, %v8141
      %v8155 = vpack.c.b16 %v8144, %v8143
      %v8156 = vpack.c.b16 %v8146, %v8145
      %v8157 = vpack.c.b16 %v8148, %v8147
      %v8158 = vpack.c.b16 %v8150, %v8149
      %8167 = vmatprep.subr.bf16.mxu0 0
      %8168 = vmatpush1.bf16.msra.mxu0 %v8158
      %8169 = vmatprep.subr.bf16.mxu0 0
      %8170 = vmatpush1.bf16.msra.mxu0 %v8157
      %8171 = vmatprep.subr.bf16.mxu0 0
      %8172 = vmatpush1.bf16.msra.mxu0 %v8156
      %8173 = vmatprep.subr.bf16.mxu0 0
      %8174 = vmatpush1.bf16.msra.mxu0 %v8155
      %8175 = vmatprep.subr.bf16.mxu0 0
      %8176 = vmatpush1.bf16.msra.mxu0 %v8154
      %8177 = vmatprep.subr.bf16.mxu0 0
      %8178 = vmatpush1.bf16.msra.mxu0 %v8153
      %8179 = vmatprep.subr.bf16.mxu0 0
      %8180 = vmatpush1.bf16.msra.mxu0 %v8152
      %8181 = vmatprep.subr.bf16.mxu0 0
      %8182 = vmatpush1.bf16.msra.mxu0 %v8151
      %8183 = vmatprep.subr.bf16.mxu0 0
      %8184 = vmatpush2.bf16.msra.mxu0 0
      %8185 = vmatprep.subr.bf16.mxu0 0
      %8186 = vmatpush2.bf16.msra.mxu0 0
      %8187 = vmatprep.subr.bf16.mxu0 0
      %8188 = vmatpush2.bf16.msra.mxu0 0
      %8189 = vmatprep.subr.bf16.mxu0 0
      %8190 = vmatpush2.bf16.msra.mxu0 0
      %8191 = vmatprep.subr.bf16.mxu0 0
      %8192 = vmatpush2.bf16.msra.mxu0 0
      %8193 = vmatprep.subr.bf16.mxu0 0
      %8194 = vmatpush2.bf16.msra.mxu0 0
      %8195 = vmatprep.subr.bf16.mxu0 0
      %8196 = vmatpush2.bf16.msra.mxu0 0
      %8197 = vmatprep.subr.bf16.mxu0 0
      %8198 = vmatpush2.bf16.msra.mxu0 0
      %8199 = vmatprep.mubr.bf16.mxu0 0
      %8200 = vmatmul.mubr.bf16.gmra.mxu0 %v7949
      %v8201 = vpop.f32.mrf.mxu0
      %v8202 = vadd.f32 %v8089, %v8201
      %v8203 = vpop.f32.mrf.mxu0
      %v8204 = vpop.f32.mrf.mxu0
      %v8205 = vadd.f32 %v8092, %v8204
      %v8206 = vpop.f32.mrf.mxu0
      %8207 = vmatprep.mubr.bf16.mxu0 0
      %8208 = vmatmul.mubr.bf16.gmra.mxu0 %v7950
      %v8209 = vpop.f32.mrf.mxu0
      %v8210 = vadd.f32 %v8097, %v8209
      %v8211 = vpop.f32.mrf.mxu0
      %v8212 = vpop.f32.mrf.mxu0
      %v8213 = vadd.f32 %v8100, %v8212
      %v8214 = vpop.f32.mrf.mxu0
      %8215 = vmatprep.mubr.bf16.mxu0 0
      %8216 = vmatmul.mubr.bf16.gmra.mxu0 %v7951
      %v8217 = vpop.f32.mrf.mxu0
      %v8218 = vadd.f32 %v8105, %v8217
      %v8219 = vpop.f32.mrf.mxu0
      %v8220 = vpop.f32.mrf.mxu0
      %v8221 = vadd.f32 %v8108, %v8220
      %v8222 = vpop.f32.mrf.mxu0
      %8223 = vmatprep.mubr.bf16.mxu0 0
      %8224 = vmatmul.mubr.bf16.gmra.mxu0 %v7952
      %v8225 = vpop.f32.mrf.mxu0
      %v8226 = vadd.f32 %v8113, %v8225
      %v8227 = vpop.f32.mrf.mxu0
      %v8228 = vpop.f32.mrf.mxu0
      %v8229 = vadd.f32 %v8116, %v8228
      %v8230 = vpop.f32.mrf.mxu0
      %8231 = vdwg.mxu0
      %s8232 = scalar_lea.vmem [#allocation3], 2
      %v8233 = vld [vmem:[%s8232] ss:$2 sm:$0xff]
      %s8234 = scalar_lea.vmem [#allocation3], 50
      %v8235 = vld [vmem:[%s8234] ss:$2 sm:$0xff]
      %s8236 = scalar_lea.vmem [#allocation3], 98
      %v8237 = vld [vmem:[%s8236] ss:$2 sm:$0xff]
      %s8238 = scalar_lea.vmem [#allocation3], 146
      %v8239 = vld [vmem:[%s8238] ss:$2 sm:$0xff]
      %s8240 = scalar_lea.vmem [#allocation3], 194
      %v8241 = vld [vmem:[%s8240] ss:$2 sm:$0xff]
      %s8242 = scalar_lea.vmem [#allocation3], 242
      %v8243 = vld [vmem:[%s8242] ss:$2 sm:$0xff]
      %s8244 = scalar_lea.vmem [#allocation3], 290
      %v8245 = vld [vmem:[%s8244] ss:$2 sm:$0xff]
      %s8246 = scalar_lea.vmem [#allocation3], 338
      %v8247 = vld [vmem:[%s8246] ss:$2 sm:$0xff]
      %v8248 = vpack.c.bf16 %v8235, %v8233
      %v8249 = vpack.c.bf16 %v8239, %v8237
      %v8250 = vpack.c.bf16 %v8243, %v8241
      %v8251 = vpack.c.bf16 %v8247, %v8245
      %s8252 = scalar_lea.vmem %s7, 128
      %v8253 = vld [vmem:[%s8252] sm:$0xf]
      %v8254 = vld [vmem:[%s8252 + $0x4] sm:$0xf]
      %v8255 = vld [vmem:[%s8252 + $0x8] sm:$0xf]
      %v8256 = vld [vmem:[%s8252 + $0xc] sm:$0xf]
      %v8257 = vld [vmem:[%s8252 + $0x10] sm:$0xf]
      %v8258 = vld [vmem:[%s8252 + $0x14] sm:$0xf]
      %v8259 = vld [vmem:[%s8252 + $0x18] sm:$0xf]
      %v8260 = vld [vmem:[%s8252 + $0x1c] sm:$0xf]
      %v8261 = vld [vmem:[%s8252 + $0x20] sm:$0xf]
      %v8262 = vld [vmem:[%s8252 + $0x24] sm:$0xf]
      %v8263 = vld [vmem:[%s8252 + $0x28] sm:$0xf]
      %v8264 = vld [vmem:[%s8252 + $0x2c] sm:$0xf]
      %v8265 = vld [vmem:[%s8252 + $0x30] sm:$0xf]
      %v8266 = vld [vmem:[%s8252 + $0x34] sm:$0xf]
      %v8267 = vld [vmem:[%s8252 + $0x38] sm:$0xf]
      %v8268 = vld [vmem:[%s8252 + $0x3c] sm:$0xf]
      %v8285 = vunpack.c.l.b16 %v8253
      %v8286 = vunpack.c.l.b16 %v8254
      %v8287 = vunpack.c.l.b16 %v8255
      %v8288 = vunpack.c.l.b16 %v8256
      %v8289 = vunpack.c.l.b16 %v8257
      %v8290 = vunpack.c.l.b16 %v8258
      %v8291 = vunpack.c.l.b16 %v8259
      %v8292 = vunpack.c.l.b16 %v8260
      %v8293 = vunpack.c.l.b16 %v8261
      %v8294 = vunpack.c.l.b16 %v8262
      %v8295 = vunpack.c.l.b16 %v8263
      %v8296 = vunpack.c.l.b16 %v8264
      %v8297 = vunpack.c.l.b16 %v8265
      %v8298 = vunpack.c.l.b16 %v8266
      %v8299 = vunpack.c.l.b16 %v8267
      %v8300 = vunpack.c.l.b16 %v8268
      %v8301 = vpack.c.b16 %v8286, %v8285
      %v8302 = vpack.c.b16 %v8288, %v8287
      %v8303 = vpack.c.b16 %v8290, %v8289
      %v8304 = vpack.c.b16 %v8292, %v8291
      %v8305 = vpack.c.b16 %v8294, %v8293
      %v8306 = vpack.c.b16 %v8296, %v8295
      %v8307 = vpack.c.b16 %v8298, %v8297
      %v8308 = vpack.c.b16 %v8300, %v8299
      %8317 = vmatprep.subr.bf16.mxu0 0
      %8318 = vmatpush1.bf16.msra.mxu0 %v8308
      %8319 = vmatprep.subr.bf16.mxu0 0
      %8320 = vmatpush1.bf16.msra.mxu0 %v8307
      %8321 = vmatprep.subr.bf16.mxu0 0
      %8322 = vmatpush1.bf16.msra.mxu0 %v8306
      %8323 = vmatprep.subr.bf16.mxu0 0
      %8324 = vmatpush1.bf16.msra.mxu0 %v8305
      %8325 = vmatprep.subr.bf16.mxu0 0
      %8326 = vmatpush1.bf16.msra.mxu0 %v8304
      %8327 = vmatprep.subr.bf16.mxu0 0
      %8328 = vmatpush1.bf16.msra.mxu0 %v8303
      %8329 = vmatprep.subr.bf16.mxu0 0
      %8330 = vmatpush1.bf16.msra.mxu0 %v8302
      %8331 = vmatprep.subr.bf16.mxu0 0
      %8332 = vmatpush1.bf16.msra.mxu0 %v8301
      %8333 = vmatprep.subr.bf16.mxu0 0
      %8334 = vmatpush2.bf16.msra.mxu0 0
      %8335 = vmatprep.subr.bf16.mxu0 0
      %8336 = vmatpush2.bf16.msra.mxu0 0
      %8337 = vmatprep.subr.bf16.mxu0 0
      %8338 = vmatpush2.bf16.msra.mxu0 0
      %8339 = vmatprep.subr.bf16.mxu0 0
      %8340 = vmatpush2.bf16.msra.mxu0 0
      %8341 = vmatprep.subr.bf16.mxu0 0
      %8342 = vmatpush2.bf16.msra.mxu0 0
      %8343 = vmatprep.subr.bf16.mxu0 0
      %8344 = vmatpush2.bf16.msra.mxu0 0
      %8345 = vmatprep.subr.bf16.mxu0 0
      %8346 = vmatpush2.bf16.msra.mxu0 0
      %8347 = vmatprep.subr.bf16.mxu0 0
      %8348 = vmatpush2.bf16.msra.mxu0 0
      %8349 = vmatprep.mubr.bf16.mxu0 0
      %8350 = vmatmul.mubr.bf16.gmra.mxu0 %v8248
      %v8351 = vpop.f32.mrf.mxu0
      %v8352 = vadd.f32 0.0, %v8351
      %v8353 = vpop.f32.mrf.mxu0
      %v8354 = vpop.f32.mrf.mxu0
      %v8355 = vadd.f32 0.0, %v8354
      %v8356 = vpop.f32.mrf.mxu0
      %8357 = vmatprep.mubr.bf16.mxu0 0
      %8358 = vmatmul.mubr.bf16.gmra.mxu0 %v8249
      %v8359 = vpop.f32.mrf.mxu0
      %v8360 = vadd.f32 0.0, %v8359
      %v8361 = vpop.f32.mrf.mxu0
      %v8362 = vpop.f32.mrf.mxu0
      %v8363 = vadd.f32 0.0, %v8362
      %v8364 = vpop.f32.mrf.mxu0
      %8365 = vmatprep.mubr.bf16.mxu0 0
      %8366 = vmatmul.mubr.bf16.gmra.mxu0 %v8250
      %v8367 = vpop.f32.mrf.mxu0
      %v8368 = vadd.f32 0.0, %v8367
      %v8369 = vpop.f32.mrf.mxu0
      %v8370 = vpop.f32.mrf.mxu0
      %v8371 = vadd.f32 0.0, %v8370
      %v8372 = vpop.f32.mrf.mxu0
      %8373 = vmatprep.mubr.bf16.mxu0 0
      %8374 = vmatmul.mubr.bf16.gmra.mxu0 %v8251
      %v8375 = vpop.f32.mrf.mxu0
      %v8376 = vadd.f32 0.0, %v8375
      %v8377 = vpop.f32.mrf.mxu0
      %v8378 = vpop.f32.mrf.mxu0
      %v8379 = vadd.f32 0.0, %v8378
      %v8380 = vpop.f32.mrf.mxu0
      %8381 = vdwg.mxu0
      %v8382 = vadd.f32 %v8202, %v8352
      %v8383 = vadd.f32 %v8205, %v8355
      %v8384 = vadd.f32 %v8210, %v8360
      %v8385 = vadd.f32 %v8213, %v8363
      %v8386 = vadd.f32 %v8218, %v8368
      %v8387 = vadd.f32 %v8221, %v8371
      %v8388 = vadd.f32 %v8226, %v8376
      %v8389 = vadd.f32 %v8229, %v8379
      %v8390 = vld [vmem:[%s2250] ss:$2 sm:$0xff]
      %s8391 = scalar_lea.vmem %s2250, 48 [#allocation3]
      %v8392 = vld [vmem:[%s8391] ss:$2 sm:$0xff]
      %s8393 = scalar_lea.vmem %s2250, 96 [#allocation3]
      %v8394 = vld [vmem:[%s8393] ss:$2 sm:$0xff]
      %s8395 = scalar_lea.vmem %s2250, 144 [#allocation3]
      %v8396 = vld [vmem:[%s8395] ss:$2 sm:$0xff]
      %s8397 = scalar_lea.vmem %s2250, 192 [#allocation3]
      %v8398 = vld [vmem:[%s8397] ss:$2 sm:$0xff]
      %s8399 = scalar_lea.vmem %s2250, 240 [#allocation3]
      %v8400 = vld [vmem:[%s8399] ss:$2 sm:$0xff]
      %s8401 = scalar_lea.vmem %s2250, 288 [#allocation3]
      %v8402 = vld [vmem:[%s8401] ss:$2 sm:$0xff]
      %s8403 = scalar_lea.vmem %s2250, 336 [#allocation3]
      %v8404 = vld [vmem:[%s8403] ss:$2 sm:$0xff]
      %v8405 = vpack.c.bf16 %v8392, %v8390
      %v8406 = vpack.c.bf16 %v8396, %v8394
      %v8407 = vpack.c.bf16 %v8400, %v8398
      %v8408 = vpack.c.bf16 %v8404, %v8402
      %s8409 = scalar_lea.vmem %s7, 192
      %v8410 = vld [vmem:[%s8409] sm:$0xf]
      %v8411 = vld [vmem:[%s8409 + $0x4] sm:$0xf]
      %v8412 = vld [vmem:[%s8409 + $0x8] sm:$0xf]
      %v8413 = vld [vmem:[%s8409 + $0xc] sm:$0xf]
      %v8414 = vld [vmem:[%s8409 + $0x10] sm:$0xf]
      %v8415 = vld [vmem:[%s8409 + $0x14] sm:$0xf]
      %v8416 = vld [vmem:[%s8409 + $0x18] sm:$0xf]
      %v8417 = vld [vmem:[%s8409 + $0x1c] sm:$0xf]
      %v8418 = vld [vmem:[%s8409 + $0x20] sm:$0xf]
      %v8419 = vld [vmem:[%s8409 + $0x24] sm:$0xf]
      %v8420 = vld [vmem:[%s8409 + $0x28] sm:$0xf]
      %v8421 = vld [vmem:[%s8409 + $0x2c] sm:$0xf]
      %v8422 = vld [vmem:[%s8409 + $0x30] sm:$0xf]
      %v8423 = vld [vmem:[%s8409 + $0x34] sm:$0xf]
      %v8424 = vld [vmem:[%s8409 + $0x38] sm:$0xf]
      %v8425 = vld [vmem:[%s8409 + $0x3c] sm:$0xf]
      %v8442 = vunpack.c.l.b16 %v8410
      %v8443 = vunpack.c.l.b16 %v8411
      %v8444 = vunpack.c.l.b16 %v8412
      %v8445 = vunpack.c.l.b16 %v8413
      %v8446 = vunpack.c.l.b16 %v8414
      %v8447 = vunpack.c.l.b16 %v8415
      %v8448 = vunpack.c.l.b16 %v8416
      %v8449 = vunpack.c.l.b16 %v8417
      %v8450 = vunpack.c.l.b16 %v8418
      %v8451 = vunpack.c.l.b16 %v8419
      %v8452 = vunpack.c.l.b16 %v8420
      %v8453 = vunpack.c.l.b16 %v8421
      %v8454 = vunpack.c.l.b16 %v8422
      %v8455 = vunpack.c.l.b16 %v8423
      %v8456 = vunpack.c.l.b16 %v8424
      %v8457 = vunpack.c.l.b16 %v8425
      %v8458 = vpack.c.b16 %v8443, %v8442
      %v8459 = vpack.c.b16 %v8445, %v8444
      %v8460 = vpack.c.b16 %v8447, %v8446
      %v8461 = vpack.c.b16 %v8449, %v8448
      %v8462 = vpack.c.b16 %v8451, %v8450
      %v8463 = vpack.c.b16 %v8453, %v8452
      %v8464 = vpack.c.b16 %v8455, %v8454
      %v8465 = vpack.c.b16 %v8457, %v8456
      %8474 = vmatprep.subr.bf16.mxu0 0
      %8475 = vmatpush1.bf16.msra.mxu0 %v8465
      %8476 = vmatprep.subr.bf16.mxu0 0
      %8477 = vmatpush1.bf16.msra.mxu0 %v8464
      %8478 = vmatprep.subr.bf16.mxu0 0
      %8479 = vmatpush1.bf16.msra.mxu0 %v8463
      %8480 = vmatprep.subr.bf16.mxu0 0
      %8481 = vmatpush1.bf16.msra.mxu0 %v8462
      %8482 = vmatprep.subr.bf16.mxu0 0
      %8483 = vmatpush1.bf16.msra.mxu0 %v8461
      %8484 = vmatprep.subr.bf16.mxu0 0
      %8485 = vmatpush1.bf16.msra.mxu0 %v8460
      %8486 = vmatprep.subr.bf16.mxu0 0
      %8487 = vmatpush1.bf16.msra.mxu0 %v8459
      %8488 = vmatprep.subr.bf16.mxu0 0
      %8489 = vmatpush1.bf16.msra.mxu0 %v8458
      %8490 = vmatprep.subr.bf16.mxu0 0
      %8491 = vmatpush2.bf16.msra.mxu0 0
      %8492 = vmatprep.subr.bf16.mxu0 0
      %8493 = vmatpush2.bf16.msra.mxu0 0
      %8494 = vmatprep.subr.bf16.mxu0 0
      %8495 = vmatpush2.bf16.msra.mxu0 0
      %8496 = vmatprep.subr.bf16.mxu0 0
      %8497 = vmatpush2.bf16.msra.mxu0 0
      %8498 = vmatprep.subr.bf16.mxu0 0
      %8499 = vmatpush2.bf16.msra.mxu0 0
      %8500 = vmatprep.subr.bf16.mxu0 0
      %8501 = vmatpush2.bf16.msra.mxu0 0
      %8502 = vmatprep.subr.bf16.mxu0 0
      %8503 = vmatpush2.bf16.msra.mxu0 0
      %8504 = vmatprep.subr.bf16.mxu0 0
      %8505 = vmatpush2.bf16.msra.mxu0 0
      %8506 = vmatprep.mubr.bf16.mxu0 0
      %8507 = vmatmul.mubr.bf16.gmra.mxu0 %v8405
      %v8508 = vpop.f32.mrf.mxu0
      %v8509 = vadd.f32 0.0, %v8508
      %v8510 = vpop.f32.mrf.mxu0
      %v8511 = vpop.f32.mrf.mxu0
      %v8512 = vadd.f32 0.0, %v8511
      %v8513 = vpop.f32.mrf.mxu0
      %8514 = vmatprep.mubr.bf16.mxu0 0
      %8515 = vmatmul.mubr.bf16.gmra.mxu0 %v8406
      %v8516 = vpop.f32.mrf.mxu0
      %v8517 = vadd.f32 0.0, %v8516
      %v8518 = vpop.f32.mrf.mxu0
      %v8519 = vpop.f32.mrf.mxu0
      %v8520 = vadd.f32 0.0, %v8519
      %v8521 = vpop.f32.mrf.mxu0
      %8522 = vmatprep.mubr.bf16.mxu0 0
      %8523 = vmatmul.mubr.bf16.gmra.mxu0 %v8407
      %v8524 = vpop.f32.mrf.mxu0
      %v8525 = vadd.f32 0.0, %v8524
      %v8526 = vpop.f32.mrf.mxu0
      %v8527 = vpop.f32.mrf.mxu0
      %v8528 = vadd.f32 0.0, %v8527
      %v8529 = vpop.f32.mrf.mxu0
      %8530 = vmatprep.mubr.bf16.mxu0 0
      %8531 = vmatmul.mubr.bf16.gmra.mxu0 %v8408
      %v8532 = vpop.f32.mrf.mxu0
      %v8533 = vadd.f32 0.0, %v8532
      %v8534 = vpop.f32.mrf.mxu0
      %v8535 = vpop.f32.mrf.mxu0
      %v8536 = vadd.f32 0.0, %v8535
      %v8537 = vpop.f32.mrf.mxu0
      %8538 = vdwg.mxu0
      %v8539 = vadd.f32 %v8382, %v8509
      %v8540 = vadd.f32 %v8383, %v8512
      %v8541 = vadd.f32 %v8384, %v8517
      %v8542 = vadd.f32 %v8385, %v8520
      %v8543 = vadd.f32 %v8386, %v8525
      %v8544 = vadd.f32 %v8387, %v8528
      %v8545 = vadd.f32 %v8388, %v8533
      %v8546 = vadd.f32 %v8389, %v8536
      %s8547 = scalar_lea.vmem %s2250, 1 [#allocation3]
      %v8548 = vld [vmem:[%s8547] ss:$2 sm:$0xff]
      %s8549 = scalar_lea.vmem %s2250, 49 [#allocation3]
      %v8550 = vld [vmem:[%s8549] ss:$2 sm:$0xff]
      %s8551 = scalar_lea.vmem %s2250, 97 [#allocation3]
      %v8552 = vld [vmem:[%s8551] ss:$2 sm:$0xff]
      %s8553 = scalar_lea.vmem %s2250, 145 [#allocation3]
      %v8554 = vld [vmem:[%s8553] ss:$2 sm:$0xff]
      %s8555 = scalar_lea.vmem %s2250, 193 [#allocation3]
      %v8556 = vld [vmem:[%s8555] ss:$2 sm:$0xff]
      %s8557 = scalar_lea.vmem %s2250, 241 [#allocation3]
      %v8558 = vld [vmem:[%s8557] ss:$2 sm:$0xff]
      %s8559 = scalar_lea.vmem %s2250, 289 [#allocation3]
      %v8560 = vld [vmem:[%s8559] ss:$2 sm:$0xff]
      %s8561 = scalar_lea.vmem %s2250, 337 [#allocation3]
      %v8562 = vld [vmem:[%s8561] ss:$2 sm:$0xff]
      %v8563 = vpack.c.bf16 %v8550, %v8548
      %v8564 = vpack.c.bf16 %v8554, %v8552
      %v8565 = vpack.c.bf16 %v8558, %v8556
      %v8566 = vpack.c.bf16 %v8562, %v8560
      %s8567 = scalar_lea.vmem %s7, 256
      %v8568 = vld [vmem:[%s8567] sm:$0xf]
      %v8569 = vld [vmem:[%s8567 + $0x4] sm:$0xf]
      %v8570 = vld [vmem:[%s8567 + $0x8] sm:$0xf]
      %v8571 = vld [vmem:[%s8567 + $0xc] sm:$0xf]
      %v8572 = vld [vmem:[%s8567 + $0x10] sm:$0xf]
      %v8573 = vld [vmem:[%s8567 + $0x14] sm:$0xf]
      %v8574 = vld [vmem:[%s8567 + $0x18] sm:$0xf]
      %v8575 = vld [vmem:[%s8567 + $0x1c] sm:$0xf]
      %v8576 = vld [vmem:[%s8567 + $0x20] sm:$0xf]
      %v8577 = vld [vmem:[%s8567 + $0x24] sm:$0xf]
      %v8578 = vld [vmem:[%s8567 + $0x28] sm:$0xf]
      %v8579 = vld [vmem:[%s8567 + $0x2c] sm:$0xf]
      %v8580 = vld [vmem:[%s8567 + $0x30] sm:$0xf]
      %v8581 = vld [vmem:[%s8567 + $0x34] sm:$0xf]
      %v8582 = vld [vmem:[%s8567 + $0x38] sm:$0xf]
      %v8583 = vld [vmem:[%s8567 + $0x3c] sm:$0xf]
      %v8600 = vunpack.c.l.b16 %v8568
      %v8601 = vunpack.c.l.b16 %v8569
      %v8602 = vunpack.c.l.b16 %v8570
      %v8603 = vunpack.c.l.b16 %v8571
      %v8604 = vunpack.c.l.b16 %v8572
      %v8605 = vunpack.c.l.b16 %v8573
      %v8606 = vunpack.c.l.b16 %v8574
      %v8607 = vunpack.c.l.b16 %v8575
      %v8608 = vunpack.c.l.b16 %v8576
      %v8609 = vunpack.c.l.b16 %v8577
      %v8610 = vunpack.c.l.b16 %v8578
      %v8611 = vunpack.c.l.b16 %v8579
      %v8612 = vunpack.c.l.b16 %v8580
      %v8613 = vunpack.c.l.b16 %v8581
      %v8614 = vunpack.c.l.b16 %v8582
      %v8615 = vunpack.c.l.b16 %v8583
      %v8616 = vpack.c.b16 %v8601, %v8600
      %v8617 = vpack.c.b16 %v8603, %v8602
      %v8618 = vpack.c.b16 %v8605, %v8604
      %v8619 = vpack.c.b16 %v8607, %v8606
      %v8620 = vpack.c.b16 %v8609, %v8608
      %v8621 = vpack.c.b16 %v8611, %v8610
      %v8622 = vpack.c.b16 %v8613, %v8612
      %v8623 = vpack.c.b16 %v8615, %v8614
      %8632 = vmatprep.subr.bf16.mxu0 0
      %8633 = vmatpush1.bf16.msra.mxu0 %v8623
      %8634 = vmatprep.subr.bf16.mxu0 0
      %8635 = vmatpush1.bf16.msra.mxu0 %v8622
      %8636 = vmatprep.subr.bf16.mxu0 0
      %8637 = vmatpush1.bf16.msra.mxu0 %v8621
      %8638 = vmatprep.subr.bf16.mxu0 0
      %8639 = vmatpush1.bf16.msra.mxu0 %v8620
      %8640 = vmatprep.subr.bf16.mxu0 0
      %8641 = vmatpush1.bf16.msra.mxu0 %v8619
      %8642 = vmatprep.subr.bf16.mxu0 0
      %8643 = vmatpush1.bf16.msra.mxu0 %v8618
      %8644 = vmatprep.subr.bf16.mxu0 0
      %8645 = vmatpush1.bf16.msra.mxu0 %v8617
      %8646 = vmatprep.subr.bf16.mxu0 0
      %8647 = vmatpush1.bf16.msra.mxu0 %v8616
      %8648 = vmatprep.subr.bf16.mxu0 0
      %8649 = vmatpush2.bf16.msra.mxu0 0
      %8650 = vmatprep.subr.bf16.mxu0 0
      %8651 = vmatpush2.bf16.msra.mxu0 0
      %8652 = vmatprep.subr.bf16.mxu0 0
      %8653 = vmatpush2.bf16.msra.mxu0 0
      %8654 = vmatprep.subr.bf16.mxu0 0
      %8655 = vmatpush2.bf16.msra.mxu0 0
      %8656 = vmatprep.subr.bf16.mxu0 0
      %8657 = vmatpush2.bf16.msra.mxu0 0
      %8658 = vmatprep.subr.bf16.mxu0 0
      %8659 = vmatpush2.bf16.msra.mxu0 0
      %8660 = vmatprep.subr.bf16.mxu0 0
      %8661 = vmatpush2.bf16.msra.mxu0 0
      %8662 = vmatprep.subr.bf16.mxu0 0
      %8663 = vmatpush2.bf16.msra.mxu0 0
      %8664 = vmatprep.mubr.bf16.mxu0 0
      %8665 = vmatmul.mubr.bf16.gmra.mxu0 %v8563
      %v8666 = vpop.f32.mrf.mxu0
      %v8667 = vadd.f32 0.0, %v8666
      %v8668 = vpop.f32.mrf.mxu0
      %v8669 = vpop.f32.mrf.mxu0
      %v8670 = vadd.f32 0.0, %v8669
      %v8671 = vpop.f32.mrf.mxu0
      %8672 = vmatprep.mubr.bf16.mxu0 0
      %8673 = vmatmul.mubr.bf16.gmra.mxu0 %v8564
      %v8674 = vpop.f32.mrf.mxu0
      %v8675 = vadd.f32 0.0, %v8674
      %v8676 = vpop.f32.mrf.mxu0
      %v8677 = vpop.f32.mrf.mxu0
      %v8678 = vadd.f32 0.0, %v8677
      %v8679 = vpop.f32.mrf.mxu0
      %8680 = vmatprep.mubr.bf16.mxu0 0
      %8681 = vmatmul.mubr.bf16.gmra.mxu0 %v8565
      %v8682 = vpop.f32.mrf.mxu0
      %v8683 = vadd.f32 0.0, %v8682
      %v8684 = vpop.f32.mrf.mxu0
      %v8685 = vpop.f32.mrf.mxu0
      %v8686 = vadd.f32 0.0, %v8685
      %v8687 = vpop.f32.mrf.mxu0
      %8688 = vmatprep.mubr.bf16.mxu0 0
      %8689 = vmatmul.mubr.bf16.gmra.mxu0 %v8566
      %v8690 = vpop.f32.mrf.mxu0
      %v8691 = vadd.f32 0.0, %v8690
      %v8692 = vpop.f32.mrf.mxu0
      %v8693 = vpop.f32.mrf.mxu0
      %v8694 = vadd.f32 0.0, %v8693
      %v8695 = vpop.f32.mrf.mxu0
      %8696 = vdwg.mxu0
      %v8697 = vadd.f32 %v8539, %v8667
      %v8698 = vadd.f32 %v8540, %v8670
      %v8699 = vadd.f32 %v8541, %v8675
      %v8700 = vadd.f32 %v8542, %v8678
      %v8701 = vadd.f32 %v8543, %v8683
      %v8702 = vadd.f32 %v8544, %v8686
      %v8703 = vadd.f32 %v8545, %v8691
      %v8704 = vadd.f32 %v8546, %v8694
      %s8705 = scalar_lea.vmem %s2250, 2 [#allocation3]
      %v8706 = vld [vmem:[%s8705] ss:$2 sm:$0xff]
      %s8707 = scalar_lea.vmem %s2250, 50 [#allocation3]
      %v8708 = vld [vmem:[%s8707] ss:$2 sm:$0xff]
      %s8709 = scalar_lea.vmem %s2250, 98 [#allocation3]
      %v8710 = vld [vmem:[%s8709] ss:$2 sm:$0xff]
      %s8711 = scalar_lea.vmem %s2250, 146 [#allocation3]
      %v8712 = vld [vmem:[%s8711] ss:$2 sm:$0xff]
      %s8713 = scalar_lea.vmem %s2250, 194 [#allocation3]
      %v8714 = vld [vmem:[%s8713] ss:$2 sm:$0xff]
      %s8715 = scalar_lea.vmem %s2250, 242 [#allocation3]
      %v8716 = vld [vmem:[%s8715] ss:$2 sm:$0xff]
      %s8717 = scalar_lea.vmem %s2250, 290 [#allocation3]
      %v8718 = vld [vmem:[%s8717] ss:$2 sm:$0xff]
      %s8719 = scalar_lea.vmem %s2250, 338 [#allocation3]
      %v8720 = vld [vmem:[%s8719] ss:$2 sm:$0xff]
      %v8721 = vpack.c.bf16 %v8708, %v8706
      %v8722 = vpack.c.bf16 %v8712, %v8710
      %v8723 = vpack.c.bf16 %v8716, %v8714
      %v8724 = vpack.c.bf16 %v8720, %v8718
      %s8725 = scalar_lea.vmem %s7, 320
      %v8726 = vld [vmem:[%s8725] sm:$0xf]
      %v8727 = vld [vmem:[%s8725 + $0x4] sm:$0xf]
      %v8728 = vld [vmem:[%s8725 + $0x8] sm:$0xf]
      %v8729 = vld [vmem:[%s8725 + $0xc] sm:$0xf]
      %v8730 = vld [vmem:[%s8725 + $0x10] sm:$0xf]
      %v8731 = vld [vmem:[%s8725 + $0x14] sm:$0xf]
      %v8732 = vld [vmem:[%s8725 + $0x18] sm:$0xf]
      %v8733 = vld [vmem:[%s8725 + $0x1c] sm:$0xf]
      %v8734 = vld [vmem:[%s8725 + $0x20] sm:$0xf]
      %v8735 = vld [vmem:[%s8725 + $0x24] sm:$0xf]
      %v8736 = vld [vmem:[%s8725 + $0x28] sm:$0xf]
      %v8737 = vld [vmem:[%s8725 + $0x2c] sm:$0xf]
      %v8738 = vld [vmem:[%s8725 + $0x30] sm:$0xf]
      %v8739 = vld [vmem:[%s8725 + $0x34] sm:$0xf]
      %v8740 = vld [vmem:[%s8725 + $0x38] sm:$0xf]
      %v8741 = vld [vmem:[%s8725 + $0x3c] sm:$0xf]
      %v8758 = vunpack.c.l.b16 %v8726
      %v8759 = vunpack.c.l.b16 %v8727
      %v8760 = vunpack.c.l.b16 %v8728
      %v8761 = vunpack.c.l.b16 %v8729
      %v8762 = vunpack.c.l.b16 %v8730
      %v8763 = vunpack.c.l.b16 %v8731
      %v8764 = vunpack.c.l.b16 %v8732
      %v8765 = vunpack.c.l.b16 %v8733
      %v8766 = vunpack.c.l.b16 %v8734
      %v8767 = vunpack.c.l.b16 %v8735
      %v8768 = vunpack.c.l.b16 %v8736
      %v8769 = vunpack.c.l.b16 %v8737
      %v8770 = vunpack.c.l.b16 %v8738
      %v8771 = vunpack.c.l.b16 %v8739
      %v8772 = vunpack.c.l.b16 %v8740
      %v8773 = vunpack.c.l.b16 %v8741
      %v8774 = vpack.c.b16 %v8759, %v8758
      %v8775 = vpack.c.b16 %v8761, %v8760
      %v8776 = vpack.c.b16 %v8763, %v8762
      %v8777 = vpack.c.b16 %v8765, %v8764
      %v8778 = vpack.c.b16 %v8767, %v8766
      %v8779 = vpack.c.b16 %v8769, %v8768
      %v8780 = vpack.c.b16 %v8771, %v8770
      %v8781 = vpack.c.b16 %v8773, %v8772
      %8790 = vmatprep.subr.bf16.mxu0 0
      %8791 = vmatpush1.bf16.msra.mxu0 %v8781
      %8792 = vmatprep.subr.bf16.mxu0 0
      %8793 = vmatpush1.bf16.msra.mxu0 %v8780
      %8794 = vmatprep.subr.bf16.mxu0 0
      %8795 = vmatpush1.bf16.msra.mxu0 %v8779
      %8796 = vmatprep.subr.bf16.mxu0 0
      %8797 = vmatpush1.bf16.msra.mxu0 %v8778
      %8798 = vmatprep.subr.bf16.mxu0 0
      %8799 = vmatpush1.bf16.msra.mxu0 %v8777
      %8800 = vmatprep.subr.bf16.mxu0 0
      %8801 = vmatpush1.bf16.msra.mxu0 %v8776
      %8802 = vmatprep.subr.bf16.mxu0 0
      %8803 = vmatpush1.bf16.msra.mxu0 %v8775
      %8804 = vmatprep.subr.bf16.mxu0 0
      %8805 = vmatpush1.bf16.msra.mxu0 %v8774
      %8806 = vmatprep.subr.bf16.mxu0 0
      %8807 = vmatpush2.bf16.msra.mxu0 0
      %8808 = vmatprep.subr.bf16.mxu0 0
      %8809 = vmatpush2.bf16.msra.mxu0 0
      %8810 = vmatprep.subr.bf16.mxu0 0
      %8811 = vmatpush2.bf16.msra.mxu0 0
      %8812 = vmatprep.subr.bf16.mxu0 0
      %8813 = vmatpush2.bf16.msra.mxu0 0
      %8814 = vmatprep.subr.bf16.mxu0 0
      %8815 = vmatpush2.bf16.msra.mxu0 0
      %8816 = vmatprep.subr.bf16.mxu0 0
      %8817 = vmatpush2.bf16.msra.mxu0 0
      %8818 = vmatprep.subr.bf16.mxu0 0
      %8819 = vmatpush2.bf16.msra.mxu0 0
      %8820 = vmatprep.subr.bf16.mxu0 0
      %8821 = vmatpush2.bf16.msra.mxu0 0
      %8822 = vmatprep.mubr.bf16.mxu0 0
      %8823 = vmatmul.mubr.bf16.gmra.mxu0 %v8721
      %v8824 = vpop.f32.mrf.mxu0
      %v8825 = vadd.f32 0.0, %v8824
      %v8826 = vpop.f32.mrf.mxu0
      %v8827 = vpop.f32.mrf.mxu0
      %v8828 = vadd.f32 0.0, %v8827
      %v8829 = vpop.f32.mrf.mxu0
      %8830 = vmatprep.mubr.bf16.mxu0 0
      %8831 = vmatmul.mubr.bf16.gmra.mxu0 %v8722
      %v8832 = vpop.f32.mrf.mxu0
      %v8833 = vadd.f32 0.0, %v8832
      %v8834 = vpop.f32.mrf.mxu0
      %v8835 = vpop.f32.mrf.mxu0
      %v8836 = vadd.f32 0.0, %v8835
      %v8837 = vpop.f32.mrf.mxu0
      %8838 = vmatprep.mubr.bf16.mxu0 0
      %8839 = vmatmul.mubr.bf16.gmra.mxu0 %v8723
      %v8840 = vpop.f32.mrf.mxu0
      %v8841 = vadd.f32 0.0, %v8840
      %v8842 = vpop.f32.mrf.mxu0
      %v8843 = vpop.f32.mrf.mxu0
      %v8844 = vadd.f32 0.0, %v8843
      %v8845 = vpop.f32.mrf.mxu0
      %8846 = vmatprep.mubr.bf16.mxu0 0
      %8847 = vmatmul.mubr.bf16.gmra.mxu0 %v8724
      %v8848 = vpop.f32.mrf.mxu0
      %v8849 = vadd.f32 0.0, %v8848
      %v8850 = vpop.f32.mrf.mxu0
      %v8851 = vpop.f32.mrf.mxu0
      %v8852 = vadd.f32 0.0, %v8851
      %v8853 = vpop.f32.mrf.mxu0
      %8854 = vdwg.mxu0
      %v8855 = vadd.f32 %v8697, %v8825
      %v8856 = vadd.f32 %v8698, %v8828
      %v8857 = vadd.f32 %v8699, %v8833
      %v8858 = vadd.f32 %v8700, %v8836
      %v8859 = vadd.f32 %v8701, %v8841
      %v8860 = vadd.f32 %v8702, %v8844
      %v8861 = vadd.f32 %v8703, %v8849
      %v8862 = vadd.f32 %v8704, %v8852
      %v8863 = vld [vmem:[%s4054] ss:$2 sm:$0xff]
      %s8864 = scalar_lea.vmem %s4054, 48 [#allocation3]
      %v8865 = vld [vmem:[%s8864] ss:$2 sm:$0xff]
      %s8866 = scalar_lea.vmem %s4054, 96 [#allocation3]
      %v8867 = vld [vmem:[%s8866] ss:$2 sm:$0xff]
      %s8868 = scalar_lea.vmem %s4054, 144 [#allocation3]
      %v8869 = vld [vmem:[%s8868] ss:$2 sm:$0xff]
      %s8870 = scalar_lea.vmem %s4054, 192 [#allocation3]
      %v8871 = vld [vmem:[%s8870] ss:$2 sm:$0xff]
      %s8872 = scalar_lea.vmem %s4054, 240 [#allocation3]
      %v8873 = vld [vmem:[%s8872] ss:$2 sm:$0xff]
      %s8874 = scalar_lea.vmem %s4054, 288 [#allocation3]
      %v8875 = vld [vmem:[%s8874] ss:$2 sm:$0xff]
      %s8876 = scalar_lea.vmem %s4054, 336 [#allocation3]
      %v8877 = vld [vmem:[%s8876] ss:$2 sm:$0xff]
      %v8878 = vpack.c.bf16 %v8865, %v8863
      %v8879 = vpack.c.bf16 %v8869, %v8867
      %v8880 = vpack.c.bf16 %v8873, %v8871
      %v8881 = vpack.c.bf16 %v8877, %v8875
      %s8882 = scalar_lea.vmem %s7, 384
      %v8883 = vld [vmem:[%s8882] sm:$0xf]
      %v8884 = vld [vmem:[%s8882 + $0x4] sm:$0xf]
      %v8885 = vld [vmem:[%s8882 + $0x8] sm:$0xf]
      %v8886 = vld [vmem:[%s8882 + $0xc] sm:$0xf]
      %v8887 = vld [vmem:[%s8882 + $0x10] sm:$0xf]
      %v8888 = vld [vmem:[%s8882 + $0x14] sm:$0xf]
      %v8889 = vld [vmem:[%s8882 + $0x18] sm:$0xf]
      %v8890 = vld [vmem:[%s8882 + $0x1c] sm:$0xf]
      %v8891 = vld [vmem:[%s8882 + $0x20] sm:$0xf]
      %v8892 = vld [vmem:[%s8882 + $0x24] sm:$0xf]
      %v8893 = vld [vmem:[%s8882 + $0x28] sm:$0xf]
      %v8894 = vld [vmem:[%s8882 + $0x2c] sm:$0xf]
      %v8895 = vld [vmem:[%s8882 + $0x30] sm:$0xf]
      %v8896 = vld [vmem:[%s8882 + $0x34] sm:$0xf]
      %v8897 = vld [vmem:[%s8882 + $0x38] sm:$0xf]
      %v8898 = vld [vmem:[%s8882 + $0x3c] sm:$0xf]
      %v8915 = vunpack.c.l.b16 %v8883
      %v8916 = vunpack.c.l.b16 %v8884
      %v8917 = vunpack.c.l.b16 %v8885
      %v8918 = vunpack.c.l.b16 %v8886
      %v8919 = vunpack.c.l.b16 %v8887
      %v8920 = vunpack.c.l.b16 %v8888
      %v8921 = vunpack.c.l.b16 %v8889
      %v8922 = vunpack.c.l.b16 %v8890
      %v8923 = vunpack.c.l.b16 %v8891
      %v8924 = vunpack.c.l.b16 %v8892
      %v8925 = vunpack.c.l.b16 %v8893
      %v8926 = vunpack.c.l.b16 %v8894
      %v8927 = vunpack.c.l.b16 %v8895
      %v8928 = vunpack.c.l.b16 %v8896
      %v8929 = vunpack.c.l.b16 %v8897
      %v8930 = vunpack.c.l.b16 %v8898
      %v8931 = vpack.c.b16 %v8916, %v8915
      %v8932 = vpack.c.b16 %v8918, %v8917
      %v8933 = vpack.c.b16 %v8920, %v8919
      %v8934 = vpack.c.b16 %v8922, %v8921
      %v8935 = vpack.c.b16 %v8924, %v8923
      %v8936 = vpack.c.b16 %v8926, %v8925
      %v8937 = vpack.c.b16 %v8928, %v8927
      %v8938 = vpack.c.b16 %v8930, %v8929
      %8947 = vmatprep.subr.bf16.mxu0 0
      %8948 = vmatpush1.bf16.msra.mxu0 %v8938
      %8949 = vmatprep.subr.bf16.mxu0 0
      %8950 = vmatpush1.bf16.msra.mxu0 %v8937
      %8951 = vmatprep.subr.bf16.mxu0 0
      %8952 = vmatpush1.bf16.msra.mxu0 %v8936
      %8953 = vmatprep.subr.bf16.mxu0 0
      %8954 = vmatpush1.bf16.msra.mxu0 %v8935
      %8955 = vmatprep.subr.bf16.mxu0 0
      %8956 = vmatpush1.bf16.msra.mxu0 %v8934
      %8957 = vmatprep.subr.bf16.mxu0 0
      %8958 = vmatpush1.bf16.msra.mxu0 %v8933
      %8959 = vmatprep.subr.bf16.mxu0 0
      %8960 = vmatpush1.bf16.msra.mxu0 %v8932
      %8961 = vmatprep.subr.bf16.mxu0 0
      %8962 = vmatpush1.bf16.msra.mxu0 %v8931
      %8963 = vmatprep.subr.bf16.mxu0 0
      %8964 = vmatpush2.bf16.msra.mxu0 0
      %8965 = vmatprep.subr.bf16.mxu0 0
      %8966 = vmatpush2.bf16.msra.mxu0 0
      %8967 = vmatprep.subr.bf16.mxu0 0
      %8968 = vmatpush2.bf16.msra.mxu0 0
      %8969 = vmatprep.subr.bf16.mxu0 0
      %8970 = vmatpush2.bf16.msra.mxu0 0
      %8971 = vmatprep.subr.bf16.mxu0 0
      %8972 = vmatpush2.bf16.msra.mxu0 0
      %8973 = vmatprep.subr.bf16.mxu0 0
      %8974 = vmatpush2.bf16.msra.mxu0 0
      %8975 = vmatprep.subr.bf16.mxu0 0
      %8976 = vmatpush2.bf16.msra.mxu0 0
      %8977 = vmatprep.subr.bf16.mxu0 0
      %8978 = vmatpush2.bf16.msra.mxu0 0
      %8979 = vmatprep.mubr.bf16.mxu0 0
      %8980 = vmatmul.mubr.bf16.gmra.mxu0 %v8878
      %v8981 = vpop.f32.mrf.mxu0
      %v8982 = vadd.f32 0.0, %v8981
      %v8983 = vpop.f32.mrf.mxu0
      %v8984 = vpop.f32.mrf.mxu0
      %v8985 = vadd.f32 0.0, %v8984
      %v8986 = vpop.f32.mrf.mxu0
      %8987 = vmatprep.mubr.bf16.mxu0 0
      %8988 = vmatmul.mubr.bf16.gmra.mxu0 %v8879
      %v8989 = vpop.f32.mrf.mxu0
      %v8990 = vadd.f32 0.0, %v8989
      %v8991 = vpop.f32.mrf.mxu0
      %v8992 = vpop.f32.mrf.mxu0
      %v8993 = vadd.f32 0.0, %v8992
      %v8994 = vpop.f32.mrf.mxu0
      %8995 = vmatprep.mubr.bf16.mxu0 0
      %8996 = vmatmul.mubr.bf16.gmra.mxu0 %v8880
      %v8997 = vpop.f32.mrf.mxu0
      %v8998 = vadd.f32 0.0, %v8997
      %v8999 = vpop.f32.mrf.mxu0
      %v9000 = vpop.f32.mrf.mxu0
      %v9001 = vadd.f32 0.0, %v9000
      %v9002 = vpop.f32.mrf.mxu0
      %9003 = vmatprep.mubr.bf16.mxu0 0
      %9004 = vmatmul.mubr.bf16.gmra.mxu0 %v8881
      %v9005 = vpop.f32.mrf.mxu0
      %v9006 = vadd.f32 0.0, %v9005
      %v9007 = vpop.f32.mrf.mxu0
      %v9008 = vpop.f32.mrf.mxu0
      %v9009 = vadd.f32 0.0, %v9008
      %v9010 = vpop.f32.mrf.mxu0
      %9011 = vdwg.mxu0
      %v9012 = vadd.f32 %v8855, %v8982
      %v9013 = vadd.f32 %v8856, %v8985
      %v9014 = vadd.f32 %v8857, %v8990
      %v9015 = vadd.f32 %v8858, %v8993
      %v9016 = vadd.f32 %v8859, %v8998
      %v9017 = vadd.f32 %v8860, %v9001
      %v9018 = vadd.f32 %v8861, %v9006
      %v9019 = vadd.f32 %v8862, %v9009
      %s9020 = scalar_lea.vmem %s4054, 1 [#allocation3]
      %v9021 = vld [vmem:[%s9020] ss:$2 sm:$0xff]
      %s9022 = scalar_lea.vmem %s4054, 49 [#allocation3]
      %v9023 = vld [vmem:[%s9022] ss:$2 sm:$0xff]
      %s9024 = scalar_lea.vmem %s4054, 97 [#allocation3]
      %v9025 = vld [vmem:[%s9024] ss:$2 sm:$0xff]
      %s9026 = scalar_lea.vmem %s4054, 145 [#allocation3]
      %v9027 = vld [vmem:[%s9026] ss:$2 sm:$0xff]
      %s9028 = scalar_lea.vmem %s4054, 193 [#allocation3]
      %v9029 = vld [vmem:[%s9028] ss:$2 sm:$0xff]
      %s9030 = scalar_lea.vmem %s4054, 241 [#allocation3]
      %v9031 = vld [vmem:[%s9030] ss:$2 sm:$0xff]
      %s9032 = scalar_lea.vmem %s4054, 289 [#allocation3]
      %v9033 = vld [vmem:[%s9032] ss:$2 sm:$0xff]
      %s9034 = scalar_lea.vmem %s4054, 337 [#allocation3]
      %v9035 = vld [vmem:[%s9034] ss:$2 sm:$0xff]
      %v9036 = vpack.c.bf16 %v9023, %v9021
      %v9037 = vpack.c.bf16 %v9027, %v9025
      %v9038 = vpack.c.bf16 %v9031, %v9029
      %v9039 = vpack.c.bf16 %v9035, %v9033
      %s9040 = scalar_lea.vmem %s7, 448
      %v9041 = vld [vmem:[%s9040] sm:$0xf]
      %v9042 = vld [vmem:[%s9040 + $0x4] sm:$0xf]
      %v9043 = vld [vmem:[%s9040 + $0x8] sm:$0xf]
      %v9044 = vld [vmem:[%s9040 + $0xc] sm:$0xf]
      %v9045 = vld [vmem:[%s9040 + $0x10] sm:$0xf]
      %v9046 = vld [vmem:[%s9040 + $0x14] sm:$0xf]
      %v9047 = vld [vmem:[%s9040 + $0x18] sm:$0xf]
      %v9048 = vld [vmem:[%s9040 + $0x1c] sm:$0xf]
      %v9049 = vld [vmem:[%s9040 + $0x20] sm:$0xf]
      %v9050 = vld [vmem:[%s9040 + $0x24] sm:$0xf]
      %v9051 = vld [vmem:[%s9040 + $0x28] sm:$0xf]
      %v9052 = vld [vmem:[%s9040 + $0x2c] sm:$0xf]
      %v9053 = vld [vmem:[%s9040 + $0x30] sm:$0xf]
      %v9054 = vld [vmem:[%s9040 + $0x34] sm:$0xf]
      %v9055 = vld [vmem:[%s9040 + $0x38] sm:$0xf]
      %v9056 = vld [vmem:[%s9040 + $0x3c] sm:$0xf]
      %v9073 = vunpack.c.l.b16 %v9041
      %v9074 = vunpack.c.l.b16 %v9042
      %v9075 = vunpack.c.l.b16 %v9043
      %v9076 = vunpack.c.l.b16 %v9044
      %v9077 = vunpack.c.l.b16 %v9045
      %v9078 = vunpack.c.l.b16 %v9046
      %v9079 = vunpack.c.l.b16 %v9047
      %v9080 = vunpack.c.l.b16 %v9048
      %v9081 = vunpack.c.l.b16 %v9049
      %v9082 = vunpack.c.l.b16 %v9050
      %v9083 = vunpack.c.l.b16 %v9051
      %v9084 = vunpack.c.l.b16 %v9052
      %v9085 = vunpack.c.l.b16 %v9053
      %v9086 = vunpack.c.l.b16 %v9054
      %v9087 = vunpack.c.l.b16 %v9055
      %v9088 = vunpack.c.l.b16 %v9056
      %v9089 = vpack.c.b16 %v9074, %v9073
      %v9090 = vpack.c.b16 %v9076, %v9075
      %v9091 = vpack.c.b16 %v9078, %v9077
      %v9092 = vpack.c.b16 %v9080, %v9079
      %v9093 = vpack.c.b16 %v9082, %v9081
      %v9094 = vpack.c.b16 %v9084, %v9083
      %v9095 = vpack.c.b16 %v9086, %v9085
      %v9096 = vpack.c.b16 %v9088, %v9087
      %9105 = vmatprep.subr.bf16.mxu0 0
      %9106 = vmatpush1.bf16.msra.mxu0 %v9096
      %9107 = vmatprep.subr.bf16.mxu0 0
      %9108 = vmatpush1.bf16.msra.mxu0 %v9095
      %9109 = vmatprep.subr.bf16.mxu0 0
      %9110 = vmatpush1.bf16.msra.mxu0 %v9094
      %9111 = vmatprep.subr.bf16.mxu0 0
      %9112 = vmatpush1.bf16.msra.mxu0 %v9093
      %9113 = vmatprep.subr.bf16.mxu0 0
      %9114 = vmatpush1.bf16.msra.mxu0 %v9092
      %9115 = vmatprep.subr.bf16.mxu0 0
      %9116 = vmatpush1.bf16.msra.mxu0 %v9091
      %9117 = vmatprep.subr.bf16.mxu0 0
      %9118 = vmatpush1.bf16.msra.mxu0 %v9090
      %9119 = vmatprep.subr.bf16.mxu0 0
      %9120 = vmatpush1.bf16.msra.mxu0 %v9089
      %9121 = vmatprep.subr.bf16.mxu0 0
      %9122 = vmatpush2.bf16.msra.mxu0 0
      %9123 = vmatprep.subr.bf16.mxu0 0
      %9124 = vmatpush2.bf16.msra.mxu0 0
      %9125 = vmatprep.subr.bf16.mxu0 0
      %9126 = vmatpush2.bf16.msra.mxu0 0
      %9127 = vmatprep.subr.bf16.mxu0 0
      %9128 = vmatpush2.bf16.msra.mxu0 0
      %9129 = vmatprep.subr.bf16.mxu0 0
      %9130 = vmatpush2.bf16.msra.mxu0 0
      %9131 = vmatprep.subr.bf16.mxu0 0
      %9132 = vmatpush2.bf16.msra.mxu0 0
      %9133 = vmatprep.subr.bf16.mxu0 0
      %9134 = vmatpush2.bf16.msra.mxu0 0
      %9135 = vmatprep.subr.bf16.mxu0 0
      %9136 = vmatpush2.bf16.msra.mxu0 0
      %9137 = vmatprep.mubr.bf16.mxu0 0
      %9138 = vmatmul.mubr.bf16.gmra.mxu0 %v9036
      %v9139 = vpop.f32.mrf.mxu0
      %v9140 = vadd.f32 0.0, %v9139
      %v9141 = vpop.f32.mrf.mxu0
      %v9142 = vpop.f32.mrf.mxu0
      %v9143 = vadd.f32 0.0, %v9142
      %v9144 = vpop.f32.mrf.mxu0
      %9145 = vmatprep.mubr.bf16.mxu0 0
      %9146 = vmatmul.mubr.bf16.gmra.mxu0 %v9037
      %v9147 = vpop.f32.mrf.mxu0
      %v9148 = vadd.f32 0.0, %v9147
      %v9149 = vpop.f32.mrf.mxu0
      %v9150 = vpop.f32.mrf.mxu0
      %v9151 = vadd.f32 0.0, %v9150
      %v9152 = vpop.f32.mrf.mxu0
      %9153 = vmatprep.mubr.bf16.mxu0 0
      %9154 = vmatmul.mubr.bf16.gmra.mxu0 %v9038
      %v9155 = vpop.f32.mrf.mxu0
      %v9156 = vadd.f32 0.0, %v9155
      %v9157 = vpop.f32.mrf.mxu0
      %v9158 = vpop.f32.mrf.mxu0
      %v9159 = vadd.f32 0.0, %v9158
      %v9160 = vpop.f32.mrf.mxu0
      %9161 = vmatprep.mubr.bf16.mxu0 0
      %9162 = vmatmul.mubr.bf16.gmra.mxu0 %v9039
      %v9163 = vpop.f32.mrf.mxu0
      %v9164 = vadd.f32 0.0, %v9163
      %v9165 = vpop.f32.mrf.mxu0
      %v9166 = vpop.f32.mrf.mxu0
      %v9167 = vadd.f32 0.0, %v9166
      %v9168 = vpop.f32.mrf.mxu0
      %9169 = vdwg.mxu0
      %v9170 = vadd.f32 %v9012, %v9140
      %v9171 = vadd.f32 %v9013, %v9143
      %v9172 = vadd.f32 %v9014, %v9148
      %v9173 = vadd.f32 %v9015, %v9151
      %v9174 = vadd.f32 %v9016, %v9156
      %v9175 = vadd.f32 %v9017, %v9159
      %v9176 = vadd.f32 %v9018, %v9164
      %v9177 = vadd.f32 %v9019, %v9167
      %s9178 = scalar_lea.vmem %s4054, 2 [#allocation3]
      %v9179 = vld [vmem:[%s9178] ss:$2 sm:$0xff]
      %s9180 = scalar_lea.vmem %s4054, 50 [#allocation3]
      %v9181 = vld [vmem:[%s9180] ss:$2 sm:$0xff]
      %s9182 = scalar_lea.vmem %s4054, 98 [#allocation3]
      %v9183 = vld [vmem:[%s9182] ss:$2 sm:$0xff]
      %s9184 = scalar_lea.vmem %s4054, 146 [#allocation3]
      %v9185 = vld [vmem:[%s9184] ss:$2 sm:$0xff]
      %s9186 = scalar_lea.vmem %s4054, 194 [#allocation3]
      %v9187 = vld [vmem:[%s9186] ss:$2 sm:$0xff]
      %s9188 = scalar_lea.vmem %s4054, 242 [#allocation3]
      %v9189 = vld [vmem:[%s9188] ss:$2 sm:$0xff]
      %s9190 = scalar_lea.vmem %s4054, 290 [#allocation3]
      %v9191 = vld [vmem:[%s9190] ss:$2 sm:$0xff]
      %s9192 = scalar_lea.vmem %s4054, 338 [#allocation3]
      %v9193 = vld [vmem:[%s9192] ss:$2 sm:$0xff]
      %v9194 = vpack.c.bf16 %v9181, %v9179
      %v9195 = vpack.c.bf16 %v9185, %v9183
      %v9196 = vpack.c.bf16 %v9189, %v9187
      %v9197 = vpack.c.bf16 %v9193, %v9191
      %s9198 = scalar_lea.vmem %s7, 512
      %v9199 = vld [vmem:[%s9198] sm:$0xf]
      %v9200 = vld [vmem:[%s9198 + $0x4] sm:$0xf]
      %v9201 = vld [vmem:[%s9198 + $0x8] sm:$0xf]
      %v9202 = vld [vmem:[%s9198 + $0xc] sm:$0xf]
      %v9203 = vld [vmem:[%s9198 + $0x10] sm:$0xf]
      %v9204 = vld [vmem:[%s9198 + $0x14] sm:$0xf]
      %v9205 = vld [vmem:[%s9198 + $0x18] sm:$0xf]
      %v9206 = vld [vmem:[%s9198 + $0x1c] sm:$0xf]
      %v9207 = vld [vmem:[%s9198 + $0x20] sm:$0xf]
      %v9208 = vld [vmem:[%s9198 + $0x24] sm:$0xf]
      %v9209 = vld [vmem:[%s9198 + $0x28] sm:$0xf]
      %v9210 = vld [vmem:[%s9198 + $0x2c] sm:$0xf]
      %v9211 = vld [vmem:[%s9198 + $0x30] sm:$0xf]
      %v9212 = vld [vmem:[%s9198 + $0x34] sm:$0xf]
      %v9213 = vld [vmem:[%s9198 + $0x38] sm:$0xf]
      %v9214 = vld [vmem:[%s9198 + $0x3c] sm:$0xf]
      %v9231 = vunpack.c.l.b16 %v9199
      %v9232 = vunpack.c.l.b16 %v9200
      %v9233 = vunpack.c.l.b16 %v9201
      %v9234 = vunpack.c.l.b16 %v9202
      %v9235 = vunpack.c.l.b16 %v9203
      %v9236 = vunpack.c.l.b16 %v9204
      %v9237 = vunpack.c.l.b16 %v9205
      %v9238 = vunpack.c.l.b16 %v9206
      %v9239 = vunpack.c.l.b16 %v9207
      %v9240 = vunpack.c.l.b16 %v9208
      %v9241 = vunpack.c.l.b16 %v9209
      %v9242 = vunpack.c.l.b16 %v9210
      %v9243 = vunpack.c.l.b16 %v9211
      %v9244 = vunpack.c.l.b16 %v9212
      %v9245 = vunpack.c.l.b16 %v9213
      %v9246 = vunpack.c.l.b16 %v9214
      %v9247 = vpack.c.b16 %v9232, %v9231
      %v9248 = vpack.c.b16 %v9234, %v9233
      %v9249 = vpack.c.b16 %v9236, %v9235
      %v9250 = vpack.c.b16 %v9238, %v9237
      %v9251 = vpack.c.b16 %v9240, %v9239
      %v9252 = vpack.c.b16 %v9242, %v9241
      %v9253 = vpack.c.b16 %v9244, %v9243
      %v9254 = vpack.c.b16 %v9246, %v9245
      %9263 = vmatprep.subr.bf16.mxu0 0
      %9264 = vmatpush1.bf16.msra.mxu0 %v9254
      %9265 = vmatprep.subr.bf16.mxu0 0
      %9266 = vmatpush1.bf16.msra.mxu0 %v9253
      %9267 = vmatprep.subr.bf16.mxu0 0
      %9268 = vmatpush1.bf16.msra.mxu0 %v9252
      %9269 = vmatprep.subr.bf16.mxu0 0
      %9270 = vmatpush1.bf16.msra.mxu0 %v9251
      %9271 = vmatprep.subr.bf16.mxu0 0
      %9272 = vmatpush1.bf16.msra.mxu0 %v9250
      %9273 = vmatprep.subr.bf16.mxu0 0
      %9274 = vmatpush1.bf16.msra.mxu0 %v9249
      %9275 = vmatprep.subr.bf16.mxu0 0
      %9276 = vmatpush1.bf16.msra.mxu0 %v9248
      %9277 = vmatprep.subr.bf16.mxu0 0
      %9278 = vmatpush1.bf16.msra.mxu0 %v9247
      %9279 = vmatprep.subr.bf16.mxu0 0
      %9280 = vmatpush2.bf16.msra.mxu0 0
      %9281 = vmatprep.subr.bf16.mxu0 0
      %9282 = vmatpush2.bf16.msra.mxu0 0
      %9283 = vmatprep.subr.bf16.mxu0 0
      %9284 = vmatpush2.bf16.msra.mxu0 0
      %9285 = vmatprep.subr.bf16.mxu0 0
      %9286 = vmatpush2.bf16.msra.mxu0 0
      %9287 = vmatprep.subr.bf16.mxu0 0
      %9288 = vmatpush2.bf16.msra.mxu0 0
      %9289 = vmatprep.subr.bf16.mxu0 0
      %9290 = vmatpush2.bf16.msra.mxu0 0
      %9291 = vmatprep.subr.bf16.mxu0 0
      %9292 = vmatpush2.bf16.msra.mxu0 0
      %9293 = vmatprep.subr.bf16.mxu0 0
      %9294 = vmatpush2.bf16.msra.mxu0 0
      %9295 = vmatprep.mubr.bf16.mxu0 0
      %9296 = vmatmul.mubr.bf16.gmra.mxu0 %v9194
      %v9297 = vpop.f32.mrf.mxu0
      %v9298 = vadd.f32 0.0, %v9297
      %v9299 = vpop.f32.mrf.mxu0
      %v9300 = vpop.f32.mrf.mxu0
      %v9301 = vadd.f32 0.0, %v9300
      %v9302 = vpop.f32.mrf.mxu0
      %9303 = vmatprep.mubr.bf16.mxu0 0
      %9304 = vmatmul.mubr.bf16.gmra.mxu0 %v9195
      %v9305 = vpop.f32.mrf.mxu0
      %v9306 = vadd.f32 0.0, %v9305
      %v9307 = vpop.f32.mrf.mxu0
      %v9308 = vpop.f32.mrf.mxu0
      %v9309 = vadd.f32 0.0, %v9308
      %v9310 = vpop.f32.mrf.mxu0
      %9311 = vmatprep.mubr.bf16.mxu0 0
      %9312 = vmatmul.mubr.bf16.gmra.mxu0 %v9196
      %v9313 = vpop.f32.mrf.mxu0
      %v9314 = vadd.f32 0.0, %v9313
      %v9315 = vpop.f32.mrf.mxu0
      %v9316 = vpop.f32.mrf.mxu0
      %v9317 = vadd.f32 0.0, %v9316
      %v9318 = vpop.f32.mrf.mxu0
      %9319 = vmatprep.mubr.bf16.mxu0 0
      %9320 = vmatmul.mubr.bf16.gmra.mxu0 %v9197
      %v9321 = vpop.f32.mrf.mxu0
      %v9322 = vadd.f32 0.0, %v9321
      %v9323 = vpop.f32.mrf.mxu0
      %v9324 = vpop.f32.mrf.mxu0
      %v9325 = vadd.f32 0.0, %v9324
      %v9326 = vpop.f32.mrf.mxu0
      %9327 = vdwg.mxu0
      %v9328 = vadd.f32 %v9170, %v9298
      %v9329 = vadd.f32 %v9171, %v9301
      %v9330 = vadd.f32 %v9172, %v9306
      %v9331 = vadd.f32 %v9173, %v9309
      %v9332 = vadd.f32 %v9174, %v9314
      %v9333 = vadd.f32 %v9175, %v9317
      %v9334 = vadd.f32 %v9176, %v9322
      %v9335 = vadd.f32 %v9177, %v9325
      %v9336 = vld [vmem:[%s8] sm:$0x1]
      %v9338 = vlaneseq
      %v9339 = vshrl.u32 %v9338, 7
      %v9340 = vsub.s32 0, %v9339
      %v9341 = vrot.slane %v9336, %v9340
      %v9343 = vadd.f32 %v9328, %v9341
      %v9344 = vadd.f32 %v9329, %v9341
      %v9345 = vadd.f32 %v9330, %v9341
      %v9346 = vadd.f32 %v9331, %v9341
      %v9347 = vadd.f32 %v9332, %v9341
      %v9348 = vadd.f32 %v9333, %v9341
      %v9349 = vadd.f32 %v9334, %v9341
      %v9350 = vadd.f32 %v9335, %v9341
      %v9351 = vmax.f32 %v9343, 0.0
      %v9352 = vmax.f32 %v9344, 0.0
      %v9353 = vmax.f32 %v9345, 0.0
      %v9354 = vmax.f32 %v9346, 0.0
      %v9355 = vmax.f32 %v9347, 0.0
      %v9356 = vmax.f32 %v9348, 0.0
      %v9357 = vmax.f32 %v9349, 0.0
      %v9358 = vmax.f32 %v9350, 0.0
      %s9359 = scalar_lea.vmem [#allocation5], 16
      %9360 = vst [vmem:[%s9359 + $0x1] sm:$0xff] %v9351
      %9361 = vst [vmem:[%s9359 + $0x11] sm:$0xff] %v9352
      %9362 = vst [vmem:[%s9359 + $0x21] sm:$0xff] %v9353
      %9363 = vst [vmem:[%s9359 + $0x31] sm:$0xff] %v9354
      %9364 = vst [vmem:[%s9359 + $0x41] sm:$0xff] %v9355
      %9365 = vst [vmem:[%s9359 + $0x51] sm:$0xff] %v9356
      %9366 = vst [vmem:[%s9359 + $0x61] sm:$0xff] %v9357
      %9367 = vst [vmem:[%s9359 + $0x71] sm:$0xff] %v9358
      %v9368 = vld [vmem:[#allocation5] sm:$0xff]
      %v9369 = vld [vmem:[#allocation5 + $0x10] sm:$0xff]
      %v9370 = vld [vmem:[#allocation5 + $0x20] sm:$0xff]
      %v9371 = vld [vmem:[#allocation5 + $0x30] sm:$0xff]
      %v9372 = vld [vmem:[#allocation5 + $0x40] sm:$0xff]
      %v9373 = vld [vmem:[#allocation5 + $0x50] sm:$0xff]
      %v9374 = vld [vmem:[#allocation5 + $0x60] sm:$0xff]
      %v9375 = vld [vmem:[#allocation5 + $0x70] sm:$0xff]
      %v9376 = vpack.c.bf16 %v9369, %v9368
      %v9377 = vpack.c.bf16 %v9371, %v9370
      %v9378 = vpack.c.bf16 %v9373, %v9372
      %v9379 = vpack.c.bf16 %v9375, %v9374
      %v9380 = vld [vmem:[%s9] sm:$0xf]
      %v9381 = vld [vmem:[%s9 + $0x4] sm:$0xf]
      %v9382 = vld [vmem:[%s9 + $0x8] sm:$0xf]
      %v9383 = vld [vmem:[%s9 + $0xc] sm:$0xf]
      %v9384 = vld [vmem:[%s9 + $0x10] sm:$0xf]
      %v9385 = vld [vmem:[%s9 + $0x14] sm:$0xf]
      %v9386 = vld [vmem:[%s9 + $0x18] sm:$0xf]
      %v9387 = vld [vmem:[%s9 + $0x1c] sm:$0xf]
      %v9388 = vld [vmem:[%s9 + $0x20] sm:$0xf]
      %v9389 = vld [vmem:[%s9 + $0x24] sm:$0xf]
      %v9390 = vld [vmem:[%s9 + $0x28] sm:$0xf]
      %v9391 = vld [vmem:[%s9 + $0x2c] sm:$0xf]
      %v9392 = vld [vmem:[%s9 + $0x30] sm:$0xf]
      %v9393 = vld [vmem:[%s9 + $0x34] sm:$0xf]
      %v9394 = vld [vmem:[%s9 + $0x38] sm:$0xf]
      %v9395 = vld [vmem:[%s9 + $0x3c] sm:$0xf]
      %v9396 = vld [vmem:[#allocation5 + $0x1] sm:$0xff]
      %v9397 = vld [vmem:[#allocation5 + $0x11] sm:$0xff]
      %v9398 = vld [vmem:[#allocation5 + $0x21] sm:$0xff]
      %v9399 = vld [vmem:[#allocation5 + $0x31] sm:$0xff]
      %v9400 = vld [vmem:[#allocation5 + $0x41] sm:$0xff]
      %v9401 = vld [vmem:[#allocation5 + $0x51] sm:$0xff]
      %v9402 = vld [vmem:[#allocation5 + $0x61] sm:$0xff]
      %v9403 = vld [vmem:[#allocation5 + $0x71] sm:$0xff]
      %v9404 = vpack.c.bf16 %v9397, %v9396
      %v9405 = vpack.c.bf16 %v9399, %v9398
      %v9406 = vpack.c.bf16 %v9401, %v9400
      %v9407 = vpack.c.bf16 %v9403, %v9402
      %s9408 = scalar_lea.vmem %s9, 64
      %v9409 = vld [vmem:[%s9408] sm:$0xf]
      %v9410 = vld [vmem:[%s9408 + $0x4] sm:$0xf]
      %v9411 = vld [vmem:[%s9408 + $0x8] sm:$0xf]
      %v9412 = vld [vmem:[%s9408 + $0xc] sm:$0xf]
      %v9413 = vld [vmem:[%s9408 + $0x10] sm:$0xf]
      %v9414 = vld [vmem:[%s9408 + $0x14] sm:$0xf]
      %v9415 = vld [vmem:[%s9408 + $0x18] sm:$0xf]
      %v9416 = vld [vmem:[%s9408 + $0x1c] sm:$0xf]
      %v9417 = vld [vmem:[%s9408 + $0x20] sm:$0xf]
      %v9418 = vld [vmem:[%s9408 + $0x24] sm:$0xf]
      %v9419 = vld [vmem:[%s9408 + $0x28] sm:$0xf]
      %v9420 = vld [vmem:[%s9408 + $0x2c] sm:$0xf]
      %v9421 = vld [vmem:[%s9408 + $0x30] sm:$0xf]
      %v9422 = vld [vmem:[%s9408 + $0x34] sm:$0xf]
      %v9423 = vld [vmem:[%s9408 + $0x38] sm:$0xf]
      %v9424 = vld [vmem:[%s9408 + $0x3c] sm:$0xf]
      %v9441 = vunpack.c.l.b16 %v9409
      %v9442 = vunpack.c.l.b16 %v9410
      %v9443 = vunpack.c.l.b16 %v9411
      %v9444 = vunpack.c.l.b16 %v9412
      %v9445 = vunpack.c.l.b16 %v9413
      %v9446 = vunpack.c.l.b16 %v9414
      %v9447 = vunpack.c.l.b16 %v9415
      %v9448 = vunpack.c.l.b16 %v9416
      %v9449 = vunpack.c.l.b16 %v9417
      %v9450 = vunpack.c.l.b16 %v9418
      %v9451 = vunpack.c.l.b16 %v9419
      %v9452 = vunpack.c.l.b16 %v9420
      %v9453 = vunpack.c.l.b16 %v9421
      %v9454 = vunpack.c.l.b16 %v9422
      %v9455 = vunpack.c.l.b16 %v9423
      %v9456 = vunpack.c.l.b16 %v9424
      %v9457 = vpack.c.b16 %v9442, %v9441
      %v9458 = vpack.c.b16 %v9444, %v9443
      %v9459 = vpack.c.b16 %v9446, %v9445
      %v9460 = vpack.c.b16 %v9448, %v9447
      %v9461 = vpack.c.b16 %v9450, %v9449
      %v9462 = vpack.c.b16 %v9452, %v9451
      %v9463 = vpack.c.b16 %v9454, %v9453
      %v9464 = vpack.c.b16 %v9456, %v9455
      %9473 = vmatprep.subr.bf16.mxu0 0
      %9474 = vmatpush1.bf16.msra.mxu0 %v9464
      %9475 = vmatprep.subr.bf16.mxu0 0
      %9476 = vmatpush1.bf16.msra.mxu0 %v9463
      %9477 = vmatprep.subr.bf16.mxu0 0
      %9478 = vmatpush1.bf16.msra.mxu0 %v9462
      %9479 = vmatprep.subr.bf16.mxu0 0
      %9480 = vmatpush1.bf16.msra.mxu0 %v9461
      %9481 = vmatprep.subr.bf16.mxu0 0
      %9482 = vmatpush1.bf16.msra.mxu0 %v9460
      %9483 = vmatprep.subr.bf16.mxu0 0
      %9484 = vmatpush1.bf16.msra.mxu0 %v9459
      %9485 = vmatprep.subr.bf16.mxu0 0
      %9486 = vmatpush1.bf16.msra.mxu0 %v9458
      %9487 = vmatprep.subr.bf16.mxu0 0
      %9488 = vmatpush1.bf16.msra.mxu0 %v9457
      %9489 = vmatprep.subr.bf16.mxu0 0
      %9490 = vmatpush2.bf16.msra.mxu0 0
      %9491 = vmatprep.subr.bf16.mxu0 0
      %9492 = vmatpush2.bf16.msra.mxu0 0
      %9493 = vmatprep.subr.bf16.mxu0 0
      %9494 = vmatpush2.bf16.msra.mxu0 0
      %9495 = vmatprep.subr.bf16.mxu0 0
      %9496 = vmatpush2.bf16.msra.mxu0 0
      %9497 = vmatprep.subr.bf16.mxu0 0
      %9498 = vmatpush2.bf16.msra.mxu0 0
      %9499 = vmatprep.subr.bf16.mxu0 0
      %9500 = vmatpush2.bf16.msra.mxu0 0
      %9501 = vmatprep.subr.bf16.mxu0 0
      %9502 = vmatpush2.bf16.msra.mxu0 0
      %9503 = vmatprep.subr.bf16.mxu0 0
      %9504 = vmatpush2.bf16.msra.mxu0 0
      %9505 = vmatprep.mubr.bf16.mxu0 0
      %9506 = vmatmul.mubr.bf16.gmra.mxu0 %v9404
      %v9507 = vpop.f32.mrf.mxu0
      %v9508 = vadd.f32 0.0, %v9507
      %v9509 = vpop.f32.mrf.mxu0
      %v9510 = vpop.f32.mrf.mxu0
      %v9511 = vadd.f32 0.0, %v9510
      %v9512 = vpop.f32.mrf.mxu0
      %9513 = vmatprep.mubr.bf16.mxu0 0
      %9514 = vmatmul.mubr.bf16.gmra.mxu0 %v9405
      %v9515 = vpop.f32.mrf.mxu0
      %v9516 = vadd.f32 0.0, %v9515
      %v9517 = vpop.f32.mrf.mxu0
      %v9518 = vpop.f32.mrf.mxu0
      %v9519 = vadd.f32 0.0, %v9518
      %v9520 = vpop.f32.mrf.mxu0
      %9521 = vmatprep.mubr.bf16.mxu0 0
      %9522 = vmatmul.mubr.bf16.gmra.mxu0 %v9406
      %v9523 = vpop.f32.mrf.mxu0
      %v9524 = vadd.f32 0.0, %v9523
      %v9525 = vpop.f32.mrf.mxu0
      %v9526 = vpop.f32.mrf.mxu0
      %v9527 = vadd.f32 0.0, %v9526
      %v9528 = vpop.f32.mrf.mxu0
      %9529 = vmatprep.mubr.bf16.mxu0 0
      %9530 = vmatmul.mubr.bf16.gmra.mxu0 %v9407
      %v9531 = vpop.f32.mrf.mxu0
      %v9532 = vadd.f32 0.0, %v9531
      %v9533 = vpop.f32.mrf.mxu0
      %v9534 = vpop.f32.mrf.mxu0
      %v9535 = vadd.f32 0.0, %v9534
      %v9536 = vpop.f32.mrf.mxu0
      %9537 = vdwg.mxu0
      %v9554 = vunpack.c.l.b16 %v9380
      %v9555 = vunpack.c.l.b16 %v9381
      %v9556 = vunpack.c.l.b16 %v9382
      %v9557 = vunpack.c.l.b16 %v9383
      %v9558 = vunpack.c.l.b16 %v9384
      %v9559 = vunpack.c.l.b16 %v9385
      %v9560 = vunpack.c.l.b16 %v9386
      %v9561 = vunpack.c.l.b16 %v9387
      %v9562 = vunpack.c.l.b16 %v9388
      %v9563 = vunpack.c.l.b16 %v9389
      %v9564 = vunpack.c.l.b16 %v9390
      %v9565 = vunpack.c.l.b16 %v9391
      %v9566 = vunpack.c.l.b16 %v9392
      %v9567 = vunpack.c.l.b16 %v9393
      %v9568 = vunpack.c.l.b16 %v9394
      %v9569 = vunpack.c.l.b16 %v9395
      %v9570 = vpack.c.b16 %v9555, %v9554
      %v9571 = vpack.c.b16 %v9557, %v9556
      %v9572 = vpack.c.b16 %v9559, %v9558
      %v9573 = vpack.c.b16 %v9561, %v9560
      %v9574 = vpack.c.b16 %v9563, %v9562
      %v9575 = vpack.c.b16 %v9565, %v9564
      %v9576 = vpack.c.b16 %v9567, %v9566
      %v9577 = vpack.c.b16 %v9569, %v9568
      %9586 = vmatprep.subr.bf16.mxu0 0
      %9587 = vmatpush1.bf16.msra.mxu0 %v9577
      %9588 = vmatprep.subr.bf16.mxu0 0
      %9589 = vmatpush1.bf16.msra.mxu0 %v9576
      %9590 = vmatprep.subr.bf16.mxu0 0
      %9591 = vmatpush1.bf16.msra.mxu0 %v9575
      %9592 = vmatprep.subr.bf16.mxu0 0
      %9593 = vmatpush1.bf16.msra.mxu0 %v9574
      %9594 = vmatprep.subr.bf16.mxu0 0
      %9595 = vmatpush1.bf16.msra.mxu0 %v9573
      %9596 = vmatprep.subr.bf16.mxu0 0
      %9597 = vmatpush1.bf16.msra.mxu0 %v9572
      %9598 = vmatprep.subr.bf16.mxu0 0
      %9599 = vmatpush1.bf16.msra.mxu0 %v9571
      %9600 = vmatprep.subr.bf16.mxu0 0
      %9601 = vmatpush1.bf16.msra.mxu0 %v9570
      %9602 = vmatprep.subr.bf16.mxu0 0
      %9603 = vmatpush2.bf16.msra.mxu0 0
      %9604 = vmatprep.subr.bf16.mxu0 0
      %9605 = vmatpush2.bf16.msra.mxu0 0
      %9606 = vmatprep.subr.bf16.mxu0 0
      %9607 = vmatpush2.bf16.msra.mxu0 0
      %9608 = vmatprep.subr.bf16.mxu0 0
      %9609 = vmatpush2.bf16.msra.mxu0 0
      %9610 = vmatprep.subr.bf16.mxu0 0
      %9611 = vmatpush2.bf16.msra.mxu0 0
      %9612 = vmatprep.subr.bf16.mxu0 0
      %9613 = vmatpush2.bf16.msra.mxu0 0
      %9614 = vmatprep.subr.bf16.mxu0 0
      %9615 = vmatpush2.bf16.msra.mxu0 0
      %9616 = vmatprep.subr.bf16.mxu0 0
      %9617 = vmatpush2.bf16.msra.mxu0 0
      %9618 = vmatprep.mubr.bf16.mxu0 0
      %9619 = vmatmul.mubr.bf16.gmra.mxu0 %v9376
      %v9620 = vpop.f32.mrf.mxu0
      %v9621 = vadd.f32 %v9508, %v9620
      %v9622 = vpop.f32.mrf.mxu0
      %v9623 = vpop.f32.mrf.mxu0
      %v9624 = vadd.f32 %v9511, %v9623
      %v9625 = vpop.f32.mrf.mxu0
      %9626 = vmatprep.mubr.bf16.mxu0 0
      %9627 = vmatmul.mubr.bf16.gmra.mxu0 %v9377
      %v9628 = vpop.f32.mrf.mxu0
      %v9629 = vadd.f32 %v9516, %v9628
      %v9630 = vpop.f32.mrf.mxu0
      %v9631 = vpop.f32.mrf.mxu0
      %v9632 = vadd.f32 %v9519, %v9631
      %v9633 = vpop.f32.mrf.mxu0
      %9634 = vmatprep.mubr.bf16.mxu0 0
      %9635 = vmatmul.mubr.bf16.gmra.mxu0 %v9378
      %v9636 = vpop.f32.mrf.mxu0
      %v9637 = vadd.f32 %v9524, %v9636
      %v9638 = vpop.f32.mrf.mxu0
      %v9639 = vpop.f32.mrf.mxu0
      %v9640 = vadd.f32 %v9527, %v9639
      %v9641 = vpop.f32.mrf.mxu0
      %9642 = vmatprep.mubr.bf16.mxu0 0
      %9643 = vmatmul.mubr.bf16.gmra.mxu0 %v9379
      %v9644 = vpop.f32.mrf.mxu0
      %v9645 = vadd.f32 %v9532, %v9644
      %v9646 = vpop.f32.mrf.mxu0
      %v9647 = vpop.f32.mrf.mxu0
      %v9648 = vadd.f32 %v9535, %v9647
      %v9649 = vpop.f32.mrf.mxu0
      %9650 = vdwg.mxu0
      %v9651 = vld [vmem:[#allocation5 + $0x2] sm:$0xff]
      %v9652 = vld [vmem:[#allocation5 + $0x12] sm:$0xff]
      %v9653 = vld [vmem:[#allocation5 + $0x22] sm:$0xff]
      %v9654 = vld [vmem:[#allocation5 + $0x32] sm:$0xff]
      %v9655 = vld [vmem:[#allocation5 + $0x42] sm:$0xff]
      %v9656 = vld [vmem:[#allocation5 + $0x52] sm:$0xff]
      %v9657 = vld [vmem:[#allocation5 + $0x62] sm:$0xff]
      %v9658 = vld [vmem:[#allocation5 + $0x72] sm:$0xff]
      %v9659 = vpack.c.bf16 %v9652, %v9651
      %v9660 = vpack.c.bf16 %v9654, %v9653
      %v9661 = vpack.c.bf16 %v9656, %v9655
      %v9662 = vpack.c.bf16 %v9658, %v9657
      %s9663 = scalar_lea.vmem %s9, 128
      %v9664 = vld [vmem:[%s9663] sm:$0xf]
      %v9665 = vld [vmem:[%s9663 + $0x4] sm:$0xf]
      %v9666 = vld [vmem:[%s9663 + $0x8] sm:$0xf]
      %v9667 = vld [vmem:[%s9663 + $0xc] sm:$0xf]
      %v9668 = vld [vmem:[%s9663 + $0x10] sm:$0xf]
      %v9669 = vld [vmem:[%s9663 + $0x14] sm:$0xf]
      %v9670 = vld [vmem:[%s9663 + $0x18] sm:$0xf]
      %v9671 = vld [vmem:[%s9663 + $0x1c] sm:$0xf]
      %v9672 = vld [vmem:[%s9663 + $0x20] sm:$0xf]
      %v9673 = vld [vmem:[%s9663 + $0x24] sm:$0xf]
      %v9674 = vld [vmem:[%s9663 + $0x28] sm:$0xf]
      %v9675 = vld [vmem:[%s9663 + $0x2c] sm:$0xf]
      %v9676 = vld [vmem:[%s9663 + $0x30] sm:$0xf]
      %v9677 = vld [vmem:[%s9663 + $0x34] sm:$0xf]
      %v9678 = vld [vmem:[%s9663 + $0x38] sm:$0xf]
      %v9679 = vld [vmem:[%s9663 + $0x3c] sm:$0xf]
      %v9696 = vunpack.c.l.b16 %v9664
      %v9697 = vunpack.c.l.b16 %v9665
      %v9698 = vunpack.c.l.b16 %v9666
      %v9699 = vunpack.c.l.b16 %v9667
      %v9700 = vunpack.c.l.b16 %v9668
      %v9701 = vunpack.c.l.b16 %v9669
      %v9702 = vunpack.c.l.b16 %v9670
      %v9703 = vunpack.c.l.b16 %v9671
      %v9704 = vunpack.c.l.b16 %v9672
      %v9705 = vunpack.c.l.b16 %v9673
      %v9706 = vunpack.c.l.b16 %v9674
      %v9707 = vunpack.c.l.b16 %v9675
      %v9708 = vunpack.c.l.b16 %v9676
      %v9709 = vunpack.c.l.b16 %v9677
      %v9710 = vunpack.c.l.b16 %v9678
      %v9711 = vunpack.c.l.b16 %v9679
      %v9712 = vpack.c.b16 %v9697, %v9696
      %v9713 = vpack.c.b16 %v9699, %v9698
      %v9714 = vpack.c.b16 %v9701, %v9700
      %v9715 = vpack.c.b16 %v9703, %v9702
      %v9716 = vpack.c.b16 %v9705, %v9704
      %v9717 = vpack.c.b16 %v9707, %v9706
      %v9718 = vpack.c.b16 %v9709, %v9708
      %v9719 = vpack.c.b16 %v9711, %v9710
      %9728 = vmatprep.subr.bf16.mxu0 0
      %9729 = vmatpush1.bf16.msra.mxu0 %v9719
      %9730 = vmatprep.subr.bf16.mxu0 0
      %9731 = vmatpush1.bf16.msra.mxu0 %v9718
      %9732 = vmatprep.subr.bf16.mxu0 0
      %9733 = vmatpush1.bf16.msra.mxu0 %v9717
      %9734 = vmatprep.subr.bf16.mxu0 0
      %9735 = vmatpush1.bf16.msra.mxu0 %v9716
      %9736 = vmatprep.subr.bf16.mxu0 0
      %9737 = vmatpush1.bf16.msra.mxu0 %v9715
      %9738 = vmatprep.subr.bf16.mxu0 0
      %9739 = vmatpush1.bf16.msra.mxu0 %v9714
      %9740 = vmatprep.subr.bf16.mxu0 0
      %9741 = vmatpush1.bf16.msra.mxu0 %v9713
      %9742 = vmatprep.subr.bf16.mxu0 0
      %9743 = vmatpush1.bf16.msra.mxu0 %v9712
      %9744 = vmatprep.subr.bf16.mxu0 0
      %9745 = vmatpush2.bf16.msra.mxu0 0
      %9746 = vmatprep.subr.bf16.mxu0 0
      %9747 = vmatpush2.bf16.msra.mxu0 0
      %9748 = vmatprep.subr.bf16.mxu0 0
      %9749 = vmatpush2.bf16.msra.mxu0 0
      %9750 = vmatprep.subr.bf16.mxu0 0
      %9751 = vmatpush2.bf16.msra.mxu0 0
      %9752 = vmatprep.subr.bf16.mxu0 0
      %9753 = vmatpush2.bf16.msra.mxu0 0
      %9754 = vmatprep.subr.bf16.mxu0 0
      %9755 = vmatpush2.bf16.msra.mxu0 0
      %9756 = vmatprep.subr.bf16.mxu0 0
      %9757 = vmatpush2.bf16.msra.mxu0 0
      %9758 = vmatprep.subr.bf16.mxu0 0
      %9759 = vmatpush2.bf16.msra.mxu0 0
      %9760 = vmatprep.mubr.bf16.mxu0 0
      %9761 = vmatmul.mubr.bf16.gmra.mxu0 %v9659
      %v9762 = vpop.f32.mrf.mxu0
      %v9763 = vadd.f32 0.0, %v9762
      %v9764 = vpop.f32.mrf.mxu0
      %v9765 = vpop.f32.mrf.mxu0
      %v9766 = vadd.f32 0.0, %v9765
      %v9767 = vpop.f32.mrf.mxu0
      %9768 = vmatprep.mubr.bf16.mxu0 0
      %9769 = vmatmul.mubr.bf16.gmra.mxu0 %v9660
      %v9770 = vpop.f32.mrf.mxu0
      %v9771 = vadd.f32 0.0, %v9770
      %v9772 = vpop.f32.mrf.mxu0
      %v9773 = vpop.f32.mrf.mxu0
      %v9774 = vadd.f32 0.0, %v9773
      %v9775 = vpop.f32.mrf.mxu0
      %9776 = vmatprep.mubr.bf16.mxu0 0
      %9777 = vmatmul.mubr.bf16.gmra.mxu0 %v9661
      %v9778 = vpop.f32.mrf.mxu0
      %v9779 = vadd.f32 0.0, %v9778
      %v9780 = vpop.f32.mrf.mxu0
      %v9781 = vpop.f32.mrf.mxu0
      %v9782 = vadd.f32 0.0, %v9781
      %v9783 = vpop.f32.mrf.mxu0
      %9784 = vmatprep.mubr.bf16.mxu0 0
      %9785 = vmatmul.mubr.bf16.gmra.mxu0 %v9662
      %v9786 = vpop.f32.mrf.mxu0
      %v9787 = vadd.f32 0.0, %v9786
      %v9788 = vpop.f32.mrf.mxu0
      %v9789 = vpop.f32.mrf.mxu0
      %v9790 = vadd.f32 0.0, %v9789
      %v9791 = vpop.f32.mrf.mxu0
      %9792 = vdwg.mxu0
      %v9793 = vadd.f32 %v9621, %v9763
      %v9794 = vadd.f32 %v9624, %v9766
      %v9795 = vadd.f32 %v9629, %v9771
      %v9796 = vadd.f32 %v9632, %v9774
      %v9797 = vadd.f32 %v9637, %v9779
      %v9798 = vadd.f32 %v9640, %v9782
      %v9799 = vadd.f32 %v9645, %v9787
      %v9800 = vadd.f32 %v9648, %v9790
      %v9801 = vld [vmem:[%s9359] sm:$0xff]
      %v9802 = vld [vmem:[%s9359 + $0x10] sm:$0xff]
      %v9803 = vld [vmem:[%s9359 + $0x20] sm:$0xff]
      %v9804 = vld [vmem:[%s9359 + $0x30] sm:$0xff]
      %v9805 = vld [vmem:[%s9359 + $0x40] sm:$0xff]
      %v9806 = vld [vmem:[%s9359 + $0x50] sm:$0xff]
      %v9807 = vld [vmem:[%s9359 + $0x60] sm:$0xff]
      %v9808 = vld [vmem:[%s9359 + $0x70] sm:$0xff]
      %v9809 = vpack.c.bf16 %v9802, %v9801
      %v9810 = vpack.c.bf16 %v9804, %v9803
      %v9811 = vpack.c.bf16 %v9806, %v9805
      %v9812 = vpack.c.bf16 %v9808, %v9807
      %s9813 = scalar_lea.vmem %s9, 192
      %v9814 = vld [vmem:[%s9813] sm:$0xf]
      %v9815 = vld [vmem:[%s9813 + $0x4] sm:$0xf]
      %v9816 = vld [vmem:[%s9813 + $0x8] sm:$0xf]
      %v9817 = vld [vmem:[%s9813 + $0xc] sm:$0xf]
      %v9818 = vld [vmem:[%s9813 + $0x10] sm:$0xf]
      %v9819 = vld [vmem:[%s9813 + $0x14] sm:$0xf]
      %v9820 = vld [vmem:[%s9813 + $0x18] sm:$0xf]
      %v9821 = vld [vmem:[%s9813 + $0x1c] sm:$0xf]
      %v9822 = vld [vmem:[%s9813 + $0x20] sm:$0xf]
      %v9823 = vld [vmem:[%s9813 + $0x24] sm:$0xf]
      %v9824 = vld [vmem:[%s9813 + $0x28] sm:$0xf]
      %v9825 = vld [vmem:[%s9813 + $0x2c] sm:$0xf]
      %v9826 = vld [vmem:[%s9813 + $0x30] sm:$0xf]
      %v9827 = vld [vmem:[%s9813 + $0x34] sm:$0xf]
      %v9828 = vld [vmem:[%s9813 + $0x38] sm:$0xf]
      %v9829 = vld [vmem:[%s9813 + $0x3c] sm:$0xf]
      %v9846 = vunpack.c.l.b16 %v9814
      %v9847 = vunpack.c.l.b16 %v9815
      %v9848 = vunpack.c.l.b16 %v9816
      %v9849 = vunpack.c.l.b16 %v9817
      %v9850 = vunpack.c.l.b16 %v9818
      %v9851 = vunpack.c.l.b16 %v9819
      %v9852 = vunpack.c.l.b16 %v9820
      %v9853 = vunpack.c.l.b16 %v9821
      %v9854 = vunpack.c.l.b16 %v9822
      %v9855 = vunpack.c.l.b16 %v9823
      %v9856 = vunpack.c.l.b16 %v9824
      %v9857 = vunpack.c.l.b16 %v9825
      %v9858 = vunpack.c.l.b16 %v9826
      %v9859 = vunpack.c.l.b16 %v9827
      %v9860 = vunpack.c.l.b16 %v9828
      %v9861 = vunpack.c.l.b16 %v9829
      %v9862 = vpack.c.b16 %v9847, %v9846
      %v9863 = vpack.c.b16 %v9849, %v9848
      %v9864 = vpack.c.b16 %v9851, %v9850
      %v9865 = vpack.c.b16 %v9853, %v9852
      %v9866 = vpack.c.b16 %v9855, %v9854
      %v9867 = vpack.c.b16 %v9857, %v9856
      %v9868 = vpack.c.b16 %v9859, %v9858
      %v9869 = vpack.c.b16 %v9861, %v9860
      %9878 = vmatprep.subr.bf16.mxu0 0
      %9879 = vmatpush1.bf16.msra.mxu0 %v9869
      %9880 = vmatprep.subr.bf16.mxu0 0
      %9881 = vmatpush1.bf16.msra.mxu0 %v9868
      %9882 = vmatprep.subr.bf16.mxu0 0
      %9883 = vmatpush1.bf16.msra.mxu0 %v9867
      %9884 = vmatprep.subr.bf16.mxu0 0
      %9885 = vmatpush1.bf16.msra.mxu0 %v9866
      %9886 = vmatprep.subr.bf16.mxu0 0
      %9887 = vmatpush1.bf16.msra.mxu0 %v9865
      %9888 = vmatprep.subr.bf16.mxu0 0
      %9889 = vmatpush1.bf16.msra.mxu0 %v9864
      %9890 = vmatprep.subr.bf16.mxu0 0
      %9891 = vmatpush1.bf16.msra.mxu0 %v9863
      %9892 = vmatprep.subr.bf16.mxu0 0
      %9893 = vmatpush1.bf16.msra.mxu0 %v9862
      %9894 = vmatprep.subr.bf16.mxu0 0
      %9895 = vmatpush2.bf16.msra.mxu0 0
      %9896 = vmatprep.subr.bf16.mxu0 0
      %9897 = vmatpush2.bf16.msra.mxu0 0
      %9898 = vmatprep.subr.bf16.mxu0 0
      %9899 = vmatpush2.bf16.msra.mxu0 0
      %9900 = vmatprep.subr.bf16.mxu0 0
      %9901 = vmatpush2.bf16.msra.mxu0 0
      %9902 = vmatprep.subr.bf16.mxu0 0
      %9903 = vmatpush2.bf16.msra.mxu0 0
      %9904 = vmatprep.subr.bf16.mxu0 0
      %9905 = vmatpush2.bf16.msra.mxu0 0
      %9906 = vmatprep.subr.bf16.mxu0 0
      %9907 = vmatpush2.bf16.msra.mxu0 0
      %9908 = vmatprep.subr.bf16.mxu0 0
      %9909 = vmatpush2.bf16.msra.mxu0 0
      %9910 = vmatprep.mubr.bf16.mxu0 0
      %9911 = vmatmul.mubr.bf16.gmra.mxu0 %v9809
      %v9912 = vpop.f32.mrf.mxu0
      %v9913 = vadd.f32 0.0, %v9912
      %v9914 = vpop.f32.mrf.mxu0
      %v9915 = vpop.f32.mrf.mxu0
      %v9916 = vadd.f32 0.0, %v9915
      %v9917 = vpop.f32.mrf.mxu0
      %9918 = vmatprep.mubr.bf16.mxu0 0
      %9919 = vmatmul.mubr.bf16.gmra.mxu0 %v9810
      %v9920 = vpop.f32.mrf.mxu0
      %v9921 = vadd.f32 0.0, %v9920
      %v9922 = vpop.f32.mrf.mxu0
      %v9923 = vpop.f32.mrf.mxu0
      %v9924 = vadd.f32 0.0, %v9923
      %v9925 = vpop.f32.mrf.mxu0
      %9926 = vmatprep.mubr.bf16.mxu0 0
      %9927 = vmatmul.mubr.bf16.gmra.mxu0 %v9811
      %v9928 = vpop.f32.mrf.mxu0
      %v9929 = vadd.f32 0.0, %v9928
      %v9930 = vpop.f32.mrf.mxu0
      %v9931 = vpop.f32.mrf.mxu0
      %v9932 = vadd.f32 0.0, %v9931
      %v9933 = vpop.f32.mrf.mxu0
      %9934 = vmatprep.mubr.bf16.mxu0 0
      %9935 = vmatmul.mubr.bf16.gmra.mxu0 %v9812
      %v9936 = vpop.f32.mrf.mxu0
      %v9937 = vadd.f32 0.0, %v9936
      %v9938 = vpop.f32.mrf.mxu0
      %v9939 = vpop.f32.mrf.mxu0
      %v9940 = vadd.f32 0.0, %v9939
      %v9941 = vpop.f32.mrf.mxu0
      %9942 = vdwg.mxu0
      %v9943 = vadd.f32 %v9793, %v9913
      %v9944 = vadd.f32 %v9794, %v9916
      %v9945 = vadd.f32 %v9795, %v9921
      %v9946 = vadd.f32 %v9796, %v9924
      %v9947 = vadd.f32 %v9797, %v9929
      %v9948 = vadd.f32 %v9798, %v9932
      %v9949 = vadd.f32 %v9799, %v9937
      %v9950 = vadd.f32 %v9800, %v9940
      %v9951 = vld [vmem:[%s9359 + $0x1] sm:$0xff]
      %v9952 = vld [vmem:[%s9359 + $0x11] sm:$0xff]
      %v9953 = vld [vmem:[%s9359 + $0x21] sm:$0xff]
      %v9954 = vld [vmem:[%s9359 + $0x31] sm:$0xff]
      %v9955 = vld [vmem:[%s9359 + $0x41] sm:$0xff]
      %v9956 = vld [vmem:[%s9359 + $0x51] sm:$0xff]
      %v9957 = vld [vmem:[%s9359 + $0x61] sm:$0xff]
      %v9958 = vld [vmem:[%s9359 + $0x71] sm:$0xff]
      %v9959 = vpack.c.bf16 %v9952, %v9951
      %v9960 = vpack.c.bf16 %v9954, %v9953
      %v9961 = vpack.c.bf16 %v9956, %v9955
      %v9962 = vpack.c.bf16 %v9958, %v9957
      %s9963 = scalar_lea.vmem %s9, 256
      %v9964 = vld [vmem:[%s9963] sm:$0xf]
      %v9965 = vld [vmem:[%s9963 + $0x4] sm:$0xf]
      %v9966 = vld [vmem:[%s9963 + $0x8] sm:$0xf]
      %v9967 = vld [vmem:[%s9963 + $0xc] sm:$0xf]
      %v9968 = vld [vmem:[%s9963 + $0x10] sm:$0xf]
      %v9969 = vld [vmem:[%s9963 + $0x14] sm:$0xf]
      %v9970 = vld [vmem:[%s9963 + $0x18] sm:$0xf]
      %v9971 = vld [vmem:[%s9963 + $0x1c] sm:$0xf]
      %v9972 = vld [vmem:[%s9963 + $0x20] sm:$0xf]
      %v9973 = vld [vmem:[%s9963 + $0x24] sm:$0xf]
      %v9974 = vld [vmem:[%s9963 + $0x28] sm:$0xf]
      %v9975 = vld [vmem:[%s9963 + $0x2c] sm:$0xf]
      %v9976 = vld [vmem:[%s9963 + $0x30] sm:$0xf]
      %v9977 = vld [vmem:[%s9963 + $0x34] sm:$0xf]
      %v9978 = vld [vmem:[%s9963 + $0x38] sm:$0xf]
      %v9979 = vld [vmem:[%s9963 + $0x3c] sm:$0xf]
      %v9996 = vunpack.c.l.b16 %v9964
      %v9997 = vunpack.c.l.b16 %v9965
      %v9998 = vunpack.c.l.b16 %v9966
      %v9999 = vunpack.c.l.b16 %v9967
      %v10000 = vunpack.c.l.b16 %v9968
      %v10001 = vunpack.c.l.b16 %v9969
      %v10002 = vunpack.c.l.b16 %v9970
      %v10003 = vunpack.c.l.b16 %v9971
      %v10004 = vunpack.c.l.b16 %v9972
      %v10005 = vunpack.c.l.b16 %v9973
      %v10006 = vunpack.c.l.b16 %v9974
      %v10007 = vunpack.c.l.b16 %v9975
      %v10008 = vunpack.c.l.b16 %v9976
      %v10009 = vunpack.c.l.b16 %v9977
      %v10010 = vunpack.c.l.b16 %v9978
      %v10011 = vunpack.c.l.b16 %v9979
      %v10012 = vpack.c.b16 %v9997, %v9996
      %v10013 = vpack.c.b16 %v9999, %v9998
      %v10014 = vpack.c.b16 %v10001, %v10000
      %v10015 = vpack.c.b16 %v10003, %v10002
      %v10016 = vpack.c.b16 %v10005, %v10004
      %v10017 = vpack.c.b16 %v10007, %v10006
      %v10018 = vpack.c.b16 %v10009, %v10008
      %v10019 = vpack.c.b16 %v10011, %v10010
      %10028 = vmatprep.subr.bf16.mxu0 0
      %10029 = vmatpush1.bf16.msra.mxu0 %v10019
      %10030 = vmatprep.subr.bf16.mxu0 0
      %10031 = vmatpush1.bf16.msra.mxu0 %v10018
      %10032 = vmatprep.subr.bf16.mxu0 0
      %10033 = vmatpush1.bf16.msra.mxu0 %v10017
      %10034 = vmatprep.subr.bf16.mxu0 0
      %10035 = vmatpush1.bf16.msra.mxu0 %v10016
      %10036 = vmatprep.subr.bf16.mxu0 0
      %10037 = vmatpush1.bf16.msra.mxu0 %v10015
      %10038 = vmatprep.subr.bf16.mxu0 0
      %10039 = vmatpush1.bf16.msra.mxu0 %v10014
      %10040 = vmatprep.subr.bf16.mxu0 0
      %10041 = vmatpush1.bf16.msra.mxu0 %v10013
      %10042 = vmatprep.subr.bf16.mxu0 0
      %10043 = vmatpush1.bf16.msra.mxu0 %v10012
      %10044 = vmatprep.subr.bf16.mxu0 0
      %10045 = vmatpush2.bf16.msra.mxu0 0
      %10046 = vmatprep.subr.bf16.mxu0 0
      %10047 = vmatpush2.bf16.msra.mxu0 0
      %10048 = vmatprep.subr.bf16.mxu0 0
      %10049 = vmatpush2.bf16.msra.mxu0 0
      %10050 = vmatprep.subr.bf16.mxu0 0
      %10051 = vmatpush2.bf16.msra.mxu0 0
      %10052 = vmatprep.subr.bf16.mxu0 0
      %10053 = vmatpush2.bf16.msra.mxu0 0
      %10054 = vmatprep.subr.bf16.mxu0 0
      %10055 = vmatpush2.bf16.msra.mxu0 0
      %10056 = vmatprep.subr.bf16.mxu0 0
      %10057 = vmatpush2.bf16.msra.mxu0 0
      %10058 = vmatprep.subr.bf16.mxu0 0
      %10059 = vmatpush2.bf16.msra.mxu0 0
      %10060 = vmatprep.mubr.bf16.mxu0 0
      %10061 = vmatmul.mubr.bf16.gmra.mxu0 %v9959
      %v10062 = vpop.f32.mrf.mxu0
      %v10063 = vadd.f32 0.0, %v10062
      %v10064 = vpop.f32.mrf.mxu0
      %v10065 = vpop.f32.mrf.mxu0
      %v10066 = vadd.f32 0.0, %v10065
      %v10067 = vpop.f32.mrf.mxu0
      %10068 = vmatprep.mubr.bf16.mxu0 0
      %10069 = vmatmul.mubr.bf16.gmra.mxu0 %v9960
      %v10070 = vpop.f32.mrf.mxu0
      %v10071 = vadd.f32 0.0, %v10070
      %v10072 = vpop.f32.mrf.mxu0
      %v10073 = vpop.f32.mrf.mxu0
      %v10074 = vadd.f32 0.0, %v10073
      %v10075 = vpop.f32.mrf.mxu0
      %10076 = vmatprep.mubr.bf16.mxu0 0
      %10077 = vmatmul.mubr.bf16.gmra.mxu0 %v9961
      %v10078 = vpop.f32.mrf.mxu0
      %v10079 = vadd.f32 0.0, %v10078
      %v10080 = vpop.f32.mrf.mxu0
      %v10081 = vpop.f32.mrf.mxu0
      %v10082 = vadd.f32 0.0, %v10081
      %v10083 = vpop.f32.mrf.mxu0
      %10084 = vmatprep.mubr.bf16.mxu0 0
      %10085 = vmatmul.mubr.bf16.gmra.mxu0 %v9962
      %v10086 = vpop.f32.mrf.mxu0
      %v10087 = vadd.f32 0.0, %v10086
      %v10088 = vpop.f32.mrf.mxu0
      %v10089 = vpop.f32.mrf.mxu0
      %v10090 = vadd.f32 0.0, %v10089
      %v10091 = vpop.f32.mrf.mxu0
      %10092 = vdwg.mxu0
      %v10093 = vadd.f32 %v9943, %v10063
      %v10094 = vadd.f32 %v9944, %v10066
      %v10095 = vadd.f32 %v9945, %v10071
      %v10096 = vadd.f32 %v9946, %v10074
      %v10097 = vadd.f32 %v9947, %v10079
      %v10098 = vadd.f32 %v9948, %v10082
      %v10099 = vadd.f32 %v9949, %v10087
      %v10100 = vadd.f32 %v9950, %v10090
      %v10101 = vld [vmem:[%s9359 + $0x2] sm:$0xff]
      %v10102 = vld [vmem:[%s9359 + $0x12] sm:$0xff]
      %v10103 = vld [vmem:[%s9359 + $0x22] sm:$0xff]
      %v10104 = vld [vmem:[%s9359 + $0x32] sm:$0xff]
      %v10105 = vld [vmem:[%s9359 + $0x42] sm:$0xff]
      %v10106 = vld [vmem:[%s9359 + $0x52] sm:$0xff]
      %v10107 = vld [vmem:[%s9359 + $0x62] sm:$0xff]
      %v10108 = vld [vmem:[%s9359 + $0x72] sm:$0xff]
      %v10109 = vpack.c.bf16 %v10102, %v10101
      %v10110 = vpack.c.bf16 %v10104, %v10103
      %v10111 = vpack.c.bf16 %v10106, %v10105
      %v10112 = vpack.c.bf16 %v10108, %v10107
      %s10113 = scalar_lea.vmem %s9, 320
      %v10114 = vld [vmem:[%s10113] sm:$0xf]
      %v10115 = vld [vmem:[%s10113 + $0x4] sm:$0xf]
      %v10116 = vld [vmem:[%s10113 + $0x8] sm:$0xf]
      %v10117 = vld [vmem:[%s10113 + $0xc] sm:$0xf]
      %v10118 = vld [vmem:[%s10113 + $0x10] sm:$0xf]
      %v10119 = vld [vmem:[%s10113 + $0x14] sm:$0xf]
      %v10120 = vld [vmem:[%s10113 + $0x18] sm:$0xf]
      %v10121 = vld [vmem:[%s10113 + $0x1c] sm:$0xf]
      %v10122 = vld [vmem:[%s10113 + $0x20] sm:$0xf]
      %v10123 = vld [vmem:[%s10113 + $0x24] sm:$0xf]
      %v10124 = vld [vmem:[%s10113 + $0x28] sm:$0xf]
      %v10125 = vld [vmem:[%s10113 + $0x2c] sm:$0xf]
      %v10126 = vld [vmem:[%s10113 + $0x30] sm:$0xf]
      %v10127 = vld [vmem:[%s10113 + $0x34] sm:$0xf]
      %v10128 = vld [vmem:[%s10113 + $0x38] sm:$0xf]
      %v10129 = vld [vmem:[%s10113 + $0x3c] sm:$0xf]
      %v10146 = vunpack.c.l.b16 %v10114
      %v10147 = vunpack.c.l.b16 %v10115
      %v10148 = vunpack.c.l.b16 %v10116
      %v10149 = vunpack.c.l.b16 %v10117
      %v10150 = vunpack.c.l.b16 %v10118
      %v10151 = vunpack.c.l.b16 %v10119
      %v10152 = vunpack.c.l.b16 %v10120
      %v10153 = vunpack.c.l.b16 %v10121
      %v10154 = vunpack.c.l.b16 %v10122
      %v10155 = vunpack.c.l.b16 %v10123
      %v10156 = vunpack.c.l.b16 %v10124
      %v10157 = vunpack.c.l.b16 %v10125
      %v10158 = vunpack.c.l.b16 %v10126
      %v10159 = vunpack.c.l.b16 %v10127
      %v10160 = vunpack.c.l.b16 %v10128
      %v10161 = vunpack.c.l.b16 %v10129
      %v10162 = vpack.c.b16 %v10147, %v10146
      %v10163 = vpack.c.b16 %v10149, %v10148
      %v10164 = vpack.c.b16 %v10151, %v10150
      %v10165 = vpack.c.b16 %v10153, %v10152
      %v10166 = vpack.c.b16 %v10155, %v10154
      %v10167 = vpack.c.b16 %v10157, %v10156
      %v10168 = vpack.c.b16 %v10159, %v10158
      %v10169 = vpack.c.b16 %v10161, %v10160
      %10178 = vmatprep.subr.bf16.mxu0 0
      %10179 = vmatpush1.bf16.msra.mxu0 %v10169
      %10180 = vmatprep.subr.bf16.mxu0 0
      %10181 = vmatpush1.bf16.msra.mxu0 %v10168
      %10182 = vmatprep.subr.bf16.mxu0 0
      %10183 = vmatpush1.bf16.msra.mxu0 %v10167
      %10184 = vmatprep.subr.bf16.mxu0 0
      %10185 = vmatpush1.bf16.msra.mxu0 %v10166
      %10186 = vmatprep.subr.bf16.mxu0 0
      %10187 = vmatpush1.bf16.msra.mxu0 %v10165
      %10188 = vmatprep.subr.bf16.mxu0 0
      %10189 = vmatpush1.bf16.msra.mxu0 %v10164
      %10190 = vmatprep.subr.bf16.mxu0 0
      %10191 = vmatpush1.bf16.msra.mxu0 %v10163
      %10192 = vmatprep.subr.bf16.mxu0 0
      %10193 = vmatpush1.bf16.msra.mxu0 %v10162
      %10194 = vmatprep.subr.bf16.mxu0 0
      %10195 = vmatpush2.bf16.msra.mxu0 0
      %10196 = vmatprep.subr.bf16.mxu0 0
      %10197 = vmatpush2.bf16.msra.mxu0 0
      %10198 = vmatprep.subr.bf16.mxu0 0
      %10199 = vmatpush2.bf16.msra.mxu0 0
      %10200 = vmatprep.subr.bf16.mxu0 0
      %10201 = vmatpush2.bf16.msra.mxu0 0
      %10202 = vmatprep.subr.bf16.mxu0 0
      %10203 = vmatpush2.bf16.msra.mxu0 0
      %10204 = vmatprep.subr.bf16.mxu0 0
      %10205 = vmatpush2.bf16.msra.mxu0 0
      %10206 = vmatprep.subr.bf16.mxu0 0
      %10207 = vmatpush2.bf16.msra.mxu0 0
      %10208 = vmatprep.subr.bf16.mxu0 0
      %10209 = vmatpush2.bf16.msra.mxu0 0
      %10210 = vmatprep.mubr.bf16.mxu0 0
      %10211 = vmatmul.mubr.bf16.gmra.mxu0 %v10109
      %v10212 = vpop.f32.mrf.mxu0
      %v10213 = vadd.f32 0.0, %v10212
      %v10214 = vpop.f32.mrf.mxu0
      %v10215 = vpop.f32.mrf.mxu0
      %v10216 = vadd.f32 0.0, %v10215
      %v10217 = vpop.f32.mrf.mxu0
      %10218 = vmatprep.mubr.bf16.mxu0 0
      %10219 = vmatmul.mubr.bf16.gmra.mxu0 %v10110
      %v10220 = vpop.f32.mrf.mxu0
      %v10221 = vadd.f32 0.0, %v10220
      %v10222 = vpop.f32.mrf.mxu0
      %v10223 = vpop.f32.mrf.mxu0
      %v10224 = vadd.f32 0.0, %v10223
      %v10225 = vpop.f32.mrf.mxu0
      %10226 = vmatprep.mubr.bf16.mxu0 0
      %10227 = vmatmul.mubr.bf16.gmra.mxu0 %v10111
      %v10228 = vpop.f32.mrf.mxu0
      %v10229 = vadd.f32 0.0, %v10228
      %v10230 = vpop.f32.mrf.mxu0
      %v10231 = vpop.f32.mrf.mxu0
      %v10232 = vadd.f32 0.0, %v10231
      %v10233 = vpop.f32.mrf.mxu0
      %10234 = vmatprep.mubr.bf16.mxu0 0
      %10235 = vmatmul.mubr.bf16.gmra.mxu0 %v10112
      %v10236 = vpop.f32.mrf.mxu0
      %v10237 = vadd.f32 0.0, %v10236
      %v10238 = vpop.f32.mrf.mxu0
      %v10239 = vpop.f32.mrf.mxu0
      %v10240 = vadd.f32 0.0, %v10239
      %v10241 = vpop.f32.mrf.mxu0
      %10242 = vdwg.mxu0
      %v10243 = vadd.f32 %v10093, %v10213
      %v10244 = vadd.f32 %v10094, %v10216
      %v10245 = vadd.f32 %v10095, %v10221
      %v10246 = vadd.f32 %v10096, %v10224
      %v10247 = vadd.f32 %v10097, %v10229
      %v10248 = vadd.f32 %v10098, %v10232
      %v10249 = vadd.f32 %v10099, %v10237
      %v10250 = vadd.f32 %v10100, %v10240
      %s10251 = scalar_lea.vmem [#allocation5], 32
      %v10252 = vld [vmem:[%s10251] sm:$0xff]
      %v10253 = vld [vmem:[%s10251 + $0x10] sm:$0xff]
      %v10254 = vld [vmem:[%s10251 + $0x20] sm:$0xff]
      %v10255 = vld [vmem:[%s10251 + $0x30] sm:$0xff]
      %v10256 = vld [vmem:[%s10251 + $0x40] sm:$0xff]
      %v10257 = vld [vmem:[%s10251 + $0x50] sm:$0xff]
      %v10258 = vld [vmem:[%s10251 + $0x60] sm:$0xff]
      %v10259 = vld [vmem:[%s10251 + $0x70] sm:$0xff]
      %v10260 = vpack.c.bf16 %v10253, %v10252
      %v10261 = vpack.c.bf16 %v10255, %v10254
      %v10262 = vpack.c.bf16 %v10257, %v10256
      %v10263 = vpack.c.bf16 %v10259, %v10258
      %s10264 = scalar_lea.vmem %s9, 384
      %v10265 = vld [vmem:[%s10264] sm:$0xf]
      %v10266 = vld [vmem:[%s10264 + $0x4] sm:$0xf]
      %v10267 = vld [vmem:[%s10264 + $0x8] sm:$0xf]
      %v10268 = vld [vmem:[%s10264 + $0xc] sm:$0xf]
      %v10269 = vld [vmem:[%s10264 + $0x10] sm:$0xf]
      %v10270 = vld [vmem:[%s10264 + $0x14] sm:$0xf]
      %v10271 = vld [vmem:[%s10264 + $0x18] sm:$0xf]
      %v10272 = vld [vmem:[%s10264 + $0x1c] sm:$0xf]
      %v10273 = vld [vmem:[%s10264 + $0x20] sm:$0xf]
      %v10274 = vld [vmem:[%s10264 + $0x24] sm:$0xf]
      %v10275 = vld [vmem:[%s10264 + $0x28] sm:$0xf]
      %v10276 = vld [vmem:[%s10264 + $0x2c] sm:$0xf]
      %v10277 = vld [vmem:[%s10264 + $0x30] sm:$0xf]
      %v10278 = vld [vmem:[%s10264 + $0x34] sm:$0xf]
      %v10279 = vld [vmem:[%s10264 + $0x38] sm:$0xf]
      %v10280 = vld [vmem:[%s10264 + $0x3c] sm:$0xf]
      %v10297 = vunpack.c.l.b16 %v10265
      %v10298 = vunpack.c.l.b16 %v10266
      %v10299 = vunpack.c.l.b16 %v10267
      %v10300 = vunpack.c.l.b16 %v10268
      %v10301 = vunpack.c.l.b16 %v10269
      %v10302 = vunpack.c.l.b16 %v10270
      %v10303 = vunpack.c.l.b16 %v10271
      %v10304 = vunpack.c.l.b16 %v10272
      %v10305 = vunpack.c.l.b16 %v10273
      %v10306 = vunpack.c.l.b16 %v10274
      %v10307 = vunpack.c.l.b16 %v10275
      %v10308 = vunpack.c.l.b16 %v10276
      %v10309 = vunpack.c.l.b16 %v10277
      %v10310 = vunpack.c.l.b16 %v10278
      %v10311 = vunpack.c.l.b16 %v10279
      %v10312 = vunpack.c.l.b16 %v10280
      %v10313 = vpack.c.b16 %v10298, %v10297
      %v10314 = vpack.c.b16 %v10300, %v10299
      %v10315 = vpack.c.b16 %v10302, %v10301
      %v10316 = vpack.c.b16 %v10304, %v10303
      %v10317 = vpack.c.b16 %v10306, %v10305
      %v10318 = vpack.c.b16 %v10308, %v10307
      %v10319 = vpack.c.b16 %v10310, %v10309
      %v10320 = vpack.c.b16 %v10312, %v10311
      %10329 = vmatprep.subr.bf16.mxu0 0
      %10330 = vmatpush1.bf16.msra.mxu0 %v10320
      %10331 = vmatprep.subr.bf16.mxu0 0
      %10332 = vmatpush1.bf16.msra.mxu0 %v10319
      %10333 = vmatprep.subr.bf16.mxu0 0
      %10334 = vmatpush1.bf16.msra.mxu0 %v10318
      %10335 = vmatprep.subr.bf16.mxu0 0
      %10336 = vmatpush1.bf16.msra.mxu0 %v10317
      %10337 = vmatprep.subr.bf16.mxu0 0
      %10338 = vmatpush1.bf16.msra.mxu0 %v10316
      %10339 = vmatprep.subr.bf16.mxu0 0
      %10340 = vmatpush1.bf16.msra.mxu0 %v10315
      %10341 = vmatprep.subr.bf16.mxu0 0
      %10342 = vmatpush1.bf16.msra.mxu0 %v10314
      %10343 = vmatprep.subr.bf16.mxu0 0
      %10344 = vmatpush1.bf16.msra.mxu0 %v10313
      %10345 = vmatprep.subr.bf16.mxu0 0
      %10346 = vmatpush2.bf16.msra.mxu0 0
      %10347 = vmatprep.subr.bf16.mxu0 0
      %10348 = vmatpush2.bf16.msra.mxu0 0
      %10349 = vmatprep.subr.bf16.mxu0 0
      %10350 = vmatpush2.bf16.msra.mxu0 0
      %10351 = vmatprep.subr.bf16.mxu0 0
      %10352 = vmatpush2.bf16.msra.mxu0 0
      %10353 = vmatprep.subr.bf16.mxu0 0
      %10354 = vmatpush2.bf16.msra.mxu0 0
      %10355 = vmatprep.subr.bf16.mxu0 0
      %10356 = vmatpush2.bf16.msra.mxu0 0
      %10357 = vmatprep.subr.bf16.mxu0 0
      %10358 = vmatpush2.bf16.msra.mxu0 0
      %10359 = vmatprep.subr.bf16.mxu0 0
      %10360 = vmatpush2.bf16.msra.mxu0 0
      %10361 = vmatprep.mubr.bf16.mxu0 0
      %10362 = vmatmul.mubr.bf16.gmra.mxu0 %v10260
      %v10363 = vpop.f32.mrf.mxu0
      %v10364 = vadd.f32 0.0, %v10363
      %v10365 = vpop.f32.mrf.mxu0
      %v10366 = vpop.f32.mrf.mxu0
      %v10367 = vadd.f32 0.0, %v10366
      %v10368 = vpop.f32.mrf.mxu0
      %10369 = vmatprep.mubr.bf16.mxu0 0
      %10370 = vmatmul.mubr.bf16.gmra.mxu0 %v10261
      %v10371 = vpop.f32.mrf.mxu0
      %v10372 = vadd.f32 0.0, %v10371
      %v10373 = vpop.f32.mrf.mxu0
      %v10374 = vpop.f32.mrf.mxu0
      %v10375 = vadd.f32 0.0, %v10374
      %v10376 = vpop.f32.mrf.mxu0
      %10377 = vmatprep.mubr.bf16.mxu0 0
      %10378 = vmatmul.mubr.bf16.gmra.mxu0 %v10262
      %v10379 = vpop.f32.mrf.mxu0
      %v10380 = vadd.f32 0.0, %v10379
      %v10381 = vpop.f32.mrf.mxu0
      %v10382 = vpop.f32.mrf.mxu0
      %v10383 = vadd.f32 0.0, %v10382
      %v10384 = vpop.f32.mrf.mxu0
      %10385 = vmatprep.mubr.bf16.mxu0 0
      %10386 = vmatmul.mubr.bf16.gmra.mxu0 %v10263
      %v10387 = vpop.f32.mrf.mxu0
      %v10388 = vadd.f32 0.0, %v10387
      %v10389 = vpop.f32.mrf.mxu0
      %v10390 = vpop.f32.mrf.mxu0
      %v10391 = vadd.f32 0.0, %v10390
      %v10392 = vpop.f32.mrf.mxu0
      %10393 = vdwg.mxu0
      %v10394 = vadd.f32 %v10243, %v10364
      %v10395 = vadd.f32 %v10244, %v10367
      %v10396 = vadd.f32 %v10245, %v10372
      %v10397 = vadd.f32 %v10246, %v10375
      %v10398 = vadd.f32 %v10247, %v10380
      %v10399 = vadd.f32 %v10248, %v10383
      %v10400 = vadd.f32 %v10249, %v10388
      %v10401 = vadd.f32 %v10250, %v10391
      %v10402 = vld [vmem:[%s10251 + $0x1] sm:$0xff]
      %v10403 = vld [vmem:[%s10251 + $0x11] sm:$0xff]
      %v10404 = vld [vmem:[%s10251 + $0x21] sm:$0xff]
      %v10405 = vld [vmem:[%s10251 + $0x31] sm:$0xff]
      %v10406 = vld [vmem:[%s10251 + $0x41] sm:$0xff]
      %v10407 = vld [vmem:[%s10251 + $0x51] sm:$0xff]
      %v10408 = vld [vmem:[%s10251 + $0x61] sm:$0xff]
      %v10409 = vld [vmem:[%s10251 + $0x71] sm:$0xff]
      %v10410 = vpack.c.bf16 %v10403, %v10402
      %v10411 = vpack.c.bf16 %v10405, %v10404
      %v10412 = vpack.c.bf16 %v10407, %v10406
      %v10413 = vpack.c.bf16 %v10409, %v10408
      %s10414 = scalar_lea.vmem %s9, 448
      %v10415 = vld [vmem:[%s10414] sm:$0xf]
      %v10416 = vld [vmem:[%s10414 + $0x4] sm:$0xf]
      %v10417 = vld [vmem:[%s10414 + $0x8] sm:$0xf]
      %v10418 = vld [vmem:[%s10414 + $0xc] sm:$0xf]
      %v10419 = vld [vmem:[%s10414 + $0x10] sm:$0xf]
      %v10420 = vld [vmem:[%s10414 + $0x14] sm:$0xf]
      %v10421 = vld [vmem:[%s10414 + $0x18] sm:$0xf]
      %v10422 = vld [vmem:[%s10414 + $0x1c] sm:$0xf]
      %v10423 = vld [vmem:[%s10414 + $0x20] sm:$0xf]
      %v10424 = vld [vmem:[%s10414 + $0x24] sm:$0xf]
      %v10425 = vld [vmem:[%s10414 + $0x28] sm:$0xf]
      %v10426 = vld [vmem:[%s10414 + $0x2c] sm:$0xf]
      %v10427 = vld [vmem:[%s10414 + $0x30] sm:$0xf]
      %v10428 = vld [vmem:[%s10414 + $0x34] sm:$0xf]
      %v10429 = vld [vmem:[%s10414 + $0x38] sm:$0xf]
      %v10430 = vld [vmem:[%s10414 + $0x3c] sm:$0xf]
      %v10447 = vunpack.c.l.b16 %v10415
      %v10448 = vunpack.c.l.b16 %v10416
      %v10449 = vunpack.c.l.b16 %v10417
      %v10450 = vunpack.c.l.b16 %v10418
      %v10451 = vunpack.c.l.b16 %v10419
      %v10452 = vunpack.c.l.b16 %v10420
      %v10453 = vunpack.c.l.b16 %v10421
      %v10454 = vunpack.c.l.b16 %v10422
      %v10455 = vunpack.c.l.b16 %v10423
      %v10456 = vunpack.c.l.b16 %v10424
      %v10457 = vunpack.c.l.b16 %v10425
      %v10458 = vunpack.c.l.b16 %v10426
      %v10459 = vunpack.c.l.b16 %v10427
      %v10460 = vunpack.c.l.b16 %v10428
      %v10461 = vunpack.c.l.b16 %v10429
      %v10462 = vunpack.c.l.b16 %v10430
      %v10463 = vpack.c.b16 %v10448, %v10447
      %v10464 = vpack.c.b16 %v10450, %v10449
      %v10465 = vpack.c.b16 %v10452, %v10451
      %v10466 = vpack.c.b16 %v10454, %v10453
      %v10467 = vpack.c.b16 %v10456, %v10455
      %v10468 = vpack.c.b16 %v10458, %v10457
      %v10469 = vpack.c.b16 %v10460, %v10459
      %v10470 = vpack.c.b16 %v10462, %v10461
      %10479 = vmatprep.subr.bf16.mxu0 0
      %10480 = vmatpush1.bf16.msra.mxu0 %v10470
      %10481 = vmatprep.subr.bf16.mxu0 0
      %10482 = vmatpush1.bf16.msra.mxu0 %v10469
      %10483 = vmatprep.subr.bf16.mxu0 0
      %10484 = vmatpush1.bf16.msra.mxu0 %v10468
      %10485 = vmatprep.subr.bf16.mxu0 0
      %10486 = vmatpush1.bf16.msra.mxu0 %v10467
      %10487 = vmatprep.subr.bf16.mxu0 0
      %10488 = vmatpush1.bf16.msra.mxu0 %v10466
      %10489 = vmatprep.subr.bf16.mxu0 0
      %10490 = vmatpush1.bf16.msra.mxu0 %v10465
      %10491 = vmatprep.subr.bf16.mxu0 0
      %10492 = vmatpush1.bf16.msra.mxu0 %v10464
      %10493 = vmatprep.subr.bf16.mxu0 0
      %10494 = vmatpush1.bf16.msra.mxu0 %v10463
      %10495 = vmatprep.subr.bf16.mxu0 0
      %10496 = vmatpush2.bf16.msra.mxu0 0
      %10497 = vmatprep.subr.bf16.mxu0 0
      %10498 = vmatpush2.bf16.msra.mxu0 0
      %10499 = vmatprep.subr.bf16.mxu0 0
      %10500 = vmatpush2.bf16.msra.mxu0 0
      %10501 = vmatprep.subr.bf16.mxu0 0
      %10502 = vmatpush2.bf16.msra.mxu0 0
      %10503 = vmatprep.subr.bf16.mxu0 0
      %10504 = vmatpush2.bf16.msra.mxu0 0
      %10505 = vmatprep.subr.bf16.mxu0 0
      %10506 = vmatpush2.bf16.msra.mxu0 0
      %10507 = vmatprep.subr.bf16.mxu0 0
      %10508 = vmatpush2.bf16.msra.mxu0 0
      %10509 = vmatprep.subr.bf16.mxu0 0
      %10510 = vmatpush2.bf16.msra.mxu0 0
      %10511 = vmatprep.mubr.bf16.mxu0 0
      %10512 = vmatmul.mubr.bf16.gmra.mxu0 %v10410
      %v10513 = vpop.f32.mrf.mxu0
      %v10514 = vadd.f32 0.0, %v10513
      %v10515 = vpop.f32.mrf.mxu0
      %v10516 = vpop.f32.mrf.mxu0
      %v10517 = vadd.f32 0.0, %v10516
      %v10518 = vpop.f32.mrf.mxu0
      %10519 = vmatprep.mubr.bf16.mxu0 0
      %10520 = vmatmul.mubr.bf16.gmra.mxu0 %v10411
      %v10521 = vpop.f32.mrf.mxu0
      %v10522 = vadd.f32 0.0, %v10521
      %v10523 = vpop.f32.mrf.mxu0
      %v10524 = vpop.f32.mrf.mxu0
      %v10525 = vadd.f32 0.0, %v10524
      %v10526 = vpop.f32.mrf.mxu0
      %10527 = vmatprep.mubr.bf16.mxu0 0
      %10528 = vmatmul.mubr.bf16.gmra.mxu0 %v10412
      %v10529 = vpop.f32.mrf.mxu0
      %v10530 = vadd.f32 0.0, %v10529
      %v10531 = vpop.f32.mrf.mxu0
      %v10532 = vpop.f32.mrf.mxu0
      %v10533 = vadd.f32 0.0, %v10532
      %v10534 = vpop.f32.mrf.mxu0
      %10535 = vmatprep.mubr.bf16.mxu0 0
      %10536 = vmatmul.mubr.bf16.gmra.mxu0 %v10413
      %v10537 = vpop.f32.mrf.mxu0
      %v10538 = vadd.f32 0.0, %v10537
      %v10539 = vpop.f32.mrf.mxu0
      %v10540 = vpop.f32.mrf.mxu0
      %v10541 = vadd.f32 0.0, %v10540
      %v10542 = vpop.f32.mrf.mxu0
      %10543 = vdwg.mxu0
      %v10544 = vadd.f32 %v10394, %v10514
      %v10545 = vadd.f32 %v10395, %v10517
      %v10546 = vadd.f32 %v10396, %v10522
      %v10547 = vadd.f32 %v10397, %v10525
      %v10548 = vadd.f32 %v10398, %v10530
      %v10549 = vadd.f32 %v10399, %v10533
      %v10550 = vadd.f32 %v10400, %v10538
      %v10551 = vadd.f32 %v10401, %v10541
      %v10552 = vld [vmem:[%s10251 + $0x2] sm:$0xff]
      %v10553 = vld [vmem:[%s10251 + $0x12] sm:$0xff]
      %v10554 = vld [vmem:[%s10251 + $0x22] sm:$0xff]
      %v10555 = vld [vmem:[%s10251 + $0x32] sm:$0xff]
      %v10556 = vld [vmem:[%s10251 + $0x42] sm:$0xff]
      %v10557 = vld [vmem:[%s10251 + $0x52] sm:$0xff]
      %v10558 = vld [vmem:[%s10251 + $0x62] sm:$0xff]
      %v10559 = vld [vmem:[%s10251 + $0x72] sm:$0xff]
      %v10560 = vpack.c.bf16 %v10553, %v10552
      %v10561 = vpack.c.bf16 %v10555, %v10554
      %v10562 = vpack.c.bf16 %v10557, %v10556
      %v10563 = vpack.c.bf16 %v10559, %v10558
      %s10564 = scalar_lea.vmem %s9, 512
      %v10565 = vld [vmem:[%s10564] sm:$0xf]
      %v10566 = vld [vmem:[%s10564 + $0x4] sm:$0xf]
      %v10567 = vld [vmem:[%s10564 + $0x8] sm:$0xf]
      %v10568 = vld [vmem:[%s10564 + $0xc] sm:$0xf]
      %v10569 = vld [vmem:[%s10564 + $0x10] sm:$0xf]
      %v10570 = vld [vmem:[%s10564 + $0x14] sm:$0xf]
      %v10571 = vld [vmem:[%s10564 + $0x18] sm:$0xf]
      %v10572 = vld [vmem:[%s10564 + $0x1c] sm:$0xf]
      %v10573 = vld [vmem:[%s10564 + $0x20] sm:$0xf]
      %v10574 = vld [vmem:[%s10564 + $0x24] sm:$0xf]
      %v10575 = vld [vmem:[%s10564 + $0x28] sm:$0xf]
      %v10576 = vld [vmem:[%s10564 + $0x2c] sm:$0xf]
      %v10577 = vld [vmem:[%s10564 + $0x30] sm:$0xf]
      %v10578 = vld [vmem:[%s10564 + $0x34] sm:$0xf]
      %v10579 = vld [vmem:[%s10564 + $0x38] sm:$0xf]
      %v10580 = vld [vmem:[%s10564 + $0x3c] sm:$0xf]
      %v10597 = vunpack.c.l.b16 %v10565
      %v10598 = vunpack.c.l.b16 %v10566
      %v10599 = vunpack.c.l.b16 %v10567
      %v10600 = vunpack.c.l.b16 %v10568
      %v10601 = vunpack.c.l.b16 %v10569
      %v10602 = vunpack.c.l.b16 %v10570
      %v10603 = vunpack.c.l.b16 %v10571
      %v10604 = vunpack.c.l.b16 %v10572
      %v10605 = vunpack.c.l.b16 %v10573
      %v10606 = vunpack.c.l.b16 %v10574
      %v10607 = vunpack.c.l.b16 %v10575
      %v10608 = vunpack.c.l.b16 %v10576
      %v10609 = vunpack.c.l.b16 %v10577
      %v10610 = vunpack.c.l.b16 %v10578
      %v10611 = vunpack.c.l.b16 %v10579
      %v10612 = vunpack.c.l.b16 %v10580
      %v10613 = vpack.c.b16 %v10598, %v10597
      %v10614 = vpack.c.b16 %v10600, %v10599
      %v10615 = vpack.c.b16 %v10602, %v10601
      %v10616 = vpack.c.b16 %v10604, %v10603
      %v10617 = vpack.c.b16 %v10606, %v10605
      %v10618 = vpack.c.b16 %v10608, %v10607
      %v10619 = vpack.c.b16 %v10610, %v10609
      %v10620 = vpack.c.b16 %v10612, %v10611
      %10629 = vmatprep.subr.bf16.mxu0 0
      %10630 = vmatpush1.bf16.msra.mxu0 %v10620
      %10631 = vmatprep.subr.bf16.mxu0 0
      %10632 = vmatpush1.bf16.msra.mxu0 %v10619
      %10633 = vmatprep.subr.bf16.mxu0 0
      %10634 = vmatpush1.bf16.msra.mxu0 %v10618
      %10635 = vmatprep.subr.bf16.mxu0 0
      %10636 = vmatpush1.bf16.msra.mxu0 %v10617
      %10637 = vmatprep.subr.bf16.mxu0 0
      %10638 = vmatpush1.bf16.msra.mxu0 %v10616
      %10639 = vmatprep.subr.bf16.mxu0 0
      %10640 = vmatpush1.bf16.msra.mxu0 %v10615
      %10641 = vmatprep.subr.bf16.mxu0 0
      %10642 = vmatpush1.bf16.msra.mxu0 %v10614
      %10643 = vmatprep.subr.bf16.mxu0 0
      %10644 = vmatpush1.bf16.msra.mxu0 %v10613
      %10645 = vmatprep.subr.bf16.mxu0 0
      %10646 = vmatpush2.bf16.msra.mxu0 0
      %10647 = vmatprep.subr.bf16.mxu0 0
      %10648 = vmatpush2.bf16.msra.mxu0 0
      %10649 = vmatprep.subr.bf16.mxu0 0
      %10650 = vmatpush2.bf16.msra.mxu0 0
      %10651 = vmatprep.subr.bf16.mxu0 0
      %10652 = vmatpush2.bf16.msra.mxu0 0
      %10653 = vmatprep.subr.bf16.mxu0 0
      %10654 = vmatpush2.bf16.msra.mxu0 0
      %10655 = vmatprep.subr.bf16.mxu0 0
      %10656 = vmatpush2.bf16.msra.mxu0 0
      %10657 = vmatprep.subr.bf16.mxu0 0
      %10658 = vmatpush2.bf16.msra.mxu0 0
      %10659 = vmatprep.subr.bf16.mxu0 0
      %10660 = vmatpush2.bf16.msra.mxu0 0
      %10661 = vmatprep.mubr.bf16.mxu0 0
      %10662 = vmatmul.mubr.bf16.gmra.mxu0 %v10560
      %v10663 = vpop.f32.mrf.mxu0
      %v10664 = vadd.f32 0.0, %v10663
      %v10665 = vpop.f32.mrf.mxu0
      %v10666 = vpop.f32.mrf.mxu0
      %v10667 = vadd.f32 0.0, %v10666
      %v10668 = vpop.f32.mrf.mxu0
      %10669 = vmatprep.mubr.bf16.mxu0 0
      %10670 = vmatmul.mubr.bf16.gmra.mxu0 %v10561
      %v10671 = vpop.f32.mrf.mxu0
      %v10672 = vadd.f32 0.0, %v10671
      %v10673 = vpop.f32.mrf.mxu0
      %v10674 = vpop.f32.mrf.mxu0
      %v10675 = vadd.f32 0.0, %v10674
      %v10676 = vpop.f32.mrf.mxu0
      %10677 = vmatprep.mubr.bf16.mxu0 0
      %10678 = vmatmul.mubr.bf16.gmra.mxu0 %v10562
      %v10679 = vpop.f32.mrf.mxu0
      %v10680 = vadd.f32 0.0, %v10679
      %v10681 = vpop.f32.mrf.mxu0
      %v10682 = vpop.f32.mrf.mxu0
      %v10683 = vadd.f32 0.0, %v10682
      %v10684 = vpop.f32.mrf.mxu0
      %10685 = vmatprep.mubr.bf16.mxu0 0
      %10686 = vmatmul.mubr.bf16.gmra.mxu0 %v10563
      %v10687 = vpop.f32.mrf.mxu0
      %v10688 = vadd.f32 0.0, %v10687
      %v10689 = vpop.f32.mrf.mxu0
      %v10690 = vpop.f32.mrf.mxu0
      %v10691 = vadd.f32 0.0, %v10690
      %v10692 = vpop.f32.mrf.mxu0
      %10693 = vdwg.mxu0
      %v10694 = vadd.f32 %v10544, %v10664
      %v10695 = vadd.f32 %v10545, %v10667
      %v10696 = vadd.f32 %v10546, %v10672
      %v10697 = vadd.f32 %v10547, %v10675
      %v10698 = vadd.f32 %v10548, %v10680
      %v10699 = vadd.f32 %v10549, %v10683
      %v10700 = vadd.f32 %v10550, %v10688
      %v10701 = vadd.f32 %v10551, %v10691
      %v10702 = vld [vmem:[%s8547] ss:$2 sm:$0xff]
      %v10703 = vld [vmem:[%s8549] ss:$2 sm:$0xff]
      %v10704 = vld [vmem:[%s8551] ss:$2 sm:$0xff]
      %v10705 = vld [vmem:[%s8553] ss:$2 sm:$0xff]
      %v10706 = vld [vmem:[%s8555] ss:$2 sm:$0xff]
      %v10707 = vld [vmem:[%s8557] ss:$2 sm:$0xff]
      %v10708 = vld [vmem:[%s8559] ss:$2 sm:$0xff]
      %v10709 = vld [vmem:[%s8561] ss:$2 sm:$0xff]
      %v10710 = vpack.c.bf16 %v10703, %v10702
      %v10711 = vpack.c.bf16 %v10705, %v10704
      %v10712 = vpack.c.bf16 %v10707, %v10706
      %v10713 = vpack.c.bf16 %v10709, %v10708
      %v10714 = vld [vmem:[%s11] sm:$0xf]
      %v10715 = vld [vmem:[%s11 + $0x4] sm:$0xf]
      %v10716 = vld [vmem:[%s11 + $0x8] sm:$0xf]
      %v10717 = vld [vmem:[%s11 + $0xc] sm:$0xf]
      %v10718 = vld [vmem:[%s11 + $0x10] sm:$0xf]
      %v10719 = vld [vmem:[%s11 + $0x14] sm:$0xf]
      %v10720 = vld [vmem:[%s11 + $0x18] sm:$0xf]
      %v10721 = vld [vmem:[%s11 + $0x1c] sm:$0xf]
      %v10722 = vld [vmem:[%s11 + $0x20] sm:$0xf]
      %v10723 = vld [vmem:[%s11 + $0x24] sm:$0xf]
      %v10724 = vld [vmem:[%s11 + $0x28] sm:$0xf]
      %v10725 = vld [vmem:[%s11 + $0x2c] sm:$0xf]
      %v10726 = vld [vmem:[%s11 + $0x30] sm:$0xf]
      %v10727 = vld [vmem:[%s11 + $0x34] sm:$0xf]
      %v10728 = vld [vmem:[%s11 + $0x38] sm:$0xf]
      %v10729 = vld [vmem:[%s11 + $0x3c] sm:$0xf]
      %v10730 = vld [vmem:[%s12] sm:$0x1]
      %v10732 = vlaneseq
      %v10733 = vshrl.u32 %v10732, 7
      %v10734 = vsub.s32 0, %v10733
      %v10735 = vrot.slane %v10730, %v10734
      %v10753 = vunpack.c.l.b16 %v10714
      %v10754 = vunpack.c.l.b16 %v10715
      %v10755 = vunpack.c.l.b16 %v10716
      %v10756 = vunpack.c.l.b16 %v10717
      %v10757 = vunpack.c.l.b16 %v10718
      %v10758 = vunpack.c.l.b16 %v10719
      %v10759 = vunpack.c.l.b16 %v10720
      %v10760 = vunpack.c.l.b16 %v10721
      %v10761 = vunpack.c.l.b16 %v10722
      %v10762 = vunpack.c.l.b16 %v10723
      %v10763 = vunpack.c.l.b16 %v10724
      %v10764 = vunpack.c.l.b16 %v10725
      %v10765 = vunpack.c.l.b16 %v10726
      %v10766 = vunpack.c.l.b16 %v10727
      %v10767 = vunpack.c.l.b16 %v10728
      %v10768 = vunpack.c.l.b16 %v10729
      %v10769 = vpack.c.b16 %v10754, %v10753
      %v10770 = vpack.c.b16 %v10756, %v10755
      %v10771 = vpack.c.b16 %v10758, %v10757
      %v10772 = vpack.c.b16 %v10760, %v10759
      %v10773 = vpack.c.b16 %v10762, %v10761
      %v10774 = vpack.c.b16 %v10764, %v10763
      %v10775 = vpack.c.b16 %v10766, %v10765
      %v10776 = vpack.c.b16 %v10768, %v10767
      %10785 = vmatprep.subr.bf16.mxu0 0
      %10786 = vmatpush1.bf16.msra.mxu0 %v10776
      %10787 = vmatprep.subr.bf16.mxu0 0
      %10788 = vmatpush1.bf16.msra.mxu0 %v10775
      %10789 = vmatprep.subr.bf16.mxu0 0
      %10790 = vmatpush1.bf16.msra.mxu0 %v10774
      %10791 = vmatprep.subr.bf16.mxu0 0
      %10792 = vmatpush1.bf16.msra.mxu0 %v10773
      %10793 = vmatprep.subr.bf16.mxu0 0
      %10794 = vmatpush1.bf16.msra.mxu0 %v10772
      %10795 = vmatprep.subr.bf16.mxu0 0
      %10796 = vmatpush1.bf16.msra.mxu0 %v10771
      %10797 = vmatprep.subr.bf16.mxu0 0
      %10798 = vmatpush1.bf16.msra.mxu0 %v10770
      %10799 = vmatprep.subr.bf16.mxu0 0
      %10800 = vmatpush1.bf16.msra.mxu0 %v10769
      %10801 = vmatprep.subr.bf16.mxu0 0
      %10802 = vmatpush2.bf16.msra.mxu0 0
      %10803 = vmatprep.subr.bf16.mxu0 0
      %10804 = vmatpush2.bf16.msra.mxu0 0
      %10805 = vmatprep.subr.bf16.mxu0 0
      %10806 = vmatpush2.bf16.msra.mxu0 0
      %10807 = vmatprep.subr.bf16.mxu0 0
      %10808 = vmatpush2.bf16.msra.mxu0 0
      %10809 = vmatprep.subr.bf16.mxu0 0
      %10810 = vmatpush2.bf16.msra.mxu0 0
      %10811 = vmatprep.subr.bf16.mxu0 0
      %10812 = vmatpush2.bf16.msra.mxu0 0
      %10813 = vmatprep.subr.bf16.mxu0 0
      %10814 = vmatpush2.bf16.msra.mxu0 0
      %10815 = vmatprep.subr.bf16.mxu0 0
      %10816 = vmatpush2.bf16.msra.mxu0 0
      %10817 = vmatprep.mubr.bf16.mxu0 0
      %10818 = vmatmul.mubr.bf16.gmra.mxu0 %v10710
      %v10819 = vpop.f32.mrf.mxu0
      %v10820 = vadd.f32 %v10735, %v10819
      %v10821 = vpop.f32.mrf.mxu0
      %v10822 = vpop.f32.mrf.mxu0
      %v10823 = vadd.f32 %v10735, %v10822
      %v10824 = vpop.f32.mrf.mxu0
      %10825 = vmatprep.mubr.bf16.mxu0 0
      %10826 = vmatmul.mubr.bf16.gmra.mxu0 %v10711
      %v10827 = vpop.f32.mrf.mxu0
      %v10828 = vadd.f32 %v10735, %v10827
      %v10829 = vpop.f32.mrf.mxu0
      %v10830 = vpop.f32.mrf.mxu0
      %v10831 = vadd.f32 %v10735, %v10830
      %v10832 = vpop.f32.mrf.mxu0
      %10833 = vmatprep.mubr.bf16.mxu0 0
      %10834 = vmatmul.mubr.bf16.gmra.mxu0 %v10712
      %v10835 = vpop.f32.mrf.mxu0
      %v10836 = vadd.f32 %v10735, %v10835
      %v10837 = vpop.f32.mrf.mxu0
      %v10838 = vpop.f32.mrf.mxu0
      %v10839 = vadd.f32 %v10735, %v10838
      %v10840 = vpop.f32.mrf.mxu0
      %10841 = vmatprep.mubr.bf16.mxu0 0
      %10842 = vmatmul.mubr.bf16.gmra.mxu0 %v10713
      %v10843 = vpop.f32.mrf.mxu0
      %v10844 = vadd.f32 %v10735, %v10843
      %v10845 = vpop.f32.mrf.mxu0
      %v10846 = vpop.f32.mrf.mxu0
      %v10847 = vadd.f32 %v10735, %v10846
      %v10848 = vpop.f32.mrf.mxu0
      %10849 = vdwg.mxu0
      %v10850 = vld [vmem:[%s10] sm:$0x1]
      %v10852 = vlaneseq
      %v10853 = vshrl.u32 %v10852, 7
      %v10854 = vsub.s32 0, %v10853
      %v10855 = vrot.slane %v10850, %v10854
      %v10857 = vadd.f32 %v10694, %v10855
      %v10858 = vadd.f32 %v10695, %v10855
      %v10859 = vadd.f32 %v10696, %v10855
      %v10860 = vadd.f32 %v10697, %v10855
      %v10861 = vadd.f32 %v10698, %v10855
      %v10862 = vadd.f32 %v10699, %v10855
      %v10863 = vadd.f32 %v10700, %v10855
      %v10864 = vadd.f32 %v10701, %v10855
      %v10865 = vadd.f32 %v10857, %v10820
      %v10866 = vadd.f32 %v10858, %v10823
      %v10867 = vadd.f32 %v10859, %v10828
      %v10868 = vadd.f32 %v10860, %v10831
      %v10869 = vadd.f32 %v10861, %v10836
      %v10870 = vadd.f32 %v10862, %v10839
      %v10871 = vadd.f32 %v10863, %v10844
      %v10872 = vadd.f32 %v10864, %v10847
      %v10873 = vmax.f32 %v10865, 0.0
      %v10874 = vmax.f32 %v10866, 0.0
      %v10875 = vmax.f32 %v10867, 0.0
      %v10876 = vmax.f32 %v10868, 0.0
      %v10877 = vmax.f32 %v10869, 0.0
      %v10878 = vmax.f32 %v10870, 0.0
      %v10879 = vmax.f32 %v10871, 0.0
      %v10880 = vmax.f32 %v10872, 0.0
      %v10881 = vadd.f32 %v10873, %v10874
      %v10882 = vadd.f32 %v10881, %v10875
      %v10883 = vadd.f32 %v10882, %v10876
      %v10884 = vadd.f32 %v10883, %v10877
      %v10885 = vadd.f32 %v10884, %v10878
      %v10886 = vadd.f32 %v10885, %v10879
      %v10887 = vadd.f32 %v10886, %v10880
      %v10888 = vrot.slane %v10887, 4
      %v10889 = vadd.f32 %v10887, %v10888
      %v10890 = vrot.slane %v10889, 2
      %v10891 = vadd.f32 %v10889, %v10890
      %v10892 = vrot.slane %v10891, 1
      %v10893 = vadd.f32 %v10891, %v10892
      %v10894 = vrcp.pop 64.0
      %v10895 = vmul.f32 %v10893, %v10894
      %v10896 = vpack.c.bf16 %v10895, %v10895
      %v10897 = vld [vmem:[%s13] sm:$0xf]
      %v10898 = vld [vmem:[%s13 + $0x4] sm:$0xf]
      %v10899 = vld [vmem:[%s13 + $0x8] sm:$0xf]
      %v10900 = vld [vmem:[%s13 + $0xc] sm:$0xf]
      %v10901 = vld [vmem:[%s13 + $0x10] sm:$0xf]
      %v10902 = vld [vmem:[%s13 + $0x14] sm:$0xf]
      %v10903 = vld [vmem:[%s13 + $0x18] sm:$0xf]
      %v10904 = vld [vmem:[%s13 + $0x1c] sm:$0xf]
      %v10905 = vld [vmem:[%s13 + $0x20] sm:$0xf]
      %v10906 = vld [vmem:[%s13 + $0x24] sm:$0xf]
      %v10907 = vld [vmem:[%s13 + $0x28] sm:$0xf]
      %v10908 = vld [vmem:[%s13 + $0x2c] sm:$0xf]
      %v10909 = vld [vmem:[%s13 + $0x30] sm:$0xf]
      %v10910 = vld [vmem:[%s13 + $0x34] sm:$0xf]
      %v10911 = vld [vmem:[%s13 + $0x38] sm:$0xf]
      %v10912 = vld [vmem:[%s13 + $0x3c] sm:$0xf]
      %v10913 = vld [vmem:[%s14] sm:$0x1]
      %v10930 = vunpack.c.l.b16 %v10897
      %v10931 = vunpack.c.l.b16 %v10898
      %v10932 = vunpack.c.l.b16 %v10899
      %v10933 = vunpack.c.l.b16 %v10900
      %v10934 = vunpack.c.l.b16 %v10901
      %v10935 = vunpack.c.l.b16 %v10902
      %v10936 = vunpack.c.l.b16 %v10903
      %v10937 = vunpack.c.l.b16 %v10904
      %v10938 = vunpack.c.l.b16 %v10905
      %v10939 = vunpack.c.l.b16 %v10906
      %v10940 = vunpack.c.l.b16 %v10907
      %v10941 = vunpack.c.l.b16 %v10908
      %v10942 = vunpack.c.l.b16 %v10909
      %v10943 = vunpack.c.l.b16 %v10910
      %v10944 = vunpack.c.l.b16 %v10911
      %v10945 = vunpack.c.l.b16 %v10912
      %v10946 = vpack.c.b16 %v10931, %v10930
      %v10947 = vpack.c.b16 %v10933, %v10932
      %v10948 = vpack.c.b16 %v10935, %v10934
      %v10949 = vpack.c.b16 %v10937, %v10936
      %v10950 = vpack.c.b16 %v10939, %v10938
      %v10951 = vpack.c.b16 %v10941, %v10940
      %v10952 = vpack.c.b16 %v10943, %v10942
      %v10953 = vpack.c.b16 %v10945, %v10944
      %10962 = vmatprep.subr.bf16.mxu0 0
      %10963 = vmatpush1.bf16.msra.mxu0 %v10953
      %10964 = vmatprep.subr.bf16.mxu0 0
      %10965 = vmatpush1.bf16.msra.mxu0 %v10952
      %10966 = vmatprep.subr.bf16.mxu0 0
      %10967 = vmatpush1.bf16.msra.mxu0 %v10951
      %10968 = vmatprep.subr.bf16.mxu0 0
      %10969 = vmatpush1.bf16.msra.mxu0 %v10950
      %10970 = vmatprep.subr.bf16.mxu0 0
      %10971 = vmatpush1.bf16.msra.mxu0 %v10949
      %10972 = vmatprep.subr.bf16.mxu0 0
      %10973 = vmatpush1.bf16.msra.mxu0 %v10948
      %10974 = vmatprep.subr.bf16.mxu0 0
      %10975 = vmatpush1.bf16.msra.mxu0 %v10947
      %10976 = vmatprep.subr.bf16.mxu0 0
      %10977 = vmatpush1.bf16.msra.mxu0 %v10946
      %10978 = vmatprep.subr.bf16.mxu0 0
      %10979 = vmatpush2.bf16.msra.mxu0 0
      %10980 = vmatprep.subr.bf16.mxu0 0
      %10981 = vmatpush2.bf16.msra.mxu0 0
      %10982 = vmatprep.subr.bf16.mxu0 0
      %10983 = vmatpush2.bf16.msra.mxu0 0
      %10984 = vmatprep.subr.bf16.mxu0 0
      %10985 = vmatpush2.bf16.msra.mxu0 0
      %10986 = vmatprep.subr.bf16.mxu0 0
      %10987 = vmatpush2.bf16.msra.mxu0 0
      %10988 = vmatprep.subr.bf16.mxu0 0
      %10989 = vmatpush2.bf16.msra.mxu0 0
      %10990 = vmatprep.subr.bf16.mxu0 0
      %10991 = vmatpush2.bf16.msra.mxu0 0
      %10992 = vmatprep.subr.bf16.mxu0 0
      %10993 = vmatpush2.bf16.msra.mxu0 0
      %10994 = vmatprep.mubr.bf16.mxu0 0
      %10995 = vmatmul.mubr.bf16.gmra.mxu0 %v10896
      %v10996 = vpop.f32.mrf.mxu0
      %v10997 = vadd.f32 %v10913, %v10996
      %v10998 = vpop.f32.mrf.mxu0
      %v10999 = vpop.f32.mrf.mxu0
      %v11000 = vpop.f32.mrf.mxu0
      %11001 = vdwg.mxu0
      %v11002 = vlaneseq
      %v11003 = vshrl.u32 %v11002, 7
      %v11004 = vsub.s32 0, %v11003
      %v11005 = vrot.slane %v10997, %v11004
      %11006 = vst [vmem:[%s492] sm:$0xff] %v11005
      %p11007 = scmp.lt.s32.totalorder %s26, 1
      %s11008 = scalar_select %p11007, %s26, 1
      %s11009 = smul.addr %s11008, 8
      %s11010 = scalar_lea.vmem %s15, %s11009
      // Predicated region
      $region85: #{jht_forward.1} parent=79 // pred_check
        %p11011 = pneg %p364
      $region86: #{jht_forward.1} parent=79 // pred_check_branch
        %11013 = sbr.rel (%p11011) target = $region88
      $region87: #{jht_forward.1} parent=79 // pred_region
        _
      $region88: #{jht_forward.1} parent=79 // pred_fallthru
        _
    $region80: #{jht_forward.1} parent=5 // pred_fallthru
      _
    %p11014 = scmp.le.s32.totalorder 2, %s21
    // Predicated region
    $region89: #{jht_forward.1} parent=5 // pred_check
      %p11015 = pneg %p11014
    $region90: #{jht_forward.1} parent=5 // pred_check_branch
      %11017 = sbr.rel (%p11015) target = $region92
    $region91: #{jht_forward.1} parent=5 // pred_region
      %s11018 = ssub.s32 %s21, 2
      // Predicated region
      $region93: #{jht_forward.1} parent=91 // pred_check
        %p11019 = pneg %p370
      $region94: #{jht_forward.1} parent=91 // pred_check_branch
        %11021 = sbr.rel (%p11019) target = $region96
      $region95: #{jht_forward.1} parent=91 // pred_region
        %p11022 = scmp.lt.s32.totalorder %s27, 1
        %s11023 = scalar_select %p11022, %s27, 1
        %s11024 = smul.addr %s11023, 8
        %s11025 = scalar_lea.vmem %s15, %s11024
      $region96: #{jht_forward.1} parent=91 // pred_fallthru
        _
    $region92: #{jht_forward.1} parent=5 // pred_fallthru
      _
  $region6: #{jht_forward.1} parent=0 // loop_footer
    %s25 = sadd.s32 1, %s21
  $region7: #{jht_forward.1} parent=0 // loop_footer_branch
    %20 = sbr.rel target = $region3
  $region8: #{jht_forward.1} parent=0 // loop_exit
    _

</llo_original>
